<compile_context>
chip_gen: v7x
topology: tpu7x:2x2x1
jax: 0.10.0
libtpu: 0.0.40
codegen_flags: <defaults>
</compile_context>

<pallas_src>
import functools

import jax
import jax.numpy as jnp
import numpy as np
from jax import lax
from jax.experimental import pallas as pl
from jax.experimental.pallas import tpu as pltpu

BN_EPS = 1e-5


def _im2col(pad_ref, N, H, W, C):
    """(N*H*W, 9*C) patch matrix from a spatially 1-padded (N,H+2,W+2,C) ref."""
    taps = []
    for dy in range(3):
        for dx in range(3):
            taps.append(pad_ref[:, dy:dy + H, dx:dx + W, :].reshape(N * H * W, C))
    return jnp.concatenate(taps, axis=-1)


def _bn_stats(x, axis, m):
    """Single-pass batch statistics (biased variance, training mode)."""
    s1 = jnp.sum(x, axis=axis, keepdims=True)
    s2 = jnp.sum(x * x, axis=axis, keepdims=True)
    mean = s1 * (1.0 / m)
    var = s2 * (1.0 / m) - mean * mean
    return mean, var


def resblock_kernel(x_nhwc_ref, x_ncs_ref, w1_ref, g1_ref, b1_ref,
                    w2t_ref, g2_ref, b2_ref, out_ref, pad_ref, *, mxu_dtype):
    N, H, W, C = x_nhwc_ref.shape
    HW = H * W
    M = float(N * HW)

    # ---- build 1-padded input in scratch: zero only the border, copy interior
    pad_ref[:, 0:1, :, :] = jnp.zeros((N, 1, W + 2, C), jnp.float32)
    pad_ref[:, H + 1:H + 2, :, :] = jnp.zeros((N, 1, W + 2, C), jnp.float32)
    pad_ref[:, :, 0:1, :] = jnp.zeros((N, H + 2, 1, C), jnp.float32)
    pad_ref[:, :, W + 1:W + 2, :] = jnp.zeros((N, H + 2, 1, C), jnp.float32)
    pad_ref[:, 1:H + 1, 1:W + 1, :] = x_nhwc_ref[...]

    # ---- conv3x3 (C -> 2C): single MXU matmul over im2col patches ----
    patches1 = _im2col(pad_ref, N, H, W, C).astype(mxu_dtype)
    h = jnp.dot(patches1, w1_ref[...], preferred_element_type=jnp.float32)

    # ---- BatchNorm2d(2C), training statistics (fused single pass) ----
    mean1, var1 = _bn_stats(h, 0, M)
    scale1 = g1_ref[...] * lax.rsqrt(var1 + BN_EPS)
    h = h * scale1 + (b1_ref[...] - mean1 * scale1)

    # ---- GLU: first half * sigmoid(second half) (sigmoid's exp hits the EUP)
    g = h[:, :C] * jax.nn.sigmoid(h[:, C:])

    # ---- re-pad the intermediate into the SAME scratch (border still zero) --
    pad_ref[:, 1:H + 1, 1:W + 1, :] = g.reshape(N, H, W, C)

    # ---- conv3x3 (C -> C): matmul in transposed orientation so the result
    #      is channels-major (C, N*H*W) -> lane-dense downstream math + store
    patches2 = _im2col(pad_ref, N, H, W, C).astype(mxu_dtype)
    out2 = lax.dot_general(w2t_ref[...], patches2,
                           dimension_numbers=(((1,), (1,)), ((), ())),
                           preferred_element_type=jnp.float32)   # (C, N*H*W)

    # ---- BatchNorm2d(C) ----
    mean2, var2 = _bn_stats(out2, 1, M)
    scale2 = g2_ref[...] * lax.rsqrt(var2 + BN_EPS)
    out2 = out2 * scale2 + (b2_ref[...] - mean2 * scale2)

    # ---- residual add + lane-dense NCHW store (last dim = H*W) ----
    for n in range(N):
        out_ref[n, :, :] = out2[:, n * HW:(n + 1) * HW] + x_ncs_ref[n, :, :]


def resblock_forward(x_nchw, w1_oihw, gamma1, beta1, w2_oihw, gamma2, beta2,
                     *, mxu_dtype=jnp.bfloat16):
    N, C, H, W = x_nchw.shape
    x_nchw = x_nchw.astype(jnp.float32)
    x_nhwc = jnp.transpose(x_nchw, (0, 2, 3, 1))        # channels-minor conv layout
    x_ncs = x_nchw.reshape(N, C, H * W)                 # free reshape: residual/output layout

    # OIHW -> (9*Cin, Cout), row order (ky, kx, ci) to match _im2col columns.
    w1 = jnp.transpose(w1_oihw, (2, 3, 1, 0)).reshape(9 * C, 2 * C).astype(mxu_dtype)
    # OIHW -> (Cout, 9*Cin), column order (ky, kx, ci); used in transposed matmul.
    w2t = jnp.transpose(w2_oihw, (0, 2, 3, 1)).reshape(C, 9 * C).astype(mxu_dtype)
    g1 = gamma1.reshape(1, 2 * C).astype(jnp.float32)
    b1 = beta1.reshape(1, 2 * C).astype(jnp.float32)
    g2 = gamma2.reshape(C, 1).astype(jnp.float32)
    b2 = beta2.reshape(C, 1).astype(jnp.float32)

    # TODO(synk): for production sizes (e.g. N=8, H=W=256, C=64) add a spatial
    # grid with 1-row halo BlockSpecs and two-pass BatchNorm statistics
    # (stats pass + normalize pass with an "arbitrary" reduction axis) so tiles
    # fit v7x's 64 MiB VMEM and independent tiles shard across both TensorCores;
    # the whole-array version below is sized for small inputs.
    kernel = functools.partial(resblock_kernel, mxu_dtype=mxu_dtype)
    out = pl.pallas_call(
        kernel,
        out_shape=jax.ShapeDtypeStruct((N, C, H * W), jnp.float32),
        in_specs=[pl.BlockSpec(memory_space=pltpu.MemorySpace.VMEM)] * 8,
        out_specs=pl.BlockSpec(memory_space=pltpu.MemorySpace.VMEM),
        scratch_shapes=[pltpu.VMEM((N, H + 2, W + 2, C), jnp.float32)],
        compiler_params=pltpu.CompilerParams(vmem_limit_bytes=32 * 1024 * 1024),
    )(x_nhwc, x_ncs, w1, g1, b1, w2t, g2, b2)

    # Output already comes out NCHW (lane-dense (N, C, H*W) slab): just reshape.
    return out.reshape(N, C, H, W)


def resblock_reference(x_nchw, w1_oihw, gamma1, beta1, w2_oihw, gamma2, beta2):
    """Pure-JAX f32 reference for numerical validation."""
    x = jnp.transpose(x_nchw, (0, 2, 3, 1)).astype(jnp.float32)
    w1 = jnp.transpose(w1_oihw, (2, 3, 1, 0)).astype(jnp.float32)
    w2 = jnp.transpose(w2_oihw, (2, 3, 1, 0)).astype(jnp.float32)

    def conv(z, w):
        return lax.conv_general_dilated(z, w, (1, 1), 'SAME',
                                        dimension_numbers=('NHWC', 'HWIO', 'NHWC'))

    def bn(z, gamma, beta):
        mean = jnp.mean(z, axis=(0, 1, 2), keepdims=True)
        var = jnp.mean((z - mean) ** 2, axis=(0, 1, 2), keepdims=True)
        return (z - mean) * lax.rsqrt(var + BN_EPS) * gamma + beta

    C = x.shape[-1]
    h = bn(conv(x, w1), gamma1, beta1)
    g = h[..., :C] * jax.nn.sigmoid(h[..., C:])
    out = bn(conv(g, w2), gamma2, beta2) + x
    return jnp.transpose(out, (0, 3, 1, 2))


if __name__ == "__main__":
    key = jax.random.PRNGKey(0)
    k = jax.random.split(key, 7)
    N, C, H, W = 2, 4, 16, 16          # channel_num = 4

    x = jax.random.normal(k[0], (N, C, H, W), jnp.float32)
    # conv3x3(channel_num, channel_num * 2): weight (2C, C, 3, 3), no bias
    w1 = jax.random.normal(k[1], (2 * C, C, 3, 3), jnp.float32) * 0.1
    gamma1 = 1.0 + 0.1 * jax.random.normal(k[2], (2 * C,), jnp.float32)
    beta1 = 0.1 * jax.random.normal(k[3], (2 * C,), jnp.float32)
    # conv3x3(channel_num, channel_num): weight (C, C, 3, 3), no bias
    w2 = jax.random.normal(k[4], (C, C, 3, 3), jnp.float32) * 0.1
    gamma2 = 1.0 + 0.1 * jax.random.normal(k[5], (C,), jnp.float32)
    beta2 = 0.1 * jax.random.normal(k[6], (C,), jnp.float32)

    ref = resblock_reference(x, w1, gamma1, beta1, w2, gamma2, beta2)

    # f32 MXU operands: tight check against the pure-JAX reference.
    out_f32 = jax.block_until_ready(
        resblock_forward(x, w1, gamma1, beta1, w2, gamma2, beta2,
                         mxu_dtype=jnp.float32))
    assert out_f32.shape == (N, C, H, W)
    np.testing.assert_allclose(np.asarray(out_f32), np.asarray(ref),
                               rtol=1e-3, atol=1e-3)

    # bf16 MXU operands (fast path on v6e/v7x, f32 accumulation): looser
    # tolerance accounts for bf16 operand rounding through two convs + two BNs.
    out_bf16 = jax.block_until_ready(
        resblock_forward(x, w1, gamma1, beta1, w2, gamma2, beta2,
                         mxu_dtype=jnp.bfloat16))
    np.testing.assert_allclose(np.asarray(out_bf16), np.asarray(ref),
                               rtol=3e-2, atol=3e-2)

    print("KERNEL_OK")
</pallas_src>

<mosaic_0001>
module attributes {stable_mosaic.version = 11 : i64} {
  func.func @resblock_kernel(%arg0: memref<2x16x16x4xf32, #tpu.memory_space<vmem>>, %arg1: memref<2x4x256xf32, #tpu.memory_space<vmem>>, %arg2: memref<36x8xf32, #tpu.memory_space<vmem>>, %arg3: memref<1x8xf32, #tpu.memory_space<vmem>>, %arg4: memref<1x8xf32, #tpu.memory_space<vmem>>, %arg5: memref<4x36xf32, #tpu.memory_space<vmem>>, %arg6: memref<4x1xf32, #tpu.memory_space<vmem>>, %arg7: memref<4x1xf32, #tpu.memory_space<vmem>>, %arg8: memref<2x4x256xf32, #tpu.memory_space<vmem>>, %arg9: memref<2x18x18x4xf32, #tpu.memory_space<vmem>>) attributes {dimension_semantics = [], scalar_prefetch = 0 : i64, scratch_operands = 1 : i64, tpu.core_type = #tpu.core_type<tc>} {
    %cst = arith.constant 0.000000e+00 : f32
    %0 = vector.broadcast %cst : f32 to vector<2x1x18x4xf32>
    %c0 = arith.constant 0 : index
    %c0_0 = arith.constant 0 : index
    %c0_1 = arith.constant 0 : index
    %c0_2 = arith.constant 0 : index
    %1 = vector.load %arg9[%c0, %c0_0, %c0_1, %c0_2] : memref<2x18x18x4xf32, #tpu.memory_space<vmem>>, vector<2x1x18x4xf32>
    tpu.vector_store %arg9[%c0, %c0_0, %c0_1, %c0_2], %0 {strides = array<i32>} : memref<2x18x18x4xf32, #tpu.memory_space<vmem>>, vector<2x1x18x4xf32>,
    %cst_3 = arith.constant 0.000000e+00 : f32
    %2 = vector.broadcast %cst_3 : f32 to vector<2x1x18x4xf32>
    %c0_4 = arith.constant 0 : index
    %c17 = arith.constant 17 : index
    %c0_5 = arith.constant 0 : index
    %c0_6 = arith.constant 0 : index
    %3 = vector.load %arg9[%c0_4, %c17, %c0_5, %c0_6] : memref<2x18x18x4xf32, #tpu.memory_space<vmem>>, vector<2x1x18x4xf32>
    tpu.vector_store %arg9[%c0_4, %c17, %c0_5, %c0_6], %2 {strides = array<i32>} : memref<2x18x18x4xf32, #tpu.memory_space<vmem>>, vector<2x1x18x4xf32>,
    %cst_7 = arith.constant 0.000000e+00 : f32
    %4 = vector.broadcast %cst_7 : f32 to vector<2x18x1x4xf32>
    %c0_8 = arith.constant 0 : index
    %c0_9 = arith.constant 0 : index
    %c0_10 = arith.constant 0 : index
    %c0_11 = arith.constant 0 : index
    %5 = vector.load %arg9[%c0_8, %c0_9, %c0_10, %c0_11] : memref<2x18x18x4xf32, #tpu.memory_space<vmem>>, vector<2x18x1x4xf32>
    tpu.vector_store %arg9[%c0_8, %c0_9, %c0_10, %c0_11], %4 {strides = array<i32>} : memref<2x18x18x4xf32, #tpu.memory_space<vmem>>, vector<2x18x1x4xf32>,
    %cst_12 = arith.constant 0.000000e+00 : f32
    %6 = vector.broadcast %cst_12 : f32 to vector<2x18x1x4xf32>
    %c0_13 = arith.constant 0 : index
    %c0_14 = arith.constant 0 : index
    %c17_15 = arith.constant 17 : index
    %c0_16 = arith.constant 0 : index
    %7 = vector.load %arg9[%c0_13, %c0_14, %c17_15, %c0_16] : memref<2x18x18x4xf32, #tpu.memory_space<vmem>>, vector<2x18x1x4xf32>
    tpu.vector_store %arg9[%c0_13, %c0_14, %c17_15, %c0_16], %6 {strides = array<i32>} : memref<2x18x18x4xf32, #tpu.memory_space<vmem>>, vector<2x18x1x4xf32>,
    %c0_17 = arith.constant 0 : index
    %c0_18 = arith.constant 0 : index
    %c0_19 = arith.constant 0 : index
    %c0_20 = arith.constant 0 : index
    %8 = vector.load %arg0[%c0_17, %c0_18, %c0_19, %c0_20] : memref<2x16x16x4xf32, #tpu.memory_space<vmem>>, vector<2x16x16x4xf32>
    %c0_21 = arith.constant 0 : index
    %c1 = arith.constant 1 : index
    %c1_22 = arith.constant 1 : index
    %c0_23 = arith.constant 0 : index
    %9 = vector.load %arg9[%c0_21, %c1, %c1_22, %c0_23] : memref<2x18x18x4xf32, #tpu.memory_space<vmem>>, vector<2x16x16x4xf32>
    tpu.vector_store %arg9[%c0_21, %c1, %c1_22, %c0_23], %8 {strides = array<i32>} : memref<2x18x18x4xf32, #tpu.memory_space<vmem>>, vector<2x16x16x4xf32>,
    %c0_24 = arith.constant 0 : index
    %c0_25 = arith.constant 0 : index
    %c0_26 = arith.constant 0 : index
    %c0_27 = arith.constant 0 : index
    %10 = vector.load %arg9[%c0_24, %c0_25, %c0_26, %c0_27] : memref<2x18x18x4xf32, #tpu.memory_space<vmem>>, vector<2x16x16x4xf32>
    %11 = vector.shape_cast %10 : vector<2x16x16x4xf32> to vector<512x4xf32>
    %c0_28 = arith.constant 0 : index
    %c0_29 = arith.constant 0 : index
    %c1_30 = arith.constant 1 : index
    %c0_31 = arith.constant 0 : index
    %12 = vector.load %arg9[%c0_28, %c0_29, %c1_30, %c0_31] : memref<2x18x18x4xf32, #tpu.memory_space<vmem>>, vector<2x16x16x4xf32>
    %13 = vector.shape_cast %12 : vector<2x16x16x4xf32> to vector<512x4xf32>
    %c0_32 = arith.constant 0 : index
    %c0_33 = arith.constant 0 : index
    %c2 = arith.constant 2 : index
    %c0_34 = arith.constant 0 : index
    %14 = vector.load %arg9[%c0_32, %c0_33, %c2, %c0_34] : memref<2x18x18x4xf32, #tpu.memory_space<vmem>>, vector<2x16x16x4xf32>
    %15 = vector.shape_cast %14 : vector<2x16x16x4xf32> to vector<512x4xf32>
    %c0_35 = arith.constant 0 : index
    %c1_36 = arith.constant 1 : index
    %c0_37 = arith.constant 0 : index
    %c0_38 = arith.constant 0 : index
    %16 = vector.load %arg9[%c0_35, %c1_36, %c0_37, %c0_38] : memref<2x18x18x4xf32, #tpu.memory_space<vmem>>, vector<2x16x16x4xf32>
    %17 = vector.shape_cast %16 : vector<2x16x16x4xf32> to vector<512x4xf32>
    %c0_39 = arith.constant 0 : index
    %c1_40 = arith.constant 1 : index
    %c1_41 = arith.constant 1 : index
    %c0_42 = arith.constant 0 : index
    %18 = vector.load %arg9[%c0_39, %c1_40, %c1_41, %c0_42] : memref<2x18x18x4xf32, #tpu.memory_space<vmem>>, vector<2x16x16x4xf32>
    %19 = vector.shape_cast %18 : vector<2x16x16x4xf32> to vector<512x4xf32>
    %c0_43 = arith.constant 0 : index
    %c1_44 = arith.constant 1 : index
    %c2_45 = arith.constant 2 : index
    %c0_46 = arith.constant 0 : index
    %20 = vector.load %arg9[%c0_43, %c1_44, %c2_45, %c0_46] : memref<2x18x18x4xf32, #tpu.memory_space<vmem>>, vector<2x16x16x4xf32>
    %21 = vector.shape_cast %20 : vector<2x16x16x4xf32> to vector<512x4xf32>
    %c0_47 = arith.constant 0 : index
    %c2_48 = arith.constant 2 : index
    %c0_49 = arith.constant 0 : index
    %c0_50 = arith.constant 0 : index
    %22 = vector.load %arg9[%c0_47, %c2_48, %c0_49, %c0_50] : memref<2x18x18x4xf32, #tpu.memory_space<vmem>>, vector<2x16x16x4xf32>
    %23 = vector.shape_cast %22 : vector<2x16x16x4xf32> to vector<512x4xf32>
    %c0_51 = arith.constant 0 : index
    %c2_52 = arith.constant 2 : index
    %c1_53 = arith.constant 1 : index
    %c0_54 = arith.constant 0 : index
    %24 = vector.load %arg9[%c0_51, %c2_52, %c1_53, %c0_54] : memref<2x18x18x4xf32, #tpu.memory_space<vmem>>, vector<2x16x16x4xf32>
    %25 = vector.shape_cast %24 : vector<2x16x16x4xf32> to vector<512x4xf32>
    %c0_55 = arith.constant 0 : index
    %c2_56 = arith.constant 2 : index
    %c2_57 = arith.constant 2 : index
    %c0_58 = arith.constant 0 : index
    %26 = vector.load %arg9[%c0_55, %c2_56, %c2_57, %c0_58] : memref<2x18x18x4xf32, #tpu.memory_space<vmem>>, vector<2x16x16x4xf32>
    %27 = vector.shape_cast %26 : vector<2x16x16x4xf32> to vector<512x4xf32>
    %28 = tpu.concatenate %11, %13, %15, %17, %19, %21, %23, %25, %27 in 1 : vector<512x4xf32>, vector<512x4xf32>, vector<512x4xf32>, vector<512x4xf32>, vector<512x4xf32>, vector<512x4xf32>, vector<512x4xf32>, vector<512x4xf32>, vector<512x4xf32> -> vector<512x36xf32>
    %c0_59 = arith.constant 0 : index
    %c0_60 = arith.constant 0 : index
    %29 = vector.load %arg2[%c0_59, %c0_60] : memref<36x8xf32, #tpu.memory_space<vmem>>, vector<36x8xf32>
    %cst_61 = arith.constant dense<0.000000e+00> : vector<512x8xf32>
    %30 = tpu.matmul %28, %29, %cst_61 {dimension_numbers = #tpu.dot_dimension_numbers<[1], [0], [0], [1], [0, 0, 1, 1], [], []>} : vector<512x36xf32>, vector<36x8xf32>, vector<512x8xf32> -> vector<512x8xf32>
    %cst_62 = arith.constant dense<0.000000e+00> : vector<8xf32>
    %31 = vector.multi_reduction <add>, %30, %cst_62 [0] : vector<512x8xf32> to vector<8xf32>
    %32 = vector.shape_cast %31 : vector<8xf32> to vector<1x8xf32>
    %33 = arith.mulf %30, %30 : vector<512x8xf32>
    %cst_63 = arith.constant dense<0.000000e+00> : vector<8xf32>
    %34 = vector.multi_reduction <add>, %33, %cst_63 [0] : vector<512x8xf32> to vector<8xf32>
    %35 = vector.shape_cast %34 : vector<8xf32> to vector<1x8xf32>
    %cst_64 = arith.constant 0.001953125 : f32
    %36 = vector.broadcast %cst_64 : f32 to vector<1x8xf32>
    %37 = arith.mulf %32, %36 : vector<1x8xf32>
    %cst_65 = arith.constant 0.001953125 : f32
    %38 = vector.broadcast %cst_65 : f32 to vector<1x8xf32>
    %39 = arith.mulf %35, %38 : vector<1x8xf32>
    %40 = arith.mulf %37, %37 : vector<1x8xf32>
    %41 = arith.subf %39, %40 : vector<1x8xf32>
    %c0_66 = arith.constant 0 : index
    %c0_67 = arith.constant 0 : index
    %42 = vector.load %arg3[%c0_66, %c0_67] : memref<1x8xf32, #tpu.memory_space<vmem>>, vector<1x8xf32>
    %cst_68 = arith.constant 9.99999974E-6 : f32
    %43 = vector.broadcast %cst_68 : f32 to vector<1x8xf32>
    %44 = arith.addf %41, %43 : vector<1x8xf32>
    %45 = math.rsqrt %44 : vector<1x8xf32>
    %46 = arith.mulf %42, %45 : vector<1x8xf32>
    %47 = vector.broadcast %46 : vector<1x8xf32> to vector<512x8xf32>
    %48 = arith.mulf %30, %47 : vector<512x8xf32>
    %c0_69 = arith.constant 0 : index
    %c0_70 = arith.constant 0 : index
    %49 = vector.load %arg4[%c0_69, %c0_70] : memref<1x8xf32, #tpu.memory_space<vmem>>, vector<1x8xf32>
    %50 = arith.mulf %37, %46 : vector<1x8xf32>
    %51 = arith.subf %49, %50 : vector<1x8xf32>
    %52 = vector.broadcast %51 : vector<1x8xf32> to vector<512x8xf32>
    %53 = arith.addf %48, %52 : vector<512x8xf32>
    %54 = vector.extract_strided_slice %53 {offsets = [0, 0], sizes = [512, 4], strides = [1, 1]} : vector<512x8xf32> to vector<512x4xf32>
    %55 = vector.extract_strided_slice %53 {offsets = [0, 4], sizes = [512, 4], strides = [1, 1]} : vector<512x8xf32> to vector<512x4xf32>
    %56 = arith.negf %55 : vector<512x4xf32>
    %57 = math.exp %56 : vector<512x4xf32>
    %cst_71 = arith.constant 1.000000e+00 : f32
    %58 = vector.broadcast %cst_71 : f32 to vector<512x4xf32>
    %59 = arith.addf %58, %57 : vector<512x4xf32>
    %60 = arith.divf %58, %59 : vector<512x4xf32>
    %61 = arith.mulf %54, %60 : vector<512x4xf32>
    %62 = vector.shape_cast %61 : vector<512x4xf32> to vector<2x16x16x4xf32>
    %c0_72 = arith.constant 0 : index
    %c1_73 = arith.constant 1 : index
    %c1_74 = arith.constant 1 : index
    %c0_75 = arith.constant 0 : index
    %63 = vector.load %arg9[%c0_72, %c1_73, %c1_74, %c0_75] : memref<2x18x18x4xf32, #tpu.memory_space<vmem>>, vector<2x16x16x4xf32>
    tpu.vector_store %arg9[%c0_72, %c1_73, %c1_74, %c0_75], %62 {strides = array<i32>} : memref<2x18x18x4xf32, #tpu.memory_space<vmem>>, vector<2x16x16x4xf32>,
    %c0_76 = arith.constant 0 : index
    %c0_77 = arith.constant 0 : index
    %c0_78 = arith.constant 0 : index
    %c0_79 = arith.constant 0 : index
    %64 = vector.load %arg9[%c0_76, %c0_77, %c0_78, %c0_79] : memref<2x18x18x4xf32, #tpu.memory_space<vmem>>, vector<2x16x16x4xf32>
    %65 = vector.shape_cast %64 : vector<2x16x16x4xf32> to vector<512x4xf32>
    %c0_80 = arith.constant 0 : index
    %c0_81 = arith.constant 0 : index
    %c1_82 = arith.constant 1 : index
    %c0_83 = arith.constant 0 : index
    %66 = vector.load %arg9[%c0_80, %c0_81, %c1_82, %c0_83] : memref<2x18x18x4xf32, #tpu.memory_space<vmem>>, vector<2x16x16x4xf32>
    %67 = vector.shape_cast %66 : vector<2x16x16x4xf32> to vector<512x4xf32>
    %c0_84 = arith.constant 0 : index
    %c0_85 = arith.constant 0 : index
    %c2_86 = arith.constant 2 : index
    %c0_87 = arith.constant 0 : index
    %68 = vector.load %arg9[%c0_84, %c0_85, %c2_86, %c0_87] : memref<2x18x18x4xf32, #tpu.memory_space<vmem>>, vector<2x16x16x4xf32>
    %69 = vector.shape_cast %68 : vector<2x16x16x4xf32> to vector<512x4xf32>
    %c0_88 = arith.constant 0 : index
    %c1_89 = arith.constant 1 : index
    %c0_90 = arith.constant 0 : index
    %c0_91 = arith.constant 0 : index
    %70 = vector.load %arg9[%c0_88, %c1_89, %c0_90, %c0_91] : memref<2x18x18x4xf32, #tpu.memory_space<vmem>>, vector<2x16x16x4xf32>
    %71 = vector.shape_cast %70 : vector<2x16x16x4xf32> to vector<512x4xf32>
    %c0_92 = arith.constant 0 : index
    %c1_93 = arith.constant 1 : index
    %c1_94 = arith.constant 1 : index
    %c0_95 = arith.constant 0 : index
    %72 = vector.load %arg9[%c0_92, %c1_93, %c1_94, %c0_95] : memref<2x18x18x4xf32, #tpu.memory_space<vmem>>, vector<2x16x16x4xf32>
    %73 = vector.shape_cast %72 : vector<2x16x16x4xf32> to vector<512x4xf32>
    %c0_96 = arith.constant 0 : index
    %c1_97 = arith.constant 1 : index
    %c2_98 = arith.constant 2 : index
    %c0_99 = arith.constant 0 : index
    %74 = vector.load %arg9[%c0_96, %c1_97, %c2_98, %c0_99] : memref<2x18x18x4xf32, #tpu.memory_space<vmem>>, vector<2x16x16x4xf32>
    %75 = vector.shape_cast %74 : vector<2x16x16x4xf32> to vector<512x4xf32>
    %c0_100 = arith.constant 0 : index
    %c2_101 = arith.constant 2 : index
    %c0_102 = arith.constant 0 : index
    %c0_103 = arith.constant 0 : index
    %76 = vector.load %arg9[%c0_100, %c2_101, %c0_102, %c0_103] : memref<2x18x18x4xf32, #tpu.memory_space<vmem>>, vector<2x16x16x4xf32>
    %77 = vector.shape_cast %76 : vector<2x16x16x4xf32> to vector<512x4xf32>
    %c0_104 = arith.constant 0 : index
    %c2_105 = arith.constant 2 : index
    %c1_106 = arith.constant 1 : index
    %c0_107 = arith.constant 0 : index
    %78 = vector.load %arg9[%c0_104, %c2_105, %c1_106, %c0_107] : memref<2x18x18x4xf32, #tpu.memory_space<vmem>>, vector<2x16x16x4xf32>
    %79 = vector.shape_cast %78 : vector<2x16x16x4xf32> to vector<512x4xf32>
    %c0_108 = arith.constant 0 : index
    %c2_109 = arith.constant 2 : index
    %c2_110 = arith.constant 2 : index
    %c0_111 = arith.constant 0 : index
    %80 = vector.load %arg9[%c0_108, %c2_109, %c2_110, %c0_111] : memref<2x18x18x4xf32, #tpu.memory_space<vmem>>, vector<2x16x16x4xf32>
    %81 = vector.shape_cast %80 : vector<2x16x16x4xf32> to vector<512x4xf32>
    %82 = tpu.concatenate %65, %67, %69, %71, %73, %75, %77, %79, %81 in 1 : vector<512x4xf32>, vector<512x4xf32>, vector<512x4xf32>, vector<512x4xf32>, vector<512x4xf32>, vector<512x4xf32>, vector<512x4xf32>, vector<512x4xf32>, vector<512x4xf32> -> vector<512x36xf32>
    %c0_112 = arith.constant 0 : index
    %c0_113 = arith.constant 0 : index
    %83 = vector.load %arg5[%c0_112, %c0_113] : memref<4x36xf32, #tpu.memory_space<vmem>>, vector<4x36xf32>
    %cst_114 = arith.constant dense<0.000000e+00> : vector<4x512xf32>
    %84 = tpu.matmul %83, %82, %cst_114 {dimension_numbers = #tpu.dot_dimension_numbers<[1], [1], [0], [0], [0, 0, 1, 0], [], []>} : vector<4x36xf32>, vector<512x36xf32>, vector<4x512xf32> -> vector<4x512xf32>
    %cst_115 = arith.constant dense<0.000000e+00> : vector<4xf32>
    %85 = vector.multi_reduction <add>, %84, %cst_115 [1] : vector<4x512xf32> to vector<4xf32>
    %86 = vector.shape_cast %85 : vector<4xf32> to vector<4x1xf32>
    %87 = arith.mulf %84, %84 : vector<4x512xf32>
    %cst_116 = arith.constant dense<0.000000e+00> : vector<4xf32>
    %88 = vector.multi_reduction <add>, %87, %cst_116 [1] : vector<4x512xf32> to vector<4xf32>
    %89 = vector.shape_cast %88 : vector<4xf32> to vector<4x1xf32>
    %cst_117 = arith.constant 0.001953125 : f32
    %90 = vector.broadcast %cst_117 : f32 to vector<4x1xf32>
    %91 = arith.mulf %86, %90 : vector<4x1xf32>
    %cst_118 = arith.constant 0.001953125 : f32
    %92 = vector.broadcast %cst_118 : f32 to vector<4x1xf32>
    %93 = arith.mulf %89, %92 : vector<4x1xf32>
    %94 = arith.mulf %91, %91 : vector<4x1xf32>
    %95 = arith.subf %93, %94 : vector<4x1xf32>
    %c0_119 = arith.constant 0 : index
    %c0_120 = arith.constant 0 : index
    %96 = vector.load %arg6[%c0_119, %c0_120] : memref<4x1xf32, #tpu.memory_space<vmem>>, vector<4x1xf32>
    %cst_121 = arith.constant 9.99999974E-6 : f32
    %97 = vector.broadcast %cst_121 : f32 to vector<4x1xf32>
    %98 = arith.addf %95, %97 : vector<4x1xf32>
    %99 = math.rsqrt %98 : vector<4x1xf32>
    %100 = arith.mulf %96, %99 : vector<4x1xf32>
    %101 = vector.broadcast %100 : vector<4x1xf32> to vector<4x512xf32>
    %102 = arith.mulf %84, %101 : vector<4x512xf32>
    %c0_122 = arith.constant 0 : index
    %c0_123 = arith.constant 0 : index
    %103 = vector.load %arg7[%c0_122, %c0_123] : memref<4x1xf32, #tpu.memory_space<vmem>>, vector<4x1xf32>
    %104 = arith.mulf %91, %100 : vector<4x1xf32>
    %105 = arith.subf %103, %104 : vector<4x1xf32>
    %106 = vector.broadcast %105 : vector<4x1xf32> to vector<4x512xf32>
    %107 = arith.addf %102, %106 : vector<4x512xf32>
    %108 = vector.extract_strided_slice %107 {offsets = [0, 0], sizes = [4, 256], strides = [1, 1]} : vector<4x512xf32> to vector<4x256xf32>
    %c0_124 = arith.constant 0 : index
    %c0_125 = arith.constant 0 : index
    %c0_126 = arith.constant 0 : index
    %109 = vector.load %arg1[%c0_124, %c0_125, %c0_126] : memref<2x4x256xf32, #tpu.memory_space<vmem>>, vector<1x4x256xf32>
    %110 = vector.shape_cast %109 : vector<1x4x256xf32> to vector<4x256xf32>
    %111 = arith.addf %108, %110 : vector<4x256xf32>
    %c0_127 = arith.constant 0 : index
    %c0_128 = arith.constant 0 : index
    %c0_129 = arith.constant 0 : index
    %112 = vector.load %arg8[%c0_127, %c0_128, %c0_129] : memref<2x4x256xf32, #tpu.memory_space<vmem>>, vector<1x4x256xf32>
    %113 = vector.shape_cast %112 : vector<1x4x256xf32> to vector<4x256xf32>
    %114 = vector.shape_cast %111 : vector<4x256xf32> to vector<1x4x256xf32>
    tpu.vector_store %arg8[%c0_127, %c0_128, %c0_129], %114 {strides = array<i32>} : memref<2x4x256xf32, #tpu.memory_space<vmem>>, vector<1x4x256xf32>,
    %115 = vector.extract_strided_slice %107 {offsets = [0, 256], sizes = [4, 256], strides = [1, 1]} : vector<4x512xf32> to vector<4x256xf32>
    %c1_130 = arith.constant 1 : index
    %c0_131 = arith.constant 0 : index
    %c0_132 = arith.constant 0 : index
    %116 = vector.load %arg1[%c1_130, %c0_131, %c0_132] : memref<2x4x256xf32, #tpu.memory_space<vmem>>, vector<1x4x256xf32>
    %117 = vector.shape_cast %116 : vector<1x4x256xf32> to vector<4x256xf32>
    %118 = arith.addf %115, %117 : vector<4x256xf32>
    %c1_133 = arith.constant 1 : index
    %c0_134 = arith.constant 0 : index
    %c0_135 = arith.constant 0 : index
    %119 = vector.load %arg8[%c1_133, %c0_134, %c0_135] : memref<2x4x256xf32, #tpu.memory_space<vmem>>, vector<1x4x256xf32>
    %120 = vector.shape_cast %119 : vector<1x4x256xf32> to vector<4x256xf32>
    %121 = vector.shape_cast %118 : vector<4x256xf32> to vector<1x4x256xf32>
    tpu.vector_store %arg8[%c1_133, %c0_134, %c0_135], %121 {strides = array<i32>} : memref<2x4x256xf32, #tpu.memory_space<vmem>>, vector<1x4x256xf32>,
    return
  }
}

</mosaic_0001>

<llo_original>
// kernel: tpu_custom_call.1
$region0: #{tpu_custom_call.1}
  #allocation0 [shape = 'u32[]', space=smem, size = 0x4, offset = 0x4, fixed_abs, tag = 'smem constant byte address 0x4 - core index']
  #allocation1 [shape = 'u32[144,128]{1,0:T(1,128)}', space=vmem, size = 0x12000, scoped, tag = 'internal scratch']
  #allocation2 [shape = 'f32[2,18,18,4]{3,2,1,0:T(8,128)}', space=vmem, size = 0x6c000, scoped, tag = 'scratch operand']
  %s0 = inlined_call_operand.vmem [shape: f32[2,16,16,4], index: 0, kind: input, shape index: {}]
  %s1 = inlined_call_operand.vmem [shape: f32[2,4,256], index: 1, kind: input, shape index: {}]
  %s2 = inlined_call_operand.vmem [shape: f32[36,8], index: 2, kind: input, shape index: {}]
  %s3 = inlined_call_operand.vmem [shape: f32[1,8], index: 3, kind: input, shape index: {}]
  %s4 = inlined_call_operand.vmem [shape: f32[1,8], index: 4, kind: input, shape index: {}]
  %s5 = inlined_call_operand.vmem [shape: f32[4,36], index: 5, kind: input, shape index: {}]
  %s6 = inlined_call_operand.vmem [shape: f32[4,1], index: 6, kind: input, shape index: {}]
  %s7 = inlined_call_operand.vmem [shape: f32[4,1], index: 7, kind: input, shape index: {}]
  %s8 = inlined_call_operand.hbm [shape: f32[2,4,256], index: 8, kind: output, shape index: {}]
  %s9 = sld [smem:[#allocation0]]
  $region42: #{tpu_custom_call.1} parent=0
    _
  %s11 = ssub.s32 1, %s9
  %s12 = scalar_select 0, %s11, %s9
  $region1: #{tpu_custom_call.1} parent=0
    #allocation3 [shape = 'u8[8192]{0}', space=vmem, size = 0x2000, scoped, tag = 'output window, operand 0, single buffered']
    #allocation4 [shape = 's32[1]{0}', space=sflag, size = 0x4, scoped, tag = 'scoped memory for tpu_custom_call.1']
    %13 = vsyncpa [#allocation4], 0
    // Predicated region
    $region2: #{tpu_custom_call.1} parent=1 // pred_check
      _
    $region3: #{tpu_custom_call.1} parent=1 // pred_check_branch
      %15 = sbr.rel (0) target = $region5
    $region4: #{tpu_custom_call.1} parent=1 // pred_region
      _
    $region5: #{tpu_custom_call.1} parent=1 // pred_fallthru
      _
    // Predicated region
    $region6: #{tpu_custom_call.1} parent=1 // pred_check
      _
    $region7: #{tpu_custom_call.1} parent=1 // pred_check_branch
      %17 = sbr.rel (0) target = $region9
    $region8: #{tpu_custom_call.1} parent=1 // pred_region
      _
    $region9: #{tpu_custom_call.1} parent=1 // pred_fallthru
      _
    // Predicated region
    $region10: #{tpu_custom_call.1} parent=1 // pred_check
      _
    $region11: #{tpu_custom_call.1} parent=1 // pred_check_branch
      %19 = sbr.rel (0) target = $region13
    $region12: #{tpu_custom_call.1} parent=1 // pred_region
      _
    $region13: #{tpu_custom_call.1} parent=1 // pred_fallthru
      _
    // Predicated region
    $region14: #{tpu_custom_call.1} parent=1 // pred_check
      _
    $region15: #{tpu_custom_call.1} parent=1 // pred_check_branch
      %21 = sbr.rel (0) target = $region17
    $region16: #{tpu_custom_call.1} parent=1 // pred_region
      _
    $region17: #{tpu_custom_call.1} parent=1 // pred_fallthru
      _
    // Predicated region
    $region18: #{tpu_custom_call.1} parent=1 // pred_check
      _
    $region19: #{tpu_custom_call.1} parent=1 // pred_check_branch
      %23 = sbr.rel (0) target = $region21
    $region20: #{tpu_custom_call.1} parent=1 // pred_region
      _
    $region21: #{tpu_custom_call.1} parent=1 // pred_fallthru
      _
    // Predicated region
    $region22: #{tpu_custom_call.1} parent=1 // pred_check
      _
    $region23: #{tpu_custom_call.1} parent=1 // pred_check_branch
      %25 = sbr.rel (0) target = $region25
    $region24: #{tpu_custom_call.1} parent=1 // pred_region
      _
    $region25: #{tpu_custom_call.1} parent=1 // pred_fallthru
      _
    // Predicated region
    $region26: #{tpu_custom_call.1} parent=1 // pred_check
      _
    $region27: #{tpu_custom_call.1} parent=1 // pred_check_branch
      %27 = sbr.rel (0) target = $region29
    $region28: #{tpu_custom_call.1} parent=1 // pred_region
      _
    $region29: #{tpu_custom_call.1} parent=1 // pred_fallthru
      _
    // Predicated region
    $region30: #{tpu_custom_call.1} parent=1 // pred_check
      _
    $region31: #{tpu_custom_call.1} parent=1 // pred_check_branch
      %29 = sbr.rel (0) target = $region33
    $region32: #{tpu_custom_call.1} parent=1 // pred_region
      _
    $region33: #{tpu_custom_call.1} parent=1 // pred_fallthru
      _
    %vm30 = vcmask 31744
    %31 = vst.msk [vmem:[#allocation2] sm:$0xff] %vm30, 0.0
    %32 = vst.msk [vmem:[#allocation2 + $0x8] sm:$0xff] %vm30, 0.0
    %vm33 = vcmask 25600
    %34 = vst.msk [vmem:[#allocation2 + $0x10] sm:$0x3] %vm33, 0.0
    %35 = vst.msk [vmem:[#allocation2 + $0x1b0] sm:$0xff] %vm30, 0.0
    %36 = vst.msk [vmem:[#allocation2 + $0x1b8] sm:$0xff] %vm30, 0.0
    %37 = vst.msk [vmem:[#allocation2 + $0x1c0] sm:$0x3] %vm33, 0.0
    %s38 = scalar_lea.vmem [#allocation2], 408
    %39 = vst.msk [vmem:[%s38] sm:$0xff] %vm30, 0.0
    %40 = vst.msk [vmem:[%s38 + $0x8] sm:$0xff] %vm30, 0.0
    %41 = vst.msk [vmem:[%s38 + $0x10] sm:$0x3] %vm33, 0.0
    %42 = vst.msk [vmem:[%s38 + $0x1b0] sm:$0xff] %vm30, 0.0
    %43 = vst.msk [vmem:[%s38 + $0x1b8] sm:$0xff] %vm30, 0.0
    %44 = vst.msk [vmem:[%s38 + $0x1c0] sm:$0x3] %vm33, 0.0
    %vm45 = vcmask 24576
    %46 = vst.msk [vmem:[#allocation2] sm:$0x1] %vm45, 0.0
    %47 = vst.msk [vmem:[#allocation2 + $0x18] sm:$0x1] %vm45, 0.0
    %48 = vst.msk [vmem:[#allocation2 + $0x30] sm:$0x1] %vm45, 0.0
    %49 = vst.msk [vmem:[#allocation2 + $0x48] sm:$0x1] %vm45, 0.0
    %50 = vst.msk [vmem:[#allocation2 + $0x60] sm:$0x1] %vm45, 0.0
    %51 = vst.msk [vmem:[#allocation2 + $0x78] sm:$0x1] %vm45, 0.0
    %52 = vst.msk [vmem:[#allocation2 + $0x90] sm:$0x1] %vm45, 0.0
    %53 = vst.msk [vmem:[#allocation2 + $0xa8] sm:$0x1] %vm45, 0.0
    %54 = vst.msk [vmem:[#allocation2 + $0xc0] sm:$0x1] %vm45, 0.0
    %55 = vst.msk [vmem:[#allocation2 + $0xd8] sm:$0x1] %vm45, 0.0
    %56 = vst.msk [vmem:[#allocation2 + $0xf0] sm:$0x1] %vm45, 0.0
    %57 = vst.msk [vmem:[#allocation2 + $0x108] sm:$0x1] %vm45, 0.0
    %58 = vst.msk [vmem:[#allocation2 + $0x120] sm:$0x1] %vm45, 0.0
    %59 = vst.msk [vmem:[#allocation2 + $0x138] sm:$0x1] %vm45, 0.0
    %60 = vst.msk [vmem:[#allocation2 + $0x150] sm:$0x1] %vm45, 0.0
    %61 = vst.msk [vmem:[#allocation2 + $0x168] sm:$0x1] %vm45, 0.0
    %62 = vst.msk [vmem:[#allocation2 + $0x180] sm:$0x1] %vm45, 0.0
    %63 = vst.msk [vmem:[#allocation2 + $0x198] sm:$0x1] %vm45, 0.0
    %64 = vst.msk [vmem:[#allocation2 + $0x1b0] sm:$0x1] %vm45, 0.0
    %65 = vst.msk [vmem:[#allocation2 + $0x1c8] sm:$0x1] %vm45, 0.0
    %66 = vst.msk [vmem:[#allocation2 + $0x1e0] sm:$0x1] %vm45, 0.0
    %67 = vst.msk [vmem:[#allocation2 + $0x1f8] sm:$0x1] %vm45, 0.0
    %68 = vst.msk [vmem:[#allocation2 + $0x210] sm:$0x1] %vm45, 0.0
    %69 = vst.msk [vmem:[#allocation2 + $0x228] sm:$0x1] %vm45, 0.0
    %70 = vst.msk [vmem:[#allocation2 + $0x240] sm:$0x1] %vm45, 0.0
    %71 = vst.msk [vmem:[#allocation2 + $0x258] sm:$0x1] %vm45, 0.0
    %72 = vst.msk [vmem:[#allocation2 + $0x270] sm:$0x1] %vm45, 0.0
    %73 = vst.msk [vmem:[#allocation2 + $0x288] sm:$0x1] %vm45, 0.0
    %74 = vst.msk [vmem:[#allocation2 + $0x2a0] sm:$0x1] %vm45, 0.0
    %75 = vst.msk [vmem:[#allocation2 + $0x2b8] sm:$0x1] %vm45, 0.0
    %76 = vst.msk [vmem:[#allocation2 + $0x2d0] sm:$0x1] %vm45, 0.0
    %77 = vst.msk [vmem:[#allocation2 + $0x2e8] sm:$0x1] %vm45, 0.0
    %78 = vst.msk [vmem:[#allocation2 + $0x300] sm:$0x1] %vm45, 0.0
    %79 = vst.msk [vmem:[#allocation2 + $0x318] sm:$0x1] %vm45, 0.0
    %80 = vst.msk [vmem:[#allocation2 + $0x330] sm:$0x1] %vm45, 0.0
    %81 = vst.msk [vmem:[#allocation2 + $0x348] sm:$0x1] %vm45, 0.0
    %82 = vst.msk [vmem:[#allocation2 + $0x11] sm:$0x1] %vm45, 0.0
    %83 = vst.msk [vmem:[#allocation2 + $0x29] sm:$0x1] %vm45, 0.0
    %84 = vst.msk [vmem:[#allocation2 + $0x41] sm:$0x1] %vm45, 0.0
    %85 = vst.msk [vmem:[#allocation2 + $0x59] sm:$0x1] %vm45, 0.0
    %86 = vst.msk [vmem:[#allocation2 + $0x71] sm:$0x1] %vm45, 0.0
    %87 = vst.msk [vmem:[#allocation2 + $0x89] sm:$0x1] %vm45, 0.0
    %88 = vst.msk [vmem:[#allocation2 + $0xa1] sm:$0x1] %vm45, 0.0
    %89 = vst.msk [vmem:[#allocation2 + $0xb9] sm:$0x1] %vm45, 0.0
    %90 = vst.msk [vmem:[#allocation2 + $0xd1] sm:$0x1] %vm45, 0.0
    %91 = vst.msk [vmem:[#allocation2 + $0xe9] sm:$0x1] %vm45, 0.0
    %92 = vst.msk [vmem:[#allocation2 + $0x101] sm:$0x1] %vm45, 0.0
    %93 = vst.msk [vmem:[#allocation2 + $0x119] sm:$0x1] %vm45, 0.0
    %94 = vst.msk [vmem:[#allocation2 + $0x131] sm:$0x1] %vm45, 0.0
    %95 = vst.msk [vmem:[#allocation2 + $0x149] sm:$0x1] %vm45, 0.0
    %96 = vst.msk [vmem:[#allocation2 + $0x161] sm:$0x1] %vm45, 0.0
    %97 = vst.msk [vmem:[#allocation2 + $0x179] sm:$0x1] %vm45, 0.0
    %98 = vst.msk [vmem:[#allocation2 + $0x191] sm:$0x1] %vm45, 0.0
    %99 = vst.msk [vmem:[#allocation2 + $0x1a9] sm:$0x1] %vm45, 0.0
    %100 = vst.msk [vmem:[#allocation2 + $0x1c1] sm:$0x1] %vm45, 0.0
    %101 = vst.msk [vmem:[#allocation2 + $0x1d9] sm:$0x1] %vm45, 0.0
    %102 = vst.msk [vmem:[#allocation2 + $0x1f1] sm:$0x1] %vm45, 0.0
    %103 = vst.msk [vmem:[#allocation2 + $0x209] sm:$0x1] %vm45, 0.0
    %104 = vst.msk [vmem:[#allocation2 + $0x221] sm:$0x1] %vm45, 0.0
    %105 = vst.msk [vmem:[#allocation2 + $0x239] sm:$0x1] %vm45, 0.0
    %106 = vst.msk [vmem:[#allocation2 + $0x251] sm:$0x1] %vm45, 0.0
    %107 = vst.msk [vmem:[#allocation2 + $0x269] sm:$0x1] %vm45, 0.0
    %108 = vst.msk [vmem:[#allocation2 + $0x281] sm:$0x1] %vm45, 0.0
    %109 = vst.msk [vmem:[#allocation2 + $0x299] sm:$0x1] %vm45, 0.0
    %110 = vst.msk [vmem:[#allocation2 + $0x2b1] sm:$0x1] %vm45, 0.0
    %111 = vst.msk [vmem:[#allocation2 + $0x2c9] sm:$0x1] %vm45, 0.0
    %112 = vst.msk [vmem:[#allocation2 + $0x2e1] sm:$0x1] %vm45, 0.0
    %113 = vst.msk [vmem:[#allocation2 + $0x2f9] sm:$0x1] %vm45, 0.0
    %114 = vst.msk [vmem:[#allocation2 + $0x311] sm:$0x1] %vm45, 0.0
    %115 = vst.msk [vmem:[#allocation2 + $0x329] sm:$0x1] %vm45, 0.0
    %116 = vst.msk [vmem:[#allocation2 + $0x341] sm:$0x1] %vm45, 0.0
    %117 = vst.msk [vmem:[#allocation2 + $0x359] sm:$0x1] %vm45, 0.0
    %v118 = vld [vmem:[%s0] sm:$0xff]
    %v119 = vld [vmem:[%s0 + $0x8] sm:$0xff]
    %v120 = vld [vmem:[%s0 + $0x10] sm:$0xff]
    %v121 = vld [vmem:[%s0 + $0x18] sm:$0xff]
    %v122 = vld [vmem:[%s0 + $0x20] sm:$0xff]
    %v123 = vld [vmem:[%s0 + $0x28] sm:$0xff]
    %v124 = vld [vmem:[%s0 + $0x30] sm:$0xff]
    %v125 = vld [vmem:[%s0 + $0x38] sm:$0xff]
    %v126 = vld [vmem:[%s0 + $0x40] sm:$0xff]
    %v127 = vld [vmem:[%s0 + $0x48] sm:$0xff]
    %v128 = vld [vmem:[%s0 + $0x50] sm:$0xff]
    %v129 = vld [vmem:[%s0 + $0x58] sm:$0xff]
    %v130 = vld [vmem:[%s0 + $0x60] sm:$0xff]
    %v131 = vld [vmem:[%s0 + $0x68] sm:$0xff]
    %v132 = vld [vmem:[%s0 + $0x70] sm:$0xff]
    %v133 = vld [vmem:[%s0 + $0x78] sm:$0xff]
    %v134 = vld [vmem:[%s0 + $0x80] sm:$0xff]
    %v135 = vld [vmem:[%s0 + $0x88] sm:$0xff]
    %v136 = vld [vmem:[%s0 + $0x90] sm:$0xff]
    %v137 = vld [vmem:[%s0 + $0x98] sm:$0xff]
    %v138 = vld [vmem:[%s0 + $0xa0] sm:$0xff]
    %v139 = vld [vmem:[%s0 + $0xa8] sm:$0xff]
    %v140 = vld [vmem:[%s0 + $0xb0] sm:$0xff]
    %v141 = vld [vmem:[%s0 + $0xb8] sm:$0xff]
    %v142 = vld [vmem:[%s0 + $0xc0] sm:$0xff]
    %v143 = vld [vmem:[%s0 + $0xc8] sm:$0xff]
    %v144 = vld [vmem:[%s0 + $0xd0] sm:$0xff]
    %v145 = vld [vmem:[%s0 + $0xd8] sm:$0xff]
    %v146 = vld [vmem:[%s0 + $0xe0] sm:$0xff]
    %v147 = vld [vmem:[%s0 + $0xe8] sm:$0xff]
    %v148 = vld [vmem:[%s0 + $0xf0] sm:$0xff]
    %v149 = vld [vmem:[%s0 + $0xf8] sm:$0xff]
    %v150 = vld [vmem:[%s0 + $0x100] sm:$0xff]
    %v151 = vld [vmem:[%s0 + $0x108] sm:$0xff]
    %v152 = vld [vmem:[%s0 + $0x110] sm:$0xff]
    %v153 = vld [vmem:[%s0 + $0x118] sm:$0xff]
    %v154 = vld [vmem:[%s0 + $0x120] sm:$0xff]
    %v155 = vld [vmem:[%s0 + $0x128] sm:$0xff]
    %v156 = vld [vmem:[%s0 + $0x130] sm:$0xff]
    %v157 = vld [vmem:[%s0 + $0x138] sm:$0xff]
    %v158 = vld [vmem:[%s0 + $0x140] sm:$0xff]
    %v159 = vld [vmem:[%s0 + $0x148] sm:$0xff]
    %v160 = vld [vmem:[%s0 + $0x150] sm:$0xff]
    %v161 = vld [vmem:[%s0 + $0x158] sm:$0xff]
    %v162 = vld [vmem:[%s0 + $0x160] sm:$0xff]
    %v163 = vld [vmem:[%s0 + $0x168] sm:$0xff]
    %v164 = vld [vmem:[%s0 + $0x170] sm:$0xff]
    %v165 = vld [vmem:[%s0 + $0x178] sm:$0xff]
    %v166 = vld [vmem:[%s0 + $0x180] sm:$0xff]
    %v167 = vld [vmem:[%s0 + $0x188] sm:$0xff]
    %v168 = vld [vmem:[%s0 + $0x190] sm:$0xff]
    %v169 = vld [vmem:[%s0 + $0x198] sm:$0xff]
    %v170 = vld [vmem:[%s0 + $0x1a0] sm:$0xff]
    %v171 = vld [vmem:[%s0 + $0x1a8] sm:$0xff]
    %v172 = vld [vmem:[%s0 + $0x1b0] sm:$0xff]
    %v173 = vld [vmem:[%s0 + $0x1b8] sm:$0xff]
    %v174 = vld [vmem:[%s0 + $0x1c0] sm:$0xff]
    %v175 = vld [vmem:[%s0 + $0x1c8] sm:$0xff]
    %v176 = vld [vmem:[%s0 + $0x1d0] sm:$0xff]
    %v177 = vld [vmem:[%s0 + $0x1d8] sm:$0xff]
    %v178 = vld [vmem:[%s0 + $0x1e0] sm:$0xff]
    %v179 = vld [vmem:[%s0 + $0x1e8] sm:$0xff]
    %v180 = vld [vmem:[%s0 + $0x1f0] sm:$0xff]
    %v181 = vld [vmem:[%s0 + $0x1f8] sm:$0xff]
    %s182 = scalar_lea.vmem [#allocation2], 24
    %183 = vst.msk [vmem:[%s182 + $0x1] sm:$0xff] %vm30, %v118
    %184 = vst.msk [vmem:[%s182 + $0x9] sm:$0xff] %vm30, %v119
    %185 = vst.msk [vmem:[%s182 + $0x19] sm:$0xff] %vm30, %v120
    %186 = vst.msk [vmem:[%s182 + $0x21] sm:$0xff] %vm30, %v121
    %187 = vst.msk [vmem:[%s182 + $0x31] sm:$0xff] %vm30, %v122
    %188 = vst.msk [vmem:[%s182 + $0x39] sm:$0xff] %vm30, %v123
    %189 = vst.msk [vmem:[%s182 + $0x49] sm:$0xff] %vm30, %v124
    %190 = vst.msk [vmem:[%s182 + $0x51] sm:$0xff] %vm30, %v125
    %191 = vst.msk [vmem:[%s182 + $0x61] sm:$0xff] %vm30, %v126
    %192 = vst.msk [vmem:[%s182 + $0x69] sm:$0xff] %vm30, %v127
    %193 = vst.msk [vmem:[%s182 + $0x79] sm:$0xff] %vm30, %v128
    %194 = vst.msk [vmem:[%s182 + $0x81] sm:$0xff] %vm30, %v129
    %195 = vst.msk [vmem:[%s182 + $0x91] sm:$0xff] %vm30, %v130
    %196 = vst.msk [vmem:[%s182 + $0x99] sm:$0xff] %vm30, %v131
    %197 = vst.msk [vmem:[%s182 + $0xa9] sm:$0xff] %vm30, %v132
    %198 = vst.msk [vmem:[%s182 + $0xb1] sm:$0xff] %vm30, %v133
    %199 = vst.msk [vmem:[%s182 + $0xc1] sm:$0xff] %vm30, %v134
    %200 = vst.msk [vmem:[%s182 + $0xc9] sm:$0xff] %vm30, %v135
    %201 = vst.msk [vmem:[%s182 + $0xd9] sm:$0xff] %vm30, %v136
    %202 = vst.msk [vmem:[%s182 + $0xe1] sm:$0xff] %vm30, %v137
    %203 = vst.msk [vmem:[%s182 + $0xf1] sm:$0xff] %vm30, %v138
    %204 = vst.msk [vmem:[%s182 + $0xf9] sm:$0xff] %vm30, %v139
    %205 = vst.msk [vmem:[%s182 + $0x109] sm:$0xff] %vm30, %v140
    %206 = vst.msk [vmem:[%s182 + $0x111] sm:$0xff] %vm30, %v141
    %207 = vst.msk [vmem:[%s182 + $0x121] sm:$0xff] %vm30, %v142
    %208 = vst.msk [vmem:[%s182 + $0x129] sm:$0xff] %vm30, %v143
    %209 = vst.msk [vmem:[%s182 + $0x139] sm:$0xff] %vm30, %v144
    %210 = vst.msk [vmem:[%s182 + $0x141] sm:$0xff] %vm30, %v145
    %211 = vst.msk [vmem:[%s182 + $0x151] sm:$0xff] %vm30, %v146
    %212 = vst.msk [vmem:[%s182 + $0x159] sm:$0xff] %vm30, %v147
    %213 = vst.msk [vmem:[%s182 + $0x169] sm:$0xff] %vm30, %v148
    %214 = vst.msk [vmem:[%s182 + $0x171] sm:$0xff] %vm30, %v149
    %215 = vst.msk [vmem:[%s182 + $0x1b1] sm:$0xff] %vm30, %v150
    %216 = vst.msk [vmem:[%s182 + $0x1b9] sm:$0xff] %vm30, %v151
    %217 = vst.msk [vmem:[%s182 + $0x1c9] sm:$0xff] %vm30, %v152
    %218 = vst.msk [vmem:[%s182 + $0x1d1] sm:$0xff] %vm30, %v153
    %219 = vst.msk [vmem:[%s182 + $0x1e1] sm:$0xff] %vm30, %v154
    %220 = vst.msk [vmem:[%s182 + $0x1e9] sm:$0xff] %vm30, %v155
    %221 = vst.msk [vmem:[%s182 + $0x1f9] sm:$0xff] %vm30, %v156
    %222 = vst.msk [vmem:[%s182 + $0x201] sm:$0xff] %vm30, %v157
    %223 = vst.msk [vmem:[%s182 + $0x211] sm:$0xff] %vm30, %v158
    %224 = vst.msk [vmem:[%s182 + $0x219] sm:$0xff] %vm30, %v159
    %225 = vst.msk [vmem:[%s182 + $0x229] sm:$0xff] %vm30, %v160
    %226 = vst.msk [vmem:[%s182 + $0x231] sm:$0xff] %vm30, %v161
    %227 = vst.msk [vmem:[%s182 + $0x241] sm:$0xff] %vm30, %v162
    %228 = vst.msk [vmem:[%s182 + $0x249] sm:$0xff] %vm30, %v163
    %229 = vst.msk [vmem:[%s182 + $0x259] sm:$0xff] %vm30, %v164
    %230 = vst.msk [vmem:[%s182 + $0x261] sm:$0xff] %vm30, %v165
    %231 = vst.msk [vmem:[%s182 + $0x271] sm:$0xff] %vm30, %v166
    %232 = vst.msk [vmem:[%s182 + $0x279] sm:$0xff] %vm30, %v167
    %233 = vst.msk [vmem:[%s182 + $0x289] sm:$0xff] %vm30, %v168
    %234 = vst.msk [vmem:[%s182 + $0x291] sm:$0xff] %vm30, %v169
    %235 = vst.msk [vmem:[%s182 + $0x2a1] sm:$0xff] %vm30, %v170
    %236 = vst.msk [vmem:[%s182 + $0x2a9] sm:$0xff] %vm30, %v171
    %237 = vst.msk [vmem:[%s182 + $0x2b9] sm:$0xff] %vm30, %v172
    %238 = vst.msk [vmem:[%s182 + $0x2c1] sm:$0xff] %vm30, %v173
    %239 = vst.msk [vmem:[%s182 + $0x2d1] sm:$0xff] %vm30, %v174
    %240 = vst.msk [vmem:[%s182 + $0x2d9] sm:$0xff] %vm30, %v175
    %241 = vst.msk [vmem:[%s182 + $0x2e9] sm:$0xff] %vm30, %v176
    %242 = vst.msk [vmem:[%s182 + $0x2f1] sm:$0xff] %vm30, %v177
    %243 = vst.msk [vmem:[%s182 + $0x301] sm:$0xff] %vm30, %v178
    %244 = vst.msk [vmem:[%s182 + $0x309] sm:$0xff] %vm30, %v179
    %245 = vst.msk [vmem:[%s182 + $0x319] sm:$0xff] %vm30, %v180
    %246 = vst.msk [vmem:[%s182 + $0x321] sm:$0xff] %vm30, %v181
    %v247 = vld [vmem:[#allocation2] sm:$0xff]
    %v248 = vld [vmem:[#allocation2 + $0x8] sm:$0xff]
    %v249 = vld [vmem:[#allocation2 + $0x18] sm:$0xff]
    %v250 = vld [vmem:[#allocation2 + $0x20] sm:$0xff]
    %v251 = vld [vmem:[#allocation2 + $0x30] sm:$0xff]
    %v252 = vld [vmem:[#allocation2 + $0x38] sm:$0xff]
    %v253 = vld [vmem:[#allocation2 + $0x48] sm:$0xff]
    %v254 = vld [vmem:[#allocation2 + $0x50] sm:$0xff]
    %v255 = vld [vmem:[#allocation2 + $0x60] sm:$0xff]
    %v256 = vld [vmem:[#allocation2 + $0x68] sm:$0xff]
    %v257 = vld [vmem:[#allocation2 + $0x78] sm:$0xff]
    %v258 = vld [vmem:[#allocation2 + $0x80] sm:$0xff]
    %v259 = vld [vmem:[#allocation2 + $0x90] sm:$0xff]
    %v260 = vld [vmem:[#allocation2 + $0x98] sm:$0xff]
    %v261 = vld [vmem:[#allocation2 + $0xa8] sm:$0xff]
    %v262 = vld [vmem:[#allocation2 + $0xb0] sm:$0xff]
    %v263 = vld [vmem:[#allocation2 + $0xc0] sm:$0xff]
    %v264 = vld [vmem:[#allocation2 + $0xc8] sm:$0xff]
    %v265 = vld [vmem:[#allocation2 + $0xd8] sm:$0xff]
    %v266 = vld [vmem:[#allocation2 + $0xe0] sm:$0xff]
    %v267 = vld [vmem:[#allocation2 + $0xf0] sm:$0xff]
    %v268 = vld [vmem:[#allocation2 + $0xf8] sm:$0xff]
    %v269 = vld [vmem:[#allocation2 + $0x108] sm:$0xff]
    %v270 = vld [vmem:[#allocation2 + $0x110] sm:$0xff]
    %v271 = vld [vmem:[#allocation2 + $0x120] sm:$0xff]
    %v272 = vld [vmem:[#allocation2 + $0x128] sm:$0xff]
    %v273 = vld [vmem:[#allocation2 + $0x138] sm:$0xff]
    %v274 = vld [vmem:[#allocation2 + $0x140] sm:$0xff]
    %v275 = vld [vmem:[#allocation2 + $0x150] sm:$0xff]
    %v276 = vld [vmem:[#allocation2 + $0x158] sm:$0xff]
    %v277 = vld [vmem:[#allocation2 + $0x168] sm:$0xff]
    %v278 = vld [vmem:[#allocation2 + $0x170] sm:$0xff]
    %v279 = vld [vmem:[#allocation2 + $0x1b0] sm:$0xff]
    %v280 = vld [vmem:[#allocation2 + $0x1b8] sm:$0xff]
    %v281 = vld [vmem:[#allocation2 + $0x1c8] sm:$0xff]
    %v282 = vld [vmem:[#allocation2 + $0x1d0] sm:$0xff]
    %v283 = vld [vmem:[#allocation2 + $0x1e0] sm:$0xff]
    %v284 = vld [vmem:[#allocation2 + $0x1e8] sm:$0xff]
    %v285 = vld [vmem:[#allocation2 + $0x1f8] sm:$0xff]
    %v286 = vld [vmem:[#allocation2 + $0x200] sm:$0xff]
    %v287 = vld [vmem:[#allocation2 + $0x210] sm:$0xff]
    %v288 = vld [vmem:[#allocation2 + $0x218] sm:$0xff]
    %v289 = vld [vmem:[#allocation2 + $0x228] sm:$0xff]
    %v290 = vld [vmem:[#allocation2 + $0x230] sm:$0xff]
    %v291 = vld [vmem:[#allocation2 + $0x240] sm:$0xff]
    %v292 = vld [vmem:[#allocation2 + $0x248] sm:$0xff]
    %v293 = vld [vmem:[#allocation2 + $0x258] sm:$0xff]
    %v294 = vld [vmem:[#allocation2 + $0x260] sm:$0xff]
    %v295 = vld [vmem:[#allocation2 + $0x270] sm:$0xff]
    %v296 = vld [vmem:[#allocation2 + $0x278] sm:$0xff]
    %v297 = vld [vmem:[#allocation2 + $0x288] sm:$0xff]
    %v298 = vld [vmem:[#allocation2 + $0x290] sm:$0xff]
    %v299 = vld [vmem:[#allocation2 + $0x2a0] sm:$0xff]
    %v300 = vld [vmem:[#allocation2 + $0x2a8] sm:$0xff]
    %v301 = vld [vmem:[#allocation2 + $0x2b8] sm:$0xff]
    %v302 = vld [vmem:[#allocation2 + $0x2c0] sm:$0xff]
    %v303 = vld [vmem:[#allocation2 + $0x2d0] sm:$0xff]
    %v304 = vld [vmem:[#allocation2 + $0x2d8] sm:$0xff]
    %v305 = vld [vmem:[#allocation2 + $0x2e8] sm:$0xff]
    %v306 = vld [vmem:[#allocation2 + $0x2f0] sm:$0xff]
    %v307 = vld [vmem:[#allocation2 + $0x300] sm:$0xff]
    %v308 = vld [vmem:[#allocation2 + $0x308] sm:$0xff]
    %v309 = vld [vmem:[#allocation2 + $0x318] sm:$0xff]
    %v310 = vld [vmem:[#allocation2 + $0x320] sm:$0xff]
    %v311 = vld [vmem:[#allocation2 + $0x1] sm:$0xff]
    %v312 = vld [vmem:[#allocation2 + $0x9] sm:$0xff]
    %v313 = vld [vmem:[#allocation2 + $0x19] sm:$0xff]
    %v314 = vld [vmem:[#allocation2 + $0x21] sm:$0xff]
    %v315 = vld [vmem:[#allocation2 + $0x31] sm:$0xff]
    %v316 = vld [vmem:[#allocation2 + $0x39] sm:$0xff]
    %v317 = vld [vmem:[#allocation2 + $0x49] sm:$0xff]
    %v318 = vld [vmem:[#allocation2 + $0x51] sm:$0xff]
    %v319 = vld [vmem:[#allocation2 + $0x61] sm:$0xff]
    %v320 = vld [vmem:[#allocation2 + $0x69] sm:$0xff]
    %v321 = vld [vmem:[#allocation2 + $0x79] sm:$0xff]
    %v322 = vld [vmem:[#allocation2 + $0x81] sm:$0xff]
    %v323 = vld [vmem:[#allocation2 + $0x91] sm:$0xff]
    %v324 = vld [vmem:[#allocation2 + $0x99] sm:$0xff]
    %v325 = vld [vmem:[#allocation2 + $0xa9] sm:$0xff]
    %v326 = vld [vmem:[#allocation2 + $0xb1] sm:$0xff]
    %v327 = vld [vmem:[#allocation2 + $0xc1] sm:$0xff]
    %v328 = vld [vmem:[#allocation2 + $0xc9] sm:$0xff]
    %v329 = vld [vmem:[#allocation2 + $0xd9] sm:$0xff]
    %v330 = vld [vmem:[#allocation2 + $0xe1] sm:$0xff]
    %v331 = vld [vmem:[#allocation2 + $0xf1] sm:$0xff]
    %v332 = vld [vmem:[#allocation2 + $0xf9] sm:$0xff]
    %v333 = vld [vmem:[#allocation2 + $0x109] sm:$0xff]
    %v334 = vld [vmem:[#allocation2 + $0x111] sm:$0xff]
    %v335 = vld [vmem:[#allocation2 + $0x121] sm:$0xff]
    %v336 = vld [vmem:[#allocation2 + $0x129] sm:$0xff]
    %v337 = vld [vmem:[#allocation2 + $0x139] sm:$0xff]
    %v338 = vld [vmem:[#allocation2 + $0x141] sm:$0xff]
    %v339 = vld [vmem:[#allocation2 + $0x151] sm:$0xff]
    %v340 = vld [vmem:[#allocation2 + $0x159] sm:$0xff]
    %v341 = vld [vmem:[#allocation2 + $0x169] sm:$0xff]
    %v342 = vld [vmem:[#allocation2 + $0x171] sm:$0xff]
    %v343 = vld [vmem:[#allocation2 + $0x1b1] sm:$0xff]
    %v344 = vld [vmem:[#allocation2 + $0x1b9] sm:$0xff]
    %v345 = vld [vmem:[#allocation2 + $0x1c9] sm:$0xff]
    %v346 = vld [vmem:[#allocation2 + $0x1d1] sm:$0xff]
    %v347 = vld [vmem:[#allocation2 + $0x1e1] sm:$0xff]
    %v348 = vld [vmem:[#allocation2 + $0x1e9] sm:$0xff]
    %v349 = vld [vmem:[#allocation2 + $0x1f9] sm:$0xff]
    %v350 = vld [vmem:[#allocation2 + $0x201] sm:$0xff]
    %v351 = vld [vmem:[#allocation2 + $0x211] sm:$0xff]
    %v352 = vld [vmem:[#allocation2 + $0x219] sm:$0xff]
    %v353 = vld [vmem:[#allocation2 + $0x229] sm:$0xff]
    %v354 = vld [vmem:[#allocation2 + $0x231] sm:$0xff]
    %v355 = vld [vmem:[#allocation2 + $0x241] sm:$0xff]
    %v356 = vld [vmem:[#allocation2 + $0x249] sm:$0xff]
    %v357 = vld [vmem:[#allocation2 + $0x259] sm:$0xff]
    %v358 = vld [vmem:[#allocation2 + $0x261] sm:$0xff]
    %v359 = vld [vmem:[#allocation2 + $0x271] sm:$0xff]
    %v360 = vld [vmem:[#allocation2 + $0x279] sm:$0xff]
    %v361 = vld [vmem:[#allocation2 + $0x289] sm:$0xff]
    %v362 = vld [vmem:[#allocation2 + $0x291] sm:$0xff]
    %v363 = vld [vmem:[#allocation2 + $0x2a1] sm:$0xff]
    %v364 = vld [vmem:[#allocation2 + $0x2a9] sm:$0xff]
    %v365 = vld [vmem:[#allocation2 + $0x2b9] sm:$0xff]
    %v366 = vld [vmem:[#allocation2 + $0x2c1] sm:$0xff]
    %v367 = vld [vmem:[#allocation2 + $0x2d1] sm:$0xff]
    %v368 = vld [vmem:[#allocation2 + $0x2d9] sm:$0xff]
    %v369 = vld [vmem:[#allocation2 + $0x2e9] sm:$0xff]
    %v370 = vld [vmem:[#allocation2 + $0x2f1] sm:$0xff]
    %v371 = vld [vmem:[#allocation2 + $0x301] sm:$0xff]
    %v372 = vld [vmem:[#allocation2 + $0x309] sm:$0xff]
    %v373 = vld [vmem:[#allocation2 + $0x319] sm:$0xff]
    %v374 = vld [vmem:[#allocation2 + $0x321] sm:$0xff]
    %v375 = vld [vmem:[#allocation2 + $0x2] sm:$0xff]
    %v376 = vld [vmem:[#allocation2 + $0xa] sm:$0xff]
    %v377 = vld [vmem:[#allocation2 + $0x1a] sm:$0xff]
    %v378 = vld [vmem:[#allocation2 + $0x22] sm:$0xff]
    %v379 = vld [vmem:[#allocation2 + $0x32] sm:$0xff]
    %v380 = vld [vmem:[#allocation2 + $0x3a] sm:$0xff]
    %v381 = vld [vmem:[#allocation2 + $0x4a] sm:$0xff]
    %v382 = vld [vmem:[#allocation2 + $0x52] sm:$0xff]
    %v383 = vld [vmem:[#allocation2 + $0x62] sm:$0xff]
    %v384 = vld [vmem:[#allocation2 + $0x6a] sm:$0xff]
    %v385 = vld [vmem:[#allocation2 + $0x7a] sm:$0xff]
    %v386 = vld [vmem:[#allocation2 + $0x82] sm:$0xff]
    %v387 = vld [vmem:[#allocation2 + $0x92] sm:$0xff]
    %v388 = vld [vmem:[#allocation2 + $0x9a] sm:$0xff]
    %v389 = vld [vmem:[#allocation2 + $0xaa] sm:$0xff]
    %v390 = vld [vmem:[#allocation2 + $0xb2] sm:$0xff]
    %v391 = vld [vmem:[#allocation2 + $0xc2] sm:$0xff]
    %v392 = vld [vmem:[#allocation2 + $0xca] sm:$0xff]
    %v393 = vld [vmem:[#allocation2 + $0xda] sm:$0xff]
    %v394 = vld [vmem:[#allocation2 + $0xe2] sm:$0xff]
    %v395 = vld [vmem:[#allocation2 + $0xf2] sm:$0xff]
    %v396 = vld [vmem:[#allocation2 + $0xfa] sm:$0xff]
    %v397 = vld [vmem:[#allocation2 + $0x10a] sm:$0xff]
    %v398 = vld [vmem:[#allocation2 + $0x112] sm:$0xff]
    %v399 = vld [vmem:[#allocation2 + $0x122] sm:$0xff]
    %v400 = vld [vmem:[#allocation2 + $0x12a] sm:$0xff]
    %v401 = vld [vmem:[#allocation2 + $0x13a] sm:$0xff]
    %v402 = vld [vmem:[#allocation2 + $0x142] sm:$0xff]
    %v403 = vld [vmem:[#allocation2 + $0x152] sm:$0xff]
    %v404 = vld [vmem:[#allocation2 + $0x15a] sm:$0xff]
    %v405 = vld [vmem:[#allocation2 + $0x16a] sm:$0xff]
    %v406 = vld [vmem:[#allocation2 + $0x172] sm:$0xff]
    %v407 = vld [vmem:[#allocation2 + $0x1b2] sm:$0xff]
    %v408 = vld [vmem:[#allocation2 + $0x1ba] sm:$0xff]
    %v409 = vld [vmem:[#allocation2 + $0x1ca] sm:$0xff]
    %v410 = vld [vmem:[#allocation2 + $0x1d2] sm:$0xff]
    %v411 = vld [vmem:[#allocation2 + $0x1e2] sm:$0xff]
    %v412 = vld [vmem:[#allocation2 + $0x1ea] sm:$0xff]
    %v413 = vld [vmem:[#allocation2 + $0x1fa] sm:$0xff]
    %v414 = vld [vmem:[#allocation2 + $0x202] sm:$0xff]
    %v415 = vld [vmem:[#allocation2 + $0x212] sm:$0xff]
    %v416 = vld [vmem:[#allocation2 + $0x21a] sm:$0xff]
    %v417 = vld [vmem:[#allocation2 + $0x22a] sm:$0xff]
    %v418 = vld [vmem:[#allocation2 + $0x232] sm:$0xff]
    %v419 = vld [vmem:[#allocation2 + $0x242] sm:$0xff]
    %v420 = vld [vmem:[#allocation2 + $0x24a] sm:$0xff]
    %v421 = vld [vmem:[#allocation2 + $0x25a] sm:$0xff]
    %v422 = vld [vmem:[#allocation2 + $0x262] sm:$0xff]
    %v423 = vld [vmem:[#allocation2 + $0x272] sm:$0xff]
    %v424 = vld [vmem:[#allocation2 + $0x27a] sm:$0xff]
    %v425 = vld [vmem:[#allocation2 + $0x28a] sm:$0xff]
    %v426 = vld [vmem:[#allocation2 + $0x292] sm:$0xff]
    %v427 = vld [vmem:[#allocation2 + $0x2a2] sm:$0xff]
    %v428 = vld [vmem:[#allocation2 + $0x2aa] sm:$0xff]
    %v429 = vld [vmem:[#allocation2 + $0x2ba] sm:$0xff]
    %v430 = vld [vmem:[#allocation2 + $0x2c2] sm:$0xff]
    %v431 = vld [vmem:[#allocation2 + $0x2d2] sm:$0xff]
    %v432 = vld [vmem:[#allocation2 + $0x2da] sm:$0xff]
    %v433 = vld [vmem:[#allocation2 + $0x2ea] sm:$0xff]
    %v434 = vld [vmem:[#allocation2 + $0x2f2] sm:$0xff]
    %v435 = vld [vmem:[#allocation2 + $0x302] sm:$0xff]
    %v436 = vld [vmem:[#allocation2 + $0x30a] sm:$0xff]
    %v437 = vld [vmem:[#allocation2 + $0x31a] sm:$0xff]
    %v438 = vld [vmem:[#allocation2 + $0x322] sm:$0xff]
    %v439 = vld [vmem:[%s182] sm:$0xff]
    %v440 = vld [vmem:[%s182 + $0x8] sm:$0xff]
    %v441 = vld [vmem:[%s182 + $0x18] sm:$0xff]
    %v442 = vld [vmem:[%s182 + $0x20] sm:$0xff]
    %v443 = vld [vmem:[%s182 + $0x30] sm:$0xff]
    %v444 = vld [vmem:[%s182 + $0x38] sm:$0xff]
    %v445 = vld [vmem:[%s182 + $0x48] sm:$0xff]
    %v446 = vld [vmem:[%s182 + $0x50] sm:$0xff]
    %v447 = vld [vmem:[%s182 + $0x60] sm:$0xff]
    %v448 = vld [vmem:[%s182 + $0x68] sm:$0xff]
    %v449 = vld [vmem:[%s182 + $0x78] sm:$0xff]
    %v450 = vld [vmem:[%s182 + $0x80] sm:$0xff]
    %v451 = vld [vmem:[%s182 + $0x90] sm:$0xff]
    %v452 = vld [vmem:[%s182 + $0x98] sm:$0xff]
    %v453 = vld [vmem:[%s182 + $0xa8] sm:$0xff]
    %v454 = vld [vmem:[%s182 + $0xb0] sm:$0xff]
    %v455 = vld [vmem:[%s182 + $0xc0] sm:$0xff]
    %v456 = vld [vmem:[%s182 + $0xc8] sm:$0xff]
    %v457 = vld [vmem:[%s182 + $0xd8] sm:$0xff]
    %v458 = vld [vmem:[%s182 + $0xe0] sm:$0xff]
    %v459 = vld [vmem:[%s182 + $0xf0] sm:$0xff]
    %v460 = vld [vmem:[%s182 + $0xf8] sm:$0xff]
    %v461 = vld [vmem:[%s182 + $0x108] sm:$0xff]
    %v462 = vld [vmem:[%s182 + $0x110] sm:$0xff]
    %v463 = vld [vmem:[%s182 + $0x120] sm:$0xff]
    %v464 = vld [vmem:[%s182 + $0x128] sm:$0xff]
    %v465 = vld [vmem:[%s182 + $0x138] sm:$0xff]
    %v466 = vld [vmem:[%s182 + $0x140] sm:$0xff]
    %v467 = vld [vmem:[%s182 + $0x150] sm:$0xff]
    %v468 = vld [vmem:[%s182 + $0x158] sm:$0xff]
    %v469 = vld [vmem:[%s182 + $0x168] sm:$0xff]
    %v470 = vld [vmem:[%s182 + $0x170] sm:$0xff]
    %v471 = vld [vmem:[%s182 + $0x1b0] sm:$0xff]
    %v472 = vld [vmem:[%s182 + $0x1b8] sm:$0xff]
    %v473 = vld [vmem:[%s182 + $0x1c8] sm:$0xff]
    %v474 = vld [vmem:[%s182 + $0x1d0] sm:$0xff]
    %v475 = vld [vmem:[%s182 + $0x1e0] sm:$0xff]
    %v476 = vld [vmem:[%s182 + $0x1e8] sm:$0xff]
    %v477 = vld [vmem:[%s182 + $0x1f8] sm:$0xff]
    %v478 = vld [vmem:[%s182 + $0x200] sm:$0xff]
    %v479 = vld [vmem:[%s182 + $0x210] sm:$0xff]
    %v480 = vld [vmem:[%s182 + $0x218] sm:$0xff]
    %v481 = vld [vmem:[%s182 + $0x228] sm:$0xff]
    %v482 = vld [vmem:[%s182 + $0x230] sm:$0xff]
    %v483 = vld [vmem:[%s182 + $0x240] sm:$0xff]
    %v484 = vld [vmem:[%s182 + $0x248] sm:$0xff]
    %v485 = vld [vmem:[%s182 + $0x258] sm:$0xff]
    %v486 = vld [vmem:[%s182 + $0x260] sm:$0xff]
    %v487 = vld [vmem:[%s182 + $0x270] sm:$0xff]
    %v488 = vld [vmem:[%s182 + $0x278] sm:$0xff]
    %v489 = vld [vmem:[%s182 + $0x288] sm:$0xff]
    %v490 = vld [vmem:[%s182 + $0x290] sm:$0xff]
    %v491 = vld [vmem:[%s182 + $0x2a0] sm:$0xff]
    %v492 = vld [vmem:[%s182 + $0x2a8] sm:$0xff]
    %v493 = vld [vmem:[%s182 + $0x2b8] sm:$0xff]
    %v494 = vld [vmem:[%s182 + $0x2c0] sm:$0xff]
    %v495 = vld [vmem:[%s182 + $0x2d0] sm:$0xff]
    %v496 = vld [vmem:[%s182 + $0x2d8] sm:$0xff]
    %v497 = vld [vmem:[%s182 + $0x2e8] sm:$0xff]
    %v498 = vld [vmem:[%s182 + $0x2f0] sm:$0xff]
    %v499 = vld [vmem:[%s182 + $0x300] sm:$0xff]
    %v500 = vld [vmem:[%s182 + $0x308] sm:$0xff]
    %v501 = vld [vmem:[%s182 + $0x318] sm:$0xff]
    %v502 = vld [vmem:[%s182 + $0x320] sm:$0xff]
    %v503 = vld [vmem:[%s182 + $0x1] sm:$0xff]
    %v504 = vld [vmem:[%s182 + $0x9] sm:$0xff]
    %v505 = vld [vmem:[%s182 + $0x19] sm:$0xff]
    %v506 = vld [vmem:[%s182 + $0x21] sm:$0xff]
    %v507 = vld [vmem:[%s182 + $0x31] sm:$0xff]
    %v508 = vld [vmem:[%s182 + $0x39] sm:$0xff]
    %v509 = vld [vmem:[%s182 + $0x49] sm:$0xff]
    %v510 = vld [vmem:[%s182 + $0x51] sm:$0xff]
    %v511 = vld [vmem:[%s182 + $0x61] sm:$0xff]
    %v512 = vld [vmem:[%s182 + $0x69] sm:$0xff]
    %v513 = vld [vmem:[%s182 + $0x79] sm:$0xff]
    %v514 = vld [vmem:[%s182 + $0x81] sm:$0xff]
    %v515 = vld [vmem:[%s182 + $0x91] sm:$0xff]
    %v516 = vld [vmem:[%s182 + $0x99] sm:$0xff]
    %v517 = vld [vmem:[%s182 + $0xa9] sm:$0xff]
    %v518 = vld [vmem:[%s182 + $0xb1] sm:$0xff]
    %v519 = vld [vmem:[%s182 + $0xc1] sm:$0xff]
    %v520 = vld [vmem:[%s182 + $0xc9] sm:$0xff]
    %v521 = vld [vmem:[%s182 + $0xd9] sm:$0xff]
    %v522 = vld [vmem:[%s182 + $0xe1] sm:$0xff]
    %v523 = vld [vmem:[%s182 + $0xf1] sm:$0xff]
    %v524 = vld [vmem:[%s182 + $0xf9] sm:$0xff]
    %v525 = vld [vmem:[%s182 + $0x109] sm:$0xff]
    %v526 = vld [vmem:[%s182 + $0x111] sm:$0xff]
    %v527 = vld [vmem:[%s182 + $0x121] sm:$0xff]
    %v528 = vld [vmem:[%s182 + $0x129] sm:$0xff]
    %v529 = vld [vmem:[%s182 + $0x139] sm:$0xff]
    %v530 = vld [vmem:[%s182 + $0x141] sm:$0xff]
    %v531 = vld [vmem:[%s182 + $0x151] sm:$0xff]
    %v532 = vld [vmem:[%s182 + $0x159] sm:$0xff]
    %v533 = vld [vmem:[%s182 + $0x169] sm:$0xff]
    %v534 = vld [vmem:[%s182 + $0x171] sm:$0xff]
    %v535 = vld [vmem:[%s182 + $0x1b1] sm:$0xff]
    %v536 = vld [vmem:[%s182 + $0x1b9] sm:$0xff]
    %v537 = vld [vmem:[%s182 + $0x1c9] sm:$0xff]
    %v538 = vld [vmem:[%s182 + $0x1d1] sm:$0xff]
    %v539 = vld [vmem:[%s182 + $0x1e1] sm:$0xff]
    %v540 = vld [vmem:[%s182 + $0x1e9] sm:$0xff]
    %v541 = vld [vmem:[%s182 + $0x1f9] sm:$0xff]
    %v542 = vld [vmem:[%s182 + $0x201] sm:$0xff]
    %v543 = vld [vmem:[%s182 + $0x211] sm:$0xff]
    %v544 = vld [vmem:[%s182 + $0x219] sm:$0xff]
    %v545 = vld [vmem:[%s182 + $0x229] sm:$0xff]
    %v546 = vld [vmem:[%s182 + $0x231] sm:$0xff]
    %v547 = vld [vmem:[%s182 + $0x241] sm:$0xff]
    %v548 = vld [vmem:[%s182 + $0x249] sm:$0xff]
    %v549 = vld [vmem:[%s182 + $0x259] sm:$0xff]
    %v550 = vld [vmem:[%s182 + $0x261] sm:$0xff]
    %v551 = vld [vmem:[%s182 + $0x271] sm:$0xff]
    %v552 = vld [vmem:[%s182 + $0x279] sm:$0xff]
    %v553 = vld [vmem:[%s182 + $0x289] sm:$0xff]
    %v554 = vld [vmem:[%s182 + $0x291] sm:$0xff]
    %v555 = vld [vmem:[%s182 + $0x2a1] sm:$0xff]
    %v556 = vld [vmem:[%s182 + $0x2a9] sm:$0xff]
    %v557 = vld [vmem:[%s182 + $0x2b9] sm:$0xff]
    %v558 = vld [vmem:[%s182 + $0x2c1] sm:$0xff]
    %v559 = vld [vmem:[%s182 + $0x2d1] sm:$0xff]
    %v560 = vld [vmem:[%s182 + $0x2d9] sm:$0xff]
    %v561 = vld [vmem:[%s182 + $0x2e9] sm:$0xff]
    %v562 = vld [vmem:[%s182 + $0x2f1] sm:$0xff]
    %v563 = vld [vmem:[%s182 + $0x301] sm:$0xff]
    %v564 = vld [vmem:[%s182 + $0x309] sm:$0xff]
    %v565 = vld [vmem:[%s182 + $0x319] sm:$0xff]
    %v566 = vld [vmem:[%s182 + $0x321] sm:$0xff]
    %v567 = vld [vmem:[%s182 + $0x2] sm:$0xff]
    %v568 = vld [vmem:[%s182 + $0xa] sm:$0xff]
    %v569 = vld [vmem:[%s182 + $0x1a] sm:$0xff]
    %v570 = vld [vmem:[%s182 + $0x22] sm:$0xff]
    %v571 = vld [vmem:[%s182 + $0x32] sm:$0xff]
    %v572 = vld [vmem:[%s182 + $0x3a] sm:$0xff]
    %v573 = vld [vmem:[%s182 + $0x4a] sm:$0xff]
    %v574 = vld [vmem:[%s182 + $0x52] sm:$0xff]
    %v575 = vld [vmem:[%s182 + $0x62] sm:$0xff]
    %v576 = vld [vmem:[%s182 + $0x6a] sm:$0xff]
    %v577 = vld [vmem:[%s182 + $0x7a] sm:$0xff]
    %v578 = vld [vmem:[%s182 + $0x82] sm:$0xff]
    %v579 = vld [vmem:[%s182 + $0x92] sm:$0xff]
    %v580 = vld [vmem:[%s182 + $0x9a] sm:$0xff]
    %v581 = vld [vmem:[%s182 + $0xaa] sm:$0xff]
    %v582 = vld [vmem:[%s182 + $0xb2] sm:$0xff]
    %v583 = vld [vmem:[%s182 + $0xc2] sm:$0xff]
    %v584 = vld [vmem:[%s182 + $0xca] sm:$0xff]
    %v585 = vld [vmem:[%s182 + $0xda] sm:$0xff]
    %v586 = vld [vmem:[%s182 + $0xe2] sm:$0xff]
    %v587 = vld [vmem:[%s182 + $0xf2] sm:$0xff]
    %v588 = vld [vmem:[%s182 + $0xfa] sm:$0xff]
    %v589 = vld [vmem:[%s182 + $0x10a] sm:$0xff]
    %v590 = vld [vmem:[%s182 + $0x112] sm:$0xff]
    %v591 = vld [vmem:[%s182 + $0x122] sm:$0xff]
    %v592 = vld [vmem:[%s182 + $0x12a] sm:$0xff]
    %v593 = vld [vmem:[%s182 + $0x13a] sm:$0xff]
    %v594 = vld [vmem:[%s182 + $0x142] sm:$0xff]
    %v595 = vld [vmem:[%s182 + $0x152] sm:$0xff]
    %v596 = vld [vmem:[%s182 + $0x15a] sm:$0xff]
    %v597 = vld [vmem:[%s182 + $0x16a] sm:$0xff]
    %v598 = vld [vmem:[%s182 + $0x172] sm:$0xff]
    %v599 = vld [vmem:[%s182 + $0x1b2] sm:$0xff]
    %v600 = vld [vmem:[%s182 + $0x1ba] sm:$0xff]
    %v601 = vld [vmem:[%s182 + $0x1ca] sm:$0xff]
    %v602 = vld [vmem:[%s182 + $0x1d2] sm:$0xff]
    %v603 = vld [vmem:[%s182 + $0x1e2] sm:$0xff]
    %v604 = vld [vmem:[%s182 + $0x1ea] sm:$0xff]
    %v605 = vld [vmem:[%s182 + $0x1fa] sm:$0xff]
    %v606 = vld [vmem:[%s182 + $0x202] sm:$0xff]
    %v607 = vld [vmem:[%s182 + $0x212] sm:$0xff]
    %v608 = vld [vmem:[%s182 + $0x21a] sm:$0xff]
    %v609 = vld [vmem:[%s182 + $0x22a] sm:$0xff]
    %v610 = vld [vmem:[%s182 + $0x232] sm:$0xff]
    %v611 = vld [vmem:[%s182 + $0x242] sm:$0xff]
    %v612 = vld [vmem:[%s182 + $0x24a] sm:$0xff]
    %v613 = vld [vmem:[%s182 + $0x25a] sm:$0xff]
    %v614 = vld [vmem:[%s182 + $0x262] sm:$0xff]
    %v615 = vld [vmem:[%s182 + $0x272] sm:$0xff]
    %v616 = vld [vmem:[%s182 + $0x27a] sm:$0xff]
    %v617 = vld [vmem:[%s182 + $0x28a] sm:$0xff]
    %v618 = vld [vmem:[%s182 + $0x292] sm:$0xff]
    %v619 = vld [vmem:[%s182 + $0x2a2] sm:$0xff]
    %v620 = vld [vmem:[%s182 + $0x2aa] sm:$0xff]
    %v621 = vld [vmem:[%s182 + $0x2ba] sm:$0xff]
    %v622 = vld [vmem:[%s182 + $0x2c2] sm:$0xff]
    %v623 = vld [vmem:[%s182 + $0x2d2] sm:$0xff]
    %v624 = vld [vmem:[%s182 + $0x2da] sm:$0xff]
    %v625 = vld [vmem:[%s182 + $0x2ea] sm:$0xff]
    %v626 = vld [vmem:[%s182 + $0x2f2] sm:$0xff]
    %v627 = vld [vmem:[%s182 + $0x302] sm:$0xff]
    %v628 = vld [vmem:[%s182 + $0x30a] sm:$0xff]
    %v629 = vld [vmem:[%s182 + $0x31a] sm:$0xff]
    %v630 = vld [vmem:[%s182 + $0x322] sm:$0xff]
    %s631 = scalar_lea.vmem [#allocation2], 48
    %v632 = vld [vmem:[%s631] sm:$0xff]
    %v633 = vld [vmem:[%s631 + $0x8] sm:$0xff]
    %v634 = vld [vmem:[%s631 + $0x18] sm:$0xff]
    %v635 = vld [vmem:[%s631 + $0x20] sm:$0xff]
    %v636 = vld [vmem:[%s631 + $0x30] sm:$0xff]
    %v637 = vld [vmem:[%s631 + $0x38] sm:$0xff]
    %v638 = vld [vmem:[%s631 + $0x48] sm:$0xff]
    %v639 = vld [vmem:[%s631 + $0x50] sm:$0xff]
    %v640 = vld [vmem:[%s631 + $0x60] sm:$0xff]
    %v641 = vld [vmem:[%s631 + $0x68] sm:$0xff]
    %v642 = vld [vmem:[%s631 + $0x78] sm:$0xff]
    %v643 = vld [vmem:[%s631 + $0x80] sm:$0xff]
    %v644 = vld [vmem:[%s631 + $0x90] sm:$0xff]
    %v645 = vld [vmem:[%s631 + $0x98] sm:$0xff]
    %v646 = vld [vmem:[%s631 + $0xa8] sm:$0xff]
    %v647 = vld [vmem:[%s631 + $0xb0] sm:$0xff]
    %v648 = vld [vmem:[%s631 + $0xc0] sm:$0xff]
    %v649 = vld [vmem:[%s631 + $0xc8] sm:$0xff]
    %v650 = vld [vmem:[%s631 + $0xd8] sm:$0xff]
    %v651 = vld [vmem:[%s631 + $0xe0] sm:$0xff]
    %v652 = vld [vmem:[%s631 + $0xf0] sm:$0xff]
    %v653 = vld [vmem:[%s631 + $0xf8] sm:$0xff]
    %v654 = vld [vmem:[%s631 + $0x108] sm:$0xff]
    %v655 = vld [vmem:[%s631 + $0x110] sm:$0xff]
    %v656 = vld [vmem:[%s631 + $0x120] sm:$0xff]
    %v657 = vld [vmem:[%s631 + $0x128] sm:$0xff]
    %v658 = vld [vmem:[%s631 + $0x138] sm:$0xff]
    %v659 = vld [vmem:[%s631 + $0x140] sm:$0xff]
    %v660 = vld [vmem:[%s631 + $0x150] sm:$0xff]
    %v661 = vld [vmem:[%s631 + $0x158] sm:$0xff]
    %v662 = vld [vmem:[%s631 + $0x168] sm:$0xff]
    %v663 = vld [vmem:[%s631 + $0x170] sm:$0xff]
    %v664 = vld [vmem:[%s631 + $0x1b0] sm:$0xff]
    %v665 = vld [vmem:[%s631 + $0x1b8] sm:$0xff]
    %v666 = vld [vmem:[%s631 + $0x1c8] sm:$0xff]
    %v667 = vld [vmem:[%s631 + $0x1d0] sm:$0xff]
    %v668 = vld [vmem:[%s631 + $0x1e0] sm:$0xff]
    %v669 = vld [vmem:[%s631 + $0x1e8] sm:$0xff]
    %v670 = vld [vmem:[%s631 + $0x1f8] sm:$0xff]
    %v671 = vld [vmem:[%s631 + $0x200] sm:$0xff]
    %v672 = vld [vmem:[%s631 + $0x210] sm:$0xff]
    %v673 = vld [vmem:[%s631 + $0x218] sm:$0xff]
    %v674 = vld [vmem:[%s631 + $0x228] sm:$0xff]
    %v675 = vld [vmem:[%s631 + $0x230] sm:$0xff]
    %v676 = vld [vmem:[%s631 + $0x240] sm:$0xff]
    %v677 = vld [vmem:[%s631 + $0x248] sm:$0xff]
    %v678 = vld [vmem:[%s631 + $0x258] sm:$0xff]
    %v679 = vld [vmem:[%s631 + $0x260] sm:$0xff]
    %v680 = vld [vmem:[%s631 + $0x270] sm:$0xff]
    %v681 = vld [vmem:[%s631 + $0x278] sm:$0xff]
    %v682 = vld [vmem:[%s631 + $0x288] sm:$0xff]
    %v683 = vld [vmem:[%s631 + $0x290] sm:$0xff]
    %v684 = vld [vmem:[%s631 + $0x2a0] sm:$0xff]
    %v685 = vld [vmem:[%s631 + $0x2a8] sm:$0xff]
    %v686 = vld [vmem:[%s631 + $0x2b8] sm:$0xff]
    %v687 = vld [vmem:[%s631 + $0x2c0] sm:$0xff]
    %v688 = vld [vmem:[%s631 + $0x2d0] sm:$0xff]
    %v689 = vld [vmem:[%s631 + $0x2d8] sm:$0xff]
    %v690 = vld [vmem:[%s631 + $0x2e8] sm:$0xff]
    %v691 = vld [vmem:[%s631 + $0x2f0] sm:$0xff]
    %v692 = vld [vmem:[%s631 + $0x300] sm:$0xff]
    %v693 = vld [vmem:[%s631 + $0x308] sm:$0xff]
    %v694 = vld [vmem:[%s631 + $0x318] sm:$0xff]
    %v695 = vld [vmem:[%s631 + $0x320] sm:$0xff]
    %v696 = vld [vmem:[%s631 + $0x1] sm:$0xff]
    %v697 = vld [vmem:[%s631 + $0x9] sm:$0xff]
    %v698 = vld [vmem:[%s631 + $0x19] sm:$0xff]
    %v699 = vld [vmem:[%s631 + $0x21] sm:$0xff]
    %v700 = vld [vmem:[%s631 + $0x31] sm:$0xff]
    %v701 = vld [vmem:[%s631 + $0x39] sm:$0xff]
    %v702 = vld [vmem:[%s631 + $0x49] sm:$0xff]
    %v703 = vld [vmem:[%s631 + $0x51] sm:$0xff]
    %v704 = vld [vmem:[%s631 + $0x61] sm:$0xff]
    %v705 = vld [vmem:[%s631 + $0x69] sm:$0xff]
    %v706 = vld [vmem:[%s631 + $0x79] sm:$0xff]
    %v707 = vld [vmem:[%s631 + $0x81] sm:$0xff]
    %v708 = vld [vmem:[%s631 + $0x91] sm:$0xff]
    %v709 = vld [vmem:[%s631 + $0x99] sm:$0xff]
    %v710 = vld [vmem:[%s631 + $0xa9] sm:$0xff]
    %v711 = vld [vmem:[%s631 + $0xb1] sm:$0xff]
    %v712 = vld [vmem:[%s631 + $0xc1] sm:$0xff]
    %v713 = vld [vmem:[%s631 + $0xc9] sm:$0xff]
    %v714 = vld [vmem:[%s631 + $0xd9] sm:$0xff]
    %v715 = vld [vmem:[%s631 + $0xe1] sm:$0xff]
    %v716 = vld [vmem:[%s631 + $0xf1] sm:$0xff]
    %v717 = vld [vmem:[%s631 + $0xf9] sm:$0xff]
    %v718 = vld [vmem:[%s631 + $0x109] sm:$0xff]
    %v719 = vld [vmem:[%s631 + $0x111] sm:$0xff]
    %v720 = vld [vmem:[%s631 + $0x121] sm:$0xff]
    %v721 = vld [vmem:[%s631 + $0x129] sm:$0xff]
    %v722 = vld [vmem:[%s631 + $0x139] sm:$0xff]
    %v723 = vld [vmem:[%s631 + $0x141] sm:$0xff]
    %v724 = vld [vmem:[%s631 + $0x151] sm:$0xff]
    %v725 = vld [vmem:[%s631 + $0x159] sm:$0xff]
    %v726 = vld [vmem:[%s631 + $0x169] sm:$0xff]
    %v727 = vld [vmem:[%s631 + $0x171] sm:$0xff]
    %v728 = vld [vmem:[%s631 + $0x1b1] sm:$0xff]
    %v729 = vld [vmem:[%s631 + $0x1b9] sm:$0xff]
    %v730 = vld [vmem:[%s631 + $0x1c9] sm:$0xff]
    %v731 = vld [vmem:[%s631 + $0x1d1] sm:$0xff]
    %v732 = vld [vmem:[%s631 + $0x1e1] sm:$0xff]
    %v733 = vld [vmem:[%s631 + $0x1e9] sm:$0xff]
    %v734 = vld [vmem:[%s631 + $0x1f9] sm:$0xff]
    %v735 = vld [vmem:[%s631 + $0x201] sm:$0xff]
    %v736 = vld [vmem:[%s631 + $0x211] sm:$0xff]
    %v737 = vld [vmem:[%s631 + $0x219] sm:$0xff]
    %v738 = vld [vmem:[%s631 + $0x229] sm:$0xff]
    %v739 = vld [vmem:[%s631 + $0x231] sm:$0xff]
    %v740 = vld [vmem:[%s631 + $0x241] sm:$0xff]
    %v741 = vld [vmem:[%s631 + $0x249] sm:$0xff]
    %v742 = vld [vmem:[%s631 + $0x259] sm:$0xff]
    %v743 = vld [vmem:[%s631 + $0x261] sm:$0xff]
    %v744 = vld [vmem:[%s631 + $0x271] sm:$0xff]
    %v745 = vld [vmem:[%s631 + $0x279] sm:$0xff]
    %v746 = vld [vmem:[%s631 + $0x289] sm:$0xff]
    %v747 = vld [vmem:[%s631 + $0x291] sm:$0xff]
    %v748 = vld [vmem:[%s631 + $0x2a1] sm:$0xff]
    %v749 = vld [vmem:[%s631 + $0x2a9] sm:$0xff]
    %v750 = vld [vmem:[%s631 + $0x2b9] sm:$0xff]
    %v751 = vld [vmem:[%s631 + $0x2c1] sm:$0xff]
    %v752 = vld [vmem:[%s631 + $0x2d1] sm:$0xff]
    %v753 = vld [vmem:[%s631 + $0x2d9] sm:$0xff]
    %v754 = vld [vmem:[%s631 + $0x2e9] sm:$0xff]
    %v755 = vld [vmem:[%s631 + $0x2f1] sm:$0xff]
    %v756 = vld [vmem:[%s631 + $0x301] sm:$0xff]
    %v757 = vld [vmem:[%s631 + $0x309] sm:$0xff]
    %v758 = vld [vmem:[%s631 + $0x319] sm:$0xff]
    %v759 = vld [vmem:[%s631 + $0x321] sm:$0xff]
    %v760 = vld [vmem:[%s631 + $0x2] sm:$0xff]
    %v761 = vld [vmem:[%s631 + $0xa] sm:$0xff]
    %v762 = vld [vmem:[%s631 + $0x1a] sm:$0xff]
    %v763 = vld [vmem:[%s631 + $0x22] sm:$0xff]
    %v764 = vld [vmem:[%s631 + $0x32] sm:$0xff]
    %v765 = vld [vmem:[%s631 + $0x3a] sm:$0xff]
    %v766 = vld [vmem:[%s631 + $0x4a] sm:$0xff]
    %v767 = vld [vmem:[%s631 + $0x52] sm:$0xff]
    %v768 = vld [vmem:[%s631 + $0x62] sm:$0xff]
    %v769 = vld [vmem:[%s631 + $0x6a] sm:$0xff]
    %v770 = vld [vmem:[%s631 + $0x7a] sm:$0xff]
    %v771 = vld [vmem:[%s631 + $0x82] sm:$0xff]
    %v772 = vld [vmem:[%s631 + $0x92] sm:$0xff]
    %v773 = vld [vmem:[%s631 + $0x9a] sm:$0xff]
    %v774 = vld [vmem:[%s631 + $0xaa] sm:$0xff]
    %v775 = vld [vmem:[%s631 + $0xb2] sm:$0xff]
    %v776 = vld [vmem:[%s631 + $0xc2] sm:$0xff]
    %v777 = vld [vmem:[%s631 + $0xca] sm:$0xff]
    %v778 = vld [vmem:[%s631 + $0xda] sm:$0xff]
    %v779 = vld [vmem:[%s631 + $0xe2] sm:$0xff]
    %v780 = vld [vmem:[%s631 + $0xf2] sm:$0xff]
    %v781 = vld [vmem:[%s631 + $0xfa] sm:$0xff]
    %v782 = vld [vmem:[%s631 + $0x10a] sm:$0xff]
    %v783 = vld [vmem:[%s631 + $0x112] sm:$0xff]
    %v784 = vld [vmem:[%s631 + $0x122] sm:$0xff]
    %v785 = vld [vmem:[%s631 + $0x12a] sm:$0xff]
    %v786 = vld [vmem:[%s631 + $0x13a] sm:$0xff]
    %v787 = vld [vmem:[%s631 + $0x142] sm:$0xff]
    %v788 = vld [vmem:[%s631 + $0x152] sm:$0xff]
    %v789 = vld [vmem:[%s631 + $0x15a] sm:$0xff]
    %v790 = vld [vmem:[%s631 + $0x16a] sm:$0xff]
    %v791 = vld [vmem:[%s631 + $0x172] sm:$0xff]
    %v792 = vld [vmem:[%s631 + $0x1b2] sm:$0xff]
    %v793 = vld [vmem:[%s631 + $0x1ba] sm:$0xff]
    %v794 = vld [vmem:[%s631 + $0x1ca] sm:$0xff]
    %v795 = vld [vmem:[%s631 + $0x1d2] sm:$0xff]
    %v796 = vld [vmem:[%s631 + $0x1e2] sm:$0xff]
    %v797 = vld [vmem:[%s631 + $0x1ea] sm:$0xff]
    %v798 = vld [vmem:[%s631 + $0x1fa] sm:$0xff]
    %v799 = vld [vmem:[%s631 + $0x202] sm:$0xff]
    %v800 = vld [vmem:[%s631 + $0x212] sm:$0xff]
    %v801 = vld [vmem:[%s631 + $0x21a] sm:$0xff]
    %v802 = vld [vmem:[%s631 + $0x22a] sm:$0xff]
    %v803 = vld [vmem:[%s631 + $0x232] sm:$0xff]
    %v804 = vld [vmem:[%s631 + $0x242] sm:$0xff]
    %v805 = vld [vmem:[%s631 + $0x24a] sm:$0xff]
    %v806 = vld [vmem:[%s631 + $0x25a] sm:$0xff]
    %v807 = vld [vmem:[%s631 + $0x262] sm:$0xff]
    %v808 = vld [vmem:[%s631 + $0x272] sm:$0xff]
    %v809 = vld [vmem:[%s631 + $0x27a] sm:$0xff]
    %v810 = vld [vmem:[%s631 + $0x28a] sm:$0xff]
    %v811 = vld [vmem:[%s631 + $0x292] sm:$0xff]
    %v812 = vld [vmem:[%s631 + $0x2a2] sm:$0xff]
    %v813 = vld [vmem:[%s631 + $0x2aa] sm:$0xff]
    %v814 = vld [vmem:[%s631 + $0x2ba] sm:$0xff]
    %v815 = vld [vmem:[%s631 + $0x2c2] sm:$0xff]
    %v816 = vld [vmem:[%s631 + $0x2d2] sm:$0xff]
    %v817 = vld [vmem:[%s631 + $0x2da] sm:$0xff]
    %v818 = vld [vmem:[%s631 + $0x2ea] sm:$0xff]
    %v819 = vld [vmem:[%s631 + $0x2f2] sm:$0xff]
    %v820 = vld [vmem:[%s631 + $0x302] sm:$0xff]
    %v821 = vld [vmem:[%s631 + $0x30a] sm:$0xff]
    %v822 = vld [vmem:[%s631 + $0x31a] sm:$0xff]
    %v823 = vld [vmem:[%s631 + $0x322] sm:$0xff]
    %888 = vrot.lane.b32.xlu0 %v311, 4
    %v889 = vpop.permute.xlu0 %888
    %890 = vrot.lane.b32.xlu0 %v312, 4
    %v891 = vpop.permute.xlu0 %890
    %892 = vrot.lane.b32.xlu0 %v313, 4
    %v893 = vpop.permute.xlu0 %892
    %894 = vrot.lane.b32.xlu0 %v314, 4
    %v895 = vpop.permute.xlu0 %894
    %896 = vrot.lane.b32.xlu0 %v315, 4
    %v897 = vpop.permute.xlu0 %896
    %898 = vrot.lane.b32.xlu0 %v316, 4
    %v899 = vpop.permute.xlu0 %898
    %900 = vrot.lane.b32.xlu0 %v317, 4
    %v901 = vpop.permute.xlu0 %900
    %902 = vrot.lane.b32.xlu0 %v318, 4
    %v903 = vpop.permute.xlu0 %902
    %904 = vrot.lane.b32.xlu0 %v319, 4
    %v905 = vpop.permute.xlu0 %904
    %906 = vrot.lane.b32.xlu0 %v320, 4
    %v907 = vpop.permute.xlu0 %906
    %908 = vrot.lane.b32.xlu0 %v321, 4
    %v909 = vpop.permute.xlu0 %908
    %910 = vrot.lane.b32.xlu0 %v322, 4
    %v911 = vpop.permute.xlu0 %910
    %912 = vrot.lane.b32.xlu0 %v323, 4
    %v913 = vpop.permute.xlu0 %912
    %914 = vrot.lane.b32.xlu0 %v324, 4
    %v915 = vpop.permute.xlu0 %914
    %916 = vrot.lane.b32.xlu0 %v325, 4
    %v917 = vpop.permute.xlu0 %916
    %918 = vrot.lane.b32.xlu0 %v326, 4
    %v919 = vpop.permute.xlu0 %918
    %920 = vrot.lane.b32.xlu0 %v327, 4
    %v921 = vpop.permute.xlu0 %920
    %922 = vrot.lane.b32.xlu0 %v328, 4
    %v923 = vpop.permute.xlu0 %922
    %924 = vrot.lane.b32.xlu0 %v329, 4
    %v925 = vpop.permute.xlu0 %924
    %926 = vrot.lane.b32.xlu0 %v330, 4
    %v927 = vpop.permute.xlu0 %926
    %928 = vrot.lane.b32.xlu0 %v331, 4
    %v929 = vpop.permute.xlu0 %928
    %930 = vrot.lane.b32.xlu0 %v332, 4
    %v931 = vpop.permute.xlu0 %930
    %932 = vrot.lane.b32.xlu0 %v333, 4
    %v933 = vpop.permute.xlu0 %932
    %934 = vrot.lane.b32.xlu0 %v334, 4
    %v935 = vpop.permute.xlu0 %934
    %936 = vrot.lane.b32.xlu0 %v335, 4
    %v937 = vpop.permute.xlu0 %936
    %938 = vrot.lane.b32.xlu0 %v336, 4
    %v939 = vpop.permute.xlu0 %938
    %940 = vrot.lane.b32.xlu0 %v337, 4
    %v941 = vpop.permute.xlu0 %940
    %942 = vrot.lane.b32.xlu0 %v338, 4
    %v943 = vpop.permute.xlu0 %942
    %944 = vrot.lane.b32.xlu0 %v339, 4
    %v945 = vpop.permute.xlu0 %944
    %946 = vrot.lane.b32.xlu0 %v340, 4
    %v947 = vpop.permute.xlu0 %946
    %948 = vrot.lane.b32.xlu0 %v341, 4
    %v949 = vpop.permute.xlu0 %948
    %950 = vrot.lane.b32.xlu0 %v342, 4
    %v951 = vpop.permute.xlu0 %950
    %952 = vrot.lane.b32.xlu0 %v343, 4
    %v953 = vpop.permute.xlu0 %952
    %954 = vrot.lane.b32.xlu0 %v344, 4
    %v955 = vpop.permute.xlu0 %954
    %956 = vrot.lane.b32.xlu0 %v345, 4
    %v957 = vpop.permute.xlu0 %956
    %958 = vrot.lane.b32.xlu0 %v346, 4
    %v959 = vpop.permute.xlu0 %958
    %960 = vrot.lane.b32.xlu0 %v347, 4
    %v961 = vpop.permute.xlu0 %960
    %962 = vrot.lane.b32.xlu0 %v348, 4
    %v963 = vpop.permute.xlu0 %962
    %964 = vrot.lane.b32.xlu0 %v349, 4
    %v965 = vpop.permute.xlu0 %964
    %966 = vrot.lane.b32.xlu0 %v350, 4
    %v967 = vpop.permute.xlu0 %966
    %968 = vrot.lane.b32.xlu0 %v351, 4
    %v969 = vpop.permute.xlu0 %968
    %970 = vrot.lane.b32.xlu0 %v352, 4
    %v971 = vpop.permute.xlu0 %970
    %972 = vrot.lane.b32.xlu0 %v353, 4
    %v973 = vpop.permute.xlu0 %972
    %974 = vrot.lane.b32.xlu0 %v354, 4
    %v975 = vpop.permute.xlu0 %974
    %976 = vrot.lane.b32.xlu0 %v355, 4
    %v977 = vpop.permute.xlu0 %976
    %978 = vrot.lane.b32.xlu0 %v356, 4
    %v979 = vpop.permute.xlu0 %978
    %980 = vrot.lane.b32.xlu0 %v357, 4
    %v981 = vpop.permute.xlu0 %980
    %982 = vrot.lane.b32.xlu0 %v358, 4
    %v983 = vpop.permute.xlu0 %982
    %984 = vrot.lane.b32.xlu0 %v359, 4
    %v985 = vpop.permute.xlu0 %984
    %986 = vrot.lane.b32.xlu0 %v360, 4
    %v987 = vpop.permute.xlu0 %986
    %988 = vrot.lane.b32.xlu0 %v361, 4
    %v989 = vpop.permute.xlu0 %988
    %990 = vrot.lane.b32.xlu0 %v362, 4
    %v991 = vpop.permute.xlu0 %990
    %992 = vrot.lane.b32.xlu0 %v363, 4
    %v993 = vpop.permute.xlu0 %992
    %994 = vrot.lane.b32.xlu0 %v364, 4
    %v995 = vpop.permute.xlu0 %994
    %996 = vrot.lane.b32.xlu0 %v365, 4
    %v997 = vpop.permute.xlu0 %996
    %998 = vrot.lane.b32.xlu0 %v366, 4
    %v999 = vpop.permute.xlu0 %998
    %1000 = vrot.lane.b32.xlu0 %v367, 4
    %v1001 = vpop.permute.xlu0 %1000
    %1002 = vrot.lane.b32.xlu0 %v368, 4
    %v1003 = vpop.permute.xlu0 %1002
    %1004 = vrot.lane.b32.xlu0 %v369, 4
    %v1005 = vpop.permute.xlu0 %1004
    %1006 = vrot.lane.b32.xlu0 %v370, 4
    %v1007 = vpop.permute.xlu0 %1006
    %1008 = vrot.lane.b32.xlu0 %v371, 4
    %v1009 = vpop.permute.xlu0 %1008
    %1010 = vrot.lane.b32.xlu0 %v372, 4
    %v1011 = vpop.permute.xlu0 %1010
    %1012 = vrot.lane.b32.xlu0 %v373, 4
    %v1013 = vpop.permute.xlu0 %1012
    %1014 = vrot.lane.b32.xlu0 %v374, 4
    %v1015 = vpop.permute.xlu0 %1014
    %1144 = vrot.lane.b32.xlu0 %v375, 8
    %v1145 = vpop.permute.xlu0 %1144
    %1146 = vrot.lane.b32.xlu0 %v376, 8
    %v1147 = vpop.permute.xlu0 %1146
    %1148 = vrot.lane.b32.xlu0 %v377, 8
    %v1149 = vpop.permute.xlu0 %1148
    %1150 = vrot.lane.b32.xlu0 %v378, 8
    %v1151 = vpop.permute.xlu0 %1150
    %1152 = vrot.lane.b32.xlu0 %v379, 8
    %v1153 = vpop.permute.xlu0 %1152
    %1154 = vrot.lane.b32.xlu0 %v380, 8
    %v1155 = vpop.permute.xlu0 %1154
    %1156 = vrot.lane.b32.xlu0 %v381, 8
    %v1157 = vpop.permute.xlu0 %1156
    %1158 = vrot.lane.b32.xlu0 %v382, 8
    %v1159 = vpop.permute.xlu0 %1158
    %1160 = vrot.lane.b32.xlu0 %v383, 8
    %v1161 = vpop.permute.xlu0 %1160
    %1162 = vrot.lane.b32.xlu0 %v384, 8
    %v1163 = vpop.permute.xlu0 %1162
    %1164 = vrot.lane.b32.xlu0 %v385, 8
    %v1165 = vpop.permute.xlu0 %1164
    %1166 = vrot.lane.b32.xlu0 %v386, 8
    %v1167 = vpop.permute.xlu0 %1166
    %1168 = vrot.lane.b32.xlu0 %v387, 8
    %v1169 = vpop.permute.xlu0 %1168
    %1170 = vrot.lane.b32.xlu0 %v388, 8
    %v1171 = vpop.permute.xlu0 %1170
    %1172 = vrot.lane.b32.xlu0 %v389, 8
    %v1173 = vpop.permute.xlu0 %1172
    %1174 = vrot.lane.b32.xlu0 %v390, 8
    %v1175 = vpop.permute.xlu0 %1174
    %1176 = vrot.lane.b32.xlu0 %v391, 8
    %v1177 = vpop.permute.xlu0 %1176
    %1178 = vrot.lane.b32.xlu0 %v392, 8
    %v1179 = vpop.permute.xlu0 %1178
    %1180 = vrot.lane.b32.xlu0 %v393, 8
    %v1181 = vpop.permute.xlu0 %1180
    %1182 = vrot.lane.b32.xlu0 %v394, 8
    %v1183 = vpop.permute.xlu0 %1182
    %1184 = vrot.lane.b32.xlu0 %v395, 8
    %v1185 = vpop.permute.xlu0 %1184
    %1186 = vrot.lane.b32.xlu0 %v396, 8
    %v1187 = vpop.permute.xlu0 %1186
    %1188 = vrot.lane.b32.xlu0 %v397, 8
    %v1189 = vpop.permute.xlu0 %1188
    %1190 = vrot.lane.b32.xlu0 %v398, 8
    %v1191 = vpop.permute.xlu0 %1190
    %1192 = vrot.lane.b32.xlu0 %v399, 8
    %v1193 = vpop.permute.xlu0 %1192
    %1194 = vrot.lane.b32.xlu0 %v400, 8
    %v1195 = vpop.permute.xlu0 %1194
    %1196 = vrot.lane.b32.xlu0 %v401, 8
    %v1197 = vpop.permute.xlu0 %1196
    %1198 = vrot.lane.b32.xlu0 %v402, 8
    %v1199 = vpop.permute.xlu0 %1198
    %1200 = vrot.lane.b32.xlu0 %v403, 8
    %v1201 = vpop.permute.xlu0 %1200
    %1202 = vrot.lane.b32.xlu0 %v404, 8
    %v1203 = vpop.permute.xlu0 %1202
    %1204 = vrot.lane.b32.xlu0 %v405, 8
    %v1205 = vpop.permute.xlu0 %1204
    %1206 = vrot.lane.b32.xlu0 %v406, 8
    %v1207 = vpop.permute.xlu0 %1206
    %1208 = vrot.lane.b32.xlu0 %v407, 8
    %v1209 = vpop.permute.xlu0 %1208
    %1210 = vrot.lane.b32.xlu0 %v408, 8
    %v1211 = vpop.permute.xlu0 %1210
    %1212 = vrot.lane.b32.xlu0 %v409, 8
    %v1213 = vpop.permute.xlu0 %1212
    %1214 = vrot.lane.b32.xlu0 %v410, 8
    %v1215 = vpop.permute.xlu0 %1214
    %1216 = vrot.lane.b32.xlu0 %v411, 8
    %v1217 = vpop.permute.xlu0 %1216
    %1218 = vrot.lane.b32.xlu0 %v412, 8
    %v1219 = vpop.permute.xlu0 %1218
    %1220 = vrot.lane.b32.xlu0 %v413, 8
    %v1221 = vpop.permute.xlu0 %1220
    %1222 = vrot.lane.b32.xlu0 %v414, 8
    %v1223 = vpop.permute.xlu0 %1222
    %1224 = vrot.lane.b32.xlu0 %v415, 8
    %v1225 = vpop.permute.xlu0 %1224
    %1226 = vrot.lane.b32.xlu0 %v416, 8
    %v1227 = vpop.permute.xlu0 %1226
    %1228 = vrot.lane.b32.xlu0 %v417, 8
    %v1229 = vpop.permute.xlu0 %1228
    %1230 = vrot.lane.b32.xlu0 %v418, 8
    %v1231 = vpop.permute.xlu0 %1230
    %1232 = vrot.lane.b32.xlu0 %v419, 8
    %v1233 = vpop.permute.xlu0 %1232
    %1234 = vrot.lane.b32.xlu0 %v420, 8
    %v1235 = vpop.permute.xlu0 %1234
    %1236 = vrot.lane.b32.xlu0 %v421, 8
    %v1237 = vpop.permute.xlu0 %1236
    %1238 = vrot.lane.b32.xlu0 %v422, 8
    %v1239 = vpop.permute.xlu0 %1238
    %1240 = vrot.lane.b32.xlu0 %v423, 8
    %v1241 = vpop.permute.xlu0 %1240
    %1242 = vrot.lane.b32.xlu0 %v424, 8
    %v1243 = vpop.permute.xlu0 %1242
    %1244 = vrot.lane.b32.xlu0 %v425, 8
    %v1245 = vpop.permute.xlu0 %1244
    %1246 = vrot.lane.b32.xlu0 %v426, 8
    %v1247 = vpop.permute.xlu0 %1246
    %1248 = vrot.lane.b32.xlu0 %v427, 8
    %v1249 = vpop.permute.xlu0 %1248
    %1250 = vrot.lane.b32.xlu0 %v428, 8
    %v1251 = vpop.permute.xlu0 %1250
    %1252 = vrot.lane.b32.xlu0 %v429, 8
    %v1253 = vpop.permute.xlu0 %1252
    %1254 = vrot.lane.b32.xlu0 %v430, 8
    %v1255 = vpop.permute.xlu0 %1254
    %1256 = vrot.lane.b32.xlu0 %v431, 8
    %v1257 = vpop.permute.xlu0 %1256
    %1258 = vrot.lane.b32.xlu0 %v432, 8
    %v1259 = vpop.permute.xlu0 %1258
    %1260 = vrot.lane.b32.xlu0 %v433, 8
    %v1261 = vpop.permute.xlu0 %1260
    %1262 = vrot.lane.b32.xlu0 %v434, 8
    %v1263 = vpop.permute.xlu0 %1262
    %1264 = vrot.lane.b32.xlu0 %v435, 8
    %v1265 = vpop.permute.xlu0 %1264
    %1266 = vrot.lane.b32.xlu0 %v436, 8
    %v1267 = vpop.permute.xlu0 %1266
    %1268 = vrot.lane.b32.xlu0 %v437, 8
    %v1269 = vpop.permute.xlu0 %1268
    %1270 = vrot.lane.b32.xlu0 %v438, 8
    %v1271 = vpop.permute.xlu0 %1270
    %1400 = vrot.lane.b32.xlu0 %v439, 12
    %v1401 = vpop.permute.xlu0 %1400
    %1402 = vrot.lane.b32.xlu0 %v440, 12
    %v1403 = vpop.permute.xlu0 %1402
    %1404 = vrot.lane.b32.xlu0 %v441, 12
    %v1405 = vpop.permute.xlu0 %1404
    %1406 = vrot.lane.b32.xlu0 %v442, 12
    %v1407 = vpop.permute.xlu0 %1406
    %1408 = vrot.lane.b32.xlu0 %v443, 12
    %v1409 = vpop.permute.xlu0 %1408
    %1410 = vrot.lane.b32.xlu0 %v444, 12
    %v1411 = vpop.permute.xlu0 %1410
    %1412 = vrot.lane.b32.xlu0 %v445, 12
    %v1413 = vpop.permute.xlu0 %1412
    %1414 = vrot.lane.b32.xlu0 %v446, 12
    %v1415 = vpop.permute.xlu0 %1414
    %1416 = vrot.lane.b32.xlu0 %v447, 12
    %v1417 = vpop.permute.xlu0 %1416
    %1418 = vrot.lane.b32.xlu0 %v448, 12
    %v1419 = vpop.permute.xlu0 %1418
    %1420 = vrot.lane.b32.xlu0 %v449, 12
    %v1421 = vpop.permute.xlu0 %1420
    %1422 = vrot.lane.b32.xlu0 %v450, 12
    %v1423 = vpop.permute.xlu0 %1422
    %1424 = vrot.lane.b32.xlu0 %v451, 12
    %v1425 = vpop.permute.xlu0 %1424
    %1426 = vrot.lane.b32.xlu0 %v452, 12
    %v1427 = vpop.permute.xlu0 %1426
    %1428 = vrot.lane.b32.xlu0 %v453, 12
    %v1429 = vpop.permute.xlu0 %1428
    %1430 = vrot.lane.b32.xlu0 %v454, 12
    %v1431 = vpop.permute.xlu0 %1430
    %1432 = vrot.lane.b32.xlu0 %v455, 12
    %v1433 = vpop.permute.xlu0 %1432
    %1434 = vrot.lane.b32.xlu0 %v456, 12
    %v1435 = vpop.permute.xlu0 %1434
    %1436 = vrot.lane.b32.xlu0 %v457, 12
    %v1437 = vpop.permute.xlu0 %1436
    %1438 = vrot.lane.b32.xlu0 %v458, 12
    %v1439 = vpop.permute.xlu0 %1438
    %1440 = vrot.lane.b32.xlu0 %v459, 12
    %v1441 = vpop.permute.xlu0 %1440
    %1442 = vrot.lane.b32.xlu0 %v460, 12
    %v1443 = vpop.permute.xlu0 %1442
    %1444 = vrot.lane.b32.xlu0 %v461, 12
    %v1445 = vpop.permute.xlu0 %1444
    %1446 = vrot.lane.b32.xlu0 %v462, 12
    %v1447 = vpop.permute.xlu0 %1446
    %1448 = vrot.lane.b32.xlu0 %v463, 12
    %v1449 = vpop.permute.xlu0 %1448
    %1450 = vrot.lane.b32.xlu0 %v464, 12
    %v1451 = vpop.permute.xlu0 %1450
    %1452 = vrot.lane.b32.xlu0 %v465, 12
    %v1453 = vpop.permute.xlu0 %1452
    %1454 = vrot.lane.b32.xlu0 %v466, 12
    %v1455 = vpop.permute.xlu0 %1454
    %1456 = vrot.lane.b32.xlu0 %v467, 12
    %v1457 = vpop.permute.xlu0 %1456
    %1458 = vrot.lane.b32.xlu0 %v468, 12
    %v1459 = vpop.permute.xlu0 %1458
    %1460 = vrot.lane.b32.xlu0 %v469, 12
    %v1461 = vpop.permute.xlu0 %1460
    %1462 = vrot.lane.b32.xlu0 %v470, 12
    %v1463 = vpop.permute.xlu0 %1462
    %1464 = vrot.lane.b32.xlu0 %v471, 12
    %v1465 = vpop.permute.xlu0 %1464
    %1466 = vrot.lane.b32.xlu0 %v472, 12
    %v1467 = vpop.permute.xlu0 %1466
    %1468 = vrot.lane.b32.xlu0 %v473, 12
    %v1469 = vpop.permute.xlu0 %1468
    %1470 = vrot.lane.b32.xlu0 %v474, 12
    %v1471 = vpop.permute.xlu0 %1470
    %1472 = vrot.lane.b32.xlu0 %v475, 12
    %v1473 = vpop.permute.xlu0 %1472
    %1474 = vrot.lane.b32.xlu0 %v476, 12
    %v1475 = vpop.permute.xlu0 %1474
    %1476 = vrot.lane.b32.xlu0 %v477, 12
    %v1477 = vpop.permute.xlu0 %1476
    %1478 = vrot.lane.b32.xlu0 %v478, 12
    %v1479 = vpop.permute.xlu0 %1478
    %1480 = vrot.lane.b32.xlu0 %v479, 12
    %v1481 = vpop.permute.xlu0 %1480
    %1482 = vrot.lane.b32.xlu0 %v480, 12
    %v1483 = vpop.permute.xlu0 %1482
    %1484 = vrot.lane.b32.xlu0 %v481, 12
    %v1485 = vpop.permute.xlu0 %1484
    %1486 = vrot.lane.b32.xlu0 %v482, 12
    %v1487 = vpop.permute.xlu0 %1486
    %1488 = vrot.lane.b32.xlu0 %v483, 12
    %v1489 = vpop.permute.xlu0 %1488
    %1490 = vrot.lane.b32.xlu0 %v484, 12
    %v1491 = vpop.permute.xlu0 %1490
    %1492 = vrot.lane.b32.xlu0 %v485, 12
    %v1493 = vpop.permute.xlu0 %1492
    %1494 = vrot.lane.b32.xlu0 %v486, 12
    %v1495 = vpop.permute.xlu0 %1494
    %1496 = vrot.lane.b32.xlu0 %v487, 12
    %v1497 = vpop.permute.xlu0 %1496
    %1498 = vrot.lane.b32.xlu0 %v488, 12
    %v1499 = vpop.permute.xlu0 %1498
    %1500 = vrot.lane.b32.xlu0 %v489, 12
    %v1501 = vpop.permute.xlu0 %1500
    %1502 = vrot.lane.b32.xlu0 %v490, 12
    %v1503 = vpop.permute.xlu0 %1502
    %1504 = vrot.lane.b32.xlu0 %v491, 12
    %v1505 = vpop.permute.xlu0 %1504
    %1506 = vrot.lane.b32.xlu0 %v492, 12
    %v1507 = vpop.permute.xlu0 %1506
    %1508 = vrot.lane.b32.xlu0 %v493, 12
    %v1509 = vpop.permute.xlu0 %1508
    %1510 = vrot.lane.b32.xlu0 %v494, 12
    %v1511 = vpop.permute.xlu0 %1510
    %1512 = vrot.lane.b32.xlu0 %v495, 12
    %v1513 = vpop.permute.xlu0 %1512
    %1514 = vrot.lane.b32.xlu0 %v496, 12
    %v1515 = vpop.permute.xlu0 %1514
    %1516 = vrot.lane.b32.xlu0 %v497, 12
    %v1517 = vpop.permute.xlu0 %1516
    %1518 = vrot.lane.b32.xlu0 %v498, 12
    %v1519 = vpop.permute.xlu0 %1518
    %1520 = vrot.lane.b32.xlu0 %v499, 12
    %v1521 = vpop.permute.xlu0 %1520
    %1522 = vrot.lane.b32.xlu0 %v500, 12
    %v1523 = vpop.permute.xlu0 %1522
    %1524 = vrot.lane.b32.xlu0 %v501, 12
    %v1525 = vpop.permute.xlu0 %1524
    %1526 = vrot.lane.b32.xlu0 %v502, 12
    %v1527 = vpop.permute.xlu0 %1526
    %1656 = vrot.lane.b32.xlu0 %v503, 16
    %v1657 = vpop.permute.xlu0 %1656
    %1658 = vrot.lane.b32.xlu0 %v504, 16
    %v1659 = vpop.permute.xlu0 %1658
    %1660 = vrot.lane.b32.xlu0 %v505, 16
    %v1661 = vpop.permute.xlu0 %1660
    %1662 = vrot.lane.b32.xlu0 %v506, 16
    %v1663 = vpop.permute.xlu0 %1662
    %1664 = vrot.lane.b32.xlu0 %v507, 16
    %v1665 = vpop.permute.xlu0 %1664
    %1666 = vrot.lane.b32.xlu0 %v508, 16
    %v1667 = vpop.permute.xlu0 %1666
    %1668 = vrot.lane.b32.xlu0 %v509, 16
    %v1669 = vpop.permute.xlu0 %1668
    %1670 = vrot.lane.b32.xlu0 %v510, 16
    %v1671 = vpop.permute.xlu0 %1670
    %1672 = vrot.lane.b32.xlu0 %v511, 16
    %v1673 = vpop.permute.xlu0 %1672
    %1674 = vrot.lane.b32.xlu0 %v512, 16
    %v1675 = vpop.permute.xlu0 %1674
    %1676 = vrot.lane.b32.xlu0 %v513, 16
    %v1677 = vpop.permute.xlu0 %1676
    %1678 = vrot.lane.b32.xlu0 %v514, 16
    %v1679 = vpop.permute.xlu0 %1678
    %1680 = vrot.lane.b32.xlu0 %v515, 16
    %v1681 = vpop.permute.xlu0 %1680
    %1682 = vrot.lane.b32.xlu0 %v516, 16
    %v1683 = vpop.permute.xlu0 %1682
    %1684 = vrot.lane.b32.xlu0 %v517, 16
    %v1685 = vpop.permute.xlu0 %1684
    %1686 = vrot.lane.b32.xlu0 %v518, 16
    %v1687 = vpop.permute.xlu0 %1686
    %1688 = vrot.lane.b32.xlu0 %v519, 16
    %v1689 = vpop.permute.xlu0 %1688
    %1690 = vrot.lane.b32.xlu0 %v520, 16
    %v1691 = vpop.permute.xlu0 %1690
    %1692 = vrot.lane.b32.xlu0 %v521, 16
    %v1693 = vpop.permute.xlu0 %1692
    %1694 = vrot.lane.b32.xlu0 %v522, 16
    %v1695 = vpop.permute.xlu0 %1694
    %1696 = vrot.lane.b32.xlu0 %v523, 16
    %v1697 = vpop.permute.xlu0 %1696
    %1698 = vrot.lane.b32.xlu0 %v524, 16
    %v1699 = vpop.permute.xlu0 %1698
    %1700 = vrot.lane.b32.xlu0 %v525, 16
    %v1701 = vpop.permute.xlu0 %1700
    %1702 = vrot.lane.b32.xlu0 %v526, 16
    %v1703 = vpop.permute.xlu0 %1702
    %1704 = vrot.lane.b32.xlu0 %v527, 16
    %v1705 = vpop.permute.xlu0 %1704
    %1706 = vrot.lane.b32.xlu0 %v528, 16
    %v1707 = vpop.permute.xlu0 %1706
    %1708 = vrot.lane.b32.xlu0 %v529, 16
    %v1709 = vpop.permute.xlu0 %1708
    %1710 = vrot.lane.b32.xlu0 %v530, 16
    %v1711 = vpop.permute.xlu0 %1710
    %1712 = vrot.lane.b32.xlu0 %v531, 16
    %v1713 = vpop.permute.xlu0 %1712
    %1714 = vrot.lane.b32.xlu0 %v532, 16
    %v1715 = vpop.permute.xlu0 %1714
    %1716 = vrot.lane.b32.xlu0 %v533, 16
    %v1717 = vpop.permute.xlu0 %1716
    %1718 = vrot.lane.b32.xlu0 %v534, 16
    %v1719 = vpop.permute.xlu0 %1718
    %1720 = vrot.lane.b32.xlu0 %v535, 16
    %v1721 = vpop.permute.xlu0 %1720
    %1722 = vrot.lane.b32.xlu0 %v536, 16
    %v1723 = vpop.permute.xlu0 %1722
    %1724 = vrot.lane.b32.xlu0 %v537, 16
    %v1725 = vpop.permute.xlu0 %1724
    %1726 = vrot.lane.b32.xlu0 %v538, 16
    %v1727 = vpop.permute.xlu0 %1726
    %1728 = vrot.lane.b32.xlu0 %v539, 16
    %v1729 = vpop.permute.xlu0 %1728
    %1730 = vrot.lane.b32.xlu0 %v540, 16
    %v1731 = vpop.permute.xlu0 %1730
    %1732 = vrot.lane.b32.xlu0 %v541, 16
    %v1733 = vpop.permute.xlu0 %1732
    %1734 = vrot.lane.b32.xlu0 %v542, 16
    %v1735 = vpop.permute.xlu0 %1734
    %1736 = vrot.lane.b32.xlu0 %v543, 16
    %v1737 = vpop.permute.xlu0 %1736
    %1738 = vrot.lane.b32.xlu0 %v544, 16
    %v1739 = vpop.permute.xlu0 %1738
    %1740 = vrot.lane.b32.xlu0 %v545, 16
    %v1741 = vpop.permute.xlu0 %1740
    %1742 = vrot.lane.b32.xlu0 %v546, 16
    %v1743 = vpop.permute.xlu0 %1742
    %1744 = vrot.lane.b32.xlu0 %v547, 16
    %v1745 = vpop.permute.xlu0 %1744
    %1746 = vrot.lane.b32.xlu0 %v548, 16
    %v1747 = vpop.permute.xlu0 %1746
    %1748 = vrot.lane.b32.xlu0 %v549, 16
    %v1749 = vpop.permute.xlu0 %1748
    %1750 = vrot.lane.b32.xlu0 %v550, 16
    %v1751 = vpop.permute.xlu0 %1750
    %1752 = vrot.lane.b32.xlu0 %v551, 16
    %v1753 = vpop.permute.xlu0 %1752
    %1754 = vrot.lane.b32.xlu0 %v552, 16
    %v1755 = vpop.permute.xlu0 %1754
    %1756 = vrot.lane.b32.xlu0 %v553, 16
    %v1757 = vpop.permute.xlu0 %1756
    %1758 = vrot.lane.b32.xlu0 %v554, 16
    %v1759 = vpop.permute.xlu0 %1758
    %1760 = vrot.lane.b32.xlu0 %v555, 16
    %v1761 = vpop.permute.xlu0 %1760
    %1762 = vrot.lane.b32.xlu0 %v556, 16
    %v1763 = vpop.permute.xlu0 %1762
    %1764 = vrot.lane.b32.xlu0 %v557, 16
    %v1765 = vpop.permute.xlu0 %1764
    %1766 = vrot.lane.b32.xlu0 %v558, 16
    %v1767 = vpop.permute.xlu0 %1766
    %1768 = vrot.lane.b32.xlu0 %v559, 16
    %v1769 = vpop.permute.xlu0 %1768
    %1770 = vrot.lane.b32.xlu0 %v560, 16
    %v1771 = vpop.permute.xlu0 %1770
    %1772 = vrot.lane.b32.xlu0 %v561, 16
    %v1773 = vpop.permute.xlu0 %1772
    %1774 = vrot.lane.b32.xlu0 %v562, 16
    %v1775 = vpop.permute.xlu0 %1774
    %1776 = vrot.lane.b32.xlu0 %v563, 16
    %v1777 = vpop.permute.xlu0 %1776
    %1778 = vrot.lane.b32.xlu0 %v564, 16
    %v1779 = vpop.permute.xlu0 %1778
    %1780 = vrot.lane.b32.xlu0 %v565, 16
    %v1781 = vpop.permute.xlu0 %1780
    %1782 = vrot.lane.b32.xlu0 %v566, 16
    %v1783 = vpop.permute.xlu0 %1782
    %1912 = vrot.lane.b32.xlu0 %v567, 20
    %v1913 = vpop.permute.xlu0 %1912
    %1914 = vrot.lane.b32.xlu0 %v568, 20
    %v1915 = vpop.permute.xlu0 %1914
    %1916 = vrot.lane.b32.xlu0 %v569, 20
    %v1917 = vpop.permute.xlu0 %1916
    %1918 = vrot.lane.b32.xlu0 %v570, 20
    %v1919 = vpop.permute.xlu0 %1918
    %1920 = vrot.lane.b32.xlu0 %v571, 20
    %v1921 = vpop.permute.xlu0 %1920
    %1922 = vrot.lane.b32.xlu0 %v572, 20
    %v1923 = vpop.permute.xlu0 %1922
    %1924 = vrot.lane.b32.xlu0 %v573, 20
    %v1925 = vpop.permute.xlu0 %1924
    %1926 = vrot.lane.b32.xlu0 %v574, 20
    %v1927 = vpop.permute.xlu0 %1926
    %1928 = vrot.lane.b32.xlu0 %v575, 20
    %v1929 = vpop.permute.xlu0 %1928
    %1930 = vrot.lane.b32.xlu0 %v576, 20
    %v1931 = vpop.permute.xlu0 %1930
    %1932 = vrot.lane.b32.xlu0 %v577, 20
    %v1933 = vpop.permute.xlu0 %1932
    %1934 = vrot.lane.b32.xlu0 %v578, 20
    %v1935 = vpop.permute.xlu0 %1934
    %1936 = vrot.lane.b32.xlu0 %v579, 20
    %v1937 = vpop.permute.xlu0 %1936
    %1938 = vrot.lane.b32.xlu0 %v580, 20
    %v1939 = vpop.permute.xlu0 %1938
    %1940 = vrot.lane.b32.xlu0 %v581, 20
    %v1941 = vpop.permute.xlu0 %1940
    %1942 = vrot.lane.b32.xlu0 %v582, 20
    %v1943 = vpop.permute.xlu0 %1942
    %1944 = vrot.lane.b32.xlu0 %v583, 20
    %v1945 = vpop.permute.xlu0 %1944
    %1946 = vrot.lane.b32.xlu0 %v584, 20
    %v1947 = vpop.permute.xlu0 %1946
    %1948 = vrot.lane.b32.xlu0 %v585, 20
    %v1949 = vpop.permute.xlu0 %1948
    %1950 = vrot.lane.b32.xlu0 %v586, 20
    %v1951 = vpop.permute.xlu0 %1950
    %1952 = vrot.lane.b32.xlu0 %v587, 20
    %v1953 = vpop.permute.xlu0 %1952
    %1954 = vrot.lane.b32.xlu0 %v588, 20
    %v1955 = vpop.permute.xlu0 %1954
    %1956 = vrot.lane.b32.xlu0 %v589, 20
    %v1957 = vpop.permute.xlu0 %1956
    %1958 = vrot.lane.b32.xlu0 %v590, 20
    %v1959 = vpop.permute.xlu0 %1958
    %1960 = vrot.lane.b32.xlu0 %v591, 20
    %v1961 = vpop.permute.xlu0 %1960
    %1962 = vrot.lane.b32.xlu0 %v592, 20
    %v1963 = vpop.permute.xlu0 %1962
    %1964 = vrot.lane.b32.xlu0 %v593, 20
    %v1965 = vpop.permute.xlu0 %1964
    %1966 = vrot.lane.b32.xlu0 %v594, 20
    %v1967 = vpop.permute.xlu0 %1966
    %1968 = vrot.lane.b32.xlu0 %v595, 20
    %v1969 = vpop.permute.xlu0 %1968
    %1970 = vrot.lane.b32.xlu0 %v596, 20
    %v1971 = vpop.permute.xlu0 %1970
    %1972 = vrot.lane.b32.xlu0 %v597, 20
    %v1973 = vpop.permute.xlu0 %1972
    %1974 = vrot.lane.b32.xlu0 %v598, 20
    %v1975 = vpop.permute.xlu0 %1974
    %1976 = vrot.lane.b32.xlu0 %v599, 20
    %v1977 = vpop.permute.xlu0 %1976
    %1978 = vrot.lane.b32.xlu0 %v600, 20
    %v1979 = vpop.permute.xlu0 %1978
    %1980 = vrot.lane.b32.xlu0 %v601, 20
    %v1981 = vpop.permute.xlu0 %1980
    %1982 = vrot.lane.b32.xlu0 %v602, 20
    %v1983 = vpop.permute.xlu0 %1982
    %1984 = vrot.lane.b32.xlu0 %v603, 20
    %v1985 = vpop.permute.xlu0 %1984
    %1986 = vrot.lane.b32.xlu0 %v604, 20
    %v1987 = vpop.permute.xlu0 %1986
    %1988 = vrot.lane.b32.xlu0 %v605, 20
    %v1989 = vpop.permute.xlu0 %1988
    %1990 = vrot.lane.b32.xlu0 %v606, 20
    %v1991 = vpop.permute.xlu0 %1990
    %1992 = vrot.lane.b32.xlu0 %v607, 20
    %v1993 = vpop.permute.xlu0 %1992
    %1994 = vrot.lane.b32.xlu0 %v608, 20
    %v1995 = vpop.permute.xlu0 %1994
    %1996 = vrot.lane.b32.xlu0 %v609, 20
    %v1997 = vpop.permute.xlu0 %1996
    %1998 = vrot.lane.b32.xlu0 %v610, 20
    %v1999 = vpop.permute.xlu0 %1998
    %2000 = vrot.lane.b32.xlu0 %v611, 20
    %v2001 = vpop.permute.xlu0 %2000
    %2002 = vrot.lane.b32.xlu0 %v612, 20
    %v2003 = vpop.permute.xlu0 %2002
    %2004 = vrot.lane.b32.xlu0 %v613, 20
    %v2005 = vpop.permute.xlu0 %2004
    %2006 = vrot.lane.b32.xlu0 %v614, 20
    %v2007 = vpop.permute.xlu0 %2006
    %2008 = vrot.lane.b32.xlu0 %v615, 20
    %v2009 = vpop.permute.xlu0 %2008
    %2010 = vrot.lane.b32.xlu0 %v616, 20
    %v2011 = vpop.permute.xlu0 %2010
    %2012 = vrot.lane.b32.xlu0 %v617, 20
    %v2013 = vpop.permute.xlu0 %2012
    %2014 = vrot.lane.b32.xlu0 %v618, 20
    %v2015 = vpop.permute.xlu0 %2014
    %2016 = vrot.lane.b32.xlu0 %v619, 20
    %v2017 = vpop.permute.xlu0 %2016
    %2018 = vrot.lane.b32.xlu0 %v620, 20
    %v2019 = vpop.permute.xlu0 %2018
    %2020 = vrot.lane.b32.xlu0 %v621, 20
    %v2021 = vpop.permute.xlu0 %2020
    %2022 = vrot.lane.b32.xlu0 %v622, 20
    %v2023 = vpop.permute.xlu0 %2022
    %2024 = vrot.lane.b32.xlu0 %v623, 20
    %v2025 = vpop.permute.xlu0 %2024
    %2026 = vrot.lane.b32.xlu0 %v624, 20
    %v2027 = vpop.permute.xlu0 %2026
    %2028 = vrot.lane.b32.xlu0 %v625, 20
    %v2029 = vpop.permute.xlu0 %2028
    %2030 = vrot.lane.b32.xlu0 %v626, 20
    %v2031 = vpop.permute.xlu0 %2030
    %2032 = vrot.lane.b32.xlu0 %v627, 20
    %v2033 = vpop.permute.xlu0 %2032
    %2034 = vrot.lane.b32.xlu0 %v628, 20
    %v2035 = vpop.permute.xlu0 %2034
    %2036 = vrot.lane.b32.xlu0 %v629, 20
    %v2037 = vpop.permute.xlu0 %2036
    %2038 = vrot.lane.b32.xlu0 %v630, 20
    %v2039 = vpop.permute.xlu0 %2038
    %2168 = vrot.lane.b32.xlu0 %v632, 24
    %v2169 = vpop.permute.xlu0 %2168
    %2170 = vrot.lane.b32.xlu0 %v633, 24
    %v2171 = vpop.permute.xlu0 %2170
    %2172 = vrot.lane.b32.xlu0 %v634, 24
    %v2173 = vpop.permute.xlu0 %2172
    %2174 = vrot.lane.b32.xlu0 %v635, 24
    %v2175 = vpop.permute.xlu0 %2174
    %2176 = vrot.lane.b32.xlu0 %v636, 24
    %v2177 = vpop.permute.xlu0 %2176
    %2178 = vrot.lane.b32.xlu0 %v637, 24
    %v2179 = vpop.permute.xlu0 %2178
    %2180 = vrot.lane.b32.xlu0 %v638, 24
    %v2181 = vpop.permute.xlu0 %2180
    %2182 = vrot.lane.b32.xlu0 %v639, 24
    %v2183 = vpop.permute.xlu0 %2182
    %2184 = vrot.lane.b32.xlu0 %v640, 24
    %v2185 = vpop.permute.xlu0 %2184
    %2186 = vrot.lane.b32.xlu0 %v641, 24
    %v2187 = vpop.permute.xlu0 %2186
    %2188 = vrot.lane.b32.xlu0 %v642, 24
    %v2189 = vpop.permute.xlu0 %2188
    %2190 = vrot.lane.b32.xlu0 %v643, 24
    %v2191 = vpop.permute.xlu0 %2190
    %2192 = vrot.lane.b32.xlu0 %v644, 24
    %v2193 = vpop.permute.xlu0 %2192
    %2194 = vrot.lane.b32.xlu0 %v645, 24
    %v2195 = vpop.permute.xlu0 %2194
    %2196 = vrot.lane.b32.xlu0 %v646, 24
    %v2197 = vpop.permute.xlu0 %2196
    %2198 = vrot.lane.b32.xlu0 %v647, 24
    %v2199 = vpop.permute.xlu0 %2198
    %2200 = vrot.lane.b32.xlu0 %v648, 24
    %v2201 = vpop.permute.xlu0 %2200
    %2202 = vrot.lane.b32.xlu0 %v649, 24
    %v2203 = vpop.permute.xlu0 %2202
    %2204 = vrot.lane.b32.xlu0 %v650, 24
    %v2205 = vpop.permute.xlu0 %2204
    %2206 = vrot.lane.b32.xlu0 %v651, 24
    %v2207 = vpop.permute.xlu0 %2206
    %2208 = vrot.lane.b32.xlu0 %v652, 24
    %v2209 = vpop.permute.xlu0 %2208
    %2210 = vrot.lane.b32.xlu0 %v653, 24
    %v2211 = vpop.permute.xlu0 %2210
    %2212 = vrot.lane.b32.xlu0 %v654, 24
    %v2213 = vpop.permute.xlu0 %2212
    %2214 = vrot.lane.b32.xlu0 %v655, 24
    %v2215 = vpop.permute.xlu0 %2214
    %2216 = vrot.lane.b32.xlu0 %v656, 24
    %v2217 = vpop.permute.xlu0 %2216
    %2218 = vrot.lane.b32.xlu0 %v657, 24
    %v2219 = vpop.permute.xlu0 %2218
    %2220 = vrot.lane.b32.xlu0 %v658, 24
    %v2221 = vpop.permute.xlu0 %2220
    %2222 = vrot.lane.b32.xlu0 %v659, 24
    %v2223 = vpop.permute.xlu0 %2222
    %2224 = vrot.lane.b32.xlu0 %v660, 24
    %v2225 = vpop.permute.xlu0 %2224
    %2226 = vrot.lane.b32.xlu0 %v661, 24
    %v2227 = vpop.permute.xlu0 %2226
    %2228 = vrot.lane.b32.xlu0 %v662, 24
    %v2229 = vpop.permute.xlu0 %2228
    %2230 = vrot.lane.b32.xlu0 %v663, 24
    %v2231 = vpop.permute.xlu0 %2230
    %2232 = vrot.lane.b32.xlu0 %v664, 24
    %v2233 = vpop.permute.xlu0 %2232
    %2234 = vrot.lane.b32.xlu0 %v665, 24
    %v2235 = vpop.permute.xlu0 %2234
    %2236 = vrot.lane.b32.xlu0 %v666, 24
    %v2237 = vpop.permute.xlu0 %2236
    %2238 = vrot.lane.b32.xlu0 %v667, 24
    %v2239 = vpop.permute.xlu0 %2238
    %2240 = vrot.lane.b32.xlu0 %v668, 24
    %v2241 = vpop.permute.xlu0 %2240
    %2242 = vrot.lane.b32.xlu0 %v669, 24
    %v2243 = vpop.permute.xlu0 %2242
    %2244 = vrot.lane.b32.xlu0 %v670, 24
    %v2245 = vpop.permute.xlu0 %2244
    %2246 = vrot.lane.b32.xlu0 %v671, 24
    %v2247 = vpop.permute.xlu0 %2246
    %2248 = vrot.lane.b32.xlu0 %v672, 24
    %v2249 = vpop.permute.xlu0 %2248
    %2250 = vrot.lane.b32.xlu0 %v673, 24
    %v2251 = vpop.permute.xlu0 %2250
    %2252 = vrot.lane.b32.xlu0 %v674, 24
    %v2253 = vpop.permute.xlu0 %2252
    %2254 = vrot.lane.b32.xlu0 %v675, 24
    %v2255 = vpop.permute.xlu0 %2254
    %2256 = vrot.lane.b32.xlu0 %v676, 24
    %v2257 = vpop.permute.xlu0 %2256
    %2258 = vrot.lane.b32.xlu0 %v677, 24
    %v2259 = vpop.permute.xlu0 %2258
    %2260 = vrot.lane.b32.xlu0 %v678, 24
    %v2261 = vpop.permute.xlu0 %2260
    %2262 = vrot.lane.b32.xlu0 %v679, 24
    %v2263 = vpop.permute.xlu0 %2262
    %2264 = vrot.lane.b32.xlu0 %v680, 24
    %v2265 = vpop.permute.xlu0 %2264
    %2266 = vrot.lane.b32.xlu0 %v681, 24
    %v2267 = vpop.permute.xlu0 %2266
    %2268 = vrot.lane.b32.xlu0 %v682, 24
    %v2269 = vpop.permute.xlu0 %2268
    %2270 = vrot.lane.b32.xlu0 %v683, 24
    %v2271 = vpop.permute.xlu0 %2270
    %2272 = vrot.lane.b32.xlu0 %v684, 24
    %v2273 = vpop.permute.xlu0 %2272
    %2274 = vrot.lane.b32.xlu0 %v685, 24
    %v2275 = vpop.permute.xlu0 %2274
    %2276 = vrot.lane.b32.xlu0 %v686, 24
    %v2277 = vpop.permute.xlu0 %2276
    %2278 = vrot.lane.b32.xlu0 %v687, 24
    %v2279 = vpop.permute.xlu0 %2278
    %2280 = vrot.lane.b32.xlu0 %v688, 24
    %v2281 = vpop.permute.xlu0 %2280
    %2282 = vrot.lane.b32.xlu0 %v689, 24
    %v2283 = vpop.permute.xlu0 %2282
    %2284 = vrot.lane.b32.xlu0 %v690, 24
    %v2285 = vpop.permute.xlu0 %2284
    %2286 = vrot.lane.b32.xlu0 %v691, 24
    %v2287 = vpop.permute.xlu0 %2286
    %2288 = vrot.lane.b32.xlu0 %v692, 24
    %v2289 = vpop.permute.xlu0 %2288
    %2290 = vrot.lane.b32.xlu0 %v693, 24
    %v2291 = vpop.permute.xlu0 %2290
    %2292 = vrot.lane.b32.xlu0 %v694, 24
    %v2293 = vpop.permute.xlu0 %2292
    %2294 = vrot.lane.b32.xlu0 %v695, 24
    %v2295 = vpop.permute.xlu0 %2294
    %2424 = vrot.lane.b32.xlu0 %v696, 28
    %v2425 = vpop.permute.xlu0 %2424
    %2426 = vrot.lane.b32.xlu0 %v697, 28
    %v2427 = vpop.permute.xlu0 %2426
    %2428 = vrot.lane.b32.xlu0 %v698, 28
    %v2429 = vpop.permute.xlu0 %2428
    %2430 = vrot.lane.b32.xlu0 %v699, 28
    %v2431 = vpop.permute.xlu0 %2430
    %2432 = vrot.lane.b32.xlu0 %v700, 28
    %v2433 = vpop.permute.xlu0 %2432
    %2434 = vrot.lane.b32.xlu0 %v701, 28
    %v2435 = vpop.permute.xlu0 %2434
    %2436 = vrot.lane.b32.xlu0 %v702, 28
    %v2437 = vpop.permute.xlu0 %2436
    %2438 = vrot.lane.b32.xlu0 %v703, 28
    %v2439 = vpop.permute.xlu0 %2438
    %2440 = vrot.lane.b32.xlu0 %v704, 28
    %v2441 = vpop.permute.xlu0 %2440
    %2442 = vrot.lane.b32.xlu0 %v705, 28
    %v2443 = vpop.permute.xlu0 %2442
    %2444 = vrot.lane.b32.xlu0 %v706, 28
    %v2445 = vpop.permute.xlu0 %2444
    %2446 = vrot.lane.b32.xlu0 %v707, 28
    %v2447 = vpop.permute.xlu0 %2446
    %2448 = vrot.lane.b32.xlu0 %v708, 28
    %v2449 = vpop.permute.xlu0 %2448
    %2450 = vrot.lane.b32.xlu0 %v709, 28
    %v2451 = vpop.permute.xlu0 %2450
    %2452 = vrot.lane.b32.xlu0 %v710, 28
    %v2453 = vpop.permute.xlu0 %2452
    %2454 = vrot.lane.b32.xlu0 %v711, 28
    %v2455 = vpop.permute.xlu0 %2454
    %2456 = vrot.lane.b32.xlu0 %v712, 28
    %v2457 = vpop.permute.xlu0 %2456
    %2458 = vrot.lane.b32.xlu0 %v713, 28
    %v2459 = vpop.permute.xlu0 %2458
    %2460 = vrot.lane.b32.xlu0 %v714, 28
    %v2461 = vpop.permute.xlu0 %2460
    %2462 = vrot.lane.b32.xlu0 %v715, 28
    %v2463 = vpop.permute.xlu0 %2462
    %2464 = vrot.lane.b32.xlu0 %v716, 28
    %v2465 = vpop.permute.xlu0 %2464
    %2466 = vrot.lane.b32.xlu0 %v717, 28
    %v2467 = vpop.permute.xlu0 %2466
    %2468 = vrot.lane.b32.xlu0 %v718, 28
    %v2469 = vpop.permute.xlu0 %2468
    %2470 = vrot.lane.b32.xlu0 %v719, 28
    %v2471 = vpop.permute.xlu0 %2470
    %2472 = vrot.lane.b32.xlu0 %v720, 28
    %v2473 = vpop.permute.xlu0 %2472
    %2474 = vrot.lane.b32.xlu0 %v721, 28
    %v2475 = vpop.permute.xlu0 %2474
    %2476 = vrot.lane.b32.xlu0 %v722, 28
    %v2477 = vpop.permute.xlu0 %2476
    %2478 = vrot.lane.b32.xlu0 %v723, 28
    %v2479 = vpop.permute.xlu0 %2478
    %2480 = vrot.lane.b32.xlu0 %v724, 28
    %v2481 = vpop.permute.xlu0 %2480
    %2482 = vrot.lane.b32.xlu0 %v725, 28
    %v2483 = vpop.permute.xlu0 %2482
    %2484 = vrot.lane.b32.xlu0 %v726, 28
    %v2485 = vpop.permute.xlu0 %2484
    %2486 = vrot.lane.b32.xlu0 %v727, 28
    %v2487 = vpop.permute.xlu0 %2486
    %2488 = vrot.lane.b32.xlu0 %v728, 28
    %v2489 = vpop.permute.xlu0 %2488
    %2490 = vrot.lane.b32.xlu0 %v729, 28
    %v2491 = vpop.permute.xlu0 %2490
    %2492 = vrot.lane.b32.xlu0 %v730, 28
    %v2493 = vpop.permute.xlu0 %2492
    %2494 = vrot.lane.b32.xlu0 %v731, 28
    %v2495 = vpop.permute.xlu0 %2494
    %2496 = vrot.lane.b32.xlu0 %v732, 28
    %v2497 = vpop.permute.xlu0 %2496
    %2498 = vrot.lane.b32.xlu0 %v733, 28
    %v2499 = vpop.permute.xlu0 %2498
    %2500 = vrot.lane.b32.xlu0 %v734, 28
    %v2501 = vpop.permute.xlu0 %2500
    %2502 = vrot.lane.b32.xlu0 %v735, 28
    %v2503 = vpop.permute.xlu0 %2502
    %2504 = vrot.lane.b32.xlu0 %v736, 28
    %v2505 = vpop.permute.xlu0 %2504
    %2506 = vrot.lane.b32.xlu0 %v737, 28
    %v2507 = vpop.permute.xlu0 %2506
    %2508 = vrot.lane.b32.xlu0 %v738, 28
    %v2509 = vpop.permute.xlu0 %2508
    %2510 = vrot.lane.b32.xlu0 %v739, 28
    %v2511 = vpop.permute.xlu0 %2510
    %2512 = vrot.lane.b32.xlu0 %v740, 28
    %v2513 = vpop.permute.xlu0 %2512
    %2514 = vrot.lane.b32.xlu0 %v741, 28
    %v2515 = vpop.permute.xlu0 %2514
    %2516 = vrot.lane.b32.xlu0 %v742, 28
    %v2517 = vpop.permute.xlu0 %2516
    %2518 = vrot.lane.b32.xlu0 %v743, 28
    %v2519 = vpop.permute.xlu0 %2518
    %2520 = vrot.lane.b32.xlu0 %v744, 28
    %v2521 = vpop.permute.xlu0 %2520
    %2522 = vrot.lane.b32.xlu0 %v745, 28
    %v2523 = vpop.permute.xlu0 %2522
    %2524 = vrot.lane.b32.xlu0 %v746, 28
    %v2525 = vpop.permute.xlu0 %2524
    %2526 = vrot.lane.b32.xlu0 %v747, 28
    %v2527 = vpop.permute.xlu0 %2526
    %2528 = vrot.lane.b32.xlu0 %v748, 28
    %v2529 = vpop.permute.xlu0 %2528
    %2530 = vrot.lane.b32.xlu0 %v749, 28
    %v2531 = vpop.permute.xlu0 %2530
    %2532 = vrot.lane.b32.xlu0 %v750, 28
    %v2533 = vpop.permute.xlu0 %2532
    %2534 = vrot.lane.b32.xlu0 %v751, 28
    %v2535 = vpop.permute.xlu0 %2534
    %2536 = vrot.lane.b32.xlu0 %v752, 28
    %v2537 = vpop.permute.xlu0 %2536
    %2538 = vrot.lane.b32.xlu0 %v753, 28
    %v2539 = vpop.permute.xlu0 %2538
    %2540 = vrot.lane.b32.xlu0 %v754, 28
    %v2541 = vpop.permute.xlu0 %2540
    %2542 = vrot.lane.b32.xlu0 %v755, 28
    %v2543 = vpop.permute.xlu0 %2542
    %2544 = vrot.lane.b32.xlu0 %v756, 28
    %v2545 = vpop.permute.xlu0 %2544
    %2546 = vrot.lane.b32.xlu0 %v757, 28
    %v2547 = vpop.permute.xlu0 %2546
    %2548 = vrot.lane.b32.xlu0 %v758, 28
    %v2549 = vpop.permute.xlu0 %2548
    %2550 = vrot.lane.b32.xlu0 %v759, 28
    %v2551 = vpop.permute.xlu0 %2550
    %2680 = vrot.lane.b32.xlu0 %v760, 32
    %v2681 = vpop.permute.xlu0 %2680
    %2682 = vrot.lane.b32.xlu0 %v761, 32
    %v2683 = vpop.permute.xlu0 %2682
    %2684 = vrot.lane.b32.xlu0 %v762, 32
    %v2685 = vpop.permute.xlu0 %2684
    %2686 = vrot.lane.b32.xlu0 %v763, 32
    %v2687 = vpop.permute.xlu0 %2686
    %2688 = vrot.lane.b32.xlu0 %v764, 32
    %v2689 = vpop.permute.xlu0 %2688
    %2690 = vrot.lane.b32.xlu0 %v765, 32
    %v2691 = vpop.permute.xlu0 %2690
    %2692 = vrot.lane.b32.xlu0 %v766, 32
    %v2693 = vpop.permute.xlu0 %2692
    %2694 = vrot.lane.b32.xlu0 %v767, 32
    %v2695 = vpop.permute.xlu0 %2694
    %2696 = vrot.lane.b32.xlu0 %v768, 32
    %v2697 = vpop.permute.xlu0 %2696
    %2698 = vrot.lane.b32.xlu0 %v769, 32
    %v2699 = vpop.permute.xlu0 %2698
    %2700 = vrot.lane.b32.xlu0 %v770, 32
    %v2701 = vpop.permute.xlu0 %2700
    %2702 = vrot.lane.b32.xlu0 %v771, 32
    %v2703 = vpop.permute.xlu0 %2702
    %2704 = vrot.lane.b32.xlu0 %v772, 32
    %v2705 = vpop.permute.xlu0 %2704
    %2706 = vrot.lane.b32.xlu0 %v773, 32
    %v2707 = vpop.permute.xlu0 %2706
    %2708 = vrot.lane.b32.xlu0 %v774, 32
    %v2709 = vpop.permute.xlu0 %2708
    %2710 = vrot.lane.b32.xlu0 %v775, 32
    %v2711 = vpop.permute.xlu0 %2710
    %2712 = vrot.lane.b32.xlu0 %v776, 32
    %v2713 = vpop.permute.xlu0 %2712
    %2714 = vrot.lane.b32.xlu0 %v777, 32
    %v2715 = vpop.permute.xlu0 %2714
    %2716 = vrot.lane.b32.xlu0 %v778, 32
    %v2717 = vpop.permute.xlu0 %2716
    %2718 = vrot.lane.b32.xlu0 %v779, 32
    %v2719 = vpop.permute.xlu0 %2718
    %2720 = vrot.lane.b32.xlu0 %v780, 32
    %v2721 = vpop.permute.xlu0 %2720
    %2722 = vrot.lane.b32.xlu0 %v781, 32
    %v2723 = vpop.permute.xlu0 %2722
    %2724 = vrot.lane.b32.xlu0 %v782, 32
    %v2725 = vpop.permute.xlu0 %2724
    %2726 = vrot.lane.b32.xlu0 %v783, 32
    %v2727 = vpop.permute.xlu0 %2726
    %2728 = vrot.lane.b32.xlu0 %v784, 32
    %v2729 = vpop.permute.xlu0 %2728
    %2730 = vrot.lane.b32.xlu0 %v785, 32
    %v2731 = vpop.permute.xlu0 %2730
    %2732 = vrot.lane.b32.xlu0 %v786, 32
    %v2733 = vpop.permute.xlu0 %2732
    %2734 = vrot.lane.b32.xlu0 %v787, 32
    %v2735 = vpop.permute.xlu0 %2734
    %2736 = vrot.lane.b32.xlu0 %v788, 32
    %v2737 = vpop.permute.xlu0 %2736
    %2738 = vrot.lane.b32.xlu0 %v789, 32
    %v2739 = vpop.permute.xlu0 %2738
    %2740 = vrot.lane.b32.xlu0 %v790, 32
    %v2741 = vpop.permute.xlu0 %2740
    %2742 = vrot.lane.b32.xlu0 %v791, 32
    %v2743 = vpop.permute.xlu0 %2742
    %2744 = vrot.lane.b32.xlu0 %v792, 32
    %v2745 = vpop.permute.xlu0 %2744
    %2746 = vrot.lane.b32.xlu0 %v793, 32
    %v2747 = vpop.permute.xlu0 %2746
    %2748 = vrot.lane.b32.xlu0 %v794, 32
    %v2749 = vpop.permute.xlu0 %2748
    %2750 = vrot.lane.b32.xlu0 %v795, 32
    %v2751 = vpop.permute.xlu0 %2750
    %2752 = vrot.lane.b32.xlu0 %v796, 32
    %v2753 = vpop.permute.xlu0 %2752
    %2754 = vrot.lane.b32.xlu0 %v797, 32
    %v2755 = vpop.permute.xlu0 %2754
    %2756 = vrot.lane.b32.xlu0 %v798, 32
    %v2757 = vpop.permute.xlu0 %2756
    %2758 = vrot.lane.b32.xlu0 %v799, 32
    %v2759 = vpop.permute.xlu0 %2758
    %2760 = vrot.lane.b32.xlu0 %v800, 32
    %v2761 = vpop.permute.xlu0 %2760
    %2762 = vrot.lane.b32.xlu0 %v801, 32
    %v2763 = vpop.permute.xlu0 %2762
    %2764 = vrot.lane.b32.xlu0 %v802, 32
    %v2765 = vpop.permute.xlu0 %2764
    %2766 = vrot.lane.b32.xlu0 %v803, 32
    %v2767 = vpop.permute.xlu0 %2766
    %2768 = vrot.lane.b32.xlu0 %v804, 32
    %v2769 = vpop.permute.xlu0 %2768
    %2770 = vrot.lane.b32.xlu0 %v805, 32
    %v2771 = vpop.permute.xlu0 %2770
    %2772 = vrot.lane.b32.xlu0 %v806, 32
    %v2773 = vpop.permute.xlu0 %2772
    %2774 = vrot.lane.b32.xlu0 %v807, 32
    %v2775 = vpop.permute.xlu0 %2774
    %2776 = vrot.lane.b32.xlu0 %v808, 32
    %v2777 = vpop.permute.xlu0 %2776
    %2778 = vrot.lane.b32.xlu0 %v809, 32
    %v2779 = vpop.permute.xlu0 %2778
    %2780 = vrot.lane.b32.xlu0 %v810, 32
    %v2781 = vpop.permute.xlu0 %2780
    %2782 = vrot.lane.b32.xlu0 %v811, 32
    %v2783 = vpop.permute.xlu0 %2782
    %2784 = vrot.lane.b32.xlu0 %v812, 32
    %v2785 = vpop.permute.xlu0 %2784
    %2786 = vrot.lane.b32.xlu0 %v813, 32
    %v2787 = vpop.permute.xlu0 %2786
    %2788 = vrot.lane.b32.xlu0 %v814, 32
    %v2789 = vpop.permute.xlu0 %2788
    %2790 = vrot.lane.b32.xlu0 %v815, 32
    %v2791 = vpop.permute.xlu0 %2790
    %2792 = vrot.lane.b32.xlu0 %v816, 32
    %v2793 = vpop.permute.xlu0 %2792
    %2794 = vrot.lane.b32.xlu0 %v817, 32
    %v2795 = vpop.permute.xlu0 %2794
    %2796 = vrot.lane.b32.xlu0 %v818, 32
    %v2797 = vpop.permute.xlu0 %2796
    %2798 = vrot.lane.b32.xlu0 %v819, 32
    %v2799 = vpop.permute.xlu0 %2798
    %2800 = vrot.lane.b32.xlu0 %v820, 32
    %v2801 = vpop.permute.xlu0 %2800
    %2802 = vrot.lane.b32.xlu0 %v821, 32
    %v2803 = vpop.permute.xlu0 %2802
    %2804 = vrot.lane.b32.xlu0 %v822, 32
    %v2805 = vpop.permute.xlu0 %2804
    %2806 = vrot.lane.b32.xlu0 %v823, 32
    %v2807 = vpop.permute.xlu0 %2806
    %v2872 = vsel %vm30, %v247, %v889
    %v2873 = vsel %vm30, %v248, %v891
    %v2874 = vsel %vm30, %v249, %v893
    %v2875 = vsel %vm30, %v250, %v895
    %v2876 = vsel %vm30, %v251, %v897
    %v2877 = vsel %vm30, %v252, %v899
    %v2878 = vsel %vm30, %v253, %v901
    %v2879 = vsel %vm30, %v254, %v903
    %v2880 = vsel %vm30, %v255, %v905
    %v2881 = vsel %vm30, %v256, %v907
    %v2882 = vsel %vm30, %v257, %v909
    %v2883 = vsel %vm30, %v258, %v911
    %v2884 = vsel %vm30, %v259, %v913
    %v2885 = vsel %vm30, %v260, %v915
    %v2886 = vsel %vm30, %v261, %v917
    %v2887 = vsel %vm30, %v262, %v919
    %v2888 = vsel %vm30, %v263, %v921
    %v2889 = vsel %vm30, %v264, %v923
    %v2890 = vsel %vm30, %v265, %v925
    %v2891 = vsel %vm30, %v266, %v927
    %v2892 = vsel %vm30, %v267, %v929
    %v2893 = vsel %vm30, %v268, %v931
    %v2894 = vsel %vm30, %v269, %v933
    %v2895 = vsel %vm30, %v270, %v935
    %v2896 = vsel %vm30, %v271, %v937
    %v2897 = vsel %vm30, %v272, %v939
    %v2898 = vsel %vm30, %v273, %v941
    %v2899 = vsel %vm30, %v274, %v943
    %v2900 = vsel %vm30, %v275, %v945
    %v2901 = vsel %vm30, %v276, %v947
    %v2902 = vsel %vm30, %v277, %v949
    %v2903 = vsel %vm30, %v278, %v951
    %v2904 = vsel %vm30, %v279, %v953
    %v2905 = vsel %vm30, %v280, %v955
    %v2906 = vsel %vm30, %v281, %v957
    %v2907 = vsel %vm30, %v282, %v959
    %v2908 = vsel %vm30, %v283, %v961
    %v2909 = vsel %vm30, %v284, %v963
    %v2910 = vsel %vm30, %v285, %v965
    %v2911 = vsel %vm30, %v286, %v967
    %v2912 = vsel %vm30, %v287, %v969
    %v2913 = vsel %vm30, %v288, %v971
    %v2914 = vsel %vm30, %v289, %v973
    %v2915 = vsel %vm30, %v290, %v975
    %v2916 = vsel %vm30, %v291, %v977
    %v2917 = vsel %vm30, %v292, %v979
    %v2918 = vsel %vm30, %v293, %v981
    %v2919 = vsel %vm30, %v294, %v983
    %v2920 = vsel %vm30, %v295, %v985
    %v2921 = vsel %vm30, %v296, %v987
    %v2922 = vsel %vm30, %v297, %v989
    %v2923 = vsel %vm30, %v298, %v991
    %v2924 = vsel %vm30, %v299, %v993
    %v2925 = vsel %vm30, %v300, %v995
    %v2926 = vsel %vm30, %v301, %v997
    %v2927 = vsel %vm30, %v302, %v999
    %v2928 = vsel %vm30, %v303, %v1001
    %v2929 = vsel %vm30, %v304, %v1003
    %v2930 = vsel %vm30, %v305, %v1005
    %v2931 = vsel %vm30, %v306, %v1007
    %v2932 = vsel %vm30, %v307, %v1009
    %v2933 = vsel %vm30, %v308, %v1011
    %v2934 = vsel %vm30, %v309, %v1013
    %v2935 = vsel %vm30, %v310, %v1015
    %vm2936 = vcmask 64512
    %v2937 = vsel %vm2936, %v2872, %v1145
    %v2938 = vsel %vm2936, %v2873, %v1147
    %v2939 = vsel %vm2936, %v2874, %v1149
    %v2940 = vsel %vm2936, %v2875, %v1151
    %v2941 = vsel %vm2936, %v2876, %v1153
    %v2942 = vsel %vm2936, %v2877, %v1155
    %v2943 = vsel %vm2936, %v2878, %v1157
    %v2944 = vsel %vm2936, %v2879, %v1159
    %v2945 = vsel %vm2936, %v2880, %v1161
    %v2946 = vsel %vm2936, %v2881, %v1163
    %v2947 = vsel %vm2936, %v2882, %v1165
    %v2948 = vsel %vm2936, %v2883, %v1167
    %v2949 = vsel %vm2936, %v2884, %v1169
    %v2950 = vsel %vm2936, %v2885, %v1171
    %v2951 = vsel %vm2936, %v2886, %v1173
    %v2952 = vsel %vm2936, %v2887, %v1175
    %v2953 = vsel %vm2936, %v2888, %v1177
    %v2954 = vsel %vm2936, %v2889, %v1179
    %v2955 = vsel %vm2936, %v2890, %v1181
    %v2956 = vsel %vm2936, %v2891, %v1183
    %v2957 = vsel %vm2936, %v2892, %v1185
    %v2958 = vsel %vm2936, %v2893, %v1187
    %v2959 = vsel %vm2936, %v2894, %v1189
    %v2960 = vsel %vm2936, %v2895, %v1191
    %v2961 = vsel %vm2936, %v2896, %v1193
    %v2962 = vsel %vm2936, %v2897, %v1195
    %v2963 = vsel %vm2936, %v2898, %v1197
    %v2964 = vsel %vm2936, %v2899, %v1199
    %v2965 = vsel %vm2936, %v2900, %v1201
    %v2966 = vsel %vm2936, %v2901, %v1203
    %v2967 = vsel %vm2936, %v2902, %v1205
    %v2968 = vsel %vm2936, %v2903, %v1207
    %v2969 = vsel %vm2936, %v2904, %v1209
    %v2970 = vsel %vm2936, %v2905, %v1211
    %v2971 = vsel %vm2936, %v2906, %v1213
    %v2972 = vsel %vm2936, %v2907, %v1215
    %v2973 = vsel %vm2936, %v2908, %v1217
    %v2974 = vsel %vm2936, %v2909, %v1219
    %v2975 = vsel %vm2936, %v2910, %v1221
    %v2976 = vsel %vm2936, %v2911, %v1223
    %v2977 = vsel %vm2936, %v2912, %v1225
    %v2978 = vsel %vm2936, %v2913, %v1227
    %v2979 = vsel %vm2936, %v2914, %v1229
    %v2980 = vsel %vm2936, %v2915, %v1231
    %v2981 = vsel %vm2936, %v2916, %v1233
    %v2982 = vsel %vm2936, %v2917, %v1235
    %v2983 = vsel %vm2936, %v2918, %v1237
    %v2984 = vsel %vm2936, %v2919, %v1239
    %v2985 = vsel %vm2936, %v2920, %v1241
    %v2986 = vsel %vm2936, %v2921, %v1243
    %v2987 = vsel %vm2936, %v2922, %v1245
    %v2988 = vsel %vm2936, %v2923, %v1247
    %v2989 = vsel %vm2936, %v2924, %v1249
    %v2990 = vsel %vm2936, %v2925, %v1251
    %v2991 = vsel %vm2936, %v2926, %v1253
    %v2992 = vsel %vm2936, %v2927, %v1255
    %v2993 = vsel %vm2936, %v2928, %v1257
    %v2994 = vsel %vm2936, %v2929, %v1259
    %v2995 = vsel %vm2936, %v2930, %v1261
    %v2996 = vsel %vm2936, %v2931, %v1263
    %v2997 = vsel %vm2936, %v2932, %v1265
    %v2998 = vsel %vm2936, %v2933, %v1267
    %v2999 = vsel %vm2936, %v2934, %v1269
    %v3000 = vsel %vm2936, %v2935, %v1271
    %vm3001 = vcmask 97280
    %v3002 = vsel %vm3001, %v2937, %v1401
    %v3003 = vsel %vm3001, %v2938, %v1403
    %v3004 = vsel %vm3001, %v2939, %v1405
    %v3005 = vsel %vm3001, %v2940, %v1407
    %v3006 = vsel %vm3001, %v2941, %v1409
    %v3007 = vsel %vm3001, %v2942, %v1411
    %v3008 = vsel %vm3001, %v2943, %v1413
    %v3009 = vsel %vm3001, %v2944, %v1415
    %v3010 = vsel %vm3001, %v2945, %v1417
    %v3011 = vsel %vm3001, %v2946, %v1419
    %v3012 = vsel %vm3001, %v2947, %v1421
    %v3013 = vsel %vm3001, %v2948, %v1423
    %v3014 = vsel %vm3001, %v2949, %v1425
    %v3015 = vsel %vm3001, %v2950, %v1427
    %v3016 = vsel %vm3001, %v2951, %v1429
    %v3017 = vsel %vm3001, %v2952, %v1431
    %v3018 = vsel %vm3001, %v2953, %v1433
    %v3019 = vsel %vm3001, %v2954, %v1435
    %v3020 = vsel %vm3001, %v2955, %v1437
    %v3021 = vsel %vm3001, %v2956, %v1439
    %v3022 = vsel %vm3001, %v2957, %v1441
    %v3023 = vsel %vm3001, %v2958, %v1443
    %v3024 = vsel %vm3001, %v2959, %v1445
    %v3025 = vsel %vm3001, %v2960, %v1447
    %v3026 = vsel %vm3001, %v2961, %v1449
    %v3027 = vsel %vm3001, %v2962, %v1451
    %v3028 = vsel %vm3001, %v2963, %v1453
    %v3029 = vsel %vm3001, %v2964, %v1455
    %v3030 = vsel %vm3001, %v2965, %v1457
    %v3031 = vsel %vm3001, %v2966, %v1459
    %v3032 = vsel %vm3001, %v2967, %v1461
    %v3033 = vsel %vm3001, %v2968, %v1463
    %v3034 = vsel %vm3001, %v2969, %v1465
    %v3035 = vsel %vm3001, %v2970, %v1467
    %v3036 = vsel %vm3001, %v2971, %v1469
    %v3037 = vsel %vm3001, %v2972, %v1471
    %v3038 = vsel %vm3001, %v2973, %v1473
    %v3039 = vsel %vm3001, %v2974, %v1475
    %v3040 = vsel %vm3001, %v2975, %v1477
    %v3041 = vsel %vm3001, %v2976, %v1479
    %v3042 = vsel %vm3001, %v2977, %v1481
    %v3043 = vsel %vm3001, %v2978, %v1483
    %v3044 = vsel %vm3001, %v2979, %v1485
    %v3045 = vsel %vm3001, %v2980, %v1487
    %v3046 = vsel %vm3001, %v2981, %v1489
    %v3047 = vsel %vm3001, %v2982, %v1491
    %v3048 = vsel %vm3001, %v2983, %v1493
    %v3049 = vsel %vm3001, %v2984, %v1495
    %v3050 = vsel %vm3001, %v2985, %v1497
    %v3051 = vsel %vm3001, %v2986, %v1499
    %v3052 = vsel %vm3001, %v2987, %v1501
    %v3053 = vsel %vm3001, %v2988, %v1503
    %v3054 = vsel %vm3001, %v2989, %v1505
    %v3055 = vsel %vm3001, %v2990, %v1507
    %v3056 = vsel %vm3001, %v2991, %v1509
    %v3057 = vsel %vm3001, %v2992, %v1511
    %v3058 = vsel %vm3001, %v2993, %v1513
    %v3059 = vsel %vm3001, %v2994, %v1515
    %v3060 = vsel %vm3001, %v2995, %v1517
    %v3061 = vsel %vm3001, %v2996, %v1519
    %v3062 = vsel %vm3001, %v2997, %v1521
    %v3063 = vsel %vm3001, %v2998, %v1523
    %v3064 = vsel %vm3001, %v2999, %v1525
    %v3065 = vsel %vm3001, %v3000, %v1527
    %vm3066 = vcmask 130048
    %v3067 = vsel %vm3066, %v3002, %v1657
    %v3068 = vsel %vm3066, %v3003, %v1659
    %v3069 = vsel %vm3066, %v3004, %v1661
    %v3070 = vsel %vm3066, %v3005, %v1663
    %v3071 = vsel %vm3066, %v3006, %v1665
    %v3072 = vsel %vm3066, %v3007, %v1667
    %v3073 = vsel %vm3066, %v3008, %v1669
    %v3074 = vsel %vm3066, %v3009, %v1671
    %v3075 = vsel %vm3066, %v3010, %v1673
    %v3076 = vsel %vm3066, %v3011, %v1675
    %v3077 = vsel %vm3066, %v3012, %v1677
    %v3078 = vsel %vm3066, %v3013, %v1679
    %v3079 = vsel %vm3066, %v3014, %v1681
    %v3080 = vsel %vm3066, %v3015, %v1683
    %v3081 = vsel %vm3066, %v3016, %v1685
    %v3082 = vsel %vm3066, %v3017, %v1687
    %v3083 = vsel %vm3066, %v3018, %v1689
    %v3084 = vsel %vm3066, %v3019, %v1691
    %v3085 = vsel %vm3066, %v3020, %v1693
    %v3086 = vsel %vm3066, %v3021, %v1695
    %v3087 = vsel %vm3066, %v3022, %v1697
    %v3088 = vsel %vm3066, %v3023, %v1699
    %v3089 = vsel %vm3066, %v3024, %v1701
    %v3090 = vsel %vm3066, %v3025, %v1703
    %v3091 = vsel %vm3066, %v3026, %v1705
    %v3092 = vsel %vm3066, %v3027, %v1707
    %v3093 = vsel %vm3066, %v3028, %v1709
    %v3094 = vsel %vm3066, %v3029, %v1711
    %v3095 = vsel %vm3066, %v3030, %v1713
    %v3096 = vsel %vm3066, %v3031, %v1715
    %v3097 = vsel %vm3066, %v3032, %v1717
    %v3098 = vsel %vm3066, %v3033, %v1719
    %v3099 = vsel %vm3066, %v3034, %v1721
    %v3100 = vsel %vm3066, %v3035, %v1723
    %v3101 = vsel %vm3066, %v3036, %v1725
    %v3102 = vsel %vm3066, %v3037, %v1727
    %v3103 = vsel %vm3066, %v3038, %v1729
    %v3104 = vsel %vm3066, %v3039, %v1731
    %v3105 = vsel %vm3066, %v3040, %v1733
    %v3106 = vsel %vm3066, %v3041, %v1735
    %v3107 = vsel %vm3066, %v3042, %v1737
    %v3108 = vsel %vm3066, %v3043, %v1739
    %v3109 = vsel %vm3066, %v3044, %v1741
    %v3110 = vsel %vm3066, %v3045, %v1743
    %v3111 = vsel %vm3066, %v3046, %v1745
    %v3112 = vsel %vm3066, %v3047, %v1747
    %v3113 = vsel %vm3066, %v3048, %v1749
    %v3114 = vsel %vm3066, %v3049, %v1751
    %v3115 = vsel %vm3066, %v3050, %v1753
    %v3116 = vsel %vm3066, %v3051, %v1755
    %v3117 = vsel %vm3066, %v3052, %v1757
    %v3118 = vsel %vm3066, %v3053, %v1759
    %v3119 = vsel %vm3066, %v3054, %v1761
    %v3120 = vsel %vm3066, %v3055, %v1763
    %v3121 = vsel %vm3066, %v3056, %v1765
    %v3122 = vsel %vm3066, %v3057, %v1767
    %v3123 = vsel %vm3066, %v3058, %v1769
    %v3124 = vsel %vm3066, %v3059, %v1771
    %v3125 = vsel %vm3066, %v3060, %v1773
    %v3126 = vsel %vm3066, %v3061, %v1775
    %v3127 = vsel %vm3066, %v3062, %v1777
    %v3128 = vsel %vm3066, %v3063, %v1779
    %v3129 = vsel %vm3066, %v3064, %v1781
    %v3130 = vsel %vm3066, %v3065, %v1783
    %vm3131 = vcmask 162816
    %v3132 = vsel %vm3131, %v3067, %v1913
    %v3133 = vsel %vm3131, %v3068, %v1915
    %v3134 = vsel %vm3131, %v3069, %v1917
    %v3135 = vsel %vm3131, %v3070, %v1919
    %v3136 = vsel %vm3131, %v3071, %v1921
    %v3137 = vsel %vm3131, %v3072, %v1923
    %v3138 = vsel %vm3131, %v3073, %v1925
    %v3139 = vsel %vm3131, %v3074, %v1927
    %v3140 = vsel %vm3131, %v3075, %v1929
    %v3141 = vsel %vm3131, %v3076, %v1931
    %v3142 = vsel %vm3131, %v3077, %v1933
    %v3143 = vsel %vm3131, %v3078, %v1935
    %v3144 = vsel %vm3131, %v3079, %v1937
    %v3145 = vsel %vm3131, %v3080, %v1939
    %v3146 = vsel %vm3131, %v3081, %v1941
    %v3147 = vsel %vm3131, %v3082, %v1943
    %v3148 = vsel %vm3131, %v3083, %v1945
    %v3149 = vsel %vm3131, %v3084, %v1947
    %v3150 = vsel %vm3131, %v3085, %v1949
    %v3151 = vsel %vm3131, %v3086, %v1951
    %v3152 = vsel %vm3131, %v3087, %v1953
    %v3153 = vsel %vm3131, %v3088, %v1955
    %v3154 = vsel %vm3131, %v3089, %v1957
    %v3155 = vsel %vm3131, %v3090, %v1959
    %v3156 = vsel %vm3131, %v3091, %v1961
    %v3157 = vsel %vm3131, %v3092, %v1963
    %v3158 = vsel %vm3131, %v3093, %v1965
    %v3159 = vsel %vm3131, %v3094, %v1967
    %v3160 = vsel %vm3131, %v3095, %v1969
    %v3161 = vsel %vm3131, %v3096, %v1971
    %v3162 = vsel %vm3131, %v3097, %v1973
    %v3163 = vsel %vm3131, %v3098, %v1975
    %v3164 = vsel %vm3131, %v3099, %v1977
    %v3165 = vsel %vm3131, %v3100, %v1979
    %v3166 = vsel %vm3131, %v3101, %v1981
    %v3167 = vsel %vm3131, %v3102, %v1983
    %v3168 = vsel %vm3131, %v3103, %v1985
    %v3169 = vsel %vm3131, %v3104, %v1987
    %v3170 = vsel %vm3131, %v3105, %v1989
    %v3171 = vsel %vm3131, %v3106, %v1991
    %v3172 = vsel %vm3131, %v3107, %v1993
    %v3173 = vsel %vm3131, %v3108, %v1995
    %v3174 = vsel %vm3131, %v3109, %v1997
    %v3175 = vsel %vm3131, %v3110, %v1999
    %v3176 = vsel %vm3131, %v3111, %v2001
    %v3177 = vsel %vm3131, %v3112, %v2003
    %v3178 = vsel %vm3131, %v3113, %v2005
    %v3179 = vsel %vm3131, %v3114, %v2007
    %v3180 = vsel %vm3131, %v3115, %v2009
    %v3181 = vsel %vm3131, %v3116, %v2011
    %v3182 = vsel %vm3131, %v3117, %v2013
    %v3183 = vsel %vm3131, %v3118, %v2015
    %v3184 = vsel %vm3131, %v3119, %v2017
    %v3185 = vsel %vm3131, %v3120, %v2019
    %v3186 = vsel %vm3131, %v3121, %v2021
    %v3187 = vsel %vm3131, %v3122, %v2023
    %v3188 = vsel %vm3131, %v3123, %v2025
    %v3189 = vsel %vm3131, %v3124, %v2027
    %v3190 = vsel %vm3131, %v3125, %v2029
    %v3191 = vsel %vm3131, %v3126, %v2031
    %v3192 = vsel %vm3131, %v3127, %v2033
    %v3193 = vsel %vm3131, %v3128, %v2035
    %v3194 = vsel %vm3131, %v3129, %v2037
    %v3195 = vsel %vm3131, %v3130, %v2039
    %vm3196 = vcmask 195584
    %v3197 = vsel %vm3196, %v3132, %v2169
    %v3198 = vsel %vm3196, %v3133, %v2171
    %v3199 = vsel %vm3196, %v3134, %v2173
    %v3200 = vsel %vm3196, %v3135, %v2175
    %v3201 = vsel %vm3196, %v3136, %v2177
    %v3202 = vsel %vm3196, %v3137, %v2179
    %v3203 = vsel %vm3196, %v3138, %v2181
    %v3204 = vsel %vm3196, %v3139, %v2183
    %v3205 = vsel %vm3196, %v3140, %v2185
    %v3206 = vsel %vm3196, %v3141, %v2187
    %v3207 = vsel %vm3196, %v3142, %v2189
    %v3208 = vsel %vm3196, %v3143, %v2191
    %v3209 = vsel %vm3196, %v3144, %v2193
    %v3210 = vsel %vm3196, %v3145, %v2195
    %v3211 = vsel %vm3196, %v3146, %v2197
    %v3212 = vsel %vm3196, %v3147, %v2199
    %v3213 = vsel %vm3196, %v3148, %v2201
    %v3214 = vsel %vm3196, %v3149, %v2203
    %v3215 = vsel %vm3196, %v3150, %v2205
    %v3216 = vsel %vm3196, %v3151, %v2207
    %v3217 = vsel %vm3196, %v3152, %v2209
    %v3218 = vsel %vm3196, %v3153, %v2211
    %v3219 = vsel %vm3196, %v3154, %v2213
    %v3220 = vsel %vm3196, %v3155, %v2215
    %v3221 = vsel %vm3196, %v3156, %v2217
    %v3222 = vsel %vm3196, %v3157, %v2219
    %v3223 = vsel %vm3196, %v3158, %v2221
    %v3224 = vsel %vm3196, %v3159, %v2223
    %v3225 = vsel %vm3196, %v3160, %v2225
    %v3226 = vsel %vm3196, %v3161, %v2227
    %v3227 = vsel %vm3196, %v3162, %v2229
    %v3228 = vsel %vm3196, %v3163, %v2231
    %v3229 = vsel %vm3196, %v3164, %v2233
    %v3230 = vsel %vm3196, %v3165, %v2235
    %v3231 = vsel %vm3196, %v3166, %v2237
    %v3232 = vsel %vm3196, %v3167, %v2239
    %v3233 = vsel %vm3196, %v3168, %v2241
    %v3234 = vsel %vm3196, %v3169, %v2243
    %v3235 = vsel %vm3196, %v3170, %v2245
    %v3236 = vsel %vm3196, %v3171, %v2247
    %v3237 = vsel %vm3196, %v3172, %v2249
    %v3238 = vsel %vm3196, %v3173, %v2251
    %v3239 = vsel %vm3196, %v3174, %v2253
    %v3240 = vsel %vm3196, %v3175, %v2255
    %v3241 = vsel %vm3196, %v3176, %v2257
    %v3242 = vsel %vm3196, %v3177, %v2259
    %v3243 = vsel %vm3196, %v3178, %v2261
    %v3244 = vsel %vm3196, %v3179, %v2263
    %v3245 = vsel %vm3196, %v3180, %v2265
    %v3246 = vsel %vm3196, %v3181, %v2267
    %v3247 = vsel %vm3196, %v3182, %v2269
    %v3248 = vsel %vm3196, %v3183, %v2271
    %v3249 = vsel %vm3196, %v3184, %v2273
    %v3250 = vsel %vm3196, %v3185, %v2275
    %v3251 = vsel %vm3196, %v3186, %v2277
    %v3252 = vsel %vm3196, %v3187, %v2279
    %v3253 = vsel %vm3196, %v3188, %v2281
    %v3254 = vsel %vm3196, %v3189, %v2283
    %v3255 = vsel %vm3196, %v3190, %v2285
    %v3256 = vsel %vm3196, %v3191, %v2287
    %v3257 = vsel %vm3196, %v3192, %v2289
    %v3258 = vsel %vm3196, %v3193, %v2291
    %v3259 = vsel %vm3196, %v3194, %v2293
    %v3260 = vsel %vm3196, %v3195, %v2295
    %vm3261 = vcmask 228352
    %v3262 = vsel %vm3261, %v3197, %v2425
    %v3263 = vsel %vm3261, %v3198, %v2427
    %v3264 = vsel %vm3261, %v3199, %v2429
    %v3265 = vsel %vm3261, %v3200, %v2431
    %v3266 = vsel %vm3261, %v3201, %v2433
    %v3267 = vsel %vm3261, %v3202, %v2435
    %v3268 = vsel %vm3261, %v3203, %v2437
    %v3269 = vsel %vm3261, %v3204, %v2439
    %v3270 = vsel %vm3261, %v3205, %v2441
    %v3271 = vsel %vm3261, %v3206, %v2443
    %v3272 = vsel %vm3261, %v3207, %v2445
    %v3273 = vsel %vm3261, %v3208, %v2447
    %v3274 = vsel %vm3261, %v3209, %v2449
    %v3275 = vsel %vm3261, %v3210, %v2451
    %v3276 = vsel %vm3261, %v3211, %v2453
    %v3277 = vsel %vm3261, %v3212, %v2455
    %v3278 = vsel %vm3261, %v3213, %v2457
    %v3279 = vsel %vm3261, %v3214, %v2459
    %v3280 = vsel %vm3261, %v3215, %v2461
    %v3281 = vsel %vm3261, %v3216, %v2463
    %v3282 = vsel %vm3261, %v3217, %v2465
    %v3283 = vsel %vm3261, %v3218, %v2467
    %v3284 = vsel %vm3261, %v3219, %v2469
    %v3285 = vsel %vm3261, %v3220, %v2471
    %v3286 = vsel %vm3261, %v3221, %v2473
    %v3287 = vsel %vm3261, %v3222, %v2475
    %v3288 = vsel %vm3261, %v3223, %v2477
    %v3289 = vsel %vm3261, %v3224, %v2479
    %v3290 = vsel %vm3261, %v3225, %v2481
    %v3291 = vsel %vm3261, %v3226, %v2483
    %v3292 = vsel %vm3261, %v3227, %v2485
    %v3293 = vsel %vm3261, %v3228, %v2487
    %v3294 = vsel %vm3261, %v3229, %v2489
    %v3295 = vsel %vm3261, %v3230, %v2491
    %v3296 = vsel %vm3261, %v3231, %v2493
    %v3297 = vsel %vm3261, %v3232, %v2495
    %v3298 = vsel %vm3261, %v3233, %v2497
    %v3299 = vsel %vm3261, %v3234, %v2499
    %v3300 = vsel %vm3261, %v3235, %v2501
    %v3301 = vsel %vm3261, %v3236, %v2503
    %v3302 = vsel %vm3261, %v3237, %v2505
    %v3303 = vsel %vm3261, %v3238, %v2507
    %v3304 = vsel %vm3261, %v3239, %v2509
    %v3305 = vsel %vm3261, %v3240, %v2511
    %v3306 = vsel %vm3261, %v3241, %v2513
    %v3307 = vsel %vm3261, %v3242, %v2515
    %v3308 = vsel %vm3261, %v3243, %v2517
    %v3309 = vsel %vm3261, %v3244, %v2519
    %v3310 = vsel %vm3261, %v3245, %v2521
    %v3311 = vsel %vm3261, %v3246, %v2523
    %v3312 = vsel %vm3261, %v3247, %v2525
    %v3313 = vsel %vm3261, %v3248, %v2527
    %v3314 = vsel %vm3261, %v3249, %v2529
    %v3315 = vsel %vm3261, %v3250, %v2531
    %v3316 = vsel %vm3261, %v3251, %v2533
    %v3317 = vsel %vm3261, %v3252, %v2535
    %v3318 = vsel %vm3261, %v3253, %v2537
    %v3319 = vsel %vm3261, %v3254, %v2539
    %v3320 = vsel %vm3261, %v3255, %v2541
    %v3321 = vsel %vm3261, %v3256, %v2543
    %v3322 = vsel %vm3261, %v3257, %v2545
    %v3323 = vsel %vm3261, %v3258, %v2547
    %v3324 = vsel %vm3261, %v3259, %v2549
    %v3325 = vsel %vm3261, %v3260, %v2551
    %vm3326 = vcmask 261120
    %v3327 = vsel %vm3326, %v3262, %v2681
    %v3328 = vsel %vm3326, %v3263, %v2683
    %v3329 = vsel %vm3326, %v3264, %v2685
    %v3330 = vsel %vm3326, %v3265, %v2687
    %v3331 = vsel %vm3326, %v3266, %v2689
    %v3332 = vsel %vm3326, %v3267, %v2691
    %v3333 = vsel %vm3326, %v3268, %v2693
    %v3334 = vsel %vm3326, %v3269, %v2695
    %v3335 = vsel %vm3326, %v3270, %v2697
    %v3336 = vsel %vm3326, %v3271, %v2699
    %v3337 = vsel %vm3326, %v3272, %v2701
    %v3338 = vsel %vm3326, %v3273, %v2703
    %v3339 = vsel %vm3326, %v3274, %v2705
    %v3340 = vsel %vm3326, %v3275, %v2707
    %v3341 = vsel %vm3326, %v3276, %v2709
    %v3342 = vsel %vm3326, %v3277, %v2711
    %v3343 = vsel %vm3326, %v3278, %v2713
    %v3344 = vsel %vm3326, %v3279, %v2715
    %v3345 = vsel %vm3326, %v3280, %v2717
    %v3346 = vsel %vm3326, %v3281, %v2719
    %v3347 = vsel %vm3326, %v3282, %v2721
    %v3348 = vsel %vm3326, %v3283, %v2723
    %v3349 = vsel %vm3326, %v3284, %v2725
    %v3350 = vsel %vm3326, %v3285, %v2727
    %v3351 = vsel %vm3326, %v3286, %v2729
    %v3352 = vsel %vm3326, %v3287, %v2731
    %v3353 = vsel %vm3326, %v3288, %v2733
    %v3354 = vsel %vm3326, %v3289, %v2735
    %v3355 = vsel %vm3326, %v3290, %v2737
    %v3356 = vsel %vm3326, %v3291, %v2739
    %v3357 = vsel %vm3326, %v3292, %v2741
    %v3358 = vsel %vm3326, %v3293, %v2743
    %v3359 = vsel %vm3326, %v3294, %v2745
    %v3360 = vsel %vm3326, %v3295, %v2747
    %v3361 = vsel %vm3326, %v3296, %v2749
    %v3362 = vsel %vm3326, %v3297, %v2751
    %v3363 = vsel %vm3326, %v3298, %v2753
    %v3364 = vsel %vm3326, %v3299, %v2755
    %v3365 = vsel %vm3326, %v3300, %v2757
    %v3366 = vsel %vm3326, %v3301, %v2759
    %v3367 = vsel %vm3326, %v3302, %v2761
    %v3368 = vsel %vm3326, %v3303, %v2763
    %v3369 = vsel %vm3326, %v3304, %v2765
    %v3370 = vsel %vm3326, %v3305, %v2767
    %v3371 = vsel %vm3326, %v3306, %v2769
    %v3372 = vsel %vm3326, %v3307, %v2771
    %v3373 = vsel %vm3326, %v3308, %v2773
    %v3374 = vsel %vm3326, %v3309, %v2775
    %v3375 = vsel %vm3326, %v3310, %v2777
    %v3376 = vsel %vm3326, %v3311, %v2779
    %v3377 = vsel %vm3326, %v3312, %v2781
    %v3378 = vsel %vm3326, %v3313, %v2783
    %v3379 = vsel %vm3326, %v3314, %v2785
    %v3380 = vsel %vm3326, %v3315, %v2787
    %v3381 = vsel %vm3326, %v3316, %v2789
    %v3382 = vsel %vm3326, %v3317, %v2791
    %v3383 = vsel %vm3326, %v3318, %v2793
    %v3384 = vsel %vm3326, %v3319, %v2795
    %v3385 = vsel %vm3326, %v3320, %v2797
    %v3386 = vsel %vm3326, %v3321, %v2799
    %v3387 = vsel %vm3326, %v3322, %v2801
    %v3388 = vsel %vm3326, %v3323, %v2803
    %v3389 = vsel %vm3326, %v3324, %v2805
    %v3390 = vsel %vm3326, %v3325, %v2807
    %v3391 = vld [vmem:[%s2] sm:$0xff]
    %v3392 = vld [vmem:[%s2 + $0x8] sm:$0xff]
    %v3393 = vld [vmem:[%s2 + $0x10] sm:$0xff]
    %v3394 = vld [vmem:[%s2 + $0x18] sm:$0xff]
    %v3395 = vld [vmem:[%s2 + $0x20] sm:$0xf]
    %vm3396 = vcmask 293888
    %v3398 = vsel %vm3396, %v3327, 0
    %v3401 = vsel %vm3396, %v3328, 0
    %v3404 = vsel %vm3396, %v3329, 0
    %v3407 = vsel %vm3396, %v3330, 0
    %v3410 = vsel %vm3396, %v3331, 0
    %v3413 = vsel %vm3396, %v3332, 0
    %v3416 = vsel %vm3396, %v3333, 0
    %v3419 = vsel %vm3396, %v3334, 0
    %v3422 = vsel %vm3396, %v3335, 0
    %v3425 = vsel %vm3396, %v3336, 0
    %v3428 = vsel %vm3396, %v3337, 0
    %v3431 = vsel %vm3396, %v3338, 0
    %v3434 = vsel %vm3396, %v3339, 0
    %v3437 = vsel %vm3396, %v3340, 0
    %v3440 = vsel %vm3396, %v3341, 0
    %v3443 = vsel %vm3396, %v3342, 0
    %v3446 = vsel %vm3396, %v3343, 0
    %v3449 = vsel %vm3396, %v3344, 0
    %v3452 = vsel %vm3396, %v3345, 0
    %v3455 = vsel %vm3396, %v3346, 0
    %v3458 = vsel %vm3396, %v3347, 0
    %v3461 = vsel %vm3396, %v3348, 0
    %v3464 = vsel %vm3396, %v3349, 0
    %v3467 = vsel %vm3396, %v3350, 0
    %v3470 = vsel %vm3396, %v3351, 0
    %v3473 = vsel %vm3396, %v3352, 0
    %v3476 = vsel %vm3396, %v3353, 0
    %v3479 = vsel %vm3396, %v3354, 0
    %v3482 = vsel %vm3396, %v3355, 0
    %v3485 = vsel %vm3396, %v3356, 0
    %v3488 = vsel %vm3396, %v3357, 0
    %v3491 = vsel %vm3396, %v3358, 0
    %v3494 = vsel %vm3396, %v3359, 0
    %v3497 = vsel %vm3396, %v3360, 0
    %v3500 = vsel %vm3396, %v3361, 0
    %v3503 = vsel %vm3396, %v3362, 0
    %v3506 = vsel %vm3396, %v3363, 0
    %v3509 = vsel %vm3396, %v3364, 0
    %v3512 = vsel %vm3396, %v3365, 0
    %v3515 = vsel %vm3396, %v3366, 0
    %v3518 = vsel %vm3396, %v3367, 0
    %v3521 = vsel %vm3396, %v3368, 0
    %v3524 = vsel %vm3396, %v3369, 0
    %v3527 = vsel %vm3396, %v3370, 0
    %v3530 = vsel %vm3396, %v3371, 0
    %v3533 = vsel %vm3396, %v3372, 0
    %v3536 = vsel %vm3396, %v3373, 0
    %v3539 = vsel %vm3396, %v3374, 0
    %v3542 = vsel %vm3396, %v3375, 0
    %v3545 = vsel %vm3396, %v3376, 0
    %v3548 = vsel %vm3396, %v3377, 0
    %v3551 = vsel %vm3396, %v3378, 0
    %v3554 = vsel %vm3396, %v3379, 0
    %v3557 = vsel %vm3396, %v3380, 0
    %v3560 = vsel %vm3396, %v3381, 0
    %v3563 = vsel %vm3396, %v3382, 0
    %v3566 = vsel %vm3396, %v3383, 0
    %v3569 = vsel %vm3396, %v3384, 0
    %v3572 = vsel %vm3396, %v3385, 0
    %v3575 = vsel %vm3396, %v3386, 0
    %v3578 = vsel %vm3396, %v3387, 0
    %v3581 = vsel %vm3396, %v3388, 0
    %v3584 = vsel %vm3396, %v3389, 0
    %v3587 = vsel %vm3396, %v3390, 0
    %vm3589 = vcmask 1043456
    %v3591 = vsel %vm3589, %v3395, 0
    %3593 = vmatprep.subr.mxu0 0.0
    %3594 = vmatpush1.msra.mxu0 %v3391
    %3595 = vmatprep.subr.mxu0 0.0
    %3596 = vmatpush1.msra.mxu0 %v3392
    %3597 = vmatprep.subr.mxu0 0.0
    %3598 = vmatpush1.msra.mxu0 %v3393
    %3599 = vmatprep.subr.mxu0 0.0
    %3600 = vmatpush1.msra.mxu0 %v3394
    %3601 = vmatprep.subr.mxu0 0.0
    %3602 = vmatpush1.msra.mxu0 %v3591
    %3603 = vmatprep.subr.mxu0 0.0
    %3604 = vmatpush1.msra.mxu0 0.0
    %3605 = vmatprep.subr.mxu0 0.0
    %3606 = vmatpush1.msra.mxu0 0.0
    %3607 = vmatprep.subr.mxu0 0.0
    %3608 = vmatpush1.msra.mxu0 0.0
    %3609 = vmatprep.subr.mxu0 0.0
    %3610 = vmatpush1.msra.mxu0 0.0
    %3611 = vmatprep.subr.mxu0 0.0
    %3612 = vmatpush1.msra.mxu0 0.0
    %3613 = vmatprep.subr.mxu0 0.0
    %3614 = vmatpush1.msra.mxu0 0.0
    %3615 = vmatprep.subr.mxu0 0.0
    %3616 = vmatpush1.msra.mxu0 0.0
    %3617 = vmatprep.subr.mxu0 0.0
    %3618 = vmatpush1.msra.mxu0 0.0
    %3619 = vmatprep.subr.mxu0 0.0
    %3620 = vmatpush1.msra.mxu0 0.0
    %3621 = vmatprep.subr.mxu0 0.0
    %3622 = vmatpush1.msra.mxu0 0.0
    %3623 = vmatprep.subr.mxu0 0.0
    %3624 = vmatpush1.msra.mxu0 0.0
    %3625 = vmatprep.subr.mxu0 0.0
    %3626 = vmatpush1.msra.mxu0 0.0
    %3627 = vmatprep.subr.mxu0 0.0
    %3628 = vmatpush1.msra.mxu0 0.0
    %3629 = vmatprep.subr.mxu0 0.0
    %3630 = vmatpush1.msra.mxu0 0.0
    %3631 = vmatprep.subr.mxu0 0.0
    %3632 = vmatpush1.msra.mxu0 0.0
    %3633 = vmatprep.subr.mxu0 0.0
    %3634 = vmatpush1.msra.mxu0 0.0
    %3635 = vmatprep.subr.mxu0 0.0
    %3636 = vmatpush1.msra.mxu0 0.0
    %3637 = vmatprep.subr.mxu0 0.0
    %3638 = vmatpush1.msra.mxu0 0.0
    %3639 = vmatprep.subr.mxu0 0.0
    %3640 = vmatpush1.msra.mxu0 0.0
    %3641 = vmatprep.subr.mxu0 0.0
    %3642 = vmatpush1.msra.mxu0 0.0
    %3643 = vmatprep.subr.mxu0 0.0
    %3644 = vmatpush1.msra.mxu0 0.0
    %3645 = vmatprep.subr.mxu0 0.0
    %3646 = vmatpush1.msra.mxu0 0.0
    %3647 = vmatprep.subr.mxu0 0.0
    %3648 = vmatpush1.msra.mxu0 0.0
    %3649 = vmatprep.subr.mxu0 0.0
    %3650 = vmatpush1.msra.mxu0 0.0
    %3651 = vmatprep.subr.mxu0 0.0
    %3652 = vmatpush1.msra.mxu0 0.0
    %3653 = vmatprep.subr.mxu0 0.0
    %3654 = vmatpush1.msra.mxu0 0.0
    %3655 = vmatprep.subr.mxu0 0.0
    %3656 = vmatpush1.msra.mxu0 0.0
    %3657 = vmatprep.mubr.f32.mxu0 0.0
    %3658 = vmatmul.mubr.f32.gmra.mrb[0].mxu0 %v3398
    %v3659 = vpop.f32.mrb[0].mxu0
    %v3660 = vadd.f32 0.0, %v3659
    %v3661 = vpop.f32.mrb[0].mxu0
    %3662 = vmatprep.mubr.f32.mxu0 0.0
    %3663 = vmatmul.mubr.f32.gmra.mrb[0].mxu0 %v3401
    %v3664 = vpop.f32.mrb[0].mxu0
    %v3665 = vadd.f32 0.0, %v3664
    %v3666 = vpop.f32.mrb[0].mxu0
    %3667 = vmatprep.mubr.f32.mxu0 0.0
    %3668 = vmatmul.mubr.f32.gmra.mrb[0].mxu0 %v3404
    %v3669 = vpop.f32.mrb[0].mxu0
    %v3670 = vadd.f32 0.0, %v3669
    %v3671 = vpop.f32.mrb[0].mxu0
    %3672 = vmatprep.mubr.f32.mxu0 0.0
    %3673 = vmatmul.mubr.f32.gmra.mrb[0].mxu0 %v3407
    %v3674 = vpop.f32.mrb[0].mxu0
    %v3675 = vadd.f32 0.0, %v3674
    %v3676 = vpop.f32.mrb[0].mxu0
    %3677 = vmatprep.mubr.f32.mxu0 0.0
    %3678 = vmatmul.mubr.f32.gmra.mrb[0].mxu0 %v3410
    %v3679 = vpop.f32.mrb[0].mxu0
    %v3680 = vadd.f32 0.0, %v3679
    %v3681 = vpop.f32.mrb[0].mxu0
    %3682 = vmatprep.mubr.f32.mxu0 0.0
    %3683 = vmatmul.mubr.f32.gmra.mrb[0].mxu0 %v3413
    %v3684 = vpop.f32.mrb[0].mxu0
    %v3685 = vadd.f32 0.0, %v3684
    %v3686 = vpop.f32.mrb[0].mxu0
    %3687 = vmatprep.mubr.f32.mxu0 0.0
    %3688 = vmatmul.mubr.f32.gmra.mrb[0].mxu0 %v3416
    %v3689 = vpop.f32.mrb[0].mxu0
    %v3690 = vadd.f32 0.0, %v3689
    %v3691 = vpop.f32.mrb[0].mxu0
    %3692 = vmatprep.mubr.f32.mxu0 0.0
    %3693 = vmatmul.mubr.f32.gmra.mrb[0].mxu0 %v3419
    %v3694 = vpop.f32.mrb[0].mxu0
    %v3695 = vadd.f32 0.0, %v3694
    %v3696 = vpop.f32.mrb[0].mxu0
    %3697 = vmatprep.mubr.f32.mxu0 0.0
    %3698 = vmatmul.mubr.f32.gmra.mrb[0].mxu0 %v3422
    %v3699 = vpop.f32.mrb[0].mxu0
    %v3700 = vadd.f32 0.0, %v3699
    %v3701 = vpop.f32.mrb[0].mxu0
    %3702 = vmatprep.mubr.f32.mxu0 0.0
    %3703 = vmatmul.mubr.f32.gmra.mrb[0].mxu0 %v3425
    %v3704 = vpop.f32.mrb[0].mxu0
    %v3705 = vadd.f32 0.0, %v3704
    %v3706 = vpop.f32.mrb[0].mxu0
    %3707 = vmatprep.mubr.f32.mxu0 0.0
    %3708 = vmatmul.mubr.f32.gmra.mrb[0].mxu0 %v3428
    %v3709 = vpop.f32.mrb[0].mxu0
    %v3710 = vadd.f32 0.0, %v3709
    %v3711 = vpop.f32.mrb[0].mxu0
    %3712 = vmatprep.mubr.f32.mxu0 0.0
    %3713 = vmatmul.mubr.f32.gmra.mrb[0].mxu0 %v3431
    %v3714 = vpop.f32.mrb[0].mxu0
    %v3715 = vadd.f32 0.0, %v3714
    %v3716 = vpop.f32.mrb[0].mxu0
    %3717 = vmatprep.mubr.f32.mxu0 0.0
    %3718 = vmatmul.mubr.f32.gmra.mrb[0].mxu0 %v3434
    %v3719 = vpop.f32.mrb[0].mxu0
    %v3720 = vadd.f32 0.0, %v3719
    %v3721 = vpop.f32.mrb[0].mxu0
    %3722 = vmatprep.mubr.f32.mxu0 0.0
    %3723 = vmatmul.mubr.f32.gmra.mrb[0].mxu0 %v3437
    %v3724 = vpop.f32.mrb[0].mxu0
    %v3725 = vadd.f32 0.0, %v3724
    %v3726 = vpop.f32.mrb[0].mxu0
    %3727 = vmatprep.mubr.f32.mxu0 0.0
    %3728 = vmatmul.mubr.f32.gmra.mrb[0].mxu0 %v3440
    %v3729 = vpop.f32.mrb[0].mxu0
    %v3730 = vadd.f32 0.0, %v3729
    %v3731 = vpop.f32.mrb[0].mxu0
    %3732 = vmatprep.mubr.f32.mxu0 0.0
    %3733 = vmatmul.mubr.f32.gmra.mrb[0].mxu0 %v3443
    %v3734 = vpop.f32.mrb[0].mxu0
    %v3735 = vadd.f32 0.0, %v3734
    %v3736 = vpop.f32.mrb[0].mxu0
    %3737 = vmatprep.mubr.f32.mxu0 0.0
    %3738 = vmatmul.mubr.f32.gmra.mrb[0].mxu0 %v3446
    %v3739 = vpop.f32.mrb[0].mxu0
    %v3740 = vadd.f32 0.0, %v3739
    %v3741 = vpop.f32.mrb[0].mxu0
    %3742 = vmatprep.mubr.f32.mxu0 0.0
    %3743 = vmatmul.mubr.f32.gmra.mrb[0].mxu0 %v3449
    %v3744 = vpop.f32.mrb[0].mxu0
    %v3745 = vadd.f32 0.0, %v3744
    %v3746 = vpop.f32.mrb[0].mxu0
    %3747 = vmatprep.mubr.f32.mxu0 0.0
    %3748 = vmatmul.mubr.f32.gmra.mrb[0].mxu0 %v3452
    %v3749 = vpop.f32.mrb[0].mxu0
    %v3750 = vadd.f32 0.0, %v3749
    %v3751 = vpop.f32.mrb[0].mxu0
    %3752 = vmatprep.mubr.f32.mxu0 0.0
    %3753 = vmatmul.mubr.f32.gmra.mrb[0].mxu0 %v3455
    %v3754 = vpop.f32.mrb[0].mxu0
    %v3755 = vadd.f32 0.0, %v3754
    %v3756 = vpop.f32.mrb[0].mxu0
    %3757 = vmatprep.mubr.f32.mxu0 0.0
    %3758 = vmatmul.mubr.f32.gmra.mrb[0].mxu0 %v3458
    %v3759 = vpop.f32.mrb[0].mxu0
    %v3760 = vadd.f32 0.0, %v3759
    %v3761 = vpop.f32.mrb[0].mxu0
    %3762 = vmatprep.mubr.f32.mxu0 0.0
    %3763 = vmatmul.mubr.f32.gmra.mrb[0].mxu0 %v3461
    %v3764 = vpop.f32.mrb[0].mxu0
    %v3765 = vadd.f32 0.0, %v3764
    %v3766 = vpop.f32.mrb[0].mxu0
    %3767 = vmatprep.mubr.f32.mxu0 0.0
    %3768 = vmatmul.mubr.f32.gmra.mrb[0].mxu0 %v3464
    %v3769 = vpop.f32.mrb[0].mxu0
    %v3770 = vadd.f32 0.0, %v3769
    %v3771 = vpop.f32.mrb[0].mxu0
    %3772 = vmatprep.mubr.f32.mxu0 0.0
    %3773 = vmatmul.mubr.f32.gmra.mrb[0].mxu0 %v3467
    %v3774 = vpop.f32.mrb[0].mxu0
    %v3775 = vadd.f32 0.0, %v3774
    %v3776 = vpop.f32.mrb[0].mxu0
    %3777 = vmatprep.mubr.f32.mxu0 0.0
    %3778 = vmatmul.mubr.f32.gmra.mrb[0].mxu0 %v3470
    %v3779 = vpop.f32.mrb[0].mxu0
    %v3780 = vadd.f32 0.0, %v3779
    %v3781 = vpop.f32.mrb[0].mxu0
    %3782 = vmatprep.mubr.f32.mxu0 0.0
    %3783 = vmatmul.mubr.f32.gmra.mrb[0].mxu0 %v3473
    %v3784 = vpop.f32.mrb[0].mxu0
    %v3785 = vadd.f32 0.0, %v3784
    %v3786 = vpop.f32.mrb[0].mxu0
    %3787 = vmatprep.mubr.f32.mxu0 0.0
    %3788 = vmatmul.mubr.f32.gmra.mrb[0].mxu0 %v3476
    %v3789 = vpop.f32.mrb[0].mxu0
    %v3790 = vadd.f32 0.0, %v3789
    %v3791 = vpop.f32.mrb[0].mxu0
    %3792 = vmatprep.mubr.f32.mxu0 0.0
    %3793 = vmatmul.mubr.f32.gmra.mrb[0].mxu0 %v3479
    %v3794 = vpop.f32.mrb[0].mxu0
    %v3795 = vadd.f32 0.0, %v3794
    %v3796 = vpop.f32.mrb[0].mxu0
    %3797 = vmatprep.mubr.f32.mxu0 0.0
    %3798 = vmatmul.mubr.f32.gmra.mrb[0].mxu0 %v3482
    %v3799 = vpop.f32.mrb[0].mxu0
    %v3800 = vadd.f32 0.0, %v3799
    %v3801 = vpop.f32.mrb[0].mxu0
    %3802 = vmatprep.mubr.f32.mxu0 0.0
    %3803 = vmatmul.mubr.f32.gmra.mrb[0].mxu0 %v3485
    %v3804 = vpop.f32.mrb[0].mxu0
    %v3805 = vadd.f32 0.0, %v3804
    %v3806 = vpop.f32.mrb[0].mxu0
    %3807 = vmatprep.mubr.f32.mxu0 0.0
    %3808 = vmatmul.mubr.f32.gmra.mrb[0].mxu0 %v3488
    %v3809 = vpop.f32.mrb[0].mxu0
    %v3810 = vadd.f32 0.0, %v3809
    %v3811 = vpop.f32.mrb[0].mxu0
    %3812 = vmatprep.mubr.f32.mxu0 0.0
    %3813 = vmatmul.mubr.f32.gmra.mrb[0].mxu0 %v3491
    %v3814 = vpop.f32.mrb[0].mxu0
    %v3815 = vadd.f32 0.0, %v3814
    %v3816 = vpop.f32.mrb[0].mxu0
    %3817 = vmatprep.mubr.f32.mxu0 0.0
    %3818 = vmatmul.mubr.f32.gmra.mrb[0].mxu0 %v3494
    %v3819 = vpop.f32.mrb[0].mxu0
    %v3820 = vadd.f32 0.0, %v3819
    %v3821 = vpop.f32.mrb[0].mxu0
    %3822 = vmatprep.mubr.f32.mxu0 0.0
    %3823 = vmatmul.mubr.f32.gmra.mrb[0].mxu0 %v3497
    %v3824 = vpop.f32.mrb[0].mxu0
    %v3825 = vadd.f32 0.0, %v3824
    %v3826 = vpop.f32.mrb[0].mxu0
    %3827 = vmatprep.mubr.f32.mxu0 0.0
    %3828 = vmatmul.mubr.f32.gmra.mrb[0].mxu0 %v3500
    %v3829 = vpop.f32.mrb[0].mxu0
    %v3830 = vadd.f32 0.0, %v3829
    %v3831 = vpop.f32.mrb[0].mxu0
    %3832 = vmatprep.mubr.f32.mxu0 0.0
    %3833 = vmatmul.mubr.f32.gmra.mrb[0].mxu0 %v3503
    %v3834 = vpop.f32.mrb[0].mxu0
    %v3835 = vadd.f32 0.0, %v3834
    %v3836 = vpop.f32.mrb[0].mxu0
    %3837 = vmatprep.mubr.f32.mxu0 0.0
    %3838 = vmatmul.mubr.f32.gmra.mrb[0].mxu0 %v3506
    %v3839 = vpop.f32.mrb[0].mxu0
    %v3840 = vadd.f32 0.0, %v3839
    %v3841 = vpop.f32.mrb[0].mxu0
    %3842 = vmatprep.mubr.f32.mxu0 0.0
    %3843 = vmatmul.mubr.f32.gmra.mrb[0].mxu0 %v3509
    %v3844 = vpop.f32.mrb[0].mxu0
    %v3845 = vadd.f32 0.0, %v3844
    %v3846 = vpop.f32.mrb[0].mxu0
    %3847 = vmatprep.mubr.f32.mxu0 0.0
    %3848 = vmatmul.mubr.f32.gmra.mrb[0].mxu0 %v3512
    %v3849 = vpop.f32.mrb[0].mxu0
    %v3850 = vadd.f32 0.0, %v3849
    %v3851 = vpop.f32.mrb[0].mxu0
    %3852 = vmatprep.mubr.f32.mxu0 0.0
    %3853 = vmatmul.mubr.f32.gmra.mrb[0].mxu0 %v3515
    %v3854 = vpop.f32.mrb[0].mxu0
    %v3855 = vadd.f32 0.0, %v3854
    %v3856 = vpop.f32.mrb[0].mxu0
    %3857 = vmatprep.mubr.f32.mxu0 0.0
    %3858 = vmatmul.mubr.f32.gmra.mrb[0].mxu0 %v3518
    %v3859 = vpop.f32.mrb[0].mxu0
    %v3860 = vadd.f32 0.0, %v3859
    %v3861 = vpop.f32.mrb[0].mxu0
    %3862 = vmatprep.mubr.f32.mxu0 0.0
    %3863 = vmatmul.mubr.f32.gmra.mrb[0].mxu0 %v3521
    %v3864 = vpop.f32.mrb[0].mxu0
    %v3865 = vadd.f32 0.0, %v3864
    %v3866 = vpop.f32.mrb[0].mxu0
    %3867 = vmatprep.mubr.f32.mxu0 0.0
    %3868 = vmatmul.mubr.f32.gmra.mrb[0].mxu0 %v3524
    %v3869 = vpop.f32.mrb[0].mxu0
    %v3870 = vadd.f32 0.0, %v3869
    %v3871 = vpop.f32.mrb[0].mxu0
    %3872 = vmatprep.mubr.f32.mxu0 0.0
    %3873 = vmatmul.mubr.f32.gmra.mrb[0].mxu0 %v3527
    %v3874 = vpop.f32.mrb[0].mxu0
    %v3875 = vadd.f32 0.0, %v3874
    %v3876 = vpop.f32.mrb[0].mxu0
    %3877 = vmatprep.mubr.f32.mxu0 0.0
    %3878 = vmatmul.mubr.f32.gmra.mrb[0].mxu0 %v3530
    %v3879 = vpop.f32.mrb[0].mxu0
    %v3880 = vadd.f32 0.0, %v3879
    %v3881 = vpop.f32.mrb[0].mxu0
    %3882 = vmatprep.mubr.f32.mxu0 0.0
    %3883 = vmatmul.mubr.f32.gmra.mrb[0].mxu0 %v3533
    %v3884 = vpop.f32.mrb[0].mxu0
    %v3885 = vadd.f32 0.0, %v3884
    %v3886 = vpop.f32.mrb[0].mxu0
    %3887 = vmatprep.mubr.f32.mxu0 0.0
    %3888 = vmatmul.mubr.f32.gmra.mrb[0].mxu0 %v3536
    %v3889 = vpop.f32.mrb[0].mxu0
    %v3890 = vadd.f32 0.0, %v3889
    %v3891 = vpop.f32.mrb[0].mxu0
    %3892 = vmatprep.mubr.f32.mxu0 0.0
    %3893 = vmatmul.mubr.f32.gmra.mrb[0].mxu0 %v3539
    %v3894 = vpop.f32.mrb[0].mxu0
    %v3895 = vadd.f32 0.0, %v3894
    %v3896 = vpop.f32.mrb[0].mxu0
    %3897 = vmatprep.mubr.f32.mxu0 0.0
    %3898 = vmatmul.mubr.f32.gmra.mrb[0].mxu0 %v3542
    %v3899 = vpop.f32.mrb[0].mxu0
    %v3900 = vadd.f32 0.0, %v3899
    %v3901 = vpop.f32.mrb[0].mxu0
    %3902 = vmatprep.mubr.f32.mxu0 0.0
    %3903 = vmatmul.mubr.f32.gmra.mrb[0].mxu0 %v3545
    %v3904 = vpop.f32.mrb[0].mxu0
    %v3905 = vadd.f32 0.0, %v3904
    %v3906 = vpop.f32.mrb[0].mxu0
    %3907 = vmatprep.mubr.f32.mxu0 0.0
    %3908 = vmatmul.mubr.f32.gmra.mrb[0].mxu0 %v3548
    %v3909 = vpop.f32.mrb[0].mxu0
    %v3910 = vadd.f32 0.0, %v3909
    %v3911 = vpop.f32.mrb[0].mxu0
    %3912 = vmatprep.mubr.f32.mxu0 0.0
    %3913 = vmatmul.mubr.f32.gmra.mrb[0].mxu0 %v3551
    %v3914 = vpop.f32.mrb[0].mxu0
    %v3915 = vadd.f32 0.0, %v3914
    %v3916 = vpop.f32.mrb[0].mxu0
    %3917 = vmatprep.mubr.f32.mxu0 0.0
    %3918 = vmatmul.mubr.f32.gmra.mrb[0].mxu0 %v3554
    %v3919 = vpop.f32.mrb[0].mxu0
    %v3920 = vadd.f32 0.0, %v3919
    %v3921 = vpop.f32.mrb[0].mxu0
    %3922 = vmatprep.mubr.f32.mxu0 0.0
    %3923 = vmatmul.mubr.f32.gmra.mrb[0].mxu0 %v3557
    %v3924 = vpop.f32.mrb[0].mxu0
    %v3925 = vadd.f32 0.0, %v3924
    %v3926 = vpop.f32.mrb[0].mxu0
    %3927 = vmatprep.mubr.f32.mxu0 0.0
    %3928 = vmatmul.mubr.f32.gmra.mrb[0].mxu0 %v3560
    %v3929 = vpop.f32.mrb[0].mxu0
    %v3930 = vadd.f32 0.0, %v3929
    %v3931 = vpop.f32.mrb[0].mxu0
    %3932 = vmatprep.mubr.f32.mxu0 0.0
    %3933 = vmatmul.mubr.f32.gmra.mrb[0].mxu0 %v3563
    %v3934 = vpop.f32.mrb[0].mxu0
    %v3935 = vadd.f32 0.0, %v3934
    %v3936 = vpop.f32.mrb[0].mxu0
    %3937 = vmatprep.mubr.f32.mxu0 0.0
    %3938 = vmatmul.mubr.f32.gmra.mrb[0].mxu0 %v3566
    %v3939 = vpop.f32.mrb[0].mxu0
    %v3940 = vadd.f32 0.0, %v3939
    %v3941 = vpop.f32.mrb[0].mxu0
    %3942 = vmatprep.mubr.f32.mxu0 0.0
    %3943 = vmatmul.mubr.f32.gmra.mrb[0].mxu0 %v3569
    %v3944 = vpop.f32.mrb[0].mxu0
    %v3945 = vadd.f32 0.0, %v3944
    %v3946 = vpop.f32.mrb[0].mxu0
    %3947 = vmatprep.mubr.f32.mxu0 0.0
    %3948 = vmatmul.mubr.f32.gmra.mrb[0].mxu0 %v3572
    %v3949 = vpop.f32.mrb[0].mxu0
    %v3950 = vadd.f32 0.0, %v3949
    %v3951 = vpop.f32.mrb[0].mxu0
    %3952 = vmatprep.mubr.f32.mxu0 0.0
    %3953 = vmatmul.mubr.f32.gmra.mrb[0].mxu0 %v3575
    %v3954 = vpop.f32.mrb[0].mxu0
    %v3955 = vadd.f32 0.0, %v3954
    %v3956 = vpop.f32.mrb[0].mxu0
    %3957 = vmatprep.mubr.f32.mxu0 0.0
    %3958 = vmatmul.mubr.f32.gmra.mrb[0].mxu0 %v3578
    %v3959 = vpop.f32.mrb[0].mxu0
    %v3960 = vadd.f32 0.0, %v3959
    %v3961 = vpop.f32.mrb[0].mxu0
    %3962 = vmatprep.mubr.f32.mxu0 0.0
    %3963 = vmatmul.mubr.f32.gmra.mrb[0].mxu0 %v3581
    %v3964 = vpop.f32.mrb[0].mxu0
    %v3965 = vadd.f32 0.0, %v3964
    %v3966 = vpop.f32.mrb[0].mxu0
    %3967 = vmatprep.mubr.f32.mxu0 0.0
    %3968 = vmatmul.mubr.f32.gmra.mrb[0].mxu0 %v3584
    %v3969 = vpop.f32.mrb[0].mxu0
    %v3970 = vadd.f32 0.0, %v3969
    %v3971 = vpop.f32.mrb[0].mxu0
    %3972 = vmatprep.mubr.f32.mxu0 0.0
    %3973 = vmatmul.mubr.f32.gmra.mrb[0].mxu0 %v3587
    %v3974 = vpop.f32.mrb[0].mxu0
    %v3975 = vadd.f32 0.0, %v3974
    %v3976 = vpop.f32.mrb[0].mxu0
    %3977 = vdwg.mxu0
    %v3978 = vsel %vm2936, %v3660, 0.0
    %v3979 = vsel %vm2936, %v3665, 0.0
    %v3980 = vadd.f32 %v3978, %v3979
    %v3981 = vsel %vm2936, %v3670, 0.0
    %v3982 = vadd.f32 %v3980, %v3981
    %v3983 = vsel %vm2936, %v3675, 0.0
    %v3984 = vadd.f32 %v3982, %v3983
    %v3985 = vsel %vm2936, %v3680, 0.0
    %v3986 = vadd.f32 %v3984, %v3985
    %v3987 = vsel %vm2936, %v3685, 0.0
    %v3988 = vadd.f32 %v3986, %v3987
    %v3989 = vsel %vm2936, %v3690, 0.0
    %v3990 = vadd.f32 %v3988, %v3989
    %v3991 = vsel %vm2936, %v3695, 0.0
    %v3992 = vadd.f32 %v3990, %v3991
    %v3993 = vsel %vm2936, %v3700, 0.0
    %v3994 = vadd.f32 %v3992, %v3993
    %v3995 = vsel %vm2936, %v3705, 0.0
    %v3996 = vadd.f32 %v3994, %v3995
    %v3997 = vsel %vm2936, %v3710, 0.0
    %v3998 = vadd.f32 %v3996, %v3997
    %v3999 = vsel %vm2936, %v3715, 0.0
    %v4000 = vadd.f32 %v3998, %v3999
    %v4001 = vsel %vm2936, %v3720, 0.0
    %v4002 = vadd.f32 %v4000, %v4001
    %v4003 = vsel %vm2936, %v3725, 0.0
    %v4004 = vadd.f32 %v4002, %v4003
    %v4005 = vsel %vm2936, %v3730, 0.0
    %v4006 = vadd.f32 %v4004, %v4005
    %v4007 = vsel %vm2936, %v3735, 0.0
    %v4008 = vadd.f32 %v4006, %v4007
    %v4009 = vsel %vm2936, %v3740, 0.0
    %v4010 = vadd.f32 %v4008, %v4009
    %v4011 = vsel %vm2936, %v3745, 0.0
    %v4012 = vadd.f32 %v4010, %v4011
    %v4013 = vsel %vm2936, %v3750, 0.0
    %v4014 = vadd.f32 %v4012, %v4013
    %v4015 = vsel %vm2936, %v3755, 0.0
    %v4016 = vadd.f32 %v4014, %v4015
    %v4017 = vsel %vm2936, %v3760, 0.0
    %v4018 = vadd.f32 %v4016, %v4017
    %v4019 = vsel %vm2936, %v3765, 0.0
    %v4020 = vadd.f32 %v4018, %v4019
    %v4021 = vsel %vm2936, %v3770, 0.0
    %v4022 = vadd.f32 %v4020, %v4021
    %v4023 = vsel %vm2936, %v3775, 0.0
    %v4024 = vadd.f32 %v4022, %v4023
    %v4025 = vsel %vm2936, %v3780, 0.0
    %v4026 = vadd.f32 %v4024, %v4025
    %v4027 = vsel %vm2936, %v3785, 0.0
    %v4028 = vadd.f32 %v4026, %v4027
    %v4029 = vsel %vm2936, %v3790, 0.0
    %v4030 = vadd.f32 %v4028, %v4029
    %v4031 = vsel %vm2936, %v3795, 0.0
    %v4032 = vadd.f32 %v4030, %v4031
    %v4033 = vsel %vm2936, %v3800, 0.0
    %v4034 = vadd.f32 %v4032, %v4033
    %v4035 = vsel %vm2936, %v3805, 0.0
    %v4036 = vadd.f32 %v4034, %v4035
    %v4037 = vsel %vm2936, %v3810, 0.0
    %v4038 = vadd.f32 %v4036, %v4037
    %v4039 = vsel %vm2936, %v3815, 0.0
    %v4040 = vadd.f32 %v4038, %v4039
    %v4041 = vsel %vm2936, %v3820, 0.0
    %v4042 = vadd.f32 %v4040, %v4041
    %v4043 = vsel %vm2936, %v3825, 0.0
    %v4044 = vadd.f32 %v4042, %v4043
    %v4045 = vsel %vm2936, %v3830, 0.0
    %v4046 = vadd.f32 %v4044, %v4045
    %v4047 = vsel %vm2936, %v3835, 0.0
    %v4048 = vadd.f32 %v4046, %v4047
    %v4049 = vsel %vm2936, %v3840, 0.0
    %v4050 = vadd.f32 %v4048, %v4049
    %v4051 = vsel %vm2936, %v3845, 0.0
    %v4052 = vadd.f32 %v4050, %v4051
    %v4053 = vsel %vm2936, %v3850, 0.0
    %v4054 = vadd.f32 %v4052, %v4053
    %v4055 = vsel %vm2936, %v3855, 0.0
    %v4056 = vadd.f32 %v4054, %v4055
    %v4057 = vsel %vm2936, %v3860, 0.0
    %v4058 = vadd.f32 %v4056, %v4057
    %v4059 = vsel %vm2936, %v3865, 0.0
    %v4060 = vadd.f32 %v4058, %v4059
    %v4061 = vsel %vm2936, %v3870, 0.0
    %v4062 = vadd.f32 %v4060, %v4061
    %v4063 = vsel %vm2936, %v3875, 0.0
    %v4064 = vadd.f32 %v4062, %v4063
    %v4065 = vsel %vm2936, %v3880, 0.0
    %v4066 = vadd.f32 %v4064, %v4065
    %v4067 = vsel %vm2936, %v3885, 0.0
    %v4068 = vadd.f32 %v4066, %v4067
    %v4069 = vsel %vm2936, %v3890, 0.0
    %v4070 = vadd.f32 %v4068, %v4069
    %v4071 = vsel %vm2936, %v3895, 0.0
    %v4072 = vadd.f32 %v4070, %v4071
    %v4073 = vsel %vm2936, %v3900, 0.0
    %v4074 = vadd.f32 %v4072, %v4073
    %v4075 = vsel %vm2936, %v3905, 0.0
    %v4076 = vadd.f32 %v4074, %v4075
    %v4077 = vsel %vm2936, %v3910, 0.0
    %v4078 = vadd.f32 %v4076, %v4077
    %v4079 = vsel %vm2936, %v3915, 0.0
    %v4080 = vadd.f32 %v4078, %v4079
    %v4081 = vsel %vm2936, %v3920, 0.0
    %v4082 = vadd.f32 %v4080, %v4081
    %v4083 = vsel %vm2936, %v3925, 0.0
    %v4084 = vadd.f32 %v4082, %v4083
    %v4085 = vsel %vm2936, %v3930, 0.0
    %v4086 = vadd.f32 %v4084, %v4085
    %v4087 = vsel %vm2936, %v3935, 0.0
    %v4088 = vadd.f32 %v4086, %v4087
    %v4089 = vsel %vm2936, %v3940, 0.0
    %v4090 = vadd.f32 %v4088, %v4089
    %v4091 = vsel %vm2936, %v3945, 0.0
    %v4092 = vadd.f32 %v4090, %v4091
    %v4093 = vsel %vm2936, %v3950, 0.0
    %v4094 = vadd.f32 %v4092, %v4093
    %v4095 = vsel %vm2936, %v3955, 0.0
    %v4096 = vadd.f32 %v4094, %v4095
    %v4097 = vsel %vm2936, %v3960, 0.0
    %v4098 = vadd.f32 %v4096, %v4097
    %v4099 = vsel %vm2936, %v3965, 0.0
    %v4100 = vadd.f32 %v4098, %v4099
    %v4101 = vsel %vm2936, %v3970, 0.0
    %v4102 = vadd.f32 %v4100, %v4101
    %v4103 = vsel %vm2936, %v3975, 0.0
    %v4104 = vadd.f32 %v4102, %v4103
    %v4105 = vrot.slane %v4104, 4
    %v4106 = vadd.f32 %v4104, %v4105
    %v4107 = vrot.slane %v4106, 2
    %v4108 = vadd.f32 %v4106, %v4107
    %v4109 = vrot.slane %v4108, 1
    %v4110 = vadd.f32 %v4108, %v4109
    %v4111 = vmul.f32 %v3660, %v3660
    %v4112 = vmul.f32 %v3665, %v3665
    %v4113 = vmul.f32 %v3670, %v3670
    %v4114 = vmul.f32 %v3675, %v3675
    %v4115 = vmul.f32 %v3680, %v3680
    %v4116 = vmul.f32 %v3685, %v3685
    %v4117 = vmul.f32 %v3690, %v3690
    %v4118 = vmul.f32 %v3695, %v3695
    %v4119 = vmul.f32 %v3700, %v3700
    %v4120 = vmul.f32 %v3705, %v3705
    %v4121 = vmul.f32 %v3710, %v3710
    %v4122 = vmul.f32 %v3715, %v3715
    %v4123 = vmul.f32 %v3720, %v3720
    %v4124 = vmul.f32 %v3725, %v3725
    %v4125 = vmul.f32 %v3730, %v3730
    %v4126 = vmul.f32 %v3735, %v3735
    %v4127 = vmul.f32 %v3740, %v3740
    %v4128 = vmul.f32 %v3745, %v3745
    %v4129 = vmul.f32 %v3750, %v3750
    %v4130 = vmul.f32 %v3755, %v3755
    %v4131 = vmul.f32 %v3760, %v3760
    %v4132 = vmul.f32 %v3765, %v3765
    %v4133 = vmul.f32 %v3770, %v3770
    %v4134 = vmul.f32 %v3775, %v3775
    %v4135 = vmul.f32 %v3780, %v3780
    %v4136 = vmul.f32 %v3785, %v3785
    %v4137 = vmul.f32 %v3790, %v3790
    %v4138 = vmul.f32 %v3795, %v3795
    %v4139 = vmul.f32 %v3800, %v3800
    %v4140 = vmul.f32 %v3805, %v3805
    %v4141 = vmul.f32 %v3810, %v3810
    %v4142 = vmul.f32 %v3815, %v3815
    %v4143 = vmul.f32 %v3820, %v3820
    %v4144 = vmul.f32 %v3825, %v3825
    %v4145 = vmul.f32 %v3830, %v3830
    %v4146 = vmul.f32 %v3835, %v3835
    %v4147 = vmul.f32 %v3840, %v3840
    %v4148 = vmul.f32 %v3845, %v3845
    %v4149 = vmul.f32 %v3850, %v3850
    %v4150 = vmul.f32 %v3855, %v3855
    %v4151 = vmul.f32 %v3860, %v3860
    %v4152 = vmul.f32 %v3865, %v3865
    %v4153 = vmul.f32 %v3870, %v3870
    %v4154 = vmul.f32 %v3875, %v3875
    %v4155 = vmul.f32 %v3880, %v3880
    %v4156 = vmul.f32 %v3885, %v3885
    %v4157 = vmul.f32 %v3890, %v3890
    %v4158 = vmul.f32 %v3895, %v3895
    %v4159 = vmul.f32 %v3900, %v3900
    %v4160 = vmul.f32 %v3905, %v3905
    %v4161 = vmul.f32 %v3910, %v3910
    %v4162 = vmul.f32 %v3915, %v3915
    %v4163 = vmul.f32 %v3920, %v3920
    %v4164 = vmul.f32 %v3925, %v3925
    %v4165 = vmul.f32 %v3930, %v3930
    %v4166 = vmul.f32 %v3935, %v3935
    %v4167 = vmul.f32 %v3940, %v3940
    %v4168 = vmul.f32 %v3945, %v3945
    %v4169 = vmul.f32 %v3950, %v3950
    %v4170 = vmul.f32 %v3955, %v3955
    %v4171 = vmul.f32 %v3960, %v3960
    %v4172 = vmul.f32 %v3965, %v3965
    %v4173 = vmul.f32 %v3970, %v3970
    %v4174 = vmul.f32 %v3975, %v3975
    %v4175 = vsel %vm2936, %v4111, 0.0
    %v4176 = vsel %vm2936, %v4112, 0.0
    %v4177 = vadd.f32 %v4175, %v4176
    %v4178 = vsel %vm2936, %v4113, 0.0
    %v4179 = vadd.f32 %v4177, %v4178
    %v4180 = vsel %vm2936, %v4114, 0.0
    %v4181 = vadd.f32 %v4179, %v4180
    %v4182 = vsel %vm2936, %v4115, 0.0
    %v4183 = vadd.f32 %v4181, %v4182
    %v4184 = vsel %vm2936, %v4116, 0.0
    %v4185 = vadd.f32 %v4183, %v4184
    %v4186 = vsel %vm2936, %v4117, 0.0
    %v4187 = vadd.f32 %v4185, %v4186
    %v4188 = vsel %vm2936, %v4118, 0.0
    %v4189 = vadd.f32 %v4187, %v4188
    %v4190 = vsel %vm2936, %v4119, 0.0
    %v4191 = vadd.f32 %v4189, %v4190
    %v4192 = vsel %vm2936, %v4120, 0.0
    %v4193 = vadd.f32 %v4191, %v4192
    %v4194 = vsel %vm2936, %v4121, 0.0
    %v4195 = vadd.f32 %v4193, %v4194
    %v4196 = vsel %vm2936, %v4122, 0.0
    %v4197 = vadd.f32 %v4195, %v4196
    %v4198 = vsel %vm2936, %v4123, 0.0
    %v4199 = vadd.f32 %v4197, %v4198
    %v4200 = vsel %vm2936, %v4124, 0.0
    %v4201 = vadd.f32 %v4199, %v4200
    %v4202 = vsel %vm2936, %v4125, 0.0
    %v4203 = vadd.f32 %v4201, %v4202
    %v4204 = vsel %vm2936, %v4126, 0.0
    %v4205 = vadd.f32 %v4203, %v4204
    %v4206 = vsel %vm2936, %v4127, 0.0
    %v4207 = vadd.f32 %v4205, %v4206
    %v4208 = vsel %vm2936, %v4128, 0.0
    %v4209 = vadd.f32 %v4207, %v4208
    %v4210 = vsel %vm2936, %v4129, 0.0
    %v4211 = vadd.f32 %v4209, %v4210
    %v4212 = vsel %vm2936, %v4130, 0.0
    %v4213 = vadd.f32 %v4211, %v4212
    %v4214 = vsel %vm2936, %v4131, 0.0
    %v4215 = vadd.f32 %v4213, %v4214
    %v4216 = vsel %vm2936, %v4132, 0.0
    %v4217 = vadd.f32 %v4215, %v4216
    %v4218 = vsel %vm2936, %v4133, 0.0
    %v4219 = vadd.f32 %v4217, %v4218
    %v4220 = vsel %vm2936, %v4134, 0.0
    %v4221 = vadd.f32 %v4219, %v4220
    %v4222 = vsel %vm2936, %v4135, 0.0
    %v4223 = vadd.f32 %v4221, %v4222
    %v4224 = vsel %vm2936, %v4136, 0.0
    %v4225 = vadd.f32 %v4223, %v4224
    %v4226 = vsel %vm2936, %v4137, 0.0
    %v4227 = vadd.f32 %v4225, %v4226
    %v4228 = vsel %vm2936, %v4138, 0.0
    %v4229 = vadd.f32 %v4227, %v4228
    %v4230 = vsel %vm2936, %v4139, 0.0
    %v4231 = vadd.f32 %v4229, %v4230
    %v4232 = vsel %vm2936, %v4140, 0.0
    %v4233 = vadd.f32 %v4231, %v4232
    %v4234 = vsel %vm2936, %v4141, 0.0
    %v4235 = vadd.f32 %v4233, %v4234
    %v4236 = vsel %vm2936, %v4142, 0.0
    %v4237 = vadd.f32 %v4235, %v4236
    %v4238 = vsel %vm2936, %v4143, 0.0
    %v4239 = vadd.f32 %v4237, %v4238
    %v4240 = vsel %vm2936, %v4144, 0.0
    %v4241 = vadd.f32 %v4239, %v4240
    %v4242 = vsel %vm2936, %v4145, 0.0
    %v4243 = vadd.f32 %v4241, %v4242
    %v4244 = vsel %vm2936, %v4146, 0.0
    %v4245 = vadd.f32 %v4243, %v4244
    %v4246 = vsel %vm2936, %v4147, 0.0
    %v4247 = vadd.f32 %v4245, %v4246
    %v4248 = vsel %vm2936, %v4148, 0.0
    %v4249 = vadd.f32 %v4247, %v4248
    %v4250 = vsel %vm2936, %v4149, 0.0
    %v4251 = vadd.f32 %v4249, %v4250
    %v4252 = vsel %vm2936, %v4150, 0.0
    %v4253 = vadd.f32 %v4251, %v4252
    %v4254 = vsel %vm2936, %v4151, 0.0
    %v4255 = vadd.f32 %v4253, %v4254
    %v4256 = vsel %vm2936, %v4152, 0.0
    %v4257 = vadd.f32 %v4255, %v4256
    %v4258 = vsel %vm2936, %v4153, 0.0
    %v4259 = vadd.f32 %v4257, %v4258
    %v4260 = vsel %vm2936, %v4154, 0.0
    %v4261 = vadd.f32 %v4259, %v4260
    %v4262 = vsel %vm2936, %v4155, 0.0
    %v4263 = vadd.f32 %v4261, %v4262
    %v4264 = vsel %vm2936, %v4156, 0.0
    %v4265 = vadd.f32 %v4263, %v4264
    %v4266 = vsel %vm2936, %v4157, 0.0
    %v4267 = vadd.f32 %v4265, %v4266
    %v4268 = vsel %vm2936, %v4158, 0.0
    %v4269 = vadd.f32 %v4267, %v4268
    %v4270 = vsel %vm2936, %v4159, 0.0
    %v4271 = vadd.f32 %v4269, %v4270
    %v4272 = vsel %vm2936, %v4160, 0.0
    %v4273 = vadd.f32 %v4271, %v4272
    %v4274 = vsel %vm2936, %v4161, 0.0
    %v4275 = vadd.f32 %v4273, %v4274
    %v4276 = vsel %vm2936, %v4162, 0.0
    %v4277 = vadd.f32 %v4275, %v4276
    %v4278 = vsel %vm2936, %v4163, 0.0
    %v4279 = vadd.f32 %v4277, %v4278
    %v4280 = vsel %vm2936, %v4164, 0.0
    %v4281 = vadd.f32 %v4279, %v4280
    %v4282 = vsel %vm2936, %v4165, 0.0
    %v4283 = vadd.f32 %v4281, %v4282
    %v4284 = vsel %vm2936, %v4166, 0.0
    %v4285 = vadd.f32 %v4283, %v4284
    %v4286 = vsel %vm2936, %v4167, 0.0
    %v4287 = vadd.f32 %v4285, %v4286
    %v4288 = vsel %vm2936, %v4168, 0.0
    %v4289 = vadd.f32 %v4287, %v4288
    %v4290 = vsel %vm2936, %v4169, 0.0
    %v4291 = vadd.f32 %v4289, %v4290
    %v4292 = vsel %vm2936, %v4170, 0.0
    %v4293 = vadd.f32 %v4291, %v4292
    %v4294 = vsel %vm2936, %v4171, 0.0
    %v4295 = vadd.f32 %v4293, %v4294
    %v4296 = vsel %vm2936, %v4172, 0.0
    %v4297 = vadd.f32 %v4295, %v4296
    %v4298 = vsel %vm2936, %v4173, 0.0
    %v4299 = vadd.f32 %v4297, %v4298
    %v4300 = vsel %vm2936, %v4174, 0.0
    %v4301 = vadd.f32 %v4299, %v4300
    %v4302 = vrot.slane %v4301, 4
    %v4303 = vadd.f32 %v4301, %v4302
    %v4304 = vrot.slane %v4303, 2
    %v4305 = vadd.f32 %v4303, %v4304
    %v4306 = vrot.slane %v4305, 1
    %v4307 = vadd.f32 %v4305, %v4306
    %v4308 = vmul.f32 %v4110, 0.001953125
    %v4309 = vmul.f32 %v4307, 0.001953125
    %v4310 = vmul.f32 %v4308, %v4308
    %v4311 = vsub.f32 %v4309, %v4310
    %v4312 = vld [vmem:[%s3] sm:$0x1]
    %v4313 = vadd.f32 %v4311, 1e-05
    %v4314 = vrsqrt.pop %v4313
    %v4315 = vmul.f32 %v4312, %v4314
    %v4317 = vlaneseq
    %v4318 = vshrl.u32 %v4317, 7
    %v4319 = vsub.s32 0, %v4318
    %v4320 = vrot.slane %v4315, %v4319
    %v4322 = vmul.f32 %v3660, %v4320
    %v4323 = vmul.f32 %v3665, %v4320
    %v4324 = vmul.f32 %v3670, %v4320
    %v4325 = vmul.f32 %v3675, %v4320
    %v4326 = vmul.f32 %v3680, %v4320
    %v4327 = vmul.f32 %v3685, %v4320
    %v4328 = vmul.f32 %v3690, %v4320
    %v4329 = vmul.f32 %v3695, %v4320
    %v4330 = vmul.f32 %v3700, %v4320
    %v4331 = vmul.f32 %v3705, %v4320
    %v4332 = vmul.f32 %v3710, %v4320
    %v4333 = vmul.f32 %v3715, %v4320
    %v4334 = vmul.f32 %v3720, %v4320
    %v4335 = vmul.f32 %v3725, %v4320
    %v4336 = vmul.f32 %v3730, %v4320
    %v4337 = vmul.f32 %v3735, %v4320
    %v4338 = vmul.f32 %v3740, %v4320
    %v4339 = vmul.f32 %v3745, %v4320
    %v4340 = vmul.f32 %v3750, %v4320
    %v4341 = vmul.f32 %v3755, %v4320
    %v4342 = vmul.f32 %v3760, %v4320
    %v4343 = vmul.f32 %v3765, %v4320
    %v4344 = vmul.f32 %v3770, %v4320
    %v4345 = vmul.f32 %v3775, %v4320
    %v4346 = vmul.f32 %v3780, %v4320
    %v4347 = vmul.f32 %v3785, %v4320
    %v4348 = vmul.f32 %v3790, %v4320
    %v4349 = vmul.f32 %v3795, %v4320
    %v4350 = vmul.f32 %v3800, %v4320
    %v4351 = vmul.f32 %v3805, %v4320
    %v4352 = vmul.f32 %v3810, %v4320
    %v4353 = vmul.f32 %v3815, %v4320
    %v4354 = vmul.f32 %v3820, %v4320
    %v4355 = vmul.f32 %v3825, %v4320
    %v4356 = vmul.f32 %v3830, %v4320
    %v4357 = vmul.f32 %v3835, %v4320
    %v4358 = vmul.f32 %v3840, %v4320
    %v4359 = vmul.f32 %v3845, %v4320
    %v4360 = vmul.f32 %v3850, %v4320
    %v4361 = vmul.f32 %v3855, %v4320
    %v4362 = vmul.f32 %v3860, %v4320
    %v4363 = vmul.f32 %v3865, %v4320
    %v4364 = vmul.f32 %v3870, %v4320
    %v4365 = vmul.f32 %v3875, %v4320
    %v4366 = vmul.f32 %v3880, %v4320
    %v4367 = vmul.f32 %v3885, %v4320
    %v4368 = vmul.f32 %v3890, %v4320
    %v4369 = vmul.f32 %v3895, %v4320
    %v4370 = vmul.f32 %v3900, %v4320
    %v4371 = vmul.f32 %v3905, %v4320
    %v4372 = vmul.f32 %v3910, %v4320
    %v4373 = vmul.f32 %v3915, %v4320
    %v4374 = vmul.f32 %v3920, %v4320
    %v4375 = vmul.f32 %v3925, %v4320
    %v4376 = vmul.f32 %v3930, %v4320
    %v4377 = vmul.f32 %v3935, %v4320
    %v4378 = vmul.f32 %v3940, %v4320
    %v4379 = vmul.f32 %v3945, %v4320
    %v4380 = vmul.f32 %v3950, %v4320
    %v4381 = vmul.f32 %v3955, %v4320
    %v4382 = vmul.f32 %v3960, %v4320
    %v4383 = vmul.f32 %v3965, %v4320
    %v4384 = vmul.f32 %v3970, %v4320
    %v4385 = vmul.f32 %v3975, %v4320
    %v4386 = vld [vmem:[%s4] sm:$0x1]
    %v4387 = vmul.f32 %v4308, %v4315
    %v4388 = vsub.f32 %v4386, %v4387
    %v4390 = vlaneseq
    %v4391 = vshrl.u32 %v4390, 7
    %v4392 = vsub.s32 0, %v4391
    %v4393 = vrot.slane %v4388, %v4392
    %v4395 = vadd.f32 %v4322, %v4393
    %v4396 = vadd.f32 %v4323, %v4393
    %v4397 = vadd.f32 %v4324, %v4393
    %v4398 = vadd.f32 %v4325, %v4393
    %v4399 = vadd.f32 %v4326, %v4393
    %v4400 = vadd.f32 %v4327, %v4393
    %v4401 = vadd.f32 %v4328, %v4393
    %v4402 = vadd.f32 %v4329, %v4393
    %v4403 = vadd.f32 %v4330, %v4393
    %v4404 = vadd.f32 %v4331, %v4393
    %v4405 = vadd.f32 %v4332, %v4393
    %v4406 = vadd.f32 %v4333, %v4393
    %v4407 = vadd.f32 %v4334, %v4393
    %v4408 = vadd.f32 %v4335, %v4393
    %v4409 = vadd.f32 %v4336, %v4393
    %v4410 = vadd.f32 %v4337, %v4393
    %v4411 = vadd.f32 %v4338, %v4393
    %v4412 = vadd.f32 %v4339, %v4393
    %v4413 = vadd.f32 %v4340, %v4393
    %v4414 = vadd.f32 %v4341, %v4393
    %v4415 = vadd.f32 %v4342, %v4393
    %v4416 = vadd.f32 %v4343, %v4393
    %v4417 = vadd.f32 %v4344, %v4393
    %v4418 = vadd.f32 %v4345, %v4393
    %v4419 = vadd.f32 %v4346, %v4393
    %v4420 = vadd.f32 %v4347, %v4393
    %v4421 = vadd.f32 %v4348, %v4393
    %v4422 = vadd.f32 %v4349, %v4393
    %v4423 = vadd.f32 %v4350, %v4393
    %v4424 = vadd.f32 %v4351, %v4393
    %v4425 = vadd.f32 %v4352, %v4393
    %v4426 = vadd.f32 %v4353, %v4393
    %v4427 = vadd.f32 %v4354, %v4393
    %v4428 = vadd.f32 %v4355, %v4393
    %v4429 = vadd.f32 %v4356, %v4393
    %v4430 = vadd.f32 %v4357, %v4393
    %v4431 = vadd.f32 %v4358, %v4393
    %v4432 = vadd.f32 %v4359, %v4393
    %v4433 = vadd.f32 %v4360, %v4393
    %v4434 = vadd.f32 %v4361, %v4393
    %v4435 = vadd.f32 %v4362, %v4393
    %v4436 = vadd.f32 %v4363, %v4393
    %v4437 = vadd.f32 %v4364, %v4393
    %v4438 = vadd.f32 %v4365, %v4393
    %v4439 = vadd.f32 %v4366, %v4393
    %v4440 = vadd.f32 %v4367, %v4393
    %v4441 = vadd.f32 %v4368, %v4393
    %v4442 = vadd.f32 %v4369, %v4393
    %v4443 = vadd.f32 %v4370, %v4393
    %v4444 = vadd.f32 %v4371, %v4393
    %v4445 = vadd.f32 %v4372, %v4393
    %v4446 = vadd.f32 %v4373, %v4393
    %v4447 = vadd.f32 %v4374, %v4393
    %v4448 = vadd.f32 %v4375, %v4393
    %v4449 = vadd.f32 %v4376, %v4393
    %v4450 = vadd.f32 %v4377, %v4393
    %v4451 = vadd.f32 %v4378, %v4393
    %v4452 = vadd.f32 %v4379, %v4393
    %v4453 = vadd.f32 %v4380, %v4393
    %v4454 = vadd.f32 %v4381, %v4393
    %v4455 = vadd.f32 %v4382, %v4393
    %v4456 = vadd.f32 %v4383, %v4393
    %v4457 = vadd.f32 %v4384, %v4393
    %v4458 = vadd.f32 %v4385, %v4393
    %v4459 = vxor.u32 %v4395, 2147483648
    %v4460 = vxor.u32 %v4396, 2147483648
    %v4461 = vxor.u32 %v4397, 2147483648
    %v4462 = vxor.u32 %v4398, 2147483648
    %v4463 = vxor.u32 %v4399, 2147483648
    %v4464 = vxor.u32 %v4400, 2147483648
    %v4465 = vxor.u32 %v4401, 2147483648
    %v4466 = vxor.u32 %v4402, 2147483648
    %v4467 = vxor.u32 %v4403, 2147483648
    %v4468 = vxor.u32 %v4404, 2147483648
    %v4469 = vxor.u32 %v4405, 2147483648
    %v4470 = vxor.u32 %v4406, 2147483648
    %v4471 = vxor.u32 %v4407, 2147483648
    %v4472 = vxor.u32 %v4408, 2147483648
    %v4473 = vxor.u32 %v4409, 2147483648
    %v4474 = vxor.u32 %v4410, 2147483648
    %v4475 = vxor.u32 %v4411, 2147483648
    %v4476 = vxor.u32 %v4412, 2147483648
    %v4477 = vxor.u32 %v4413, 2147483648
    %v4478 = vxor.u32 %v4414, 2147483648
    %v4479 = vxor.u32 %v4415, 2147483648
    %v4480 = vxor.u32 %v4416, 2147483648
    %v4481 = vxor.u32 %v4417, 2147483648
    %v4482 = vxor.u32 %v4418, 2147483648
    %v4483 = vxor.u32 %v4419, 2147483648
    %v4484 = vxor.u32 %v4420, 2147483648
    %v4485 = vxor.u32 %v4421, 2147483648
    %v4486 = vxor.u32 %v4422, 2147483648
    %v4487 = vxor.u32 %v4423, 2147483648
    %v4488 = vxor.u32 %v4424, 2147483648
    %v4489 = vxor.u32 %v4425, 2147483648
    %v4490 = vxor.u32 %v4426, 2147483648
    %v4491 = vxor.u32 %v4427, 2147483648
    %v4492 = vxor.u32 %v4428, 2147483648
    %v4493 = vxor.u32 %v4429, 2147483648
    %v4494 = vxor.u32 %v4430, 2147483648
    %v4495 = vxor.u32 %v4431, 2147483648
    %v4496 = vxor.u32 %v4432, 2147483648
    %v4497 = vxor.u32 %v4433, 2147483648
    %v4498 = vxor.u32 %v4434, 2147483648
    %v4499 = vxor.u32 %v4435, 2147483648
    %v4500 = vxor.u32 %v4436, 2147483648
    %v4501 = vxor.u32 %v4437, 2147483648
    %v4502 = vxor.u32 %v4438, 2147483648
    %v4503 = vxor.u32 %v4439, 2147483648
    %v4504 = vxor.u32 %v4440, 2147483648
    %v4505 = vxor.u32 %v4441, 2147483648
    %v4506 = vxor.u32 %v4442, 2147483648
    %v4507 = vxor.u32 %v4443, 2147483648
    %v4508 = vxor.u32 %v4444, 2147483648
    %v4509 = vxor.u32 %v4445, 2147483648
    %v4510 = vxor.u32 %v4446, 2147483648
    %v4511 = vxor.u32 %v4447, 2147483648
    %v4512 = vxor.u32 %v4448, 2147483648
    %v4513 = vxor.u32 %v4449, 2147483648
    %v4514 = vxor.u32 %v4450, 2147483648
    %v4515 = vxor.u32 %v4451, 2147483648
    %v4516 = vxor.u32 %v4452, 2147483648
    %v4517 = vxor.u32 %v4453, 2147483648
    %v4518 = vxor.u32 %v4454, 2147483648
    %v4519 = vxor.u32 %v4455, 2147483648
    %v4520 = vxor.u32 %v4456, 2147483648
    %v4521 = vxor.u32 %v4457, 2147483648
    %v4522 = vxor.u32 %v4458, 2147483648
    %v4523 = vmul.f32 %v4459, 1.442695
    %v4524 = vpow.pop %v4523
    %v4525 = vmul.f32 %v4460, 1.442695
    %v4526 = vpow.pop %v4525
    %v4527 = vmul.f32 %v4461, 1.442695
    %v4528 = vpow.pop %v4527
    %v4529 = vmul.f32 %v4462, 1.442695
    %v4530 = vpow.pop %v4529
    %v4531 = vmul.f32 %v4463, 1.442695
    %v4532 = vpow.pop %v4531
    %v4533 = vmul.f32 %v4464, 1.442695
    %v4534 = vpow.pop %v4533
    %v4535 = vmul.f32 %v4465, 1.442695
    %v4536 = vpow.pop %v4535
    %v4537 = vmul.f32 %v4466, 1.442695
    %v4538 = vpow.pop %v4537
    %v4539 = vmul.f32 %v4467, 1.442695
    %v4540 = vpow.pop %v4539
    %v4541 = vmul.f32 %v4468, 1.442695
    %v4542 = vpow.pop %v4541
    %v4543 = vmul.f32 %v4469, 1.442695
    %v4544 = vpow.pop %v4543
    %v4545 = vmul.f32 %v4470, 1.442695
    %v4546 = vpow.pop %v4545
    %v4547 = vmul.f32 %v4471, 1.442695
    %v4548 = vpow.pop %v4547
    %v4549 = vmul.f32 %v4472, 1.442695
    %v4550 = vpow.pop %v4549
    %v4551 = vmul.f32 %v4473, 1.442695
    %v4552 = vpow.pop %v4551
    %v4553 = vmul.f32 %v4474, 1.442695
    %v4554 = vpow.pop %v4553
    %v4555 = vmul.f32 %v4475, 1.442695
    %v4556 = vpow.pop %v4555
    %v4557 = vmul.f32 %v4476, 1.442695
    %v4558 = vpow.pop %v4557
    %v4559 = vmul.f32 %v4477, 1.442695
    %v4560 = vpow.pop %v4559
    %v4561 = vmul.f32 %v4478, 1.442695
    %v4562 = vpow.pop %v4561
    %v4563 = vmul.f32 %v4479, 1.442695
    %v4564 = vpow.pop %v4563
    %v4565 = vmul.f32 %v4480, 1.442695
    %v4566 = vpow.pop %v4565
    %v4567 = vmul.f32 %v4481, 1.442695
    %v4568 = vpow.pop %v4567
    %v4569 = vmul.f32 %v4482, 1.442695
    %v4570 = vpow.pop %v4569
    %v4571 = vmul.f32 %v4483, 1.442695
    %v4572 = vpow.pop %v4571
    %v4573 = vmul.f32 %v4484, 1.442695
    %v4574 = vpow.pop %v4573
    %v4575 = vmul.f32 %v4485, 1.442695
    %v4576 = vpow.pop %v4575
    %v4577 = vmul.f32 %v4486, 1.442695
    %v4578 = vpow.pop %v4577
    %v4579 = vmul.f32 %v4487, 1.442695
    %v4580 = vpow.pop %v4579
    %v4581 = vmul.f32 %v4488, 1.442695
    %v4582 = vpow.pop %v4581
    %v4583 = vmul.f32 %v4489, 1.442695
    %v4584 = vpow.pop %v4583
    %v4585 = vmul.f32 %v4490, 1.442695
    %v4586 = vpow.pop %v4585
    %v4587 = vmul.f32 %v4491, 1.442695
    %v4588 = vpow.pop %v4587
    %v4589 = vmul.f32 %v4492, 1.442695
    %v4590 = vpow.pop %v4589
    %v4591 = vmul.f32 %v4493, 1.442695
    %v4592 = vpow.pop %v4591
    %v4593 = vmul.f32 %v4494, 1.442695
    %v4594 = vpow.pop %v4593
    %v4595 = vmul.f32 %v4495, 1.442695
    %v4596 = vpow.pop %v4595
    %v4597 = vmul.f32 %v4496, 1.442695
    %v4598 = vpow.pop %v4597
    %v4599 = vmul.f32 %v4497, 1.442695
    %v4600 = vpow.pop %v4599
    %v4601 = vmul.f32 %v4498, 1.442695
    %v4602 = vpow.pop %v4601
    %v4603 = vmul.f32 %v4499, 1.442695
    %v4604 = vpow.pop %v4603
    %v4605 = vmul.f32 %v4500, 1.442695
    %v4606 = vpow.pop %v4605
    %v4607 = vmul.f32 %v4501, 1.442695
    %v4608 = vpow.pop %v4607
    %v4609 = vmul.f32 %v4502, 1.442695
    %v4610 = vpow.pop %v4609
    %v4611 = vmul.f32 %v4503, 1.442695
    %v4612 = vpow.pop %v4611
    %v4613 = vmul.f32 %v4504, 1.442695
    %v4614 = vpow.pop %v4613
    %v4615 = vmul.f32 %v4505, 1.442695
    %v4616 = vpow.pop %v4615
    %v4617 = vmul.f32 %v4506, 1.442695
    %v4618 = vpow.pop %v4617
    %v4619 = vmul.f32 %v4507, 1.442695
    %v4620 = vpow.pop %v4619
    %v4621 = vmul.f32 %v4508, 1.442695
    %v4622 = vpow.pop %v4621
    %v4623 = vmul.f32 %v4509, 1.442695
    %v4624 = vpow.pop %v4623
    %v4625 = vmul.f32 %v4510, 1.442695
    %v4626 = vpow.pop %v4625
    %v4627 = vmul.f32 %v4511, 1.442695
    %v4628 = vpow.pop %v4627
    %v4629 = vmul.f32 %v4512, 1.442695
    %v4630 = vpow.pop %v4629
    %v4631 = vmul.f32 %v4513, 1.442695
    %v4632 = vpow.pop %v4631
    %v4633 = vmul.f32 %v4514, 1.442695
    %v4634 = vpow.pop %v4633
    %v4635 = vmul.f32 %v4515, 1.442695
    %v4636 = vpow.pop %v4635
    %v4637 = vmul.f32 %v4516, 1.442695
    %v4638 = vpow.pop %v4637
    %v4639 = vmul.f32 %v4517, 1.442695
    %v4640 = vpow.pop %v4639
    %v4641 = vmul.f32 %v4518, 1.442695
    %v4642 = vpow.pop %v4641
    %v4643 = vmul.f32 %v4519, 1.442695
    %v4644 = vpow.pop %v4643
    %v4645 = vmul.f32 %v4520, 1.442695
    %v4646 = vpow.pop %v4645
    %v4647 = vmul.f32 %v4521, 1.442695
    %v4648 = vpow.pop %v4647
    %v4649 = vmul.f32 %v4522, 1.442695
    %v4650 = vpow.pop %v4649
    %v4651 = vadd.f32 %v4524, 1.0
    %v4652 = vadd.f32 %v4526, 1.0
    %v4653 = vadd.f32 %v4528, 1.0
    %v4654 = vadd.f32 %v4530, 1.0
    %v4655 = vadd.f32 %v4532, 1.0
    %v4656 = vadd.f32 %v4534, 1.0
    %v4657 = vadd.f32 %v4536, 1.0
    %v4658 = vadd.f32 %v4538, 1.0
    %v4659 = vadd.f32 %v4540, 1.0
    %v4660 = vadd.f32 %v4542, 1.0
    %v4661 = vadd.f32 %v4544, 1.0
    %v4662 = vadd.f32 %v4546, 1.0
    %v4663 = vadd.f32 %v4548, 1.0
    %v4664 = vadd.f32 %v4550, 1.0
    %v4665 = vadd.f32 %v4552, 1.0
    %v4666 = vadd.f32 %v4554, 1.0
    %v4667 = vadd.f32 %v4556, 1.0
    %v4668 = vadd.f32 %v4558, 1.0
    %v4669 = vadd.f32 %v4560, 1.0
    %v4670 = vadd.f32 %v4562, 1.0
    %v4671 = vadd.f32 %v4564, 1.0
    %v4672 = vadd.f32 %v4566, 1.0
    %v4673 = vadd.f32 %v4568, 1.0
    %v4674 = vadd.f32 %v4570, 1.0
    %v4675 = vadd.f32 %v4572, 1.0
    %v4676 = vadd.f32 %v4574, 1.0
    %v4677 = vadd.f32 %v4576, 1.0
    %v4678 = vadd.f32 %v4578, 1.0
    %v4679 = vadd.f32 %v4580, 1.0
    %v4680 = vadd.f32 %v4582, 1.0
    %v4681 = vadd.f32 %v4584, 1.0
    %v4682 = vadd.f32 %v4586, 1.0
    %v4683 = vadd.f32 %v4588, 1.0
    %v4684 = vadd.f32 %v4590, 1.0
    %v4685 = vadd.f32 %v4592, 1.0
    %v4686 = vadd.f32 %v4594, 1.0
    %v4687 = vadd.f32 %v4596, 1.0
    %v4688 = vadd.f32 %v4598, 1.0
    %v4689 = vadd.f32 %v4600, 1.0
    %v4690 = vadd.f32 %v4602, 1.0
    %v4691 = vadd.f32 %v4604, 1.0
    %v4692 = vadd.f32 %v4606, 1.0
    %v4693 = vadd.f32 %v4608, 1.0
    %v4694 = vadd.f32 %v4610, 1.0
    %v4695 = vadd.f32 %v4612, 1.0
    %v4696 = vadd.f32 %v4614, 1.0
    %v4697 = vadd.f32 %v4616, 1.0
    %v4698 = vadd.f32 %v4618, 1.0
    %v4699 = vadd.f32 %v4620, 1.0
    %v4700 = vadd.f32 %v4622, 1.0
    %v4701 = vadd.f32 %v4624, 1.0
    %v4702 = vadd.f32 %v4626, 1.0
    %v4703 = vadd.f32 %v4628, 1.0
    %v4704 = vadd.f32 %v4630, 1.0
    %v4705 = vadd.f32 %v4632, 1.0
    %v4706 = vadd.f32 %v4634, 1.0
    %v4707 = vadd.f32 %v4636, 1.0
    %v4708 = vadd.f32 %v4638, 1.0
    %v4709 = vadd.f32 %v4640, 1.0
    %v4710 = vadd.f32 %v4642, 1.0
    %v4711 = vadd.f32 %v4644, 1.0
    %v4712 = vadd.f32 %v4646, 1.0
    %v4713 = vadd.f32 %v4648, 1.0
    %v4714 = vadd.f32 %v4650, 1.0
    %v4715 = vrcp.pop %v4651
    %v4716 = vmul.f32 1.0, %v4715
    %v4717 = vrcp.pop %v4652
    %v4718 = vmul.f32 1.0, %v4717
    %v4719 = vrcp.pop %v4653
    %v4720 = vmul.f32 1.0, %v4719
    %v4721 = vrcp.pop %v4654
    %v4722 = vmul.f32 1.0, %v4721
    %v4723 = vrcp.pop %v4655
    %v4724 = vmul.f32 1.0, %v4723
    %v4725 = vrcp.pop %v4656
    %v4726 = vmul.f32 1.0, %v4725
    %v4727 = vrcp.pop %v4657
    %v4728 = vmul.f32 1.0, %v4727
    %v4729 = vrcp.pop %v4658
    %v4730 = vmul.f32 1.0, %v4729
    %v4731 = vrcp.pop %v4659
    %v4732 = vmul.f32 1.0, %v4731
    %v4733 = vrcp.pop %v4660
    %v4734 = vmul.f32 1.0, %v4733
    %v4735 = vrcp.pop %v4661
    %v4736 = vmul.f32 1.0, %v4735
    %v4737 = vrcp.pop %v4662
    %v4738 = vmul.f32 1.0, %v4737
    %v4739 = vrcp.pop %v4663
    %v4740 = vmul.f32 1.0, %v4739
    %v4741 = vrcp.pop %v4664
    %v4742 = vmul.f32 1.0, %v4741
    %v4743 = vrcp.pop %v4665
    %v4744 = vmul.f32 1.0, %v4743
    %v4745 = vrcp.pop %v4666
    %v4746 = vmul.f32 1.0, %v4745
    %v4747 = vrcp.pop %v4667
    %v4748 = vmul.f32 1.0, %v4747
    %v4749 = vrcp.pop %v4668
    %v4750 = vmul.f32 1.0, %v4749
    %v4751 = vrcp.pop %v4669
    %v4752 = vmul.f32 1.0, %v4751
    %v4753 = vrcp.pop %v4670
    %v4754 = vmul.f32 1.0, %v4753
    %v4755 = vrcp.pop %v4671
    %v4756 = vmul.f32 1.0, %v4755
    %v4757 = vrcp.pop %v4672
    %v4758 = vmul.f32 1.0, %v4757
    %v4759 = vrcp.pop %v4673
    %v4760 = vmul.f32 1.0, %v4759
    %v4761 = vrcp.pop %v4674
    %v4762 = vmul.f32 1.0, %v4761
    %v4763 = vrcp.pop %v4675
    %v4764 = vmul.f32 1.0, %v4763
    %v4765 = vrcp.pop %v4676
    %v4766 = vmul.f32 1.0, %v4765
    %v4767 = vrcp.pop %v4677
    %v4768 = vmul.f32 1.0, %v4767
    %v4769 = vrcp.pop %v4678
    %v4770 = vmul.f32 1.0, %v4769
    %v4771 = vrcp.pop %v4679
    %v4772 = vmul.f32 1.0, %v4771
    %v4773 = vrcp.pop %v4680
    %v4774 = vmul.f32 1.0, %v4773
    %v4775 = vrcp.pop %v4681
    %v4776 = vmul.f32 1.0, %v4775
    %v4777 = vrcp.pop %v4682
    %v4778 = vmul.f32 1.0, %v4777
    %v4779 = vrcp.pop %v4683
    %v4780 = vmul.f32 1.0, %v4779
    %v4781 = vrcp.pop %v4684
    %v4782 = vmul.f32 1.0, %v4781
    %v4783 = vrcp.pop %v4685
    %v4784 = vmul.f32 1.0, %v4783
    %v4785 = vrcp.pop %v4686
    %v4786 = vmul.f32 1.0, %v4785
    %v4787 = vrcp.pop %v4687
    %v4788 = vmul.f32 1.0, %v4787
    %v4789 = vrcp.pop %v4688
    %v4790 = vmul.f32 1.0, %v4789
    %v4791 = vrcp.pop %v4689
    %v4792 = vmul.f32 1.0, %v4791
    %v4793 = vrcp.pop %v4690
    %v4794 = vmul.f32 1.0, %v4793
    %v4795 = vrcp.pop %v4691
    %v4796 = vmul.f32 1.0, %v4795
    %v4797 = vrcp.pop %v4692
    %v4798 = vmul.f32 1.0, %v4797
    %v4799 = vrcp.pop %v4693
    %v4800 = vmul.f32 1.0, %v4799
    %v4801 = vrcp.pop %v4694
    %v4802 = vmul.f32 1.0, %v4801
    %v4803 = vrcp.pop %v4695
    %v4804 = vmul.f32 1.0, %v4803
    %v4805 = vrcp.pop %v4696
    %v4806 = vmul.f32 1.0, %v4805
    %v4807 = vrcp.pop %v4697
    %v4808 = vmul.f32 1.0, %v4807
    %v4809 = vrcp.pop %v4698
    %v4810 = vmul.f32 1.0, %v4809
    %v4811 = vrcp.pop %v4699
    %v4812 = vmul.f32 1.0, %v4811
    %v4813 = vrcp.pop %v4700
    %v4814 = vmul.f32 1.0, %v4813
    %v4815 = vrcp.pop %v4701
    %v4816 = vmul.f32 1.0, %v4815
    %v4817 = vrcp.pop %v4702
    %v4818 = vmul.f32 1.0, %v4817
    %v4819 = vrcp.pop %v4703
    %v4820 = vmul.f32 1.0, %v4819
    %v4821 = vrcp.pop %v4704
    %v4822 = vmul.f32 1.0, %v4821
    %v4823 = vrcp.pop %v4705
    %v4824 = vmul.f32 1.0, %v4823
    %v4825 = vrcp.pop %v4706
    %v4826 = vmul.f32 1.0, %v4825
    %v4827 = vrcp.pop %v4707
    %v4828 = vmul.f32 1.0, %v4827
    %v4829 = vrcp.pop %v4708
    %v4830 = vmul.f32 1.0, %v4829
    %v4831 = vrcp.pop %v4709
    %v4832 = vmul.f32 1.0, %v4831
    %v4833 = vrcp.pop %v4710
    %v4834 = vmul.f32 1.0, %v4833
    %v4835 = vrcp.pop %v4711
    %v4836 = vmul.f32 1.0, %v4835
    %v4837 = vrcp.pop %v4712
    %v4838 = vmul.f32 1.0, %v4837
    %v4839 = vrcp.pop %v4713
    %v4840 = vmul.f32 1.0, %v4839
    %v4841 = vrcp.pop %v4714
    %v4842 = vmul.f32 1.0, %v4841
    %4907 = vrot.lane.b32.xlu0 %v4716, 124
    %v4908 = vpop.permute.xlu0 %4907
    %4909 = vrot.lane.b32.xlu0 %v4718, 124
    %v4910 = vpop.permute.xlu0 %4909
    %4911 = vrot.lane.b32.xlu0 %v4720, 124
    %v4912 = vpop.permute.xlu0 %4911
    %4913 = vrot.lane.b32.xlu0 %v4722, 124
    %v4914 = vpop.permute.xlu0 %4913
    %4915 = vrot.lane.b32.xlu0 %v4724, 124
    %v4916 = vpop.permute.xlu0 %4915
    %4917 = vrot.lane.b32.xlu0 %v4726, 124
    %v4918 = vpop.permute.xlu0 %4917
    %4919 = vrot.lane.b32.xlu0 %v4728, 124
    %v4920 = vpop.permute.xlu0 %4919
    %4921 = vrot.lane.b32.xlu0 %v4730, 124
    %v4922 = vpop.permute.xlu0 %4921
    %4923 = vrot.lane.b32.xlu0 %v4732, 124
    %v4924 = vpop.permute.xlu0 %4923
    %4925 = vrot.lane.b32.xlu0 %v4734, 124
    %v4926 = vpop.permute.xlu0 %4925
    %4927 = vrot.lane.b32.xlu0 %v4736, 124
    %v4928 = vpop.permute.xlu0 %4927
    %4929 = vrot.lane.b32.xlu0 %v4738, 124
    %v4930 = vpop.permute.xlu0 %4929
    %4931 = vrot.lane.b32.xlu0 %v4740, 124
    %v4932 = vpop.permute.xlu0 %4931
    %4933 = vrot.lane.b32.xlu0 %v4742, 124
    %v4934 = vpop.permute.xlu0 %4933
    %4935 = vrot.lane.b32.xlu0 %v4744, 124
    %v4936 = vpop.permute.xlu0 %4935
    %4937 = vrot.lane.b32.xlu0 %v4746, 124
    %v4938 = vpop.permute.xlu0 %4937
    %4939 = vrot.lane.b32.xlu0 %v4748, 124
    %v4940 = vpop.permute.xlu0 %4939
    %4941 = vrot.lane.b32.xlu0 %v4750, 124
    %v4942 = vpop.permute.xlu0 %4941
    %4943 = vrot.lane.b32.xlu0 %v4752, 124
    %v4944 = vpop.permute.xlu0 %4943
    %4945 = vrot.lane.b32.xlu0 %v4754, 124
    %v4946 = vpop.permute.xlu0 %4945
    %4947 = vrot.lane.b32.xlu0 %v4756, 124
    %v4948 = vpop.permute.xlu0 %4947
    %4949 = vrot.lane.b32.xlu0 %v4758, 124
    %v4950 = vpop.permute.xlu0 %4949
    %4951 = vrot.lane.b32.xlu0 %v4760, 124
    %v4952 = vpop.permute.xlu0 %4951
    %4953 = vrot.lane.b32.xlu0 %v4762, 124
    %v4954 = vpop.permute.xlu0 %4953
    %4955 = vrot.lane.b32.xlu0 %v4764, 124
    %v4956 = vpop.permute.xlu0 %4955
    %4957 = vrot.lane.b32.xlu0 %v4766, 124
    %v4958 = vpop.permute.xlu0 %4957
    %4959 = vrot.lane.b32.xlu0 %v4768, 124
    %v4960 = vpop.permute.xlu0 %4959
    %4961 = vrot.lane.b32.xlu0 %v4770, 124
    %v4962 = vpop.permute.xlu0 %4961
    %4963 = vrot.lane.b32.xlu0 %v4772, 124
    %v4964 = vpop.permute.xlu0 %4963
    %4965 = vrot.lane.b32.xlu0 %v4774, 124
    %v4966 = vpop.permute.xlu0 %4965
    %4967 = vrot.lane.b32.xlu0 %v4776, 124
    %v4968 = vpop.permute.xlu0 %4967
    %4969 = vrot.lane.b32.xlu0 %v4778, 124
    %v4970 = vpop.permute.xlu0 %4969
    %4971 = vrot.lane.b32.xlu0 %v4780, 124
    %v4972 = vpop.permute.xlu0 %4971
    %4973 = vrot.lane.b32.xlu0 %v4782, 124
    %v4974 = vpop.permute.xlu0 %4973
    %4975 = vrot.lane.b32.xlu0 %v4784, 124
    %v4976 = vpop.permute.xlu0 %4975
    %4977 = vrot.lane.b32.xlu0 %v4786, 124
    %v4978 = vpop.permute.xlu0 %4977
    %4979 = vrot.lane.b32.xlu0 %v4788, 124
    %v4980 = vpop.permute.xlu0 %4979
    %4981 = vrot.lane.b32.xlu0 %v4790, 124
    %v4982 = vpop.permute.xlu0 %4981
    %4983 = vrot.lane.b32.xlu0 %v4792, 124
    %v4984 = vpop.permute.xlu0 %4983
    %4985 = vrot.lane.b32.xlu0 %v4794, 124
    %v4986 = vpop.permute.xlu0 %4985
    %4987 = vrot.lane.b32.xlu0 %v4796, 124
    %v4988 = vpop.permute.xlu0 %4987
    %4989 = vrot.lane.b32.xlu0 %v4798, 124
    %v4990 = vpop.permute.xlu0 %4989
    %4991 = vrot.lane.b32.xlu0 %v4800, 124
    %v4992 = vpop.permute.xlu0 %4991
    %4993 = vrot.lane.b32.xlu0 %v4802, 124
    %v4994 = vpop.permute.xlu0 %4993
    %4995 = vrot.lane.b32.xlu0 %v4804, 124
    %v4996 = vpop.permute.xlu0 %4995
    %4997 = vrot.lane.b32.xlu0 %v4806, 124
    %v4998 = vpop.permute.xlu0 %4997
    %4999 = vrot.lane.b32.xlu0 %v4808, 124
    %v5000 = vpop.permute.xlu0 %4999
    %5001 = vrot.lane.b32.xlu0 %v4810, 124
    %v5002 = vpop.permute.xlu0 %5001
    %5003 = vrot.lane.b32.xlu0 %v4812, 124
    %v5004 = vpop.permute.xlu0 %5003
    %5005 = vrot.lane.b32.xlu0 %v4814, 124
    %v5006 = vpop.permute.xlu0 %5005
    %5007 = vrot.lane.b32.xlu0 %v4816, 124
    %v5008 = vpop.permute.xlu0 %5007
    %5009 = vrot.lane.b32.xlu0 %v4818, 124
    %v5010 = vpop.permute.xlu0 %5009
    %5011 = vrot.lane.b32.xlu0 %v4820, 124
    %v5012 = vpop.permute.xlu0 %5011
    %5013 = vrot.lane.b32.xlu0 %v4822, 124
    %v5014 = vpop.permute.xlu0 %5013
    %5015 = vrot.lane.b32.xlu0 %v4824, 124
    %v5016 = vpop.permute.xlu0 %5015
    %5017 = vrot.lane.b32.xlu0 %v4826, 124
    %v5018 = vpop.permute.xlu0 %5017
    %5019 = vrot.lane.b32.xlu0 %v4828, 124
    %v5020 = vpop.permute.xlu0 %5019
    %5021 = vrot.lane.b32.xlu0 %v4830, 124
    %v5022 = vpop.permute.xlu0 %5021
    %5023 = vrot.lane.b32.xlu0 %v4832, 124
    %v5024 = vpop.permute.xlu0 %5023
    %5025 = vrot.lane.b32.xlu0 %v4834, 124
    %v5026 = vpop.permute.xlu0 %5025
    %5027 = vrot.lane.b32.xlu0 %v4836, 124
    %v5028 = vpop.permute.xlu0 %5027
    %5029 = vrot.lane.b32.xlu0 %v4838, 124
    %v5030 = vpop.permute.xlu0 %5029
    %5031 = vrot.lane.b32.xlu0 %v4840, 124
    %v5032 = vpop.permute.xlu0 %5031
    %5033 = vrot.lane.b32.xlu0 %v4842, 124
    %v5034 = vpop.permute.xlu0 %5033
    %v5099 = vmul.f32 %v4395, %v4908
    %v5100 = vmul.f32 %v4396, %v4910
    %v5101 = vmul.f32 %v4397, %v4912
    %v5102 = vmul.f32 %v4398, %v4914
    %v5103 = vmul.f32 %v4399, %v4916
    %v5104 = vmul.f32 %v4400, %v4918
    %v5105 = vmul.f32 %v4401, %v4920
    %v5106 = vmul.f32 %v4402, %v4922
    %v5107 = vmul.f32 %v4403, %v4924
    %v5108 = vmul.f32 %v4404, %v4926
    %v5109 = vmul.f32 %v4405, %v4928
    %v5110 = vmul.f32 %v4406, %v4930
    %v5111 = vmul.f32 %v4407, %v4932
    %v5112 = vmul.f32 %v4408, %v4934
    %v5113 = vmul.f32 %v4409, %v4936
    %v5114 = vmul.f32 %v4410, %v4938
    %v5115 = vmul.f32 %v4411, %v4940
    %v5116 = vmul.f32 %v4412, %v4942
    %v5117 = vmul.f32 %v4413, %v4944
    %v5118 = vmul.f32 %v4414, %v4946
    %v5119 = vmul.f32 %v4415, %v4948
    %v5120 = vmul.f32 %v4416, %v4950
    %v5121 = vmul.f32 %v4417, %v4952
    %v5122 = vmul.f32 %v4418, %v4954
    %v5123 = vmul.f32 %v4419, %v4956
    %v5124 = vmul.f32 %v4420, %v4958
    %v5125 = vmul.f32 %v4421, %v4960
    %v5126 = vmul.f32 %v4422, %v4962
    %v5127 = vmul.f32 %v4423, %v4964
    %v5128 = vmul.f32 %v4424, %v4966
    %v5129 = vmul.f32 %v4425, %v4968
    %v5130 = vmul.f32 %v4426, %v4970
    %v5131 = vmul.f32 %v4427, %v4972
    %v5132 = vmul.f32 %v4428, %v4974
    %v5133 = vmul.f32 %v4429, %v4976
    %v5134 = vmul.f32 %v4430, %v4978
    %v5135 = vmul.f32 %v4431, %v4980
    %v5136 = vmul.f32 %v4432, %v4982
    %v5137 = vmul.f32 %v4433, %v4984
    %v5138 = vmul.f32 %v4434, %v4986
    %v5139 = vmul.f32 %v4435, %v4988
    %v5140 = vmul.f32 %v4436, %v4990
    %v5141 = vmul.f32 %v4437, %v4992
    %v5142 = vmul.f32 %v4438, %v4994
    %v5143 = vmul.f32 %v4439, %v4996
    %v5144 = vmul.f32 %v4440, %v4998
    %v5145 = vmul.f32 %v4441, %v5000
    %v5146 = vmul.f32 %v4442, %v5002
    %v5147 = vmul.f32 %v4443, %v5004
    %v5148 = vmul.f32 %v4444, %v5006
    %v5149 = vmul.f32 %v4445, %v5008
    %v5150 = vmul.f32 %v4446, %v5010
    %v5151 = vmul.f32 %v4447, %v5012
    %v5152 = vmul.f32 %v4448, %v5014
    %v5153 = vmul.f32 %v4449, %v5016
    %v5154 = vmul.f32 %v4450, %v5018
    %v5155 = vmul.f32 %v4451, %v5020
    %v5156 = vmul.f32 %v4452, %v5022
    %v5157 = vmul.f32 %v4453, %v5024
    %v5158 = vmul.f32 %v4454, %v5026
    %v5159 = vmul.f32 %v4455, %v5028
    %v5160 = vmul.f32 %v4456, %v5030
    %v5161 = vmul.f32 %v4457, %v5032
    %v5162 = vmul.f32 %v4458, %v5034
    %5163 = vst.msk [vmem:[%s182 + $0x1] sm:$0xff] %vm30, %v5099
    %5164 = vst.msk [vmem:[%s182 + $0x9] sm:$0xff] %vm30, %v5100
    %5165 = vst.msk [vmem:[%s182 + $0x19] sm:$0xff] %vm30, %v5101
    %5166 = vst.msk [vmem:[%s182 + $0x21] sm:$0xff] %vm30, %v5102
    %5167 = vst.msk [vmem:[%s182 + $0x31] sm:$0xff] %vm30, %v5103
    %5168 = vst.msk [vmem:[%s182 + $0x39] sm:$0xff] %vm30, %v5104
    %5169 = vst.msk [vmem:[%s182 + $0x49] sm:$0xff] %vm30, %v5105
    %5170 = vst.msk [vmem:[%s182 + $0x51] sm:$0xff] %vm30, %v5106
    %5171 = vst.msk [vmem:[%s182 + $0x61] sm:$0xff] %vm30, %v5107
    %5172 = vst.msk [vmem:[%s182 + $0x69] sm:$0xff] %vm30, %v5108
    %5173 = vst.msk [vmem:[%s182 + $0x79] sm:$0xff] %vm30, %v5109
    %5174 = vst.msk [vmem:[%s182 + $0x81] sm:$0xff] %vm30, %v5110
    %5175 = vst.msk [vmem:[%s182 + $0x91] sm:$0xff] %vm30, %v5111
    %5176 = vst.msk [vmem:[%s182 + $0x99] sm:$0xff] %vm30, %v5112
    %5177 = vst.msk [vmem:[%s182 + $0xa9] sm:$0xff] %vm30, %v5113
    %5178 = vst.msk [vmem:[%s182 + $0xb1] sm:$0xff] %vm30, %v5114
    %5179 = vst.msk [vmem:[%s182 + $0xc1] sm:$0xff] %vm30, %v5115
    %5180 = vst.msk [vmem:[%s182 + $0xc9] sm:$0xff] %vm30, %v5116
    %5181 = vst.msk [vmem:[%s182 + $0xd9] sm:$0xff] %vm30, %v5117
    %5182 = vst.msk [vmem:[%s182 + $0xe1] sm:$0xff] %vm30, %v5118
    %5183 = vst.msk [vmem:[%s182 + $0xf1] sm:$0xff] %vm30, %v5119
    %5184 = vst.msk [vmem:[%s182 + $0xf9] sm:$0xff] %vm30, %v5120
    %5185 = vst.msk [vmem:[%s182 + $0x109] sm:$0xff] %vm30, %v5121
    %5186 = vst.msk [vmem:[%s182 + $0x111] sm:$0xff] %vm30, %v5122
    %5187 = vst.msk [vmem:[%s182 + $0x121] sm:$0xff] %vm30, %v5123
    %5188 = vst.msk [vmem:[%s182 + $0x129] sm:$0xff] %vm30, %v5124
    %5189 = vst.msk [vmem:[%s182 + $0x139] sm:$0xff] %vm30, %v5125
    %5190 = vst.msk [vmem:[%s182 + $0x141] sm:$0xff] %vm30, %v5126
    %5191 = vst.msk [vmem:[%s182 + $0x151] sm:$0xff] %vm30, %v5127
    %5192 = vst.msk [vmem:[%s182 + $0x159] sm:$0xff] %vm30, %v5128
    %5193 = vst.msk [vmem:[%s182 + $0x169] sm:$0xff] %vm30, %v5129
    %5194 = vst.msk [vmem:[%s182 + $0x171] sm:$0xff] %vm30, %v5130
    %5195 = vst.msk [vmem:[%s182 + $0x1b1] sm:$0xff] %vm30, %v5131
    %5196 = vst.msk [vmem:[%s182 + $0x1b9] sm:$0xff] %vm30, %v5132
    %5197 = vst.msk [vmem:[%s182 + $0x1c9] sm:$0xff] %vm30, %v5133
    %5198 = vst.msk [vmem:[%s182 + $0x1d1] sm:$0xff] %vm30, %v5134
    %5199 = vst.msk [vmem:[%s182 + $0x1e1] sm:$0xff] %vm30, %v5135
    %5200 = vst.msk [vmem:[%s182 + $0x1e9] sm:$0xff] %vm30, %v5136
    %5201 = vst.msk [vmem:[%s182 + $0x1f9] sm:$0xff] %vm30, %v5137
    %5202 = vst.msk [vmem:[%s182 + $0x201] sm:$0xff] %vm30, %v5138
    %5203 = vst.msk [vmem:[%s182 + $0x211] sm:$0xff] %vm30, %v5139
    %5204 = vst.msk [vmem:[%s182 + $0x219] sm:$0xff] %vm30, %v5140
    %5205 = vst.msk [vmem:[%s182 + $0x229] sm:$0xff] %vm30, %v5141
    %5206 = vst.msk [vmem:[%s182 + $0x231] sm:$0xff] %vm30, %v5142
    %5207 = vst.msk [vmem:[%s182 + $0x241] sm:$0xff] %vm30, %v5143
    %5208 = vst.msk [vmem:[%s182 + $0x249] sm:$0xff] %vm30, %v5144
    %5209 = vst.msk [vmem:[%s182 + $0x259] sm:$0xff] %vm30, %v5145
    %5210 = vst.msk [vmem:[%s182 + $0x261] sm:$0xff] %vm30, %v5146
    %5211 = vst.msk [vmem:[%s182 + $0x271] sm:$0xff] %vm30, %v5147
    %5212 = vst.msk [vmem:[%s182 + $0x279] sm:$0xff] %vm30, %v5148
    %5213 = vst.msk [vmem:[%s182 + $0x289] sm:$0xff] %vm30, %v5149
    %5214 = vst.msk [vmem:[%s182 + $0x291] sm:$0xff] %vm30, %v5150
    %5215 = vst.msk [vmem:[%s182 + $0x2a1] sm:$0xff] %vm30, %v5151
    %5216 = vst.msk [vmem:[%s182 + $0x2a9] sm:$0xff] %vm30, %v5152
    %5217 = vst.msk [vmem:[%s182 + $0x2b9] sm:$0xff] %vm30, %v5153
    %5218 = vst.msk [vmem:[%s182 + $0x2c1] sm:$0xff] %vm30, %v5154
    %5219 = vst.msk [vmem:[%s182 + $0x2d1] sm:$0xff] %vm30, %v5155
    %5220 = vst.msk [vmem:[%s182 + $0x2d9] sm:$0xff] %vm30, %v5156
    %5221 = vst.msk [vmem:[%s182 + $0x2e9] sm:$0xff] %vm30, %v5157
    %5222 = vst.msk [vmem:[%s182 + $0x2f1] sm:$0xff] %vm30, %v5158
    %5223 = vst.msk [vmem:[%s182 + $0x301] sm:$0xff] %vm30, %v5159
    %5224 = vst.msk [vmem:[%s182 + $0x309] sm:$0xff] %vm30, %v5160
    %5225 = vst.msk [vmem:[%s182 + $0x319] sm:$0xff] %vm30, %v5161
    %5226 = vst.msk [vmem:[%s182 + $0x321] sm:$0xff] %vm30, %v5162
    %v5227 = vld [vmem:[#allocation2] sm:$0xff]
    %v5228 = vld [vmem:[#allocation2 + $0x8] sm:$0xff]
    %v5229 = vld [vmem:[#allocation2 + $0x18] sm:$0xff]
    %v5230 = vld [vmem:[#allocation2 + $0x20] sm:$0xff]
    %v5231 = vld [vmem:[#allocation2 + $0x30] sm:$0xff]
    %v5232 = vld [vmem:[#allocation2 + $0x38] sm:$0xff]
    %v5233 = vld [vmem:[#allocation2 + $0x48] sm:$0xff]
    %v5234 = vld [vmem:[#allocation2 + $0x50] sm:$0xff]
    %v5235 = vld [vmem:[#allocation2 + $0x60] sm:$0xff]
    %v5236 = vld [vmem:[#allocation2 + $0x68] sm:$0xff]
    %v5237 = vld [vmem:[#allocation2 + $0x78] sm:$0xff]
    %v5238 = vld [vmem:[#allocation2 + $0x80] sm:$0xff]
    %v5239 = vld [vmem:[#allocation2 + $0x90] sm:$0xff]
    %v5240 = vld [vmem:[#allocation2 + $0x98] sm:$0xff]
    %v5241 = vld [vmem:[#allocation2 + $0xa8] sm:$0xff]
    %v5242 = vld [vmem:[#allocation2 + $0xb0] sm:$0xff]
    %v5243 = vld [vmem:[#allocation2 + $0xc0] sm:$0xff]
    %v5244 = vld [vmem:[#allocation2 + $0xc8] sm:$0xff]
    %v5245 = vld [vmem:[#allocation2 + $0xd8] sm:$0xff]
    %v5246 = vld [vmem:[#allocation2 + $0xe0] sm:$0xff]
    %v5247 = vld [vmem:[#allocation2 + $0xf0] sm:$0xff]
    %v5248 = vld [vmem:[#allocation2 + $0xf8] sm:$0xff]
    %v5249 = vld [vmem:[#allocation2 + $0x108] sm:$0xff]
    %v5250 = vld [vmem:[#allocation2 + $0x110] sm:$0xff]
    %v5251 = vld [vmem:[#allocation2 + $0x120] sm:$0xff]
    %v5252 = vld [vmem:[#allocation2 + $0x128] sm:$0xff]
    %v5253 = vld [vmem:[#allocation2 + $0x138] sm:$0xff]
    %v5254 = vld [vmem:[#allocation2 + $0x140] sm:$0xff]
    %v5255 = vld [vmem:[#allocation2 + $0x150] sm:$0xff]
    %v5256 = vld [vmem:[#allocation2 + $0x158] sm:$0xff]
    %v5257 = vld [vmem:[#allocation2 + $0x168] sm:$0xff]
    %v5258 = vld [vmem:[#allocation2 + $0x170] sm:$0xff]
    %v5259 = vld [vmem:[#allocation2 + $0x1b0] sm:$0xff]
    %v5260 = vld [vmem:[#allocation2 + $0x1b8] sm:$0xff]
    %v5261 = vld [vmem:[#allocation2 + $0x1c8] sm:$0xff]
    %v5262 = vld [vmem:[#allocation2 + $0x1d0] sm:$0xff]
    %v5263 = vld [vmem:[#allocation2 + $0x1e0] sm:$0xff]
    %v5264 = vld [vmem:[#allocation2 + $0x1e8] sm:$0xff]
    %v5265 = vld [vmem:[#allocation2 + $0x1f8] sm:$0xff]
    %v5266 = vld [vmem:[#allocation2 + $0x200] sm:$0xff]
    %v5267 = vld [vmem:[#allocation2 + $0x210] sm:$0xff]
    %v5268 = vld [vmem:[#allocation2 + $0x218] sm:$0xff]
    %v5269 = vld [vmem:[#allocation2 + $0x228] sm:$0xff]
    %v5270 = vld [vmem:[#allocation2 + $0x230] sm:$0xff]
    %v5271 = vld [vmem:[#allocation2 + $0x240] sm:$0xff]
    %v5272 = vld [vmem:[#allocation2 + $0x248] sm:$0xff]
    %v5273 = vld [vmem:[#allocation2 + $0x258] sm:$0xff]
    %v5274 = vld [vmem:[#allocation2 + $0x260] sm:$0xff]
    %v5275 = vld [vmem:[#allocation2 + $0x270] sm:$0xff]
    %v5276 = vld [vmem:[#allocation2 + $0x278] sm:$0xff]
    %v5277 = vld [vmem:[#allocation2 + $0x288] sm:$0xff]
    %v5278 = vld [vmem:[#allocation2 + $0x290] sm:$0xff]
    %v5279 = vld [vmem:[#allocation2 + $0x2a0] sm:$0xff]
    %v5280 = vld [vmem:[#allocation2 + $0x2a8] sm:$0xff]
    %v5281 = vld [vmem:[#allocation2 + $0x2b8] sm:$0xff]
    %v5282 = vld [vmem:[#allocation2 + $0x2c0] sm:$0xff]
    %v5283 = vld [vmem:[#allocation2 + $0x2d0] sm:$0xff]
    %v5284 = vld [vmem:[#allocation2 + $0x2d8] sm:$0xff]
    %v5285 = vld [vmem:[#allocation2 + $0x2e8] sm:$0xff]
    %v5286 = vld [vmem:[#allocation2 + $0x2f0] sm:$0xff]
    %v5287 = vld [vmem:[#allocation2 + $0x300] sm:$0xff]
    %v5288 = vld [vmem:[#allocation2 + $0x308] sm:$0xff]
    %v5289 = vld [vmem:[#allocation2 + $0x318] sm:$0xff]
    %v5290 = vld [vmem:[#allocation2 + $0x320] sm:$0xff]
    %v5291 = vld [vmem:[#allocation2 + $0x1] sm:$0xff]
    %v5292 = vld [vmem:[#allocation2 + $0x9] sm:$0xff]
    %v5293 = vld [vmem:[#allocation2 + $0x19] sm:$0xff]
    %v5294 = vld [vmem:[#allocation2 + $0x21] sm:$0xff]
    %v5295 = vld [vmem:[#allocation2 + $0x31] sm:$0xff]
    %v5296 = vld [vmem:[#allocation2 + $0x39] sm:$0xff]
    %v5297 = vld [vmem:[#allocation2 + $0x49] sm:$0xff]
    %v5298 = vld [vmem:[#allocation2 + $0x51] sm:$0xff]
    %v5299 = vld [vmem:[#allocation2 + $0x61] sm:$0xff]
    %v5300 = vld [vmem:[#allocation2 + $0x69] sm:$0xff]
    %v5301 = vld [vmem:[#allocation2 + $0x79] sm:$0xff]
    %v5302 = vld [vmem:[#allocation2 + $0x81] sm:$0xff]
    %v5303 = vld [vmem:[#allocation2 + $0x91] sm:$0xff]
    %v5304 = vld [vmem:[#allocation2 + $0x99] sm:$0xff]
    %v5305 = vld [vmem:[#allocation2 + $0xa9] sm:$0xff]
    %v5306 = vld [vmem:[#allocation2 + $0xb1] sm:$0xff]
    %v5307 = vld [vmem:[#allocation2 + $0xc1] sm:$0xff]
    %v5308 = vld [vmem:[#allocation2 + $0xc9] sm:$0xff]
    %v5309 = vld [vmem:[#allocation2 + $0xd9] sm:$0xff]
    %v5310 = vld [vmem:[#allocation2 + $0xe1] sm:$0xff]
    %v5311 = vld [vmem:[#allocation2 + $0xf1] sm:$0xff]
    %v5312 = vld [vmem:[#allocation2 + $0xf9] sm:$0xff]
    %v5313 = vld [vmem:[#allocation2 + $0x109] sm:$0xff]
    %v5314 = vld [vmem:[#allocation2 + $0x111] sm:$0xff]
    %v5315 = vld [vmem:[#allocation2 + $0x121] sm:$0xff]
    %v5316 = vld [vmem:[#allocation2 + $0x129] sm:$0xff]
    %v5317 = vld [vmem:[#allocation2 + $0x139] sm:$0xff]
    %v5318 = vld [vmem:[#allocation2 + $0x141] sm:$0xff]
    %v5319 = vld [vmem:[#allocation2 + $0x151] sm:$0xff]
    %v5320 = vld [vmem:[#allocation2 + $0x159] sm:$0xff]
    %v5321 = vld [vmem:[#allocation2 + $0x169] sm:$0xff]
    %v5322 = vld [vmem:[#allocation2 + $0x171] sm:$0xff]
    %v5323 = vld [vmem:[#allocation2 + $0x1b1] sm:$0xff]
    %v5324 = vld [vmem:[#allocation2 + $0x1b9] sm:$0xff]
    %v5325 = vld [vmem:[#allocation2 + $0x1c9] sm:$0xff]
    %v5326 = vld [vmem:[#allocation2 + $0x1d1] sm:$0xff]
    %v5327 = vld [vmem:[#allocation2 + $0x1e1] sm:$0xff]
    %v5328 = vld [vmem:[#allocation2 + $0x1e9] sm:$0xff]
    %v5329 = vld [vmem:[#allocation2 + $0x1f9] sm:$0xff]
    %v5330 = vld [vmem:[#allocation2 + $0x201] sm:$0xff]
    %v5331 = vld [vmem:[#allocation2 + $0x211] sm:$0xff]
    %v5332 = vld [vmem:[#allocation2 + $0x219] sm:$0xff]
    %v5333 = vld [vmem:[#allocation2 + $0x229] sm:$0xff]
    %v5334 = vld [vmem:[#allocation2 + $0x231] sm:$0xff]
    %v5335 = vld [vmem:[#allocation2 + $0x241] sm:$0xff]
    %v5336 = vld [vmem:[#allocation2 + $0x249] sm:$0xff]
    %v5337 = vld [vmem:[#allocation2 + $0x259] sm:$0xff]
    %v5338 = vld [vmem:[#allocation2 + $0x261] sm:$0xff]
    %v5339 = vld [vmem:[#allocation2 + $0x271] sm:$0xff]
    %v5340 = vld [vmem:[#allocation2 + $0x279] sm:$0xff]
    %v5341 = vld [vmem:[#allocation2 + $0x289] sm:$0xff]
    %v5342 = vld [vmem:[#allocation2 + $0x291] sm:$0xff]
    %v5343 = vld [vmem:[#allocation2 + $0x2a1] sm:$0xff]
    %v5344 = vld [vmem:[#allocation2 + $0x2a9] sm:$0xff]
    %v5345 = vld [vmem:[#allocation2 + $0x2b9] sm:$0xff]
    %v5346 = vld [vmem:[#allocation2 + $0x2c1] sm:$0xff]
    %v5347 = vld [vmem:[#allocation2 + $0x2d1] sm:$0xff]
    %v5348 = vld [vmem:[#allocation2 + $0x2d9] sm:$0xff]
    %v5349 = vld [vmem:[#allocation2 + $0x2e9] sm:$0xff]
    %v5350 = vld [vmem:[#allocation2 + $0x2f1] sm:$0xff]
    %v5351 = vld [vmem:[#allocation2 + $0x301] sm:$0xff]
    %v5352 = vld [vmem:[#allocation2 + $0x309] sm:$0xff]
    %v5353 = vld [vmem:[#allocation2 + $0x319] sm:$0xff]
    %v5354 = vld [vmem:[#allocation2 + $0x321] sm:$0xff]
    %v5355 = vld [vmem:[#allocation2 + $0x2] sm:$0xff]
    %v5356 = vld [vmem:[#allocation2 + $0xa] sm:$0xff]
    %v5357 = vld [vmem:[#allocation2 + $0x1a] sm:$0xff]
    %v5358 = vld [vmem:[#allocation2 + $0x22] sm:$0xff]
    %v5359 = vld [vmem:[#allocation2 + $0x32] sm:$0xff]
    %v5360 = vld [vmem:[#allocation2 + $0x3a] sm:$0xff]
    %v5361 = vld [vmem:[#allocation2 + $0x4a] sm:$0xff]
    %v5362 = vld [vmem:[#allocation2 + $0x52] sm:$0xff]
    %v5363 = vld [vmem:[#allocation2 + $0x62] sm:$0xff]
    %v5364 = vld [vmem:[#allocation2 + $0x6a] sm:$0xff]
    %v5365 = vld [vmem:[#allocation2 + $0x7a] sm:$0xff]
    %v5366 = vld [vmem:[#allocation2 + $0x82] sm:$0xff]
    %v5367 = vld [vmem:[#allocation2 + $0x92] sm:$0xff]
    %v5368 = vld [vmem:[#allocation2 + $0x9a] sm:$0xff]
    %v5369 = vld [vmem:[#allocation2 + $0xaa] sm:$0xff]
    %v5370 = vld [vmem:[#allocation2 + $0xb2] sm:$0xff]
    %v5371 = vld [vmem:[#allocation2 + $0xc2] sm:$0xff]
    %v5372 = vld [vmem:[#allocation2 + $0xca] sm:$0xff]
    %v5373 = vld [vmem:[#allocation2 + $0xda] sm:$0xff]
    %v5374 = vld [vmem:[#allocation2 + $0xe2] sm:$0xff]
    %v5375 = vld [vmem:[#allocation2 + $0xf2] sm:$0xff]
    %v5376 = vld [vmem:[#allocation2 + $0xfa] sm:$0xff]
    %v5377 = vld [vmem:[#allocation2 + $0x10a] sm:$0xff]
    %v5378 = vld [vmem:[#allocation2 + $0x112] sm:$0xff]
    %v5379 = vld [vmem:[#allocation2 + $0x122] sm:$0xff]
    %v5380 = vld [vmem:[#allocation2 + $0x12a] sm:$0xff]
    %v5381 = vld [vmem:[#allocation2 + $0x13a] sm:$0xff]
    %v5382 = vld [vmem:[#allocation2 + $0x142] sm:$0xff]
    %v5383 = vld [vmem:[#allocation2 + $0x152] sm:$0xff]
    %v5384 = vld [vmem:[#allocation2 + $0x15a] sm:$0xff]
    %v5385 = vld [vmem:[#allocation2 + $0x16a] sm:$0xff]
    %v5386 = vld [vmem:[#allocation2 + $0x172] sm:$0xff]
    %v5387 = vld [vmem:[#allocation2 + $0x1b2] sm:$0xff]
    %v5388 = vld [vmem:[#allocation2 + $0x1ba] sm:$0xff]
    %v5389 = vld [vmem:[#allocation2 + $0x1ca] sm:$0xff]
    %v5390 = vld [vmem:[#allocation2 + $0x1d2] sm:$0xff]
    %v5391 = vld [vmem:[#allocation2 + $0x1e2] sm:$0xff]
    %v5392 = vld [vmem:[#allocation2 + $0x1ea] sm:$0xff]
    %v5393 = vld [vmem:[#allocation2 + $0x1fa] sm:$0xff]
    %v5394 = vld [vmem:[#allocation2 + $0x202] sm:$0xff]
    %v5395 = vld [vmem:[#allocation2 + $0x212] sm:$0xff]
    %v5396 = vld [vmem:[#allocation2 + $0x21a] sm:$0xff]
    %v5397 = vld [vmem:[#allocation2 + $0x22a] sm:$0xff]
    %v5398 = vld [vmem:[#allocation2 + $0x232] sm:$0xff]
    %v5399 = vld [vmem:[#allocation2 + $0x242] sm:$0xff]
    %v5400 = vld [vmem:[#allocation2 + $0x24a] sm:$0xff]
    %v5401 = vld [vmem:[#allocation2 + $0x25a] sm:$0xff]
    %v5402 = vld [vmem:[#allocation2 + $0x262] sm:$0xff]
    %v5403 = vld [vmem:[#allocation2 + $0x272] sm:$0xff]
    %v5404 = vld [vmem:[#allocation2 + $0x27a] sm:$0xff]
    %v5405 = vld [vmem:[#allocation2 + $0x28a] sm:$0xff]
    %v5406 = vld [vmem:[#allocation2 + $0x292] sm:$0xff]
    %v5407 = vld [vmem:[#allocation2 + $0x2a2] sm:$0xff]
    %v5408 = vld [vmem:[#allocation2 + $0x2aa] sm:$0xff]
    %v5409 = vld [vmem:[#allocation2 + $0x2ba] sm:$0xff]
    %v5410 = vld [vmem:[#allocation2 + $0x2c2] sm:$0xff]
    %v5411 = vld [vmem:[#allocation2 + $0x2d2] sm:$0xff]
    %v5412 = vld [vmem:[#allocation2 + $0x2da] sm:$0xff]
    %v5413 = vld [vmem:[#allocation2 + $0x2ea] sm:$0xff]
    %v5414 = vld [vmem:[#allocation2 + $0x2f2] sm:$0xff]
    %v5415 = vld [vmem:[#allocation2 + $0x302] sm:$0xff]
    %v5416 = vld [vmem:[#allocation2 + $0x30a] sm:$0xff]
    %v5417 = vld [vmem:[#allocation2 + $0x31a] sm:$0xff]
    %v5418 = vld [vmem:[#allocation2 + $0x322] sm:$0xff]
    %v5419 = vld [vmem:[%s182] sm:$0xff]
    %v5420 = vld [vmem:[%s182 + $0x8] sm:$0xff]
    %v5421 = vld [vmem:[%s182 + $0x18] sm:$0xff]
    %v5422 = vld [vmem:[%s182 + $0x20] sm:$0xff]
    %v5423 = vld [vmem:[%s182 + $0x30] sm:$0xff]
    %v5424 = vld [vmem:[%s182 + $0x38] sm:$0xff]
    %v5425 = vld [vmem:[%s182 + $0x48] sm:$0xff]
    %v5426 = vld [vmem:[%s182 + $0x50] sm:$0xff]
    %v5427 = vld [vmem:[%s182 + $0x60] sm:$0xff]
    %v5428 = vld [vmem:[%s182 + $0x68] sm:$0xff]
    %v5429 = vld [vmem:[%s182 + $0x78] sm:$0xff]
    %v5430 = vld [vmem:[%s182 + $0x80] sm:$0xff]
    %v5431 = vld [vmem:[%s182 + $0x90] sm:$0xff]
    %v5432 = vld [vmem:[%s182 + $0x98] sm:$0xff]
    %v5433 = vld [vmem:[%s182 + $0xa8] sm:$0xff]
    %v5434 = vld [vmem:[%s182 + $0xb0] sm:$0xff]
    %v5435 = vld [vmem:[%s182 + $0xc0] sm:$0xff]
    %v5436 = vld [vmem:[%s182 + $0xc8] sm:$0xff]
    %v5437 = vld [vmem:[%s182 + $0xd8] sm:$0xff]
    %v5438 = vld [vmem:[%s182 + $0xe0] sm:$0xff]
    %v5439 = vld [vmem:[%s182 + $0xf0] sm:$0xff]
    %v5440 = vld [vmem:[%s182 + $0xf8] sm:$0xff]
    %v5441 = vld [vmem:[%s182 + $0x108] sm:$0xff]
    %v5442 = vld [vmem:[%s182 + $0x110] sm:$0xff]
    %v5443 = vld [vmem:[%s182 + $0x120] sm:$0xff]
    %v5444 = vld [vmem:[%s182 + $0x128] sm:$0xff]
    %v5445 = vld [vmem:[%s182 + $0x138] sm:$0xff]
    %v5446 = vld [vmem:[%s182 + $0x140] sm:$0xff]
    %v5447 = vld [vmem:[%s182 + $0x150] sm:$0xff]
    %v5448 = vld [vmem:[%s182 + $0x158] sm:$0xff]
    %v5449 = vld [vmem:[%s182 + $0x168] sm:$0xff]
    %v5450 = vld [vmem:[%s182 + $0x170] sm:$0xff]
    %v5451 = vld [vmem:[%s182 + $0x1b0] sm:$0xff]
    %v5452 = vld [vmem:[%s182 + $0x1b8] sm:$0xff]
    %v5453 = vld [vmem:[%s182 + $0x1c8] sm:$0xff]
    %v5454 = vld [vmem:[%s182 + $0x1d0] sm:$0xff]
    %v5455 = vld [vmem:[%s182 + $0x1e0] sm:$0xff]
    %v5456 = vld [vmem:[%s182 + $0x1e8] sm:$0xff]
    %v5457 = vld [vmem:[%s182 + $0x1f8] sm:$0xff]
    %v5458 = vld [vmem:[%s182 + $0x200] sm:$0xff]
    %v5459 = vld [vmem:[%s182 + $0x210] sm:$0xff]
    %v5460 = vld [vmem:[%s182 + $0x218] sm:$0xff]
    %v5461 = vld [vmem:[%s182 + $0x228] sm:$0xff]
    %v5462 = vld [vmem:[%s182 + $0x230] sm:$0xff]
    %v5463 = vld [vmem:[%s182 + $0x240] sm:$0xff]
    %v5464 = vld [vmem:[%s182 + $0x248] sm:$0xff]
    %v5465 = vld [vmem:[%s182 + $0x258] sm:$0xff]
    %v5466 = vld [vmem:[%s182 + $0x260] sm:$0xff]
    %v5467 = vld [vmem:[%s182 + $0x270] sm:$0xff]
    %v5468 = vld [vmem:[%s182 + $0x278] sm:$0xff]
    %v5469 = vld [vmem:[%s182 + $0x288] sm:$0xff]
    %v5470 = vld [vmem:[%s182 + $0x290] sm:$0xff]
    %v5471 = vld [vmem:[%s182 + $0x2a0] sm:$0xff]
    %v5472 = vld [vmem:[%s182 + $0x2a8] sm:$0xff]
    %v5473 = vld [vmem:[%s182 + $0x2b8] sm:$0xff]
    %v5474 = vld [vmem:[%s182 + $0x2c0] sm:$0xff]
    %v5475 = vld [vmem:[%s182 + $0x2d0] sm:$0xff]
    %v5476 = vld [vmem:[%s182 + $0x2d8] sm:$0xff]
    %v5477 = vld [vmem:[%s182 + $0x2e8] sm:$0xff]
    %v5478 = vld [vmem:[%s182 + $0x2f0] sm:$0xff]
    %v5479 = vld [vmem:[%s182 + $0x300] sm:$0xff]
    %v5480 = vld [vmem:[%s182 + $0x308] sm:$0xff]
    %v5481 = vld [vmem:[%s182 + $0x318] sm:$0xff]
    %v5482 = vld [vmem:[%s182 + $0x320] sm:$0xff]
    %v5483 = vld [vmem:[%s182 + $0x1] sm:$0xff]
    %v5484 = vld [vmem:[%s182 + $0x9] sm:$0xff]
    %v5485 = vld [vmem:[%s182 + $0x19] sm:$0xff]
    %v5486 = vld [vmem:[%s182 + $0x21] sm:$0xff]
    %v5487 = vld [vmem:[%s182 + $0x31] sm:$0xff]
    %v5488 = vld [vmem:[%s182 + $0x39] sm:$0xff]
    %v5489 = vld [vmem:[%s182 + $0x49] sm:$0xff]
    %v5490 = vld [vmem:[%s182 + $0x51] sm:$0xff]
    %v5491 = vld [vmem:[%s182 + $0x61] sm:$0xff]
    %v5492 = vld [vmem:[%s182 + $0x69] sm:$0xff]
    %v5493 = vld [vmem:[%s182 + $0x79] sm:$0xff]
    %v5494 = vld [vmem:[%s182 + $0x81] sm:$0xff]
    %v5495 = vld [vmem:[%s182 + $0x91] sm:$0xff]
    %v5496 = vld [vmem:[%s182 + $0x99] sm:$0xff]
    %v5497 = vld [vmem:[%s182 + $0xa9] sm:$0xff]
    %v5498 = vld [vmem:[%s182 + $0xb1] sm:$0xff]
    %v5499 = vld [vmem:[%s182 + $0xc1] sm:$0xff]
    %v5500 = vld [vmem:[%s182 + $0xc9] sm:$0xff]
    %v5501 = vld [vmem:[%s182 + $0xd9] sm:$0xff]
    %v5502 = vld [vmem:[%s182 + $0xe1] sm:$0xff]
    %v5503 = vld [vmem:[%s182 + $0xf1] sm:$0xff]
    %v5504 = vld [vmem:[%s182 + $0xf9] sm:$0xff]
    %v5505 = vld [vmem:[%s182 + $0x109] sm:$0xff]
    %v5506 = vld [vmem:[%s182 + $0x111] sm:$0xff]
    %v5507 = vld [vmem:[%s182 + $0x121] sm:$0xff]
    %v5508 = vld [vmem:[%s182 + $0x129] sm:$0xff]
    %v5509 = vld [vmem:[%s182 + $0x139] sm:$0xff]
    %v5510 = vld [vmem:[%s182 + $0x141] sm:$0xff]
    %v5511 = vld [vmem:[%s182 + $0x151] sm:$0xff]
    %v5512 = vld [vmem:[%s182 + $0x159] sm:$0xff]
    %v5513 = vld [vmem:[%s182 + $0x169] sm:$0xff]
    %v5514 = vld [vmem:[%s182 + $0x171] sm:$0xff]
    %v5515 = vld [vmem:[%s182 + $0x1b1] sm:$0xff]
    %v5516 = vld [vmem:[%s182 + $0x1b9] sm:$0xff]
    %v5517 = vld [vmem:[%s182 + $0x1c9] sm:$0xff]
    %v5518 = vld [vmem:[%s182 + $0x1d1] sm:$0xff]
    %v5519 = vld [vmem:[%s182 + $0x1e1] sm:$0xff]
    %v5520 = vld [vmem:[%s182 + $0x1e9] sm:$0xff]
    %v5521 = vld [vmem:[%s182 + $0x1f9] sm:$0xff]
    %v5522 = vld [vmem:[%s182 + $0x201] sm:$0xff]
    %v5523 = vld [vmem:[%s182 + $0x211] sm:$0xff]
    %v5524 = vld [vmem:[%s182 + $0x219] sm:$0xff]
    %v5525 = vld [vmem:[%s182 + $0x229] sm:$0xff]
    %v5526 = vld [vmem:[%s182 + $0x231] sm:$0xff]
    %v5527 = vld [vmem:[%s182 + $0x241] sm:$0xff]
    %v5528 = vld [vmem:[%s182 + $0x249] sm:$0xff]
    %v5529 = vld [vmem:[%s182 + $0x259] sm:$0xff]
    %v5530 = vld [vmem:[%s182 + $0x261] sm:$0xff]
    %v5531 = vld [vmem:[%s182 + $0x271] sm:$0xff]
    %v5532 = vld [vmem:[%s182 + $0x279] sm:$0xff]
    %v5533 = vld [vmem:[%s182 + $0x289] sm:$0xff]
    %v5534 = vld [vmem:[%s182 + $0x291] sm:$0xff]
    %v5535 = vld [vmem:[%s182 + $0x2a1] sm:$0xff]
    %v5536 = vld [vmem:[%s182 + $0x2a9] sm:$0xff]
    %v5537 = vld [vmem:[%s182 + $0x2b9] sm:$0xff]
    %v5538 = vld [vmem:[%s182 + $0x2c1] sm:$0xff]
    %v5539 = vld [vmem:[%s182 + $0x2d1] sm:$0xff]
    %v5540 = vld [vmem:[%s182 + $0x2d9] sm:$0xff]
    %v5541 = vld [vmem:[%s182 + $0x2e9] sm:$0xff]
    %v5542 = vld [vmem:[%s182 + $0x2f1] sm:$0xff]
    %v5543 = vld [vmem:[%s182 + $0x301] sm:$0xff]
    %v5544 = vld [vmem:[%s182 + $0x309] sm:$0xff]
    %v5545 = vld [vmem:[%s182 + $0x319] sm:$0xff]
    %v5546 = vld [vmem:[%s182 + $0x321] sm:$0xff]
    %v5547 = vld [vmem:[%s182 + $0x2] sm:$0xff]
    %v5548 = vld [vmem:[%s182 + $0xa] sm:$0xff]
    %v5549 = vld [vmem:[%s182 + $0x1a] sm:$0xff]
    %v5550 = vld [vmem:[%s182 + $0x22] sm:$0xff]
    %v5551 = vld [vmem:[%s182 + $0x32] sm:$0xff]
    %v5552 = vld [vmem:[%s182 + $0x3a] sm:$0xff]
    %v5553 = vld [vmem:[%s182 + $0x4a] sm:$0xff]
    %v5554 = vld [vmem:[%s182 + $0x52] sm:$0xff]
    %v5555 = vld [vmem:[%s182 + $0x62] sm:$0xff]
    %v5556 = vld [vmem:[%s182 + $0x6a] sm:$0xff]
    %v5557 = vld [vmem:[%s182 + $0x7a] sm:$0xff]
    %v5558 = vld [vmem:[%s182 + $0x82] sm:$0xff]
    %v5559 = vld [vmem:[%s182 + $0x92] sm:$0xff]
    %v5560 = vld [vmem:[%s182 + $0x9a] sm:$0xff]
    %v5561 = vld [vmem:[%s182 + $0xaa] sm:$0xff]
    %v5562 = vld [vmem:[%s182 + $0xb2] sm:$0xff]
    %v5563 = vld [vmem:[%s182 + $0xc2] sm:$0xff]
    %v5564 = vld [vmem:[%s182 + $0xca] sm:$0xff]
    %v5565 = vld [vmem:[%s182 + $0xda] sm:$0xff]
    %v5566 = vld [vmem:[%s182 + $0xe2] sm:$0xff]
    %v5567 = vld [vmem:[%s182 + $0xf2] sm:$0xff]
    %v5568 = vld [vmem:[%s182 + $0xfa] sm:$0xff]
    %v5569 = vld [vmem:[%s182 + $0x10a] sm:$0xff]
    %v5570 = vld [vmem:[%s182 + $0x112] sm:$0xff]
    %v5571 = vld [vmem:[%s182 + $0x122] sm:$0xff]
    %v5572 = vld [vmem:[%s182 + $0x12a] sm:$0xff]
    %v5573 = vld [vmem:[%s182 + $0x13a] sm:$0xff]
    %v5574 = vld [vmem:[%s182 + $0x142] sm:$0xff]
    %v5575 = vld [vmem:[%s182 + $0x152] sm:$0xff]
    %v5576 = vld [vmem:[%s182 + $0x15a] sm:$0xff]
    %v5577 = vld [vmem:[%s182 + $0x16a] sm:$0xff]
    %v5578 = vld [vmem:[%s182 + $0x172] sm:$0xff]
    %v5579 = vld [vmem:[%s182 + $0x1b2] sm:$0xff]
    %v5580 = vld [vmem:[%s182 + $0x1ba] sm:$0xff]
    %v5581 = vld [vmem:[%s182 + $0x1ca] sm:$0xff]
    %v5582 = vld [vmem:[%s182 + $0x1d2] sm:$0xff]
    %v5583 = vld [vmem:[%s182 + $0x1e2] sm:$0xff]
    %v5584 = vld [vmem:[%s182 + $0x1ea] sm:$0xff]
    %v5585 = vld [vmem:[%s182 + $0x1fa] sm:$0xff]
    %v5586 = vld [vmem:[%s182 + $0x202] sm:$0xff]
    %v5587 = vld [vmem:[%s182 + $0x212] sm:$0xff]
    %v5588 = vld [vmem:[%s182 + $0x21a] sm:$0xff]
    %v5589 = vld [vmem:[%s182 + $0x22a] sm:$0xff]
    %v5590 = vld [vmem:[%s182 + $0x232] sm:$0xff]
    %v5591 = vld [vmem:[%s182 + $0x242] sm:$0xff]
    %v5592 = vld [vmem:[%s182 + $0x24a] sm:$0xff]
    %v5593 = vld [vmem:[%s182 + $0x25a] sm:$0xff]
    %v5594 = vld [vmem:[%s182 + $0x262] sm:$0xff]
    %v5595 = vld [vmem:[%s182 + $0x272] sm:$0xff]
    %v5596 = vld [vmem:[%s182 + $0x27a] sm:$0xff]
    %v5597 = vld [vmem:[%s182 + $0x28a] sm:$0xff]
    %v5598 = vld [vmem:[%s182 + $0x292] sm:$0xff]
    %v5599 = vld [vmem:[%s182 + $0x2a2] sm:$0xff]
    %v5600 = vld [vmem:[%s182 + $0x2aa] sm:$0xff]
    %v5601 = vld [vmem:[%s182 + $0x2ba] sm:$0xff]
    %v5602 = vld [vmem:[%s182 + $0x2c2] sm:$0xff]
    %v5603 = vld [vmem:[%s182 + $0x2d2] sm:$0xff]
    %v5604 = vld [vmem:[%s182 + $0x2da] sm:$0xff]
    %v5605 = vld [vmem:[%s182 + $0x2ea] sm:$0xff]
    %v5606 = vld [vmem:[%s182 + $0x2f2] sm:$0xff]
    %v5607 = vld [vmem:[%s182 + $0x302] sm:$0xff]
    %v5608 = vld [vmem:[%s182 + $0x30a] sm:$0xff]
    %v5609 = vld [vmem:[%s182 + $0x31a] sm:$0xff]
    %v5610 = vld [vmem:[%s182 + $0x322] sm:$0xff]
    %v5611 = vld [vmem:[%s631] sm:$0xff]
    %v5612 = vld [vmem:[%s631 + $0x8] sm:$0xff]
    %v5613 = vld [vmem:[%s631 + $0x18] sm:$0xff]
    %v5614 = vld [vmem:[%s631 + $0x20] sm:$0xff]
    %v5615 = vld [vmem:[%s631 + $0x30] sm:$0xff]
    %v5616 = vld [vmem:[%s631 + $0x38] sm:$0xff]
    %v5617 = vld [vmem:[%s631 + $0x48] sm:$0xff]
    %v5618 = vld [vmem:[%s631 + $0x50] sm:$0xff]
    %v5619 = vld [vmem:[%s631 + $0x60] sm:$0xff]
    %v5620 = vld [vmem:[%s631 + $0x68] sm:$0xff]
    %v5621 = vld [vmem:[%s631 + $0x78] sm:$0xff]
    %v5622 = vld [vmem:[%s631 + $0x80] sm:$0xff]
    %v5623 = vld [vmem:[%s631 + $0x90] sm:$0xff]
    %v5624 = vld [vmem:[%s631 + $0x98] sm:$0xff]
    %v5625 = vld [vmem:[%s631 + $0xa8] sm:$0xff]
    %v5626 = vld [vmem:[%s631 + $0xb0] sm:$0xff]
    %v5627 = vld [vmem:[%s631 + $0xc0] sm:$0xff]
    %v5628 = vld [vmem:[%s631 + $0xc8] sm:$0xff]
    %v5629 = vld [vmem:[%s631 + $0xd8] sm:$0xff]
    %v5630 = vld [vmem:[%s631 + $0xe0] sm:$0xff]
    %v5631 = vld [vmem:[%s631 + $0xf0] sm:$0xff]
    %v5632 = vld [vmem:[%s631 + $0xf8] sm:$0xff]
    %v5633 = vld [vmem:[%s631 + $0x108] sm:$0xff]
    %v5634 = vld [vmem:[%s631 + $0x110] sm:$0xff]
    %v5635 = vld [vmem:[%s631 + $0x120] sm:$0xff]
    %v5636 = vld [vmem:[%s631 + $0x128] sm:$0xff]
    %v5637 = vld [vmem:[%s631 + $0x138] sm:$0xff]
    %v5638 = vld [vmem:[%s631 + $0x140] sm:$0xff]
    %v5639 = vld [vmem:[%s631 + $0x150] sm:$0xff]
    %v5640 = vld [vmem:[%s631 + $0x158] sm:$0xff]
    %v5641 = vld [vmem:[%s631 + $0x168] sm:$0xff]
    %v5642 = vld [vmem:[%s631 + $0x170] sm:$0xff]
    %v5643 = vld [vmem:[%s631 + $0x1b0] sm:$0xff]
    %v5644 = vld [vmem:[%s631 + $0x1b8] sm:$0xff]
    %v5645 = vld [vmem:[%s631 + $0x1c8] sm:$0xff]
    %v5646 = vld [vmem:[%s631 + $0x1d0] sm:$0xff]
    %v5647 = vld [vmem:[%s631 + $0x1e0] sm:$0xff]
    %v5648 = vld [vmem:[%s631 + $0x1e8] sm:$0xff]
    %v5649 = vld [vmem:[%s631 + $0x1f8] sm:$0xff]
    %v5650 = vld [vmem:[%s631 + $0x200] sm:$0xff]
    %v5651 = vld [vmem:[%s631 + $0x210] sm:$0xff]
    %v5652 = vld [vmem:[%s631 + $0x218] sm:$0xff]
    %v5653 = vld [vmem:[%s631 + $0x228] sm:$0xff]
    %v5654 = vld [vmem:[%s631 + $0x230] sm:$0xff]
    %v5655 = vld [vmem:[%s631 + $0x240] sm:$0xff]
    %v5656 = vld [vmem:[%s631 + $0x248] sm:$0xff]
    %v5657 = vld [vmem:[%s631 + $0x258] sm:$0xff]
    %v5658 = vld [vmem:[%s631 + $0x260] sm:$0xff]
    %v5659 = vld [vmem:[%s631 + $0x270] sm:$0xff]
    %v5660 = vld [vmem:[%s631 + $0x278] sm:$0xff]
    %v5661 = vld [vmem:[%s631 + $0x288] sm:$0xff]
    %v5662 = vld [vmem:[%s631 + $0x290] sm:$0xff]
    %v5663 = vld [vmem:[%s631 + $0x2a0] sm:$0xff]
    %v5664 = vld [vmem:[%s631 + $0x2a8] sm:$0xff]
    %v5665 = vld [vmem:[%s631 + $0x2b8] sm:$0xff]
    %v5666 = vld [vmem:[%s631 + $0x2c0] sm:$0xff]
    %v5667 = vld [vmem:[%s631 + $0x2d0] sm:$0xff]
    %v5668 = vld [vmem:[%s631 + $0x2d8] sm:$0xff]
    %v5669 = vld [vmem:[%s631 + $0x2e8] sm:$0xff]
    %v5670 = vld [vmem:[%s631 + $0x2f0] sm:$0xff]
    %v5671 = vld [vmem:[%s631 + $0x300] sm:$0xff]
    %v5672 = vld [vmem:[%s631 + $0x308] sm:$0xff]
    %v5673 = vld [vmem:[%s631 + $0x318] sm:$0xff]
    %v5674 = vld [vmem:[%s631 + $0x320] sm:$0xff]
    %v5675 = vld [vmem:[%s631 + $0x1] sm:$0xff]
    %v5676 = vld [vmem:[%s631 + $0x9] sm:$0xff]
    %v5677 = vld [vmem:[%s631 + $0x19] sm:$0xff]
    %v5678 = vld [vmem:[%s631 + $0x21] sm:$0xff]
    %v5679 = vld [vmem:[%s631 + $0x31] sm:$0xff]
    %v5680 = vld [vmem:[%s631 + $0x39] sm:$0xff]
    %v5681 = vld [vmem:[%s631 + $0x49] sm:$0xff]
    %v5682 = vld [vmem:[%s631 + $0x51] sm:$0xff]
    %v5683 = vld [vmem:[%s631 + $0x61] sm:$0xff]
    %v5684 = vld [vmem:[%s631 + $0x69] sm:$0xff]
    %v5685 = vld [vmem:[%s631 + $0x79] sm:$0xff]
    %v5686 = vld [vmem:[%s631 + $0x81] sm:$0xff]
    %v5687 = vld [vmem:[%s631 + $0x91] sm:$0xff]
    %v5688 = vld [vmem:[%s631 + $0x99] sm:$0xff]
    %v5689 = vld [vmem:[%s631 + $0xa9] sm:$0xff]
    %v5690 = vld [vmem:[%s631 + $0xb1] sm:$0xff]
    %v5691 = vld [vmem:[%s631 + $0xc1] sm:$0xff]
    %v5692 = vld [vmem:[%s631 + $0xc9] sm:$0xff]
    %v5693 = vld [vmem:[%s631 + $0xd9] sm:$0xff]
    %v5694 = vld [vmem:[%s631 + $0xe1] sm:$0xff]
    %v5695 = vld [vmem:[%s631 + $0xf1] sm:$0xff]
    %v5696 = vld [vmem:[%s631 + $0xf9] sm:$0xff]
    %v5697 = vld [vmem:[%s631 + $0x109] sm:$0xff]
    %v5698 = vld [vmem:[%s631 + $0x111] sm:$0xff]
    %v5699 = vld [vmem:[%s631 + $0x121] sm:$0xff]
    %v5700 = vld [vmem:[%s631 + $0x129] sm:$0xff]
    %v5701 = vld [vmem:[%s631 + $0x139] sm:$0xff]
    %v5702 = vld [vmem:[%s631 + $0x141] sm:$0xff]
    %v5703 = vld [vmem:[%s631 + $0x151] sm:$0xff]
    %v5704 = vld [vmem:[%s631 + $0x159] sm:$0xff]
    %v5705 = vld [vmem:[%s631 + $0x169] sm:$0xff]
    %v5706 = vld [vmem:[%s631 + $0x171] sm:$0xff]
    %v5707 = vld [vmem:[%s631 + $0x1b1] sm:$0xff]
    %v5708 = vld [vmem:[%s631 + $0x1b9] sm:$0xff]
    %v5709 = vld [vmem:[%s631 + $0x1c9] sm:$0xff]
    %v5710 = vld [vmem:[%s631 + $0x1d1] sm:$0xff]
    %v5711 = vld [vmem:[%s631 + $0x1e1] sm:$0xff]
    %v5712 = vld [vmem:[%s631 + $0x1e9] sm:$0xff]
    %v5713 = vld [vmem:[%s631 + $0x1f9] sm:$0xff]
    %v5714 = vld [vmem:[%s631 + $0x201] sm:$0xff]
    %v5715 = vld [vmem:[%s631 + $0x211] sm:$0xff]
    %v5716 = vld [vmem:[%s631 + $0x219] sm:$0xff]
    %v5717 = vld [vmem:[%s631 + $0x229] sm:$0xff]
    %v5718 = vld [vmem:[%s631 + $0x231] sm:$0xff]
    %v5719 = vld [vmem:[%s631 + $0x241] sm:$0xff]
    %v5720 = vld [vmem:[%s631 + $0x249] sm:$0xff]
    %v5721 = vld [vmem:[%s631 + $0x259] sm:$0xff]
    %v5722 = vld [vmem:[%s631 + $0x261] sm:$0xff]
    %v5723 = vld [vmem:[%s631 + $0x271] sm:$0xff]
    %v5724 = vld [vmem:[%s631 + $0x279] sm:$0xff]
    %v5725 = vld [vmem:[%s631 + $0x289] sm:$0xff]
    %v5726 = vld [vmem:[%s631 + $0x291] sm:$0xff]
    %v5727 = vld [vmem:[%s631 + $0x2a1] sm:$0xff]
    %v5728 = vld [vmem:[%s631 + $0x2a9] sm:$0xff]
    %v5729 = vld [vmem:[%s631 + $0x2b9] sm:$0xff]
    %v5730 = vld [vmem:[%s631 + $0x2c1] sm:$0xff]
    %v5731 = vld [vmem:[%s631 + $0x2d1] sm:$0xff]
    %v5732 = vld [vmem:[%s631 + $0x2d9] sm:$0xff]
    %v5733 = vld [vmem:[%s631 + $0x2e9] sm:$0xff]
    %v5734 = vld [vmem:[%s631 + $0x2f1] sm:$0xff]
    %v5735 = vld [vmem:[%s631 + $0x301] sm:$0xff]
    %v5736 = vld [vmem:[%s631 + $0x309] sm:$0xff]
    %v5737 = vld [vmem:[%s631 + $0x319] sm:$0xff]
    %v5738 = vld [vmem:[%s631 + $0x321] sm:$0xff]
    %v5739 = vld [vmem:[%s631 + $0x2] sm:$0xff]
    %v5740 = vld [vmem:[%s631 + $0xa] sm:$0xff]
    %v5741 = vld [vmem:[%s631 + $0x1a] sm:$0xff]
    %v5742 = vld [vmem:[%s631 + $0x22] sm:$0xff]
    %v5743 = vld [vmem:[%s631 + $0x32] sm:$0xff]
    %v5744 = vld [vmem:[%s631 + $0x3a] sm:$0xff]
    %v5745 = vld [vmem:[%s631 + $0x4a] sm:$0xff]
    %v5746 = vld [vmem:[%s631 + $0x52] sm:$0xff]
    %v5747 = vld [vmem:[%s631 + $0x62] sm:$0xff]
    %v5748 = vld [vmem:[%s631 + $0x6a] sm:$0xff]
    %v5749 = vld [vmem:[%s631 + $0x7a] sm:$0xff]
    %v5750 = vld [vmem:[%s631 + $0x82] sm:$0xff]
    %v5751 = vld [vmem:[%s631 + $0x92] sm:$0xff]
    %v5752 = vld [vmem:[%s631 + $0x9a] sm:$0xff]
    %v5753 = vld [vmem:[%s631 + $0xaa] sm:$0xff]
    %v5754 = vld [vmem:[%s631 + $0xb2] sm:$0xff]
    %v5755 = vld [vmem:[%s631 + $0xc2] sm:$0xff]
    %v5756 = vld [vmem:[%s631 + $0xca] sm:$0xff]
    %v5757 = vld [vmem:[%s631 + $0xda] sm:$0xff]
    %v5758 = vld [vmem:[%s631 + $0xe2] sm:$0xff]
    %v5759 = vld [vmem:[%s631 + $0xf2] sm:$0xff]
    %v5760 = vld [vmem:[%s631 + $0xfa] sm:$0xff]
    %v5761 = vld [vmem:[%s631 + $0x10a] sm:$0xff]
    %v5762 = vld [vmem:[%s631 + $0x112] sm:$0xff]
    %v5763 = vld [vmem:[%s631 + $0x122] sm:$0xff]
    %v5764 = vld [vmem:[%s631 + $0x12a] sm:$0xff]
    %v5765 = vld [vmem:[%s631 + $0x13a] sm:$0xff]
    %v5766 = vld [vmem:[%s631 + $0x142] sm:$0xff]
    %v5767 = vld [vmem:[%s631 + $0x152] sm:$0xff]
    %v5768 = vld [vmem:[%s631 + $0x15a] sm:$0xff]
    %v5769 = vld [vmem:[%s631 + $0x16a] sm:$0xff]
    %v5770 = vld [vmem:[%s631 + $0x172] sm:$0xff]
    %v5771 = vld [vmem:[%s631 + $0x1b2] sm:$0xff]
    %v5772 = vld [vmem:[%s631 + $0x1ba] sm:$0xff]
    %v5773 = vld [vmem:[%s631 + $0x1ca] sm:$0xff]
    %v5774 = vld [vmem:[%s631 + $0x1d2] sm:$0xff]
    %v5775 = vld [vmem:[%s631 + $0x1e2] sm:$0xff]
    %v5776 = vld [vmem:[%s631 + $0x1ea] sm:$0xff]
    %v5777 = vld [vmem:[%s631 + $0x1fa] sm:$0xff]
    %v5778 = vld [vmem:[%s631 + $0x202] sm:$0xff]
    %v5779 = vld [vmem:[%s631 + $0x212] sm:$0xff]
    %v5780 = vld [vmem:[%s631 + $0x21a] sm:$0xff]
    %v5781 = vld [vmem:[%s631 + $0x22a] sm:$0xff]
    %v5782 = vld [vmem:[%s631 + $0x232] sm:$0xff]
    %v5783 = vld [vmem:[%s631 + $0x242] sm:$0xff]
    %v5784 = vld [vmem:[%s631 + $0x24a] sm:$0xff]
    %v5785 = vld [vmem:[%s631 + $0x25a] sm:$0xff]
    %v5786 = vld [vmem:[%s631 + $0x262] sm:$0xff]
    %v5787 = vld [vmem:[%s631 + $0x272] sm:$0xff]
    %v5788 = vld [vmem:[%s631 + $0x27a] sm:$0xff]
    %v5789 = vld [vmem:[%s631 + $0x28a] sm:$0xff]
    %v5790 = vld [vmem:[%s631 + $0x292] sm:$0xff]
    %v5791 = vld [vmem:[%s631 + $0x2a2] sm:$0xff]
    %v5792 = vld [vmem:[%s631 + $0x2aa] sm:$0xff]
    %v5793 = vld [vmem:[%s631 + $0x2ba] sm:$0xff]
    %v5794 = vld [vmem:[%s631 + $0x2c2] sm:$0xff]
    %v5795 = vld [vmem:[%s631 + $0x2d2] sm:$0xff]
    %v5796 = vld [vmem:[%s631 + $0x2da] sm:$0xff]
    %v5797 = vld [vmem:[%s631 + $0x2ea] sm:$0xff]
    %v5798 = vld [vmem:[%s631 + $0x2f2] sm:$0xff]
    %v5799 = vld [vmem:[%s631 + $0x302] sm:$0xff]
    %v5800 = vld [vmem:[%s631 + $0x30a] sm:$0xff]
    %v5801 = vld [vmem:[%s631 + $0x31a] sm:$0xff]
    %v5802 = vld [vmem:[%s631 + $0x322] sm:$0xff]
    %5867 = vrot.lane.b32.xlu0 %v5291, 4
    %v5868 = vpop.permute.xlu0 %5867
    %5869 = vrot.lane.b32.xlu0 %v5292, 4
    %v5870 = vpop.permute.xlu0 %5869
    %5871 = vrot.lane.b32.xlu0 %v5293, 4
    %v5872 = vpop.permute.xlu0 %5871
    %5873 = vrot.lane.b32.xlu0 %v5294, 4
    %v5874 = vpop.permute.xlu0 %5873
    %5875 = vrot.lane.b32.xlu0 %v5295, 4
    %v5876 = vpop.permute.xlu0 %5875
    %5877 = vrot.lane.b32.xlu0 %v5296, 4
    %v5878 = vpop.permute.xlu0 %5877
    %5879 = vrot.lane.b32.xlu0 %v5297, 4
    %v5880 = vpop.permute.xlu0 %5879
    %5881 = vrot.lane.b32.xlu0 %v5298, 4
    %v5882 = vpop.permute.xlu0 %5881
    %5883 = vrot.lane.b32.xlu0 %v5299, 4
    %v5884 = vpop.permute.xlu0 %5883
    %5885 = vrot.lane.b32.xlu0 %v5300, 4
    %v5886 = vpop.permute.xlu0 %5885
    %5887 = vrot.lane.b32.xlu0 %v5301, 4
    %v5888 = vpop.permute.xlu0 %5887
    %5889 = vrot.lane.b32.xlu0 %v5302, 4
    %v5890 = vpop.permute.xlu0 %5889
    %5891 = vrot.lane.b32.xlu0 %v5303, 4
    %v5892 = vpop.permute.xlu0 %5891
    %5893 = vrot.lane.b32.xlu0 %v5304, 4
    %v5894 = vpop.permute.xlu0 %5893
    %5895 = vrot.lane.b32.xlu0 %v5305, 4
    %v5896 = vpop.permute.xlu0 %5895
    %5897 = vrot.lane.b32.xlu0 %v5306, 4
    %v5898 = vpop.permute.xlu0 %5897
    %5899 = vrot.lane.b32.xlu0 %v5307, 4
    %v5900 = vpop.permute.xlu0 %5899
    %5901 = vrot.lane.b32.xlu0 %v5308, 4
    %v5902 = vpop.permute.xlu0 %5901
    %5903 = vrot.lane.b32.xlu0 %v5309, 4
    %v5904 = vpop.permute.xlu0 %5903
    %5905 = vrot.lane.b32.xlu0 %v5310, 4
    %v5906 = vpop.permute.xlu0 %5905
    %5907 = vrot.lane.b32.xlu0 %v5311, 4
    %v5908 = vpop.permute.xlu0 %5907
    %5909 = vrot.lane.b32.xlu0 %v5312, 4
    %v5910 = vpop.permute.xlu0 %5909
    %5911 = vrot.lane.b32.xlu0 %v5313, 4
    %v5912 = vpop.permute.xlu0 %5911
    %5913 = vrot.lane.b32.xlu0 %v5314, 4
    %v5914 = vpop.permute.xlu0 %5913
    %5915 = vrot.lane.b32.xlu0 %v5315, 4
    %v5916 = vpop.permute.xlu0 %5915
    %5917 = vrot.lane.b32.xlu0 %v5316, 4
    %v5918 = vpop.permute.xlu0 %5917
    %5919 = vrot.lane.b32.xlu0 %v5317, 4
    %v5920 = vpop.permute.xlu0 %5919
    %5921 = vrot.lane.b32.xlu0 %v5318, 4
    %v5922 = vpop.permute.xlu0 %5921
    %5923 = vrot.lane.b32.xlu0 %v5319, 4
    %v5924 = vpop.permute.xlu0 %5923
    %5925 = vrot.lane.b32.xlu0 %v5320, 4
    %v5926 = vpop.permute.xlu0 %5925
    %5927 = vrot.lane.b32.xlu0 %v5321, 4
    %v5928 = vpop.permute.xlu0 %5927
    %5929 = vrot.lane.b32.xlu0 %v5322, 4
    %v5930 = vpop.permute.xlu0 %5929
    %5931 = vrot.lane.b32.xlu0 %v5323, 4
    %v5932 = vpop.permute.xlu0 %5931
    %5933 = vrot.lane.b32.xlu0 %v5324, 4
    %v5934 = vpop.permute.xlu0 %5933
    %5935 = vrot.lane.b32.xlu0 %v5325, 4
    %v5936 = vpop.permute.xlu0 %5935
    %5937 = vrot.lane.b32.xlu0 %v5326, 4
    %v5938 = vpop.permute.xlu0 %5937
    %5939 = vrot.lane.b32.xlu0 %v5327, 4
    %v5940 = vpop.permute.xlu0 %5939
    %5941 = vrot.lane.b32.xlu0 %v5328, 4
    %v5942 = vpop.permute.xlu0 %5941
    %5943 = vrot.lane.b32.xlu0 %v5329, 4
    %v5944 = vpop.permute.xlu0 %5943
    %5945 = vrot.lane.b32.xlu0 %v5330, 4
    %v5946 = vpop.permute.xlu0 %5945
    %5947 = vrot.lane.b32.xlu0 %v5331, 4
    %v5948 = vpop.permute.xlu0 %5947
    %5949 = vrot.lane.b32.xlu0 %v5332, 4
    %v5950 = vpop.permute.xlu0 %5949
    %5951 = vrot.lane.b32.xlu0 %v5333, 4
    %v5952 = vpop.permute.xlu0 %5951
    %5953 = vrot.lane.b32.xlu0 %v5334, 4
    %v5954 = vpop.permute.xlu0 %5953
    %5955 = vrot.lane.b32.xlu0 %v5335, 4
    %v5956 = vpop.permute.xlu0 %5955
    %5957 = vrot.lane.b32.xlu0 %v5336, 4
    %v5958 = vpop.permute.xlu0 %5957
    %5959 = vrot.lane.b32.xlu0 %v5337, 4
    %v5960 = vpop.permute.xlu0 %5959
    %5961 = vrot.lane.b32.xlu0 %v5338, 4
    %v5962 = vpop.permute.xlu0 %5961
    %5963 = vrot.lane.b32.xlu0 %v5339, 4
    %v5964 = vpop.permute.xlu0 %5963
    %5965 = vrot.lane.b32.xlu0 %v5340, 4
    %v5966 = vpop.permute.xlu0 %5965
    %5967 = vrot.lane.b32.xlu0 %v5341, 4
    %v5968 = vpop.permute.xlu0 %5967
    %5969 = vrot.lane.b32.xlu0 %v5342, 4
    %v5970 = vpop.permute.xlu0 %5969
    %5971 = vrot.lane.b32.xlu0 %v5343, 4
    %v5972 = vpop.permute.xlu0 %5971
    %5973 = vrot.lane.b32.xlu0 %v5344, 4
    %v5974 = vpop.permute.xlu0 %5973
    %5975 = vrot.lane.b32.xlu0 %v5345, 4
    %v5976 = vpop.permute.xlu0 %5975
    %5977 = vrot.lane.b32.xlu0 %v5346, 4
    %v5978 = vpop.permute.xlu0 %5977
    %5979 = vrot.lane.b32.xlu0 %v5347, 4
    %v5980 = vpop.permute.xlu0 %5979
    %5981 = vrot.lane.b32.xlu0 %v5348, 4
    %v5982 = vpop.permute.xlu0 %5981
    %5983 = vrot.lane.b32.xlu0 %v5349, 4
    %v5984 = vpop.permute.xlu0 %5983
    %5985 = vrot.lane.b32.xlu0 %v5350, 4
    %v5986 = vpop.permute.xlu0 %5985
    %5987 = vrot.lane.b32.xlu0 %v5351, 4
    %v5988 = vpop.permute.xlu0 %5987
    %5989 = vrot.lane.b32.xlu0 %v5352, 4
    %v5990 = vpop.permute.xlu0 %5989
    %5991 = vrot.lane.b32.xlu0 %v5353, 4
    %v5992 = vpop.permute.xlu0 %5991
    %5993 = vrot.lane.b32.xlu0 %v5354, 4
    %v5994 = vpop.permute.xlu0 %5993
    %6123 = vrot.lane.b32.xlu0 %v5355, 8
    %v6124 = vpop.permute.xlu0 %6123
    %6125 = vrot.lane.b32.xlu0 %v5356, 8
    %v6126 = vpop.permute.xlu0 %6125
    %6127 = vrot.lane.b32.xlu0 %v5357, 8
    %v6128 = vpop.permute.xlu0 %6127
    %6129 = vrot.lane.b32.xlu0 %v5358, 8
    %v6130 = vpop.permute.xlu0 %6129
    %6131 = vrot.lane.b32.xlu0 %v5359, 8
    %v6132 = vpop.permute.xlu0 %6131
    %6133 = vrot.lane.b32.xlu0 %v5360, 8
    %v6134 = vpop.permute.xlu0 %6133
    %6135 = vrot.lane.b32.xlu0 %v5361, 8
    %v6136 = vpop.permute.xlu0 %6135
    %6137 = vrot.lane.b32.xlu0 %v5362, 8
    %v6138 = vpop.permute.xlu0 %6137
    %6139 = vrot.lane.b32.xlu0 %v5363, 8
    %v6140 = vpop.permute.xlu0 %6139
    %6141 = vrot.lane.b32.xlu0 %v5364, 8
    %v6142 = vpop.permute.xlu0 %6141
    %6143 = vrot.lane.b32.xlu0 %v5365, 8
    %v6144 = vpop.permute.xlu0 %6143
    %6145 = vrot.lane.b32.xlu0 %v5366, 8
    %v6146 = vpop.permute.xlu0 %6145
    %6147 = vrot.lane.b32.xlu0 %v5367, 8
    %v6148 = vpop.permute.xlu0 %6147
    %6149 = vrot.lane.b32.xlu0 %v5368, 8
    %v6150 = vpop.permute.xlu0 %6149
    %6151 = vrot.lane.b32.xlu0 %v5369, 8
    %v6152 = vpop.permute.xlu0 %6151
    %6153 = vrot.lane.b32.xlu0 %v5370, 8
    %v6154 = vpop.permute.xlu0 %6153
    %6155 = vrot.lane.b32.xlu0 %v5371, 8
    %v6156 = vpop.permute.xlu0 %6155
    %6157 = vrot.lane.b32.xlu0 %v5372, 8
    %v6158 = vpop.permute.xlu0 %6157
    %6159 = vrot.lane.b32.xlu0 %v5373, 8
    %v6160 = vpop.permute.xlu0 %6159
    %6161 = vrot.lane.b32.xlu0 %v5374, 8
    %v6162 = vpop.permute.xlu0 %6161
    %6163 = vrot.lane.b32.xlu0 %v5375, 8
    %v6164 = vpop.permute.xlu0 %6163
    %6165 = vrot.lane.b32.xlu0 %v5376, 8
    %v6166 = vpop.permute.xlu0 %6165
    %6167 = vrot.lane.b32.xlu0 %v5377, 8
    %v6168 = vpop.permute.xlu0 %6167
    %6169 = vrot.lane.b32.xlu0 %v5378, 8
    %v6170 = vpop.permute.xlu0 %6169
    %6171 = vrot.lane.b32.xlu0 %v5379, 8
    %v6172 = vpop.permute.xlu0 %6171
    %6173 = vrot.lane.b32.xlu0 %v5380, 8
    %v6174 = vpop.permute.xlu0 %6173
    %6175 = vrot.lane.b32.xlu0 %v5381, 8
    %v6176 = vpop.permute.xlu0 %6175
    %6177 = vrot.lane.b32.xlu0 %v5382, 8
    %v6178 = vpop.permute.xlu0 %6177
    %6179 = vrot.lane.b32.xlu0 %v5383, 8
    %v6180 = vpop.permute.xlu0 %6179
    %6181 = vrot.lane.b32.xlu0 %v5384, 8
    %v6182 = vpop.permute.xlu0 %6181
    %6183 = vrot.lane.b32.xlu0 %v5385, 8
    %v6184 = vpop.permute.xlu0 %6183
    %6185 = vrot.lane.b32.xlu0 %v5386, 8
    %v6186 = vpop.permute.xlu0 %6185
    %6187 = vrot.lane.b32.xlu0 %v5387, 8
    %v6188 = vpop.permute.xlu0 %6187
    %6189 = vrot.lane.b32.xlu0 %v5388, 8
    %v6190 = vpop.permute.xlu0 %6189
    %6191 = vrot.lane.b32.xlu0 %v5389, 8
    %v6192 = vpop.permute.xlu0 %6191
    %6193 = vrot.lane.b32.xlu0 %v5390, 8
    %v6194 = vpop.permute.xlu0 %6193
    %6195 = vrot.lane.b32.xlu0 %v5391, 8
    %v6196 = vpop.permute.xlu0 %6195
    %6197 = vrot.lane.b32.xlu0 %v5392, 8
    %v6198 = vpop.permute.xlu0 %6197
    %6199 = vrot.lane.b32.xlu0 %v5393, 8
    %v6200 = vpop.permute.xlu0 %6199
    %6201 = vrot.lane.b32.xlu0 %v5394, 8
    %v6202 = vpop.permute.xlu0 %6201
    %6203 = vrot.lane.b32.xlu0 %v5395, 8
    %v6204 = vpop.permute.xlu0 %6203
    %6205 = vrot.lane.b32.xlu0 %v5396, 8
    %v6206 = vpop.permute.xlu0 %6205
    %6207 = vrot.lane.b32.xlu0 %v5397, 8
    %v6208 = vpop.permute.xlu0 %6207
    %6209 = vrot.lane.b32.xlu0 %v5398, 8
    %v6210 = vpop.permute.xlu0 %6209
    %6211 = vrot.lane.b32.xlu0 %v5399, 8
    %v6212 = vpop.permute.xlu0 %6211
    %6213 = vrot.lane.b32.xlu0 %v5400, 8
    %v6214 = vpop.permute.xlu0 %6213
    %6215 = vrot.lane.b32.xlu0 %v5401, 8
    %v6216 = vpop.permute.xlu0 %6215
    %6217 = vrot.lane.b32.xlu0 %v5402, 8
    %v6218 = vpop.permute.xlu0 %6217
    %6219 = vrot.lane.b32.xlu0 %v5403, 8
    %v6220 = vpop.permute.xlu0 %6219
    %6221 = vrot.lane.b32.xlu0 %v5404, 8
    %v6222 = vpop.permute.xlu0 %6221
    %6223 = vrot.lane.b32.xlu0 %v5405, 8
    %v6224 = vpop.permute.xlu0 %6223
    %6225 = vrot.lane.b32.xlu0 %v5406, 8
    %v6226 = vpop.permute.xlu0 %6225
    %6227 = vrot.lane.b32.xlu0 %v5407, 8
    %v6228 = vpop.permute.xlu0 %6227
    %6229 = vrot.lane.b32.xlu0 %v5408, 8
    %v6230 = vpop.permute.xlu0 %6229
    %6231 = vrot.lane.b32.xlu0 %v5409, 8
    %v6232 = vpop.permute.xlu0 %6231
    %6233 = vrot.lane.b32.xlu0 %v5410, 8
    %v6234 = vpop.permute.xlu0 %6233
    %6235 = vrot.lane.b32.xlu0 %v5411, 8
    %v6236 = vpop.permute.xlu0 %6235
    %6237 = vrot.lane.b32.xlu0 %v5412, 8
    %v6238 = vpop.permute.xlu0 %6237
    %6239 = vrot.lane.b32.xlu0 %v5413, 8
    %v6240 = vpop.permute.xlu0 %6239
    %6241 = vrot.lane.b32.xlu0 %v5414, 8
    %v6242 = vpop.permute.xlu0 %6241
    %6243 = vrot.lane.b32.xlu0 %v5415, 8
    %v6244 = vpop.permute.xlu0 %6243
    %6245 = vrot.lane.b32.xlu0 %v5416, 8
    %v6246 = vpop.permute.xlu0 %6245
    %6247 = vrot.lane.b32.xlu0 %v5417, 8
    %v6248 = vpop.permute.xlu0 %6247
    %6249 = vrot.lane.b32.xlu0 %v5418, 8
    %v6250 = vpop.permute.xlu0 %6249
    %6379 = vrot.lane.b32.xlu0 %v5419, 12
    %v6380 = vpop.permute.xlu0 %6379
    %6381 = vrot.lane.b32.xlu0 %v5420, 12
    %v6382 = vpop.permute.xlu0 %6381
    %6383 = vrot.lane.b32.xlu0 %v5421, 12
    %v6384 = vpop.permute.xlu0 %6383
    %6385 = vrot.lane.b32.xlu0 %v5422, 12
    %v6386 = vpop.permute.xlu0 %6385
    %6387 = vrot.lane.b32.xlu0 %v5423, 12
    %v6388 = vpop.permute.xlu0 %6387
    %6389 = vrot.lane.b32.xlu0 %v5424, 12
    %v6390 = vpop.permute.xlu0 %6389
    %6391 = vrot.lane.b32.xlu0 %v5425, 12
    %v6392 = vpop.permute.xlu0 %6391
    %6393 = vrot.lane.b32.xlu0 %v5426, 12
    %v6394 = vpop.permute.xlu0 %6393
    %6395 = vrot.lane.b32.xlu0 %v5427, 12
    %v6396 = vpop.permute.xlu0 %6395
    %6397 = vrot.lane.b32.xlu0 %v5428, 12
    %v6398 = vpop.permute.xlu0 %6397
    %6399 = vrot.lane.b32.xlu0 %v5429, 12
    %v6400 = vpop.permute.xlu0 %6399
    %6401 = vrot.lane.b32.xlu0 %v5430, 12
    %v6402 = vpop.permute.xlu0 %6401
    %6403 = vrot.lane.b32.xlu0 %v5431, 12
    %v6404 = vpop.permute.xlu0 %6403
    %6405 = vrot.lane.b32.xlu0 %v5432, 12
    %v6406 = vpop.permute.xlu0 %6405
    %6407 = vrot.lane.b32.xlu0 %v5433, 12
    %v6408 = vpop.permute.xlu0 %6407
    %6409 = vrot.lane.b32.xlu0 %v5434, 12
    %v6410 = vpop.permute.xlu0 %6409
    %6411 = vrot.lane.b32.xlu0 %v5435, 12
    %v6412 = vpop.permute.xlu0 %6411
    %6413 = vrot.lane.b32.xlu0 %v5436, 12
    %v6414 = vpop.permute.xlu0 %6413
    %6415 = vrot.lane.b32.xlu0 %v5437, 12
    %v6416 = vpop.permute.xlu0 %6415
    %6417 = vrot.lane.b32.xlu0 %v5438, 12
    %v6418 = vpop.permute.xlu0 %6417
    %6419 = vrot.lane.b32.xlu0 %v5439, 12
    %v6420 = vpop.permute.xlu0 %6419
    %6421 = vrot.lane.b32.xlu0 %v5440, 12
    %v6422 = vpop.permute.xlu0 %6421
    %6423 = vrot.lane.b32.xlu0 %v5441, 12
    %v6424 = vpop.permute.xlu0 %6423
    %6425 = vrot.lane.b32.xlu0 %v5442, 12
    %v6426 = vpop.permute.xlu0 %6425
    %6427 = vrot.lane.b32.xlu0 %v5443, 12
    %v6428 = vpop.permute.xlu0 %6427
    %6429 = vrot.lane.b32.xlu0 %v5444, 12
    %v6430 = vpop.permute.xlu0 %6429
    %6431 = vrot.lane.b32.xlu0 %v5445, 12
    %v6432 = vpop.permute.xlu0 %6431
    %6433 = vrot.lane.b32.xlu0 %v5446, 12
    %v6434 = vpop.permute.xlu0 %6433
    %6435 = vrot.lane.b32.xlu0 %v5447, 12
    %v6436 = vpop.permute.xlu0 %6435
    %6437 = vrot.lane.b32.xlu0 %v5448, 12
    %v6438 = vpop.permute.xlu0 %6437
    %6439 = vrot.lane.b32.xlu0 %v5449, 12
    %v6440 = vpop.permute.xlu0 %6439
    %6441 = vrot.lane.b32.xlu0 %v5450, 12
    %v6442 = vpop.permute.xlu0 %6441
    %6443 = vrot.lane.b32.xlu0 %v5451, 12
    %v6444 = vpop.permute.xlu0 %6443
    %6445 = vrot.lane.b32.xlu0 %v5452, 12
    %v6446 = vpop.permute.xlu0 %6445
    %6447 = vrot.lane.b32.xlu0 %v5453, 12
    %v6448 = vpop.permute.xlu0 %6447
    %6449 = vrot.lane.b32.xlu0 %v5454, 12
    %v6450 = vpop.permute.xlu0 %6449
    %6451 = vrot.lane.b32.xlu0 %v5455, 12
    %v6452 = vpop.permute.xlu0 %6451
    %6453 = vrot.lane.b32.xlu0 %v5456, 12
    %v6454 = vpop.permute.xlu0 %6453
    %6455 = vrot.lane.b32.xlu0 %v5457, 12
    %v6456 = vpop.permute.xlu0 %6455
    %6457 = vrot.lane.b32.xlu0 %v5458, 12
    %v6458 = vpop.permute.xlu0 %6457
    %6459 = vrot.lane.b32.xlu0 %v5459, 12
    %v6460 = vpop.permute.xlu0 %6459
    %6461 = vrot.lane.b32.xlu0 %v5460, 12
    %v6462 = vpop.permute.xlu0 %6461
    %6463 = vrot.lane.b32.xlu0 %v5461, 12
    %v6464 = vpop.permute.xlu0 %6463
    %6465 = vrot.lane.b32.xlu0 %v5462, 12
    %v6466 = vpop.permute.xlu0 %6465
    %6467 = vrot.lane.b32.xlu0 %v5463, 12
    %v6468 = vpop.permute.xlu0 %6467
    %6469 = vrot.lane.b32.xlu0 %v5464, 12
    %v6470 = vpop.permute.xlu0 %6469
    %6471 = vrot.lane.b32.xlu0 %v5465, 12
    %v6472 = vpop.permute.xlu0 %6471
    %6473 = vrot.lane.b32.xlu0 %v5466, 12
    %v6474 = vpop.permute.xlu0 %6473
    %6475 = vrot.lane.b32.xlu0 %v5467, 12
    %v6476 = vpop.permute.xlu0 %6475
    %6477 = vrot.lane.b32.xlu0 %v5468, 12
    %v6478 = vpop.permute.xlu0 %6477
    %6479 = vrot.lane.b32.xlu0 %v5469, 12
    %v6480 = vpop.permute.xlu0 %6479
    %6481 = vrot.lane.b32.xlu0 %v5470, 12
    %v6482 = vpop.permute.xlu0 %6481
    %6483 = vrot.lane.b32.xlu0 %v5471, 12
    %v6484 = vpop.permute.xlu0 %6483
    %6485 = vrot.lane.b32.xlu0 %v5472, 12
    %v6486 = vpop.permute.xlu0 %6485
    %6487 = vrot.lane.b32.xlu0 %v5473, 12
    %v6488 = vpop.permute.xlu0 %6487
    %6489 = vrot.lane.b32.xlu0 %v5474, 12
    %v6490 = vpop.permute.xlu0 %6489
    %6491 = vrot.lane.b32.xlu0 %v5475, 12
    %v6492 = vpop.permute.xlu0 %6491
    %6493 = vrot.lane.b32.xlu0 %v5476, 12
    %v6494 = vpop.permute.xlu0 %6493
    %6495 = vrot.lane.b32.xlu0 %v5477, 12
    %v6496 = vpop.permute.xlu0 %6495
    %6497 = vrot.lane.b32.xlu0 %v5478, 12
    %v6498 = vpop.permute.xlu0 %6497
    %6499 = vrot.lane.b32.xlu0 %v5479, 12
    %v6500 = vpop.permute.xlu0 %6499
    %6501 = vrot.lane.b32.xlu0 %v5480, 12
    %v6502 = vpop.permute.xlu0 %6501
    %6503 = vrot.lane.b32.xlu0 %v5481, 12
    %v6504 = vpop.permute.xlu0 %6503
    %6505 = vrot.lane.b32.xlu0 %v5482, 12
    %v6506 = vpop.permute.xlu0 %6505
    %6635 = vrot.lane.b32.xlu0 %v5483, 16
    %v6636 = vpop.permute.xlu0 %6635
    %6637 = vrot.lane.b32.xlu0 %v5484, 16
    %v6638 = vpop.permute.xlu0 %6637
    %6639 = vrot.lane.b32.xlu0 %v5485, 16
    %v6640 = vpop.permute.xlu0 %6639
    %6641 = vrot.lane.b32.xlu0 %v5486, 16
    %v6642 = vpop.permute.xlu0 %6641
    %6643 = vrot.lane.b32.xlu0 %v5487, 16
    %v6644 = vpop.permute.xlu0 %6643
    %6645 = vrot.lane.b32.xlu0 %v5488, 16
    %v6646 = vpop.permute.xlu0 %6645
    %6647 = vrot.lane.b32.xlu0 %v5489, 16
    %v6648 = vpop.permute.xlu0 %6647
    %6649 = vrot.lane.b32.xlu0 %v5490, 16
    %v6650 = vpop.permute.xlu0 %6649
    %6651 = vrot.lane.b32.xlu0 %v5491, 16
    %v6652 = vpop.permute.xlu0 %6651
    %6653 = vrot.lane.b32.xlu0 %v5492, 16
    %v6654 = vpop.permute.xlu0 %6653
    %6655 = vrot.lane.b32.xlu0 %v5493, 16
    %v6656 = vpop.permute.xlu0 %6655
    %6657 = vrot.lane.b32.xlu0 %v5494, 16
    %v6658 = vpop.permute.xlu0 %6657
    %6659 = vrot.lane.b32.xlu0 %v5495, 16
    %v6660 = vpop.permute.xlu0 %6659
    %6661 = vrot.lane.b32.xlu0 %v5496, 16
    %v6662 = vpop.permute.xlu0 %6661
    %6663 = vrot.lane.b32.xlu0 %v5497, 16
    %v6664 = vpop.permute.xlu0 %6663
    %6665 = vrot.lane.b32.xlu0 %v5498, 16
    %v6666 = vpop.permute.xlu0 %6665
    %6667 = vrot.lane.b32.xlu0 %v5499, 16
    %v6668 = vpop.permute.xlu0 %6667
    %6669 = vrot.lane.b32.xlu0 %v5500, 16
    %v6670 = vpop.permute.xlu0 %6669
    %6671 = vrot.lane.b32.xlu0 %v5501, 16
    %v6672 = vpop.permute.xlu0 %6671
    %6673 = vrot.lane.b32.xlu0 %v5502, 16
    %v6674 = vpop.permute.xlu0 %6673
    %6675 = vrot.lane.b32.xlu0 %v5503, 16
    %v6676 = vpop.permute.xlu0 %6675
    %6677 = vrot.lane.b32.xlu0 %v5504, 16
    %v6678 = vpop.permute.xlu0 %6677
    %6679 = vrot.lane.b32.xlu0 %v5505, 16
    %v6680 = vpop.permute.xlu0 %6679
    %6681 = vrot.lane.b32.xlu0 %v5506, 16
    %v6682 = vpop.permute.xlu0 %6681
    %6683 = vrot.lane.b32.xlu0 %v5507, 16
    %v6684 = vpop.permute.xlu0 %6683
    %6685 = vrot.lane.b32.xlu0 %v5508, 16
    %v6686 = vpop.permute.xlu0 %6685
    %6687 = vrot.lane.b32.xlu0 %v5509, 16
    %v6688 = vpop.permute.xlu0 %6687
    %6689 = vrot.lane.b32.xlu0 %v5510, 16
    %v6690 = vpop.permute.xlu0 %6689
    %6691 = vrot.lane.b32.xlu0 %v5511, 16
    %v6692 = vpop.permute.xlu0 %6691
    %6693 = vrot.lane.b32.xlu0 %v5512, 16
    %v6694 = vpop.permute.xlu0 %6693
    %6695 = vrot.lane.b32.xlu0 %v5513, 16
    %v6696 = vpop.permute.xlu0 %6695
    %6697 = vrot.lane.b32.xlu0 %v5514, 16
    %v6698 = vpop.permute.xlu0 %6697
    %6699 = vrot.lane.b32.xlu0 %v5515, 16
    %v6700 = vpop.permute.xlu0 %6699
    %6701 = vrot.lane.b32.xlu0 %v5516, 16
    %v6702 = vpop.permute.xlu0 %6701
    %6703 = vrot.lane.b32.xlu0 %v5517, 16
    %v6704 = vpop.permute.xlu0 %6703
    %6705 = vrot.lane.b32.xlu0 %v5518, 16
    %v6706 = vpop.permute.xlu0 %6705
    %6707 = vrot.lane.b32.xlu0 %v5519, 16
    %v6708 = vpop.permute.xlu0 %6707
    %6709 = vrot.lane.b32.xlu0 %v5520, 16
    %v6710 = vpop.permute.xlu0 %6709
    %6711 = vrot.lane.b32.xlu0 %v5521, 16
    %v6712 = vpop.permute.xlu0 %6711
    %6713 = vrot.lane.b32.xlu0 %v5522, 16
    %v6714 = vpop.permute.xlu0 %6713
    %6715 = vrot.lane.b32.xlu0 %v5523, 16
    %v6716 = vpop.permute.xlu0 %6715
    %6717 = vrot.lane.b32.xlu0 %v5524, 16
    %v6718 = vpop.permute.xlu0 %6717
    %6719 = vrot.lane.b32.xlu0 %v5525, 16
    %v6720 = vpop.permute.xlu0 %6719
    %6721 = vrot.lane.b32.xlu0 %v5526, 16
    %v6722 = vpop.permute.xlu0 %6721
    %6723 = vrot.lane.b32.xlu0 %v5527, 16
    %v6724 = vpop.permute.xlu0 %6723
    %6725 = vrot.lane.b32.xlu0 %v5528, 16
    %v6726 = vpop.permute.xlu0 %6725
    %6727 = vrot.lane.b32.xlu0 %v5529, 16
    %v6728 = vpop.permute.xlu0 %6727
    %6729 = vrot.lane.b32.xlu0 %v5530, 16
    %v6730 = vpop.permute.xlu0 %6729
    %6731 = vrot.lane.b32.xlu0 %v5531, 16
    %v6732 = vpop.permute.xlu0 %6731
    %6733 = vrot.lane.b32.xlu0 %v5532, 16
    %v6734 = vpop.permute.xlu0 %6733
    %6735 = vrot.lane.b32.xlu0 %v5533, 16
    %v6736 = vpop.permute.xlu0 %6735
    %6737 = vrot.lane.b32.xlu0 %v5534, 16
    %v6738 = vpop.permute.xlu0 %6737
    %6739 = vrot.lane.b32.xlu0 %v5535, 16
    %v6740 = vpop.permute.xlu0 %6739
    %6741 = vrot.lane.b32.xlu0 %v5536, 16
    %v6742 = vpop.permute.xlu0 %6741
    %6743 = vrot.lane.b32.xlu0 %v5537, 16
    %v6744 = vpop.permute.xlu0 %6743
    %6745 = vrot.lane.b32.xlu0 %v5538, 16
    %v6746 = vpop.permute.xlu0 %6745
    %6747 = vrot.lane.b32.xlu0 %v5539, 16
    %v6748 = vpop.permute.xlu0 %6747
    %6749 = vrot.lane.b32.xlu0 %v5540, 16
    %v6750 = vpop.permute.xlu0 %6749
    %6751 = vrot.lane.b32.xlu0 %v5541, 16
    %v6752 = vpop.permute.xlu0 %6751
    %6753 = vrot.lane.b32.xlu0 %v5542, 16
    %v6754 = vpop.permute.xlu0 %6753
    %6755 = vrot.lane.b32.xlu0 %v5543, 16
    %v6756 = vpop.permute.xlu0 %6755
    %6757 = vrot.lane.b32.xlu0 %v5544, 16
    %v6758 = vpop.permute.xlu0 %6757
    %6759 = vrot.lane.b32.xlu0 %v5545, 16
    %v6760 = vpop.permute.xlu0 %6759
    %6761 = vrot.lane.b32.xlu0 %v5546, 16
    %v6762 = vpop.permute.xlu0 %6761
    %6891 = vrot.lane.b32.xlu0 %v5547, 20
    %v6892 = vpop.permute.xlu0 %6891
    %6893 = vrot.lane.b32.xlu0 %v5548, 20
    %v6894 = vpop.permute.xlu0 %6893
    %6895 = vrot.lane.b32.xlu0 %v5549, 20
    %v6896 = vpop.permute.xlu0 %6895
    %6897 = vrot.lane.b32.xlu0 %v5550, 20
    %v6898 = vpop.permute.xlu0 %6897
    %6899 = vrot.lane.b32.xlu0 %v5551, 20
    %v6900 = vpop.permute.xlu0 %6899
    %6901 = vrot.lane.b32.xlu0 %v5552, 20
    %v6902 = vpop.permute.xlu0 %6901
    %6903 = vrot.lane.b32.xlu0 %v5553, 20
    %v6904 = vpop.permute.xlu0 %6903
    %6905 = vrot.lane.b32.xlu0 %v5554, 20
    %v6906 = vpop.permute.xlu0 %6905
    %6907 = vrot.lane.b32.xlu0 %v5555, 20
    %v6908 = vpop.permute.xlu0 %6907
    %6909 = vrot.lane.b32.xlu0 %v5556, 20
    %v6910 = vpop.permute.xlu0 %6909
    %6911 = vrot.lane.b32.xlu0 %v5557, 20
    %v6912 = vpop.permute.xlu0 %6911
    %6913 = vrot.lane.b32.xlu0 %v5558, 20
    %v6914 = vpop.permute.xlu0 %6913
    %6915 = vrot.lane.b32.xlu0 %v5559, 20
    %v6916 = vpop.permute.xlu0 %6915
    %6917 = vrot.lane.b32.xlu0 %v5560, 20
    %v6918 = vpop.permute.xlu0 %6917
    %6919 = vrot.lane.b32.xlu0 %v5561, 20
    %v6920 = vpop.permute.xlu0 %6919
    %6921 = vrot.lane.b32.xlu0 %v5562, 20
    %v6922 = vpop.permute.xlu0 %6921
    %6923 = vrot.lane.b32.xlu0 %v5563, 20
    %v6924 = vpop.permute.xlu0 %6923
    %6925 = vrot.lane.b32.xlu0 %v5564, 20
    %v6926 = vpop.permute.xlu0 %6925
    %6927 = vrot.lane.b32.xlu0 %v5565, 20
    %v6928 = vpop.permute.xlu0 %6927
    %6929 = vrot.lane.b32.xlu0 %v5566, 20
    %v6930 = vpop.permute.xlu0 %6929
    %6931 = vrot.lane.b32.xlu0 %v5567, 20
    %v6932 = vpop.permute.xlu0 %6931
    %6933 = vrot.lane.b32.xlu0 %v5568, 20
    %v6934 = vpop.permute.xlu0 %6933
    %6935 = vrot.lane.b32.xlu0 %v5569, 20
    %v6936 = vpop.permute.xlu0 %6935
    %6937 = vrot.lane.b32.xlu0 %v5570, 20
    %v6938 = vpop.permute.xlu0 %6937
    %6939 = vrot.lane.b32.xlu0 %v5571, 20
    %v6940 = vpop.permute.xlu0 %6939
    %6941 = vrot.lane.b32.xlu0 %v5572, 20
    %v6942 = vpop.permute.xlu0 %6941
    %6943 = vrot.lane.b32.xlu0 %v5573, 20
    %v6944 = vpop.permute.xlu0 %6943
    %6945 = vrot.lane.b32.xlu0 %v5574, 20
    %v6946 = vpop.permute.xlu0 %6945
    %6947 = vrot.lane.b32.xlu0 %v5575, 20
    %v6948 = vpop.permute.xlu0 %6947
    %6949 = vrot.lane.b32.xlu0 %v5576, 20
    %v6950 = vpop.permute.xlu0 %6949
    %6951 = vrot.lane.b32.xlu0 %v5577, 20
    %v6952 = vpop.permute.xlu0 %6951
    %6953 = vrot.lane.b32.xlu0 %v5578, 20
    %v6954 = vpop.permute.xlu0 %6953
    %6955 = vrot.lane.b32.xlu0 %v5579, 20
    %v6956 = vpop.permute.xlu0 %6955
    %6957 = vrot.lane.b32.xlu0 %v5580, 20
    %v6958 = vpop.permute.xlu0 %6957
    %6959 = vrot.lane.b32.xlu0 %v5581, 20
    %v6960 = vpop.permute.xlu0 %6959
    %6961 = vrot.lane.b32.xlu0 %v5582, 20
    %v6962 = vpop.permute.xlu0 %6961
    %6963 = vrot.lane.b32.xlu0 %v5583, 20
    %v6964 = vpop.permute.xlu0 %6963
    %6965 = vrot.lane.b32.xlu0 %v5584, 20
    %v6966 = vpop.permute.xlu0 %6965
    %6967 = vrot.lane.b32.xlu0 %v5585, 20
    %v6968 = vpop.permute.xlu0 %6967
    %6969 = vrot.lane.b32.xlu0 %v5586, 20
    %v6970 = vpop.permute.xlu0 %6969
    %6971 = vrot.lane.b32.xlu0 %v5587, 20
    %v6972 = vpop.permute.xlu0 %6971
    %6973 = vrot.lane.b32.xlu0 %v5588, 20
    %v6974 = vpop.permute.xlu0 %6973
    %6975 = vrot.lane.b32.xlu0 %v5589, 20
    %v6976 = vpop.permute.xlu0 %6975
    %6977 = vrot.lane.b32.xlu0 %v5590, 20
    %v6978 = vpop.permute.xlu0 %6977
    %6979 = vrot.lane.b32.xlu0 %v5591, 20
    %v6980 = vpop.permute.xlu0 %6979
    %6981 = vrot.lane.b32.xlu0 %v5592, 20
    %v6982 = vpop.permute.xlu0 %6981
    %6983 = vrot.lane.b32.xlu0 %v5593, 20
    %v6984 = vpop.permute.xlu0 %6983
    %6985 = vrot.lane.b32.xlu0 %v5594, 20
    %v6986 = vpop.permute.xlu0 %6985
    %6987 = vrot.lane.b32.xlu0 %v5595, 20
    %v6988 = vpop.permute.xlu0 %6987
    %6989 = vrot.lane.b32.xlu0 %v5596, 20
    %v6990 = vpop.permute.xlu0 %6989
    %6991 = vrot.lane.b32.xlu0 %v5597, 20
    %v6992 = vpop.permute.xlu0 %6991
    %6993 = vrot.lane.b32.xlu0 %v5598, 20
    %v6994 = vpop.permute.xlu0 %6993
    %6995 = vrot.lane.b32.xlu0 %v5599, 20
    %v6996 = vpop.permute.xlu0 %6995
    %6997 = vrot.lane.b32.xlu0 %v5600, 20
    %v6998 = vpop.permute.xlu0 %6997
    %6999 = vrot.lane.b32.xlu0 %v5601, 20
    %v7000 = vpop.permute.xlu0 %6999
    %7001 = vrot.lane.b32.xlu0 %v5602, 20
    %v7002 = vpop.permute.xlu0 %7001
    %7003 = vrot.lane.b32.xlu0 %v5603, 20
    %v7004 = vpop.permute.xlu0 %7003
    %7005 = vrot.lane.b32.xlu0 %v5604, 20
    %v7006 = vpop.permute.xlu0 %7005
    %7007 = vrot.lane.b32.xlu0 %v5605, 20
    %v7008 = vpop.permute.xlu0 %7007
    %7009 = vrot.lane.b32.xlu0 %v5606, 20
    %v7010 = vpop.permute.xlu0 %7009
    %7011 = vrot.lane.b32.xlu0 %v5607, 20
    %v7012 = vpop.permute.xlu0 %7011
    %7013 = vrot.lane.b32.xlu0 %v5608, 20
    %v7014 = vpop.permute.xlu0 %7013
    %7015 = vrot.lane.b32.xlu0 %v5609, 20
    %v7016 = vpop.permute.xlu0 %7015
    %7017 = vrot.lane.b32.xlu0 %v5610, 20
    %v7018 = vpop.permute.xlu0 %7017
    %7147 = vrot.lane.b32.xlu0 %v5611, 24
    %v7148 = vpop.permute.xlu0 %7147
    %7149 = vrot.lane.b32.xlu0 %v5612, 24
    %v7150 = vpop.permute.xlu0 %7149
    %7151 = vrot.lane.b32.xlu0 %v5613, 24
    %v7152 = vpop.permute.xlu0 %7151
    %7153 = vrot.lane.b32.xlu0 %v5614, 24
    %v7154 = vpop.permute.xlu0 %7153
    %7155 = vrot.lane.b32.xlu0 %v5615, 24
    %v7156 = vpop.permute.xlu0 %7155
    %7157 = vrot.lane.b32.xlu0 %v5616, 24
    %v7158 = vpop.permute.xlu0 %7157
    %7159 = vrot.lane.b32.xlu0 %v5617, 24
    %v7160 = vpop.permute.xlu0 %7159
    %7161 = vrot.lane.b32.xlu0 %v5618, 24
    %v7162 = vpop.permute.xlu0 %7161
    %7163 = vrot.lane.b32.xlu0 %v5619, 24
    %v7164 = vpop.permute.xlu0 %7163
    %7165 = vrot.lane.b32.xlu0 %v5620, 24
    %v7166 = vpop.permute.xlu0 %7165
    %7167 = vrot.lane.b32.xlu0 %v5621, 24
    %v7168 = vpop.permute.xlu0 %7167
    %7169 = vrot.lane.b32.xlu0 %v5622, 24
    %v7170 = vpop.permute.xlu0 %7169
    %7171 = vrot.lane.b32.xlu0 %v5623, 24
    %v7172 = vpop.permute.xlu0 %7171
    %7173 = vrot.lane.b32.xlu0 %v5624, 24
    %v7174 = vpop.permute.xlu0 %7173
    %7175 = vrot.lane.b32.xlu0 %v5625, 24
    %v7176 = vpop.permute.xlu0 %7175
    %7177 = vrot.lane.b32.xlu0 %v5626, 24
    %v7178 = vpop.permute.xlu0 %7177
    %7179 = vrot.lane.b32.xlu0 %v5627, 24
    %v7180 = vpop.permute.xlu0 %7179
    %7181 = vrot.lane.b32.xlu0 %v5628, 24
    %v7182 = vpop.permute.xlu0 %7181
    %7183 = vrot.lane.b32.xlu0 %v5629, 24
    %v7184 = vpop.permute.xlu0 %7183
    %7185 = vrot.lane.b32.xlu0 %v5630, 24
    %v7186 = vpop.permute.xlu0 %7185
    %7187 = vrot.lane.b32.xlu0 %v5631, 24
    %v7188 = vpop.permute.xlu0 %7187
    %7189 = vrot.lane.b32.xlu0 %v5632, 24
    %v7190 = vpop.permute.xlu0 %7189
    %7191 = vrot.lane.b32.xlu0 %v5633, 24
    %v7192 = vpop.permute.xlu0 %7191
    %7193 = vrot.lane.b32.xlu0 %v5634, 24
    %v7194 = vpop.permute.xlu0 %7193
    %7195 = vrot.lane.b32.xlu0 %v5635, 24
    %v7196 = vpop.permute.xlu0 %7195
    %7197 = vrot.lane.b32.xlu0 %v5636, 24
    %v7198 = vpop.permute.xlu0 %7197
    %7199 = vrot.lane.b32.xlu0 %v5637, 24
    %v7200 = vpop.permute.xlu0 %7199
    %7201 = vrot.lane.b32.xlu0 %v5638, 24
    %v7202 = vpop.permute.xlu0 %7201
    %7203 = vrot.lane.b32.xlu0 %v5639, 24
    %v7204 = vpop.permute.xlu0 %7203
    %7205 = vrot.lane.b32.xlu0 %v5640, 24
    %v7206 = vpop.permute.xlu0 %7205
    %7207 = vrot.lane.b32.xlu0 %v5641, 24
    %v7208 = vpop.permute.xlu0 %7207
    %7209 = vrot.lane.b32.xlu0 %v5642, 24
    %v7210 = vpop.permute.xlu0 %7209
    %7211 = vrot.lane.b32.xlu0 %v5643, 24
    %v7212 = vpop.permute.xlu0 %7211
    %7213 = vrot.lane.b32.xlu0 %v5644, 24
    %v7214 = vpop.permute.xlu0 %7213
    %7215 = vrot.lane.b32.xlu0 %v5645, 24
    %v7216 = vpop.permute.xlu0 %7215
    %7217 = vrot.lane.b32.xlu0 %v5646, 24
    %v7218 = vpop.permute.xlu0 %7217
    %7219 = vrot.lane.b32.xlu0 %v5647, 24
    %v7220 = vpop.permute.xlu0 %7219
    %7221 = vrot.lane.b32.xlu0 %v5648, 24
    %v7222 = vpop.permute.xlu0 %7221
    %7223 = vrot.lane.b32.xlu0 %v5649, 24
    %v7224 = vpop.permute.xlu0 %7223
    %7225 = vrot.lane.b32.xlu0 %v5650, 24
    %v7226 = vpop.permute.xlu0 %7225
    %7227 = vrot.lane.b32.xlu0 %v5651, 24
    %v7228 = vpop.permute.xlu0 %7227
    %7229 = vrot.lane.b32.xlu0 %v5652, 24
    %v7230 = vpop.permute.xlu0 %7229
    %7231 = vrot.lane.b32.xlu0 %v5653, 24
    %v7232 = vpop.permute.xlu0 %7231
    %7233 = vrot.lane.b32.xlu0 %v5654, 24
    %v7234 = vpop.permute.xlu0 %7233
    %7235 = vrot.lane.b32.xlu0 %v5655, 24
    %v7236 = vpop.permute.xlu0 %7235
    %7237 = vrot.lane.b32.xlu0 %v5656, 24
    %v7238 = vpop.permute.xlu0 %7237
    %7239 = vrot.lane.b32.xlu0 %v5657, 24
    %v7240 = vpop.permute.xlu0 %7239
    %7241 = vrot.lane.b32.xlu0 %v5658, 24
    %v7242 = vpop.permute.xlu0 %7241
    %7243 = vrot.lane.b32.xlu0 %v5659, 24
    %v7244 = vpop.permute.xlu0 %7243
    %7245 = vrot.lane.b32.xlu0 %v5660, 24
    %v7246 = vpop.permute.xlu0 %7245
    %7247 = vrot.lane.b32.xlu0 %v5661, 24
    %v7248 = vpop.permute.xlu0 %7247
    %7249 = vrot.lane.b32.xlu0 %v5662, 24
    %v7250 = vpop.permute.xlu0 %7249
    %7251 = vrot.lane.b32.xlu0 %v5663, 24
    %v7252 = vpop.permute.xlu0 %7251
    %7253 = vrot.lane.b32.xlu0 %v5664, 24
    %v7254 = vpop.permute.xlu0 %7253
    %7255 = vrot.lane.b32.xlu0 %v5665, 24
    %v7256 = vpop.permute.xlu0 %7255
    %7257 = vrot.lane.b32.xlu0 %v5666, 24
    %v7258 = vpop.permute.xlu0 %7257
    %7259 = vrot.lane.b32.xlu0 %v5667, 24
    %v7260 = vpop.permute.xlu0 %7259
    %7261 = vrot.lane.b32.xlu0 %v5668, 24
    %v7262 = vpop.permute.xlu0 %7261
    %7263 = vrot.lane.b32.xlu0 %v5669, 24
    %v7264 = vpop.permute.xlu0 %7263
    %7265 = vrot.lane.b32.xlu0 %v5670, 24
    %v7266 = vpop.permute.xlu0 %7265
    %7267 = vrot.lane.b32.xlu0 %v5671, 24
    %v7268 = vpop.permute.xlu0 %7267
    %7269 = vrot.lane.b32.xlu0 %v5672, 24
    %v7270 = vpop.permute.xlu0 %7269
    %7271 = vrot.lane.b32.xlu0 %v5673, 24
    %v7272 = vpop.permute.xlu0 %7271
    %7273 = vrot.lane.b32.xlu0 %v5674, 24
    %v7274 = vpop.permute.xlu0 %7273
    %7403 = vrot.lane.b32.xlu0 %v5675, 28
    %v7404 = vpop.permute.xlu0 %7403
    %7405 = vrot.lane.b32.xlu0 %v5676, 28
    %v7406 = vpop.permute.xlu0 %7405
    %7407 = vrot.lane.b32.xlu0 %v5677, 28
    %v7408 = vpop.permute.xlu0 %7407
    %7409 = vrot.lane.b32.xlu0 %v5678, 28
    %v7410 = vpop.permute.xlu0 %7409
    %7411 = vrot.lane.b32.xlu0 %v5679, 28
    %v7412 = vpop.permute.xlu0 %7411
    %7413 = vrot.lane.b32.xlu0 %v5680, 28
    %v7414 = vpop.permute.xlu0 %7413
    %7415 = vrot.lane.b32.xlu0 %v5681, 28
    %v7416 = vpop.permute.xlu0 %7415
    %7417 = vrot.lane.b32.xlu0 %v5682, 28
    %v7418 = vpop.permute.xlu0 %7417
    %7419 = vrot.lane.b32.xlu0 %v5683, 28
    %v7420 = vpop.permute.xlu0 %7419
    %7421 = vrot.lane.b32.xlu0 %v5684, 28
    %v7422 = vpop.permute.xlu0 %7421
    %7423 = vrot.lane.b32.xlu0 %v5685, 28
    %v7424 = vpop.permute.xlu0 %7423
    %7425 = vrot.lane.b32.xlu0 %v5686, 28
    %v7426 = vpop.permute.xlu0 %7425
    %7427 = vrot.lane.b32.xlu0 %v5687, 28
    %v7428 = vpop.permute.xlu0 %7427
    %7429 = vrot.lane.b32.xlu0 %v5688, 28
    %v7430 = vpop.permute.xlu0 %7429
    %7431 = vrot.lane.b32.xlu0 %v5689, 28
    %v7432 = vpop.permute.xlu0 %7431
    %7433 = vrot.lane.b32.xlu0 %v5690, 28
    %v7434 = vpop.permute.xlu0 %7433
    %7435 = vrot.lane.b32.xlu0 %v5691, 28
    %v7436 = vpop.permute.xlu0 %7435
    %7437 = vrot.lane.b32.xlu0 %v5692, 28
    %v7438 = vpop.permute.xlu0 %7437
    %7439 = vrot.lane.b32.xlu0 %v5693, 28
    %v7440 = vpop.permute.xlu0 %7439
    %7441 = vrot.lane.b32.xlu0 %v5694, 28
    %v7442 = vpop.permute.xlu0 %7441
    %7443 = vrot.lane.b32.xlu0 %v5695, 28
    %v7444 = vpop.permute.xlu0 %7443
    %7445 = vrot.lane.b32.xlu0 %v5696, 28
    %v7446 = vpop.permute.xlu0 %7445
    %7447 = vrot.lane.b32.xlu0 %v5697, 28
    %v7448 = vpop.permute.xlu0 %7447
    %7449 = vrot.lane.b32.xlu0 %v5698, 28
    %v7450 = vpop.permute.xlu0 %7449
    %7451 = vrot.lane.b32.xlu0 %v5699, 28
    %v7452 = vpop.permute.xlu0 %7451
    %7453 = vrot.lane.b32.xlu0 %v5700, 28
    %v7454 = vpop.permute.xlu0 %7453
    %7455 = vrot.lane.b32.xlu0 %v5701, 28
    %v7456 = vpop.permute.xlu0 %7455
    %7457 = vrot.lane.b32.xlu0 %v5702, 28
    %v7458 = vpop.permute.xlu0 %7457
    %7459 = vrot.lane.b32.xlu0 %v5703, 28
    %v7460 = vpop.permute.xlu0 %7459
    %7461 = vrot.lane.b32.xlu0 %v5704, 28
    %v7462 = vpop.permute.xlu0 %7461
    %7463 = vrot.lane.b32.xlu0 %v5705, 28
    %v7464 = vpop.permute.xlu0 %7463
    %7465 = vrot.lane.b32.xlu0 %v5706, 28
    %v7466 = vpop.permute.xlu0 %7465
    %7467 = vrot.lane.b32.xlu0 %v5707, 28
    %v7468 = vpop.permute.xlu0 %7467
    %7469 = vrot.lane.b32.xlu0 %v5708, 28
    %v7470 = vpop.permute.xlu0 %7469
    %7471 = vrot.lane.b32.xlu0 %v5709, 28
    %v7472 = vpop.permute.xlu0 %7471
    %7473 = vrot.lane.b32.xlu0 %v5710, 28
    %v7474 = vpop.permute.xlu0 %7473
    %7475 = vrot.lane.b32.xlu0 %v5711, 28
    %v7476 = vpop.permute.xlu0 %7475
    %7477 = vrot.lane.b32.xlu0 %v5712, 28
    %v7478 = vpop.permute.xlu0 %7477
    %7479 = vrot.lane.b32.xlu0 %v5713, 28
    %v7480 = vpop.permute.xlu0 %7479
    %7481 = vrot.lane.b32.xlu0 %v5714, 28
    %v7482 = vpop.permute.xlu0 %7481
    %7483 = vrot.lane.b32.xlu0 %v5715, 28
    %v7484 = vpop.permute.xlu0 %7483
    %7485 = vrot.lane.b32.xlu0 %v5716, 28
    %v7486 = vpop.permute.xlu0 %7485
    %7487 = vrot.lane.b32.xlu0 %v5717, 28
    %v7488 = vpop.permute.xlu0 %7487
    %7489 = vrot.lane.b32.xlu0 %v5718, 28
    %v7490 = vpop.permute.xlu0 %7489
    %7491 = vrot.lane.b32.xlu0 %v5719, 28
    %v7492 = vpop.permute.xlu0 %7491
    %7493 = vrot.lane.b32.xlu0 %v5720, 28
    %v7494 = vpop.permute.xlu0 %7493
    %7495 = vrot.lane.b32.xlu0 %v5721, 28
    %v7496 = vpop.permute.xlu0 %7495
    %7497 = vrot.lane.b32.xlu0 %v5722, 28
    %v7498 = vpop.permute.xlu0 %7497
    %7499 = vrot.lane.b32.xlu0 %v5723, 28
    %v7500 = vpop.permute.xlu0 %7499
    %7501 = vrot.lane.b32.xlu0 %v5724, 28
    %v7502 = vpop.permute.xlu0 %7501
    %7503 = vrot.lane.b32.xlu0 %v5725, 28
    %v7504 = vpop.permute.xlu0 %7503
    %7505 = vrot.lane.b32.xlu0 %v5726, 28
    %v7506 = vpop.permute.xlu0 %7505
    %7507 = vrot.lane.b32.xlu0 %v5727, 28
    %v7508 = vpop.permute.xlu0 %7507
    %7509 = vrot.lane.b32.xlu0 %v5728, 28
    %v7510 = vpop.permute.xlu0 %7509
    %7511 = vrot.lane.b32.xlu0 %v5729, 28
    %v7512 = vpop.permute.xlu0 %7511
    %7513 = vrot.lane.b32.xlu0 %v5730, 28
    %v7514 = vpop.permute.xlu0 %7513
    %7515 = vrot.lane.b32.xlu0 %v5731, 28
    %v7516 = vpop.permute.xlu0 %7515
    %7517 = vrot.lane.b32.xlu0 %v5732, 28
    %v7518 = vpop.permute.xlu0 %7517
    %7519 = vrot.lane.b32.xlu0 %v5733, 28
    %v7520 = vpop.permute.xlu0 %7519
    %7521 = vrot.lane.b32.xlu0 %v5734, 28
    %v7522 = vpop.permute.xlu0 %7521
    %7523 = vrot.lane.b32.xlu0 %v5735, 28
    %v7524 = vpop.permute.xlu0 %7523
    %7525 = vrot.lane.b32.xlu0 %v5736, 28
    %v7526 = vpop.permute.xlu0 %7525
    %7527 = vrot.lane.b32.xlu0 %v5737, 28
    %v7528 = vpop.permute.xlu0 %7527
    %7529 = vrot.lane.b32.xlu0 %v5738, 28
    %v7530 = vpop.permute.xlu0 %7529
    %7659 = vrot.lane.b32.xlu0 %v5739, 32
    %v7660 = vpop.permute.xlu0 %7659
    %7661 = vrot.lane.b32.xlu0 %v5740, 32
    %v7662 = vpop.permute.xlu0 %7661
    %7663 = vrot.lane.b32.xlu0 %v5741, 32
    %v7664 = vpop.permute.xlu0 %7663
    %7665 = vrot.lane.b32.xlu0 %v5742, 32
    %v7666 = vpop.permute.xlu0 %7665
    %7667 = vrot.lane.b32.xlu0 %v5743, 32
    %v7668 = vpop.permute.xlu0 %7667
    %7669 = vrot.lane.b32.xlu0 %v5744, 32
    %v7670 = vpop.permute.xlu0 %7669
    %7671 = vrot.lane.b32.xlu0 %v5745, 32
    %v7672 = vpop.permute.xlu0 %7671
    %7673 = vrot.lane.b32.xlu0 %v5746, 32
    %v7674 = vpop.permute.xlu0 %7673
    %7675 = vrot.lane.b32.xlu0 %v5747, 32
    %v7676 = vpop.permute.xlu0 %7675
    %7677 = vrot.lane.b32.xlu0 %v5748, 32
    %v7678 = vpop.permute.xlu0 %7677
    %7679 = vrot.lane.b32.xlu0 %v5749, 32
    %v7680 = vpop.permute.xlu0 %7679
    %7681 = vrot.lane.b32.xlu0 %v5750, 32
    %v7682 = vpop.permute.xlu0 %7681
    %7683 = vrot.lane.b32.xlu0 %v5751, 32
    %v7684 = vpop.permute.xlu0 %7683
    %7685 = vrot.lane.b32.xlu0 %v5752, 32
    %v7686 = vpop.permute.xlu0 %7685
    %7687 = vrot.lane.b32.xlu0 %v5753, 32
    %v7688 = vpop.permute.xlu0 %7687
    %7689 = vrot.lane.b32.xlu0 %v5754, 32
    %v7690 = vpop.permute.xlu0 %7689
    %7691 = vrot.lane.b32.xlu0 %v5755, 32
    %v7692 = vpop.permute.xlu0 %7691
    %7693 = vrot.lane.b32.xlu0 %v5756, 32
    %v7694 = vpop.permute.xlu0 %7693
    %7695 = vrot.lane.b32.xlu0 %v5757, 32
    %v7696 = vpop.permute.xlu0 %7695
    %7697 = vrot.lane.b32.xlu0 %v5758, 32
    %v7698 = vpop.permute.xlu0 %7697
    %7699 = vrot.lane.b32.xlu0 %v5759, 32
    %v7700 = vpop.permute.xlu0 %7699
    %7701 = vrot.lane.b32.xlu0 %v5760, 32
    %v7702 = vpop.permute.xlu0 %7701
    %7703 = vrot.lane.b32.xlu0 %v5761, 32
    %v7704 = vpop.permute.xlu0 %7703
    %7705 = vrot.lane.b32.xlu0 %v5762, 32
    %v7706 = vpop.permute.xlu0 %7705
    %7707 = vrot.lane.b32.xlu0 %v5763, 32
    %v7708 = vpop.permute.xlu0 %7707
    %7709 = vrot.lane.b32.xlu0 %v5764, 32
    %v7710 = vpop.permute.xlu0 %7709
    %7711 = vrot.lane.b32.xlu0 %v5765, 32
    %v7712 = vpop.permute.xlu0 %7711
    %7713 = vrot.lane.b32.xlu0 %v5766, 32
    %v7714 = vpop.permute.xlu0 %7713
    %7715 = vrot.lane.b32.xlu0 %v5767, 32
    %v7716 = vpop.permute.xlu0 %7715
    %7717 = vrot.lane.b32.xlu0 %v5768, 32
    %v7718 = vpop.permute.xlu0 %7717
    %7719 = vrot.lane.b32.xlu0 %v5769, 32
    %v7720 = vpop.permute.xlu0 %7719
    %7721 = vrot.lane.b32.xlu0 %v5770, 32
    %v7722 = vpop.permute.xlu0 %7721
    %7723 = vrot.lane.b32.xlu0 %v5771, 32
    %v7724 = vpop.permute.xlu0 %7723
    %7725 = vrot.lane.b32.xlu0 %v5772, 32
    %v7726 = vpop.permute.xlu0 %7725
    %7727 = vrot.lane.b32.xlu0 %v5773, 32
    %v7728 = vpop.permute.xlu0 %7727
    %7729 = vrot.lane.b32.xlu0 %v5774, 32
    %v7730 = vpop.permute.xlu0 %7729
    %7731 = vrot.lane.b32.xlu0 %v5775, 32
    %v7732 = vpop.permute.xlu0 %7731
    %7733 = vrot.lane.b32.xlu0 %v5776, 32
    %v7734 = vpop.permute.xlu0 %7733
    %7735 = vrot.lane.b32.xlu0 %v5777, 32
    %v7736 = vpop.permute.xlu0 %7735
    %7737 = vrot.lane.b32.xlu0 %v5778, 32
    %v7738 = vpop.permute.xlu0 %7737
    %7739 = vrot.lane.b32.xlu0 %v5779, 32
    %v7740 = vpop.permute.xlu0 %7739
    %7741 = vrot.lane.b32.xlu0 %v5780, 32
    %v7742 = vpop.permute.xlu0 %7741
    %7743 = vrot.lane.b32.xlu0 %v5781, 32
    %v7744 = vpop.permute.xlu0 %7743
    %7745 = vrot.lane.b32.xlu0 %v5782, 32
    %v7746 = vpop.permute.xlu0 %7745
    %7747 = vrot.lane.b32.xlu0 %v5783, 32
    %v7748 = vpop.permute.xlu0 %7747
    %7749 = vrot.lane.b32.xlu0 %v5784, 32
    %v7750 = vpop.permute.xlu0 %7749
    %7751 = vrot.lane.b32.xlu0 %v5785, 32
    %v7752 = vpop.permute.xlu0 %7751
    %7753 = vrot.lane.b32.xlu0 %v5786, 32
    %v7754 = vpop.permute.xlu0 %7753
    %7755 = vrot.lane.b32.xlu0 %v5787, 32
    %v7756 = vpop.permute.xlu0 %7755
    %7757 = vrot.lane.b32.xlu0 %v5788, 32
    %v7758 = vpop.permute.xlu0 %7757
    %7759 = vrot.lane.b32.xlu0 %v5789, 32
    %v7760 = vpop.permute.xlu0 %7759
    %7761 = vrot.lane.b32.xlu0 %v5790, 32
    %v7762 = vpop.permute.xlu0 %7761
    %7763 = vrot.lane.b32.xlu0 %v5791, 32
    %v7764 = vpop.permute.xlu0 %7763
    %7765 = vrot.lane.b32.xlu0 %v5792, 32
    %v7766 = vpop.permute.xlu0 %7765
    %7767 = vrot.lane.b32.xlu0 %v5793, 32
    %v7768 = vpop.permute.xlu0 %7767
    %7769 = vrot.lane.b32.xlu0 %v5794, 32
    %v7770 = vpop.permute.xlu0 %7769
    %7771 = vrot.lane.b32.xlu0 %v5795, 32
    %v7772 = vpop.permute.xlu0 %7771
    %7773 = vrot.lane.b32.xlu0 %v5796, 32
    %v7774 = vpop.permute.xlu0 %7773
    %7775 = vrot.lane.b32.xlu0 %v5797, 32
    %v7776 = vpop.permute.xlu0 %7775
    %7777 = vrot.lane.b32.xlu0 %v5798, 32
    %v7778 = vpop.permute.xlu0 %7777
    %7779 = vrot.lane.b32.xlu0 %v5799, 32
    %v7780 = vpop.permute.xlu0 %7779
    %7781 = vrot.lane.b32.xlu0 %v5800, 32
    %v7782 = vpop.permute.xlu0 %7781
    %7783 = vrot.lane.b32.xlu0 %v5801, 32
    %v7784 = vpop.permute.xlu0 %7783
    %7785 = vrot.lane.b32.xlu0 %v5802, 32
    %v7786 = vpop.permute.xlu0 %7785
    %v7851 = vsel %vm30, %v5227, %v5868
    %v7852 = vsel %vm30, %v5228, %v5870
    %v7853 = vsel %vm30, %v5229, %v5872
    %v7854 = vsel %vm30, %v5230, %v5874
    %v7855 = vsel %vm30, %v5231, %v5876
    %v7856 = vsel %vm30, %v5232, %v5878
    %v7857 = vsel %vm30, %v5233, %v5880
    %v7858 = vsel %vm30, %v5234, %v5882
    %v7859 = vsel %vm30, %v5235, %v5884
    %v7860 = vsel %vm30, %v5236, %v5886
    %v7861 = vsel %vm30, %v5237, %v5888
    %v7862 = vsel %vm30, %v5238, %v5890
    %v7863 = vsel %vm30, %v5239, %v5892
    %v7864 = vsel %vm30, %v5240, %v5894
    %v7865 = vsel %vm30, %v5241, %v5896
    %v7866 = vsel %vm30, %v5242, %v5898
    %v7867 = vsel %vm30, %v5243, %v5900
    %v7868 = vsel %vm30, %v5244, %v5902
    %v7869 = vsel %vm30, %v5245, %v5904
    %v7870 = vsel %vm30, %v5246, %v5906
    %v7871 = vsel %vm30, %v5247, %v5908
    %v7872 = vsel %vm30, %v5248, %v5910
    %v7873 = vsel %vm30, %v5249, %v5912
    %v7874 = vsel %vm30, %v5250, %v5914
    %v7875 = vsel %vm30, %v5251, %v5916
    %v7876 = vsel %vm30, %v5252, %v5918
    %v7877 = vsel %vm30, %v5253, %v5920
    %v7878 = vsel %vm30, %v5254, %v5922
    %v7879 = vsel %vm30, %v5255, %v5924
    %v7880 = vsel %vm30, %v5256, %v5926
    %v7881 = vsel %vm30, %v5257, %v5928
    %v7882 = vsel %vm30, %v5258, %v5930
    %v7883 = vsel %vm30, %v5259, %v5932
    %v7884 = vsel %vm30, %v5260, %v5934
    %v7885 = vsel %vm30, %v5261, %v5936
    %v7886 = vsel %vm30, %v5262, %v5938
    %v7887 = vsel %vm30, %v5263, %v5940
    %v7888 = vsel %vm30, %v5264, %v5942
    %v7889 = vsel %vm30, %v5265, %v5944
    %v7890 = vsel %vm30, %v5266, %v5946
    %v7891 = vsel %vm30, %v5267, %v5948
    %v7892 = vsel %vm30, %v5268, %v5950
    %v7893 = vsel %vm30, %v5269, %v5952
    %v7894 = vsel %vm30, %v5270, %v5954
    %v7895 = vsel %vm30, %v5271, %v5956
    %v7896 = vsel %vm30, %v5272, %v5958
    %v7897 = vsel %vm30, %v5273, %v5960
    %v7898 = vsel %vm30, %v5274, %v5962
    %v7899 = vsel %vm30, %v5275, %v5964
    %v7900 = vsel %vm30, %v5276, %v5966
    %v7901 = vsel %vm30, %v5277, %v5968
    %v7902 = vsel %vm30, %v5278, %v5970
    %v7903 = vsel %vm30, %v5279, %v5972
    %v7904 = vsel %vm30, %v5280, %v5974
    %v7905 = vsel %vm30, %v5281, %v5976
    %v7906 = vsel %vm30, %v5282, %v5978
    %v7907 = vsel %vm30, %v5283, %v5980
    %v7908 = vsel %vm30, %v5284, %v5982
    %v7909 = vsel %vm30, %v5285, %v5984
    %v7910 = vsel %vm30, %v5286, %v5986
    %v7911 = vsel %vm30, %v5287, %v5988
    %v7912 = vsel %vm30, %v5288, %v5990
    %v7913 = vsel %vm30, %v5289, %v5992
    %v7914 = vsel %vm30, %v5290, %v5994
    %v7915 = vsel %vm2936, %v7851, %v6124
    %v7916 = vsel %vm2936, %v7852, %v6126
    %v7917 = vsel %vm2936, %v7853, %v6128
    %v7918 = vsel %vm2936, %v7854, %v6130
    %v7919 = vsel %vm2936, %v7855, %v6132
    %v7920 = vsel %vm2936, %v7856, %v6134
    %v7921 = vsel %vm2936, %v7857, %v6136
    %v7922 = vsel %vm2936, %v7858, %v6138
    %v7923 = vsel %vm2936, %v7859, %v6140
    %v7924 = vsel %vm2936, %v7860, %v6142
    %v7925 = vsel %vm2936, %v7861, %v6144
    %v7926 = vsel %vm2936, %v7862, %v6146
    %v7927 = vsel %vm2936, %v7863, %v6148
    %v7928 = vsel %vm2936, %v7864, %v6150
    %v7929 = vsel %vm2936, %v7865, %v6152
    %v7930 = vsel %vm2936, %v7866, %v6154
    %v7931 = vsel %vm2936, %v7867, %v6156
    %v7932 = vsel %vm2936, %v7868, %v6158
    %v7933 = vsel %vm2936, %v7869, %v6160
    %v7934 = vsel %vm2936, %v7870, %v6162
    %v7935 = vsel %vm2936, %v7871, %v6164
    %v7936 = vsel %vm2936, %v7872, %v6166
    %v7937 = vsel %vm2936, %v7873, %v6168
    %v7938 = vsel %vm2936, %v7874, %v6170
    %v7939 = vsel %vm2936, %v7875, %v6172
    %v7940 = vsel %vm2936, %v7876, %v6174
    %v7941 = vsel %vm2936, %v7877, %v6176
    %v7942 = vsel %vm2936, %v7878, %v6178
    %v7943 = vsel %vm2936, %v7879, %v6180
    %v7944 = vsel %vm2936, %v7880, %v6182
    %v7945 = vsel %vm2936, %v7881, %v6184
    %v7946 = vsel %vm2936, %v7882, %v6186
    %v7947 = vsel %vm2936, %v7883, %v6188
    %v7948 = vsel %vm2936, %v7884, %v6190
    %v7949 = vsel %vm2936, %v7885, %v6192
    %v7950 = vsel %vm2936, %v7886, %v6194
    %v7951 = vsel %vm2936, %v7887, %v6196
    %v7952 = vsel %vm2936, %v7888, %v6198
    %v7953 = vsel %vm2936, %v7889, %v6200
    %v7954 = vsel %vm2936, %v7890, %v6202
    %v7955 = vsel %vm2936, %v7891, %v6204
    %v7956 = vsel %vm2936, %v7892, %v6206
    %v7957 = vsel %vm2936, %v7893, %v6208
    %v7958 = vsel %vm2936, %v7894, %v6210
    %v7959 = vsel %vm2936, %v7895, %v6212
    %v7960 = vsel %vm2936, %v7896, %v6214
    %v7961 = vsel %vm2936, %v7897, %v6216
    %v7962 = vsel %vm2936, %v7898, %v6218
    %v7963 = vsel %vm2936, %v7899, %v6220
    %v7964 = vsel %vm2936, %v7900, %v6222
    %v7965 = vsel %vm2936, %v7901, %v6224
    %v7966 = vsel %vm2936, %v7902, %v6226
    %v7967 = vsel %vm2936, %v7903, %v6228
    %v7968 = vsel %vm2936, %v7904, %v6230
    %v7969 = vsel %vm2936, %v7905, %v6232
    %v7970 = vsel %vm2936, %v7906, %v6234
    %v7971 = vsel %vm2936, %v7907, %v6236
    %v7972 = vsel %vm2936, %v7908, %v6238
    %v7973 = vsel %vm2936, %v7909, %v6240
    %v7974 = vsel %vm2936, %v7910, %v6242
    %v7975 = vsel %vm2936, %v7911, %v6244
    %v7976 = vsel %vm2936, %v7912, %v6246
    %v7977 = vsel %vm2936, %v7913, %v6248
    %v7978 = vsel %vm2936, %v7914, %v6250
    %v7979 = vsel %vm3001, %v7915, %v6380
    %v7980 = vsel %vm3001, %v7916, %v6382
    %v7981 = vsel %vm3001, %v7917, %v6384
    %v7982 = vsel %vm3001, %v7918, %v6386
    %v7983 = vsel %vm3001, %v7919, %v6388
    %v7984 = vsel %vm3001, %v7920, %v6390
    %v7985 = vsel %vm3001, %v7921, %v6392
    %v7986 = vsel %vm3001, %v7922, %v6394
    %v7987 = vsel %vm3001, %v7923, %v6396
    %v7988 = vsel %vm3001, %v7924, %v6398
    %v7989 = vsel %vm3001, %v7925, %v6400
    %v7990 = vsel %vm3001, %v7926, %v6402
    %v7991 = vsel %vm3001, %v7927, %v6404
    %v7992 = vsel %vm3001, %v7928, %v6406
    %v7993 = vsel %vm3001, %v7929, %v6408
    %v7994 = vsel %vm3001, %v7930, %v6410
    %v7995 = vsel %vm3001, %v7931, %v6412
    %v7996 = vsel %vm3001, %v7932, %v6414
    %v7997 = vsel %vm3001, %v7933, %v6416
    %v7998 = vsel %vm3001, %v7934, %v6418
    %v7999 = vsel %vm3001, %v7935, %v6420
    %v8000 = vsel %vm3001, %v7936, %v6422
    %v8001 = vsel %vm3001, %v7937, %v6424
    %v8002 = vsel %vm3001, %v7938, %v6426
    %v8003 = vsel %vm3001, %v7939, %v6428
    %v8004 = vsel %vm3001, %v7940, %v6430
    %v8005 = vsel %vm3001, %v7941, %v6432
    %v8006 = vsel %vm3001, %v7942, %v6434
    %v8007 = vsel %vm3001, %v7943, %v6436
    %v8008 = vsel %vm3001, %v7944, %v6438
    %v8009 = vsel %vm3001, %v7945, %v6440
    %v8010 = vsel %vm3001, %v7946, %v6442
    %v8011 = vsel %vm3001, %v7947, %v6444
    %v8012 = vsel %vm3001, %v7948, %v6446
    %v8013 = vsel %vm3001, %v7949, %v6448
    %v8014 = vsel %vm3001, %v7950, %v6450
    %v8015 = vsel %vm3001, %v7951, %v6452
    %v8016 = vsel %vm3001, %v7952, %v6454
    %v8017 = vsel %vm3001, %v7953, %v6456
    %v8018 = vsel %vm3001, %v7954, %v6458
    %v8019 = vsel %vm3001, %v7955, %v6460
    %v8020 = vsel %vm3001, %v7956, %v6462
    %v8021 = vsel %vm3001, %v7957, %v6464
    %v8022 = vsel %vm3001, %v7958, %v6466
    %v8023 = vsel %vm3001, %v7959, %v6468
    %v8024 = vsel %vm3001, %v7960, %v6470
    %v8025 = vsel %vm3001, %v7961, %v6472
    %v8026 = vsel %vm3001, %v7962, %v6474
    %v8027 = vsel %vm3001, %v7963, %v6476
    %v8028 = vsel %vm3001, %v7964, %v6478
    %v8029 = vsel %vm3001, %v7965, %v6480
    %v8030 = vsel %vm3001, %v7966, %v6482
    %v8031 = vsel %vm3001, %v7967, %v6484
    %v8032 = vsel %vm3001, %v7968, %v6486
    %v8033 = vsel %vm3001, %v7969, %v6488
    %v8034 = vsel %vm3001, %v7970, %v6490
    %v8035 = vsel %vm3001, %v7971, %v6492
    %v8036 = vsel %vm3001, %v7972, %v6494
    %v8037 = vsel %vm3001, %v7973, %v6496
    %v8038 = vsel %vm3001, %v7974, %v6498
    %v8039 = vsel %vm3001, %v7975, %v6500
    %v8040 = vsel %vm3001, %v7976, %v6502
    %v8041 = vsel %vm3001, %v7977, %v6504
    %v8042 = vsel %vm3001, %v7978, %v6506
    %v8043 = vsel %vm3066, %v7979, %v6636
    %v8044 = vsel %vm3066, %v7980, %v6638
    %v8045 = vsel %vm3066, %v7981, %v6640
    %v8046 = vsel %vm3066, %v7982, %v6642
    %v8047 = vsel %vm3066, %v7983, %v6644
    %v8048 = vsel %vm3066, %v7984, %v6646
    %v8049 = vsel %vm3066, %v7985, %v6648
    %v8050 = vsel %vm3066, %v7986, %v6650
    %v8051 = vsel %vm3066, %v7987, %v6652
    %v8052 = vsel %vm3066, %v7988, %v6654
    %v8053 = vsel %vm3066, %v7989, %v6656
    %v8054 = vsel %vm3066, %v7990, %v6658
    %v8055 = vsel %vm3066, %v7991, %v6660
    %v8056 = vsel %vm3066, %v7992, %v6662
    %v8057 = vsel %vm3066, %v7993, %v6664
    %v8058 = vsel %vm3066, %v7994, %v6666
    %v8059 = vsel %vm3066, %v7995, %v6668
    %v8060 = vsel %vm3066, %v7996, %v6670
    %v8061 = vsel %vm3066, %v7997, %v6672
    %v8062 = vsel %vm3066, %v7998, %v6674
    %v8063 = vsel %vm3066, %v7999, %v6676
    %v8064 = vsel %vm3066, %v8000, %v6678
    %v8065 = vsel %vm3066, %v8001, %v6680
    %v8066 = vsel %vm3066, %v8002, %v6682
    %v8067 = vsel %vm3066, %v8003, %v6684
    %v8068 = vsel %vm3066, %v8004, %v6686
    %v8069 = vsel %vm3066, %v8005, %v6688
    %v8070 = vsel %vm3066, %v8006, %v6690
    %v8071 = vsel %vm3066, %v8007, %v6692
    %v8072 = vsel %vm3066, %v8008, %v6694
    %v8073 = vsel %vm3066, %v8009, %v6696
    %v8074 = vsel %vm3066, %v8010, %v6698
    %v8075 = vsel %vm3066, %v8011, %v6700
    %v8076 = vsel %vm3066, %v8012, %v6702
    %v8077 = vsel %vm3066, %v8013, %v6704
    %v8078 = vsel %vm3066, %v8014, %v6706
    %v8079 = vsel %vm3066, %v8015, %v6708
    %v8080 = vsel %vm3066, %v8016, %v6710
    %v8081 = vsel %vm3066, %v8017, %v6712
    %v8082 = vsel %vm3066, %v8018, %v6714
    %v8083 = vsel %vm3066, %v8019, %v6716
    %v8084 = vsel %vm3066, %v8020, %v6718
    %v8085 = vsel %vm3066, %v8021, %v6720
    %v8086 = vsel %vm3066, %v8022, %v6722
    %v8087 = vsel %vm3066, %v8023, %v6724
    %v8088 = vsel %vm3066, %v8024, %v6726
    %v8089 = vsel %vm3066, %v8025, %v6728
    %v8090 = vsel %vm3066, %v8026, %v6730
    %v8091 = vsel %vm3066, %v8027, %v6732
    %v8092 = vsel %vm3066, %v8028, %v6734
    %v8093 = vsel %vm3066, %v8029, %v6736
    %v8094 = vsel %vm3066, %v8030, %v6738
    %v8095 = vsel %vm3066, %v8031, %v6740
    %v8096 = vsel %vm3066, %v8032, %v6742
    %v8097 = vsel %vm3066, %v8033, %v6744
    %v8098 = vsel %vm3066, %v8034, %v6746
    %v8099 = vsel %vm3066, %v8035, %v6748
    %v8100 = vsel %vm3066, %v8036, %v6750
    %v8101 = vsel %vm3066, %v8037, %v6752
    %v8102 = vsel %vm3066, %v8038, %v6754
    %v8103 = vsel %vm3066, %v8039, %v6756
    %v8104 = vsel %vm3066, %v8040, %v6758
    %v8105 = vsel %vm3066, %v8041, %v6760
    %v8106 = vsel %vm3066, %v8042, %v6762
    %v8107 = vsel %vm3131, %v8043, %v6892
    %v8108 = vsel %vm3131, %v8044, %v6894
    %v8109 = vsel %vm3131, %v8045, %v6896
    %v8110 = vsel %vm3131, %v8046, %v6898
    %v8111 = vsel %vm3131, %v8047, %v6900
    %v8112 = vsel %vm3131, %v8048, %v6902
    %v8113 = vsel %vm3131, %v8049, %v6904
    %v8114 = vsel %vm3131, %v8050, %v6906
    %v8115 = vsel %vm3131, %v8051, %v6908
    %v8116 = vsel %vm3131, %v8052, %v6910
    %v8117 = vsel %vm3131, %v8053, %v6912
    %v8118 = vsel %vm3131, %v8054, %v6914
    %v8119 = vsel %vm3131, %v8055, %v6916
    %v8120 = vsel %vm3131, %v8056, %v6918
    %v8121 = vsel %vm3131, %v8057, %v6920
    %v8122 = vsel %vm3131, %v8058, %v6922
    %v8123 = vsel %vm3131, %v8059, %v6924
    %v8124 = vsel %vm3131, %v8060, %v6926
    %v8125 = vsel %vm3131, %v8061, %v6928
    %v8126 = vsel %vm3131, %v8062, %v6930
    %v8127 = vsel %vm3131, %v8063, %v6932
    %v8128 = vsel %vm3131, %v8064, %v6934
    %v8129 = vsel %vm3131, %v8065, %v6936
    %v8130 = vsel %vm3131, %v8066, %v6938
    %v8131 = vsel %vm3131, %v8067, %v6940
    %v8132 = vsel %vm3131, %v8068, %v6942
    %v8133 = vsel %vm3131, %v8069, %v6944
    %v8134 = vsel %vm3131, %v8070, %v6946
    %v8135 = vsel %vm3131, %v8071, %v6948
    %v8136 = vsel %vm3131, %v8072, %v6950
    %v8137 = vsel %vm3131, %v8073, %v6952
    %v8138 = vsel %vm3131, %v8074, %v6954
    %v8139 = vsel %vm3131, %v8075, %v6956
    %v8140 = vsel %vm3131, %v8076, %v6958
    %v8141 = vsel %vm3131, %v8077, %v6960
    %v8142 = vsel %vm3131, %v8078, %v6962
    %v8143 = vsel %vm3131, %v8079, %v6964
    %v8144 = vsel %vm3131, %v8080, %v6966
    %v8145 = vsel %vm3131, %v8081, %v6968
    %v8146 = vsel %vm3131, %v8082, %v6970
    %v8147 = vsel %vm3131, %v8083, %v6972
    %v8148 = vsel %vm3131, %v8084, %v6974
    %v8149 = vsel %vm3131, %v8085, %v6976
    %v8150 = vsel %vm3131, %v8086, %v6978
    %v8151 = vsel %vm3131, %v8087, %v6980
    %v8152 = vsel %vm3131, %v8088, %v6982
    %v8153 = vsel %vm3131, %v8089, %v6984
    %v8154 = vsel %vm3131, %v8090, %v6986
    %v8155 = vsel %vm3131, %v8091, %v6988
    %v8156 = vsel %vm3131, %v8092, %v6990
    %v8157 = vsel %vm3131, %v8093, %v6992
    %v8158 = vsel %vm3131, %v8094, %v6994
    %v8159 = vsel %vm3131, %v8095, %v6996
    %v8160 = vsel %vm3131, %v8096, %v6998
    %v8161 = vsel %vm3131, %v8097, %v7000
    %v8162 = vsel %vm3131, %v8098, %v7002
    %v8163 = vsel %vm3131, %v8099, %v7004
    %v8164 = vsel %vm3131, %v8100, %v7006
    %v8165 = vsel %vm3131, %v8101, %v7008
    %v8166 = vsel %vm3131, %v8102, %v7010
    %v8167 = vsel %vm3131, %v8103, %v7012
    %v8168 = vsel %vm3131, %v8104, %v7014
    %v8169 = vsel %vm3131, %v8105, %v7016
    %v8170 = vsel %vm3131, %v8106, %v7018
    %v8171 = vsel %vm3196, %v8107, %v7148
    %v8172 = vsel %vm3196, %v8108, %v7150
    %v8173 = vsel %vm3196, %v8109, %v7152
    %v8174 = vsel %vm3196, %v8110, %v7154
    %v8175 = vsel %vm3196, %v8111, %v7156
    %v8176 = vsel %vm3196, %v8112, %v7158
    %v8177 = vsel %vm3196, %v8113, %v7160
    %v8178 = vsel %vm3196, %v8114, %v7162
    %v8179 = vsel %vm3196, %v8115, %v7164
    %v8180 = vsel %vm3196, %v8116, %v7166
    %v8181 = vsel %vm3196, %v8117, %v7168
    %v8182 = vsel %vm3196, %v8118, %v7170
    %v8183 = vsel %vm3196, %v8119, %v7172
    %v8184 = vsel %vm3196, %v8120, %v7174
    %v8185 = vsel %vm3196, %v8121, %v7176
    %v8186 = vsel %vm3196, %v8122, %v7178
    %v8187 = vsel %vm3196, %v8123, %v7180
    %v8188 = vsel %vm3196, %v8124, %v7182
    %v8189 = vsel %vm3196, %v8125, %v7184
    %v8190 = vsel %vm3196, %v8126, %v7186
    %v8191 = vsel %vm3196, %v8127, %v7188
    %v8192 = vsel %vm3196, %v8128, %v7190
    %v8193 = vsel %vm3196, %v8129, %v7192
    %v8194 = vsel %vm3196, %v8130, %v7194
    %v8195 = vsel %vm3196, %v8131, %v7196
    %v8196 = vsel %vm3196, %v8132, %v7198
    %v8197 = vsel %vm3196, %v8133, %v7200
    %v8198 = vsel %vm3196, %v8134, %v7202
    %v8199 = vsel %vm3196, %v8135, %v7204
    %v8200 = vsel %vm3196, %v8136, %v7206
    %v8201 = vsel %vm3196, %v8137, %v7208
    %v8202 = vsel %vm3196, %v8138, %v7210
    %v8203 = vsel %vm3196, %v8139, %v7212
    %v8204 = vsel %vm3196, %v8140, %v7214
    %v8205 = vsel %vm3196, %v8141, %v7216
    %v8206 = vsel %vm3196, %v8142, %v7218
    %v8207 = vsel %vm3196, %v8143, %v7220
    %v8208 = vsel %vm3196, %v8144, %v7222
    %v8209 = vsel %vm3196, %v8145, %v7224
    %v8210 = vsel %vm3196, %v8146, %v7226
    %v8211 = vsel %vm3196, %v8147, %v7228
    %v8212 = vsel %vm3196, %v8148, %v7230
    %v8213 = vsel %vm3196, %v8149, %v7232
    %v8214 = vsel %vm3196, %v8150, %v7234
    %v8215 = vsel %vm3196, %v8151, %v7236
    %v8216 = vsel %vm3196, %v8152, %v7238
    %v8217 = vsel %vm3196, %v8153, %v7240
    %v8218 = vsel %vm3196, %v8154, %v7242
    %v8219 = vsel %vm3196, %v8155, %v7244
    %v8220 = vsel %vm3196, %v8156, %v7246
    %v8221 = vsel %vm3196, %v8157, %v7248
    %v8222 = vsel %vm3196, %v8158, %v7250
    %v8223 = vsel %vm3196, %v8159, %v7252
    %v8224 = vsel %vm3196, %v8160, %v7254
    %v8225 = vsel %vm3196, %v8161, %v7256
    %v8226 = vsel %vm3196, %v8162, %v7258
    %v8227 = vsel %vm3196, %v8163, %v7260
    %v8228 = vsel %vm3196, %v8164, %v7262
    %v8229 = vsel %vm3196, %v8165, %v7264
    %v8230 = vsel %vm3196, %v8166, %v7266
    %v8231 = vsel %vm3196, %v8167, %v7268
    %v8232 = vsel %vm3196, %v8168, %v7270
    %v8233 = vsel %vm3196, %v8169, %v7272
    %v8234 = vsel %vm3196, %v8170, %v7274
    %v8235 = vsel %vm3261, %v8171, %v7404
    %v8236 = vsel %vm3261, %v8172, %v7406
    %v8237 = vsel %vm3261, %v8173, %v7408
    %v8238 = vsel %vm3261, %v8174, %v7410
    %v8239 = vsel %vm3261, %v8175, %v7412
    %v8240 = vsel %vm3261, %v8176, %v7414
    %v8241 = vsel %vm3261, %v8177, %v7416
    %v8242 = vsel %vm3261, %v8178, %v7418
    %v8243 = vsel %vm3261, %v8179, %v7420
    %v8244 = vsel %vm3261, %v8180, %v7422
    %v8245 = vsel %vm3261, %v8181, %v7424
    %v8246 = vsel %vm3261, %v8182, %v7426
    %v8247 = vsel %vm3261, %v8183, %v7428
    %v8248 = vsel %vm3261, %v8184, %v7430
    %v8249 = vsel %vm3261, %v8185, %v7432
    %v8250 = vsel %vm3261, %v8186, %v7434
    %v8251 = vsel %vm3261, %v8187, %v7436
    %v8252 = vsel %vm3261, %v8188, %v7438
    %v8253 = vsel %vm3261, %v8189, %v7440
    %v8254 = vsel %vm3261, %v8190, %v7442
    %v8255 = vsel %vm3261, %v8191, %v7444
    %v8256 = vsel %vm3261, %v8192, %v7446
    %v8257 = vsel %vm3261, %v8193, %v7448
    %v8258 = vsel %vm3261, %v8194, %v7450
    %v8259 = vsel %vm3261, %v8195, %v7452
    %v8260 = vsel %vm3261, %v8196, %v7454
    %v8261 = vsel %vm3261, %v8197, %v7456
    %v8262 = vsel %vm3261, %v8198, %v7458
    %v8263 = vsel %vm3261, %v8199, %v7460
    %v8264 = vsel %vm3261, %v8200, %v7462
    %v8265 = vsel %vm3261, %v8201, %v7464
    %v8266 = vsel %vm3261, %v8202, %v7466
    %v8267 = vsel %vm3261, %v8203, %v7468
    %v8268 = vsel %vm3261, %v8204, %v7470
    %v8269 = vsel %vm3261, %v8205, %v7472
    %v8270 = vsel %vm3261, %v8206, %v7474
    %v8271 = vsel %vm3261, %v8207, %v7476
    %v8272 = vsel %vm3261, %v8208, %v7478
    %v8273 = vsel %vm3261, %v8209, %v7480
    %v8274 = vsel %vm3261, %v8210, %v7482
    %v8275 = vsel %vm3261, %v8211, %v7484
    %v8276 = vsel %vm3261, %v8212, %v7486
    %v8277 = vsel %vm3261, %v8213, %v7488
    %v8278 = vsel %vm3261, %v8214, %v7490
    %v8279 = vsel %vm3261, %v8215, %v7492
    %v8280 = vsel %vm3261, %v8216, %v7494
    %v8281 = vsel %vm3261, %v8217, %v7496
    %v8282 = vsel %vm3261, %v8218, %v7498
    %v8283 = vsel %vm3261, %v8219, %v7500
    %v8284 = vsel %vm3261, %v8220, %v7502
    %v8285 = vsel %vm3261, %v8221, %v7504
    %v8286 = vsel %vm3261, %v8222, %v7506
    %v8287 = vsel %vm3261, %v8223, %v7508
    %v8288 = vsel %vm3261, %v8224, %v7510
    %v8289 = vsel %vm3261, %v8225, %v7512
    %v8290 = vsel %vm3261, %v8226, %v7514
    %v8291 = vsel %vm3261, %v8227, %v7516
    %v8292 = vsel %vm3261, %v8228, %v7518
    %v8293 = vsel %vm3261, %v8229, %v7520
    %v8294 = vsel %vm3261, %v8230, %v7522
    %v8295 = vsel %vm3261, %v8231, %v7524
    %v8296 = vsel %vm3261, %v8232, %v7526
    %v8297 = vsel %vm3261, %v8233, %v7528
    %v8298 = vsel %vm3261, %v8234, %v7530
    %v8299 = vsel %vm3326, %v8235, %v7660
    %v8300 = vsel %vm3326, %v8236, %v7662
    %v8301 = vsel %vm3326, %v8237, %v7664
    %v8302 = vsel %vm3326, %v8238, %v7666
    %v8303 = vsel %vm3326, %v8239, %v7668
    %v8304 = vsel %vm3326, %v8240, %v7670
    %v8305 = vsel %vm3326, %v8241, %v7672
    %v8306 = vsel %vm3326, %v8242, %v7674
    %v8307 = vsel %vm3326, %v8243, %v7676
    %v8308 = vsel %vm3326, %v8244, %v7678
    %v8309 = vsel %vm3326, %v8245, %v7680
    %v8310 = vsel %vm3326, %v8246, %v7682
    %v8311 = vsel %vm3326, %v8247, %v7684
    %v8312 = vsel %vm3326, %v8248, %v7686
    %v8313 = vsel %vm3326, %v8249, %v7688
    %v8314 = vsel %vm3326, %v8250, %v7690
    %v8315 = vsel %vm3326, %v8251, %v7692
    %v8316 = vsel %vm3326, %v8252, %v7694
    %v8317 = vsel %vm3326, %v8253, %v7696
    %v8318 = vsel %vm3326, %v8254, %v7698
    %v8319 = vsel %vm3326, %v8255, %v7700
    %v8320 = vsel %vm3326, %v8256, %v7702
    %v8321 = vsel %vm3326, %v8257, %v7704
    %v8322 = vsel %vm3326, %v8258, %v7706
    %v8323 = vsel %vm3326, %v8259, %v7708
    %v8324 = vsel %vm3326, %v8260, %v7710
    %v8325 = vsel %vm3326, %v8261, %v7712
    %v8326 = vsel %vm3326, %v8262, %v7714
    %v8327 = vsel %vm3326, %v8263, %v7716
    %v8328 = vsel %vm3326, %v8264, %v7718
    %v8329 = vsel %vm3326, %v8265, %v7720
    %v8330 = vsel %vm3326, %v8266, %v7722
    %v8331 = vsel %vm3326, %v8267, %v7724
    %v8332 = vsel %vm3326, %v8268, %v7726
    %v8333 = vsel %vm3326, %v8269, %v7728
    %v8334 = vsel %vm3326, %v8270, %v7730
    %v8335 = vsel %vm3326, %v8271, %v7732
    %v8336 = vsel %vm3326, %v8272, %v7734
    %v8337 = vsel %vm3326, %v8273, %v7736
    %v8338 = vsel %vm3326, %v8274, %v7738
    %v8339 = vsel %vm3326, %v8275, %v7740
    %v8340 = vsel %vm3326, %v8276, %v7742
    %v8341 = vsel %vm3326, %v8277, %v7744
    %v8342 = vsel %vm3326, %v8278, %v7746
    %v8343 = vsel %vm3326, %v8279, %v7748
    %v8344 = vsel %vm3326, %v8280, %v7750
    %v8345 = vsel %vm3326, %v8281, %v7752
    %v8346 = vsel %vm3326, %v8282, %v7754
    %v8347 = vsel %vm3326, %v8283, %v7756
    %v8348 = vsel %vm3326, %v8284, %v7758
    %v8349 = vsel %vm3326, %v8285, %v7760
    %v8350 = vsel %vm3326, %v8286, %v7762
    %v8351 = vsel %vm3326, %v8287, %v7764
    %v8352 = vsel %vm3326, %v8288, %v7766
    %v8353 = vsel %vm3326, %v8289, %v7768
    %v8354 = vsel %vm3326, %v8290, %v7770
    %v8355 = vsel %vm3326, %v8291, %v7772
    %v8356 = vsel %vm3326, %v8292, %v7774
    %v8357 = vsel %vm3326, %v8293, %v7776
    %v8358 = vsel %vm3326, %v8294, %v7778
    %v8359 = vsel %vm3326, %v8295, %v7780
    %v8360 = vsel %vm3326, %v8296, %v7782
    %v8361 = vsel %vm3326, %v8297, %v7784
    %v8362 = vsel %vm3326, %v8298, %v7786
    %v8363 = vld [vmem:[%s5] sm:$0xf]
    %v8365 = vsel %vm3396, %v8363, 0
    %v8368 = vsel %vm3396, %v8299, 0
    %v8371 = vsel %vm3396, %v8300, 0
    %v8374 = vsel %vm3396, %v8301, 0
    %v8377 = vsel %vm3396, %v8302, 0
    %v8380 = vsel %vm3396, %v8303, 0
    %v8383 = vsel %vm3396, %v8304, 0
    %v8386 = vsel %vm3396, %v8305, 0
    %v8389 = vsel %vm3396, %v8306, 0
    %v8392 = vsel %vm3396, %v8307, 0
    %v8395 = vsel %vm3396, %v8308, 0
    %v8398 = vsel %vm3396, %v8309, 0
    %v8401 = vsel %vm3396, %v8310, 0
    %v8404 = vsel %vm3396, %v8311, 0
    %v8407 = vsel %vm3396, %v8312, 0
    %v8410 = vsel %vm3396, %v8313, 0
    %v8413 = vsel %vm3396, %v8314, 0
    %v8416 = vsel %vm3396, %v8315, 0
    %v8419 = vsel %vm3396, %v8316, 0
    %v8422 = vsel %vm3396, %v8317, 0
    %v8425 = vsel %vm3396, %v8318, 0
    %v8428 = vsel %vm3396, %v8319, 0
    %v8431 = vsel %vm3396, %v8320, 0
    %v8434 = vsel %vm3396, %v8321, 0
    %v8437 = vsel %vm3396, %v8322, 0
    %v8440 = vsel %vm3396, %v8323, 0
    %v8443 = vsel %vm3396, %v8324, 0
    %v8446 = vsel %vm3396, %v8325, 0
    %v8449 = vsel %vm3396, %v8326, 0
    %v8452 = vsel %vm3396, %v8327, 0
    %v8455 = vsel %vm3396, %v8328, 0
    %v8458 = vsel %vm3396, %v8329, 0
    %v8461 = vsel %vm3396, %v8330, 0
    %v8464 = vsel %vm3396, %v8331, 0
    %v8467 = vsel %vm3396, %v8332, 0
    %v8470 = vsel %vm3396, %v8333, 0
    %v8473 = vsel %vm3396, %v8334, 0
    %v8476 = vsel %vm3396, %v8335, 0
    %v8479 = vsel %vm3396, %v8336, 0
    %v8482 = vsel %vm3396, %v8337, 0
    %v8485 = vsel %vm3396, %v8338, 0
    %v8488 = vsel %vm3396, %v8339, 0
    %v8491 = vsel %vm3396, %v8340, 0
    %v8494 = vsel %vm3396, %v8341, 0
    %v8497 = vsel %vm3396, %v8342, 0
    %v8500 = vsel %vm3396, %v8343, 0
    %v8503 = vsel %vm3396, %v8344, 0
    %v8506 = vsel %vm3396, %v8345, 0
    %v8509 = vsel %vm3396, %v8346, 0
    %v8512 = vsel %vm3396, %v8347, 0
    %v8515 = vsel %vm3396, %v8348, 0
    %v8518 = vsel %vm3396, %v8349, 0
    %v8521 = vsel %vm3396, %v8350, 0
    %v8524 = vsel %vm3396, %v8351, 0
    %v8527 = vsel %vm3396, %v8352, 0
    %v8530 = vsel %vm3396, %v8353, 0
    %v8533 = vsel %vm3396, %v8354, 0
    %v8536 = vsel %vm3396, %v8355, 0
    %v8539 = vsel %vm3396, %v8356, 0
    %v8542 = vsel %vm3396, %v8357, 0
    %v8545 = vsel %vm3396, %v8358, 0
    %v8548 = vsel %vm3396, %v8359, 0
    %v8551 = vsel %vm3396, %v8360, 0
    %v8554 = vsel %vm3396, %v8361, 0
    %v8557 = vsel %vm3396, %v8362, 0
    %8559 = vmatprep.subr.mxu0 0.0
    %8560 = vmatpush1.xpose.msra.mxu0 %v8368
    %8561 = vmatprep.subr.mxu0 0.0
    %8562 = vmatpush1.xpose.msra.mxu0 %v8371
    %8563 = vmatprep.subr.mxu0 0.0
    %8564 = vmatpush1.xpose.msra.mxu0 %v8374
    %8565 = vmatprep.subr.mxu0 0.0
    %8566 = vmatpush1.xpose.msra.mxu0 %v8377
    %8567 = vmatprep.subr.mxu0 0.0
    %8568 = vmatpush1.xpose.msra.mxu0 %v8380
    %8569 = vmatprep.subr.mxu0 0.0
    %8570 = vmatpush1.xpose.msra.mxu0 %v8383
    %8571 = vmatprep.subr.mxu0 0.0
    %8572 = vmatpush1.xpose.msra.mxu0 %v8386
    %8573 = vmatprep.subr.mxu0 0.0
    %8574 = vmatpush1.xpose.msra.mxu0 %v8389
    %8575 = vmatprep.subr.mxu0 0.0
    %8576 = vmatpush1.xpose.msra.mxu0 %v8392
    %8577 = vmatprep.subr.mxu0 0.0
    %8578 = vmatpush1.xpose.msra.mxu0 %v8395
    %8579 = vmatprep.subr.mxu0 0.0
    %8580 = vmatpush1.xpose.msra.mxu0 %v8398
    %8581 = vmatprep.subr.mxu0 0.0
    %8582 = vmatpush1.xpose.msra.mxu0 %v8401
    %8583 = vmatprep.subr.mxu0 0.0
    %8584 = vmatpush1.xpose.msra.mxu0 %v8404
    %8585 = vmatprep.subr.mxu0 0.0
    %8586 = vmatpush1.xpose.msra.mxu0 %v8407
    %8587 = vmatprep.subr.mxu0 0.0
    %8588 = vmatpush1.xpose.msra.mxu0 %v8410
    %8589 = vmatprep.subr.mxu0 0.0
    %8590 = vmatpush1.xpose.msra.mxu0 %v8413
    %8591 = vmatprep.subr.mxu0 0.0
    %8592 = vmatpush1.xpose.msra.mxu0 %v8416
    %8593 = vmatprep.subr.mxu0 0.0
    %8594 = vmatpush1.xpose.msra.mxu0 %v8419
    %8595 = vmatprep.subr.mxu0 0.0
    %8596 = vmatpush1.xpose.msra.mxu0 %v8422
    %8597 = vmatprep.subr.mxu0 0.0
    %8598 = vmatpush1.xpose.msra.mxu0 %v8425
    %8599 = vmatprep.subr.mxu0 0.0
    %8600 = vmatpush1.xpose.msra.mxu0 %v8428
    %8601 = vmatprep.subr.mxu0 0.0
    %8602 = vmatpush1.xpose.msra.mxu0 %v8431
    %8603 = vmatprep.subr.mxu0 0.0
    %8604 = vmatpush1.xpose.msra.mxu0 %v8434
    %8605 = vmatprep.subr.mxu0 0.0
    %8606 = vmatpush1.xpose.msra.mxu0 %v8437
    %8607 = vmatprep.subr.mxu0 0.0
    %8608 = vmatpush1.xpose.msra.mxu0 %v8440
    %8609 = vmatprep.subr.mxu0 0.0
    %8610 = vmatpush1.xpose.msra.mxu0 %v8443
    %8611 = vmatprep.subr.mxu0 0.0
    %8612 = vmatpush1.xpose.msra.mxu0 %v8446
    %8613 = vmatprep.subr.mxu0 0.0
    %8614 = vmatpush1.xpose.msra.mxu0 %v8449
    %8615 = vmatprep.subr.mxu0 0.0
    %8616 = vmatpush1.xpose.msra.mxu0 %v8452
    %8617 = vmatprep.subr.mxu0 0.0
    %8618 = vmatpush1.xpose.msra.mxu0 %v8455
    %8619 = vmatprep.subr.mxu0 0.0
    %8620 = vmatpush1.xpose.msra.mxu0 %v8458
    %8621 = vmatprep.subr.mxu0 0.0
    %8622 = vmatpush1.xpose.msra.mxu0 %v8461
    %8623 = vmatprep.mubr.f32.mxu0 0.0
    %8624 = vmatmul.mubr.f32.gmra.mrb[0].mxu0 %v8365
    %v8625 = vpop.f32.mrb[0].mxu0
    %v8626 = vadd.f32 0.0, %v8625
    %v8627 = vpop.f32.mrb[0].mxu0
    %v8628 = vadd.f32 0.0, %v8627
    %8629 = vdwg.mxu0
    %8630 = vmatprep.subr.mxu0 0.0
    %8631 = vmatpush1.xpose.msra.mxu0 %v8464
    %8632 = vmatprep.subr.mxu0 0.0
    %8633 = vmatpush1.xpose.msra.mxu0 %v8467
    %8634 = vmatprep.subr.mxu0 0.0
    %8635 = vmatpush1.xpose.msra.mxu0 %v8470
    %8636 = vmatprep.subr.mxu0 0.0
    %8637 = vmatpush1.xpose.msra.mxu0 %v8473
    %8638 = vmatprep.subr.mxu0 0.0
    %8639 = vmatpush1.xpose.msra.mxu0 %v8476
    %8640 = vmatprep.subr.mxu0 0.0
    %8641 = vmatpush1.xpose.msra.mxu0 %v8479
    %8642 = vmatprep.subr.mxu0 0.0
    %8643 = vmatpush1.xpose.msra.mxu0 %v8482
    %8644 = vmatprep.subr.mxu0 0.0
    %8645 = vmatpush1.xpose.msra.mxu0 %v8485
    %8646 = vmatprep.subr.mxu0 0.0
    %8647 = vmatpush1.xpose.msra.mxu0 %v8488
    %8648 = vmatprep.subr.mxu0 0.0
    %8649 = vmatpush1.xpose.msra.mxu0 %v8491
    %8650 = vmatprep.subr.mxu0 0.0
    %8651 = vmatpush1.xpose.msra.mxu0 %v8494
    %8652 = vmatprep.subr.mxu0 0.0
    %8653 = vmatpush1.xpose.msra.mxu0 %v8497
    %8654 = vmatprep.subr.mxu0 0.0
    %8655 = vmatpush1.xpose.msra.mxu0 %v8500
    %8656 = vmatprep.subr.mxu0 0.0
    %8657 = vmatpush1.xpose.msra.mxu0 %v8503
    %8658 = vmatprep.subr.mxu0 0.0
    %8659 = vmatpush1.xpose.msra.mxu0 %v8506
    %8660 = vmatprep.subr.mxu0 0.0
    %8661 = vmatpush1.xpose.msra.mxu0 %v8509
    %8662 = vmatprep.subr.mxu0 0.0
    %8663 = vmatpush1.xpose.msra.mxu0 %v8512
    %8664 = vmatprep.subr.mxu0 0.0
    %8665 = vmatpush1.xpose.msra.mxu0 %v8515
    %8666 = vmatprep.subr.mxu0 0.0
    %8667 = vmatpush1.xpose.msra.mxu0 %v8518
    %8668 = vmatprep.subr.mxu0 0.0
    %8669 = vmatpush1.xpose.msra.mxu0 %v8521
    %8670 = vmatprep.subr.mxu0 0.0
    %8671 = vmatpush1.xpose.msra.mxu0 %v8524
    %8672 = vmatprep.subr.mxu0 0.0
    %8673 = vmatpush1.xpose.msra.mxu0 %v8527
    %8674 = vmatprep.subr.mxu0 0.0
    %8675 = vmatpush1.xpose.msra.mxu0 %v8530
    %8676 = vmatprep.subr.mxu0 0.0
    %8677 = vmatpush1.xpose.msra.mxu0 %v8533
    %8678 = vmatprep.subr.mxu0 0.0
    %8679 = vmatpush1.xpose.msra.mxu0 %v8536
    %8680 = vmatprep.subr.mxu0 0.0
    %8681 = vmatpush1.xpose.msra.mxu0 %v8539
    %8682 = vmatprep.subr.mxu0 0.0
    %8683 = vmatpush1.xpose.msra.mxu0 %v8542
    %8684 = vmatprep.subr.mxu0 0.0
    %8685 = vmatpush1.xpose.msra.mxu0 %v8545
    %8686 = vmatprep.subr.mxu0 0.0
    %8687 = vmatpush1.xpose.msra.mxu0 %v8548
    %8688 = vmatprep.subr.mxu0 0.0
    %8689 = vmatpush1.xpose.msra.mxu0 %v8551
    %8690 = vmatprep.subr.mxu0 0.0
    %8691 = vmatpush1.xpose.msra.mxu0 %v8554
    %8692 = vmatprep.subr.mxu0 0.0
    %8693 = vmatpush1.xpose.msra.mxu0 %v8557
    %8694 = vmatprep.mubr.f32.mxu0 0.0
    %8695 = vmatmul.mubr.f32.gmra.mrb[0].mxu0 %v8365
    %v8696 = vpop.f32.mrb[0].mxu0
    %v8697 = vadd.f32 0.0, %v8696
    %v8698 = vpop.f32.mrb[0].mxu0
    %v8699 = vadd.f32 0.0, %v8698
    %8700 = vdwg.mxu0
    %v8701 = vsel %vm3589, %v8626, 0.0
    %v8702 = vsel %vm3589, %v8628, 0.0
    %v8703 = vadd.f32 %v8701, %v8702
    %v8704 = vsel %vm3589, %v8697, 0.0
    %v8705 = vadd.f32 %v8703, %v8704
    %v8706 = vsel %vm3589, %v8699, 0.0
    %v8707 = vadd.f32 %v8705, %v8706
    %8708 = vadd.xlane.f32.xlu0 %v8707
    %v8709 = vpop.xlane.xlu0 %8708
    %v8710 = vmul.f32 %v8626, %v8626
    %v8711 = vmul.f32 %v8628, %v8628
    %v8712 = vmul.f32 %v8697, %v8697
    %v8713 = vmul.f32 %v8699, %v8699
    %v8714 = vsel %vm3589, %v8710, 0.0
    %v8715 = vsel %vm3589, %v8711, 0.0
    %v8716 = vadd.f32 %v8714, %v8715
    %v8717 = vsel %vm3589, %v8712, 0.0
    %v8718 = vadd.f32 %v8716, %v8717
    %v8719 = vsel %vm3589, %v8713, 0.0
    %v8720 = vadd.f32 %v8718, %v8719
    %8721 = vadd.xlane.f32.xlu0 %v8720
    %v8722 = vpop.xlane.xlu0 %8721
    %v8723 = vmul.f32 %v8709, 0.001953125
    %v8724 = vmul.f32 %v8722, 0.001953125
    %v8725 = vmul.f32 %v8723, %v8723
    %v8726 = vsub.f32 %v8724, %v8725
    %v8727 = vld [vmem:[%s6] sm:$0xf]
    %v8728 = vadd.f32 %v8726, 1e-05
    %v8729 = vrsqrt.pop %v8728
    %v8730 = vmul.f32 %v8727, %v8729
    %8732 = vset.pattern.permute.xlu0 0
    %8733 = vperm.xlu0 %8732, %v8730
    %v8734 = vpop.permute.xlu0 %8733
    %v8736 = vmul.f32 %v8626, %v8734
    %v8737 = vmul.f32 %v8628, %v8734
    %v8738 = vmul.f32 %v8697, %v8734
    %v8739 = vmul.f32 %v8699, %v8734
    %v8740 = vld [vmem:[%s7] sm:$0xf]
    %v8741 = vmul.f32 %v8723, %v8730
    %v8742 = vsub.f32 %v8740, %v8741
    %8744 = vset.pattern.permute.xlu0 0
    %8745 = vperm.xlu0 %8744, %v8742
    %v8746 = vpop.permute.xlu0 %8745
    %v8748 = vadd.f32 %v8736, %v8746
    %v8749 = vadd.f32 %v8737, %v8746
    %v8750 = vadd.f32 %v8738, %v8746
    %v8751 = vadd.f32 %v8739, %v8746
    %v8752 = vld [vmem:[%s1] sm:$0xff]
    %v8754 = vcombine.high %v8752, %v8752
    %v8756 = vadd.f32 %v8748, %v8752
    %v8757 = vadd.f32 %v8749, %v8754
    %v8760 = vcombine.low %v8756, %v8757
    %8762 = vst [vmem:[#allocation3] sm:$0xff] %v8760
    %s8763 = scalar_lea.vmem %s1, 8
    %v8764 = vld [vmem:[%s8763] sm:$0xff]
    %v8766 = vcombine.high %v8764, %v8764
    %v8768 = vadd.f32 %v8750, %v8764
    %v8769 = vadd.f32 %v8751, %v8766
    %v8772 = vcombine.low %v8768, %v8769
    %s8774 = scalar_lea.vmem [#allocation3], 8
    %8775 = vst [vmem:[%s8774] sm:$0xff] %v8772
    // Predicated region
    $region34: #{tpu_custom_call.1} parent=1 // pred_check
      _
    $region35: #{tpu_custom_call.1} parent=1 // pred_check_branch
      %8777 = sbr.rel (0) target = $region37
    $region36: #{tpu_custom_call.1} parent=1 // pred_region
      %s8779 = ssub.s32 256, 256
      %8780 = vsyncadd [#allocation4], %s8779
      %s8781 = sshll.u32 [#allocation3], 4
      %s8782 = int_to_ptr.vmem [resolvable:$true] %s8781
      %8787 = dma.vmem_to_hbm [thread:$0]  %s8782, 256, %s8, [#allocation4], 128, 128, 8
    $region37: #{tpu_custom_call.1} parent=1 // pred_fallthru
      _
    // Predicated region
    $region38: #{tpu_custom_call.1} parent=1 // pred_check
      _
    $region39: #{tpu_custom_call.1} parent=1 // pred_check_branch
      %8789 = sbr.rel (0) target = $region41
    $region40: #{tpu_custom_call.1} parent=1 // pred_region
      %8790 = dma.done [#allocation4], 256
    $region41: #{tpu_custom_call.1} parent=1 // pred_fallthru
      _
    %8791 = vsyncpa [#allocation4], 1

</llo_original>
